<compile_context>
chip_gen: v7x
topology: tpu7x:2x2x1
jax: 0.10.0
libtpu: 0.0.40
codegen_flags: <defaults>
</compile_context>

<pallas_src>
import functools

import numpy as np
import jax
import jax.numpy as jnp
from jax import lax
from jax.experimental import pallas as pl
from jax.experimental.pallas import tpu as pltpu

EPS = 1e-5
HALO = 8                                           # sublane-aligned left halo
CONV_CFG = [(7, 2, 6), (5, 4, 8), (3, 4, 8), (3, 4, 6)]   # (K, dilation, pad)
HEAD_HIDDEN = 130
HEAD_HIDDEN_PAD = 256


# ----------------------------------------------------------------------------
# Fused kernel: 4x (conv + BN + ReLU) + avg-pool + MLP head
# ----------------------------------------------------------------------------
def _fcn1_fused_kernel(slab0_ref, feat_ref,
                       w0, cb0, cg0, cbe0,
                       w1, cb1, cg1, cbe1,
                       w2_hbm, cb2, cg2, cbe2,
                       w3_hbm, cb3, cg3, cbe3,
                       hwp, hwf, hb, hg, hbe, ow, ob,
                       o_ref,
                       s1, s2, s3, w2v, w3v, sem,
                       *, B, L0, L1, L2, L3):
    bf = jnp.bfloat16

    # ---- Start streaming the two big late-layer weight slabs HBM->VMEM; the
    #      DMAs overlap with the layer-0/1 compute below.
    cp2 = pltpu.make_async_copy(w2_hbm, w2v, sem.at[0])
    cp3 = pltpu.make_async_copy(w3_hbm, w3v, sem.at[1])
    cp2.start()
    cp3.start()

    # ---- Zero only the halo rows of the padded-activation scratches
    #      (interior rows are fully overwritten before being read).
    for s, l_in in ((s1, L0), (s2, L1), (s3, L2)):
        c = s.shape[2]
        tail = s.shape[1] - (HALO + l_in)
        s[:, 0:HALO, :] = jnp.zeros((B, HALO, c), jnp.float32)
        s[:, HALO + l_in:, :] = jnp.zeros((B, tail, c), jnp.float32)

    def bn_relu(y, g_ref, be_ref):
        # Training-mode BatchNorm (batch statistics); two-pass variance.
        mu = jnp.mean(y, axis=0, keepdims=True)
        var = jnp.mean((y - mu) * (y - mu), axis=0, keepdims=True)
        return jnp.maximum((y - mu) * (g_ref[...] / jnp.sqrt(var + EPS))
                           + be_ref[...], 0.0)

    def conv_layer(in_scr, w_ref, b_ref, g_ref, be_ref, li, l_out):
        K, dil, pad = CONV_CFG[li]
        base = HALO - pad
        # im2col slab (B*l_out, K*C_in) in bf16 -> one MXU dot per layer.
        slab = jnp.concatenate(
            [jnp.concatenate(
                [in_scr[b, base + k * dil: base + k * dil + l_out, :].astype(bf)
                 for k in range(K)], axis=-1)
             for b in range(B)], axis=0)
        y = jnp.dot(slab, w_ref[...],
                    preferred_element_type=jnp.float32) + b_ref[...]
        return bn_relu(y, g_ref, be_ref)

    # ---- layer 0 (im2col slab prepared in the wrapper; C_in=4 is lane-hostile)
    y0 = jnp.dot(slab0_ref[...], w0[...],
                 preferred_element_type=jnp.float32) + cb0[...]
    h = bn_relu(y0, cg0, cbe0)                       # (B*L0, 128)
    for b in range(B):
        s1[b, HALO:HALO + L0, :] = h[b * L0:(b + 1) * L0, :]

    # ---- layer 1
    h = conv_layer(s1, w1, cb1, cg1, cbe1, 1, L1)    # (B*L1, 256)
    for b in range(B):
        s2[b, HALO:HALO + L1, :] = h[b * L1:(b + 1) * L1, :]

    # ---- layer 2 (weights arrive via the manual DMA started above)
    cp2.wait()
    h = conv_layer(s2, w2v, cb2, cg2, cbe2, 2, L2)   # (B*L2, 512)
    for b in range(B):
        s3[b, HALO:HALO + L2, :] = h[b * L2:(b + 1) * L2, :]

    # ---- layer 3
    cp3.wait()
    h = conv_layer(s3, w3v, cb3, cg3, cbe3, 3, L3)   # (B*L3, 256)

    # ---- AdaptiveAvgPool1d(1) + Flatten -> (B, 256)
    pooled = jnp.concatenate(
        [jnp.mean(h[b * L3:(b + 1) * L3, :], axis=0, keepdims=True)
         for b in range(B)], axis=0)

    # ---- head: Linear(258->130, padded to 256 lanes) + BN + ReLU + Linear(->2)
    # concat(pooled, feat) @ W1 == pooled @ W1[:256] + feat @ W1[256:]; the
    # 2-column feat part is done on the VPU (no degenerate K=2 matmul).
    f = feat_ref[...]
    z = (jnp.dot(pooled.astype(bf), hwp[...],
                 preferred_element_type=jnp.float32)
         + f[:, 0:1] * hwf[0:1, :] + f[:, 1:2] * hwf[1:2, :]
         + hb[...])                                  # (B, 256)
    a = bn_relu(z, hg, hbe)
    o_ref[...] = (jnp.dot(a.astype(bf), ow[...],
                          preferred_element_type=jnp.float32) + ob[...])


# ----------------------------------------------------------------------------
# Wrapper
# ----------------------------------------------------------------------------
def _full_spec(a):
    nd = a.ndim
    return pl.BlockSpec(a.shape, lambda i, _nd=nd: (0,) * _nd)


def fcn1_forward(x, feat, params):
    B, C_in, L = x.shape
    bf = jnp.bfloat16

    # Per-layer output lengths.
    L_outs, l = [], L
    for (K, d, p) in CONV_CFG:
        l = l + 2 * p - d * (K - 1)
        L_outs.append(l)
    L0, L1, L2, L3 = L_outs

    # ---- layer-0 im2col in the wrapper (pure layout plumbing on a tiny input).
    K0, d0, p0 = CONV_CFG[0]
    x_cl = jnp.transpose(x, (0, 2, 1))                        # (B, L, C_in)
    x_pad = jnp.pad(x_cl, ((0, 0), (p0, p0), (0, 0)))
    slab0 = jnp.concatenate(
        [x_pad[:, k * d0:k * d0 + L0, :] for k in range(K0)], axis=-1)
    slab0 = slab0.reshape(B * L0, K0 * C_in).astype(bf)       # (B*L0, K0*C_in)

    # ---- conv weights flattened to (K*C_in, C_out) bf16; biases/BN stay f32.
    wflat, conv_rest, c_outs = [], [], []
    for (w, b, g, be) in params["convs"]:
        K, ci, co = w.shape
        wflat.append(w.reshape(K * ci, co).astype(bf))
        conv_rest.append((b, g, be))
        c_outs.append(co)

    # ---- head params: split the concat matmul; pad hidden 130 -> 256 lanes
    #      (padding is inert: zero cols/bias/beta and zero out-proj rows).
    w1, b1, g1, be1, w2, b2 = params["head"]
    padc = HEAD_HIDDEN_PAD - HEAD_HIDDEN
    hwp = jnp.pad(w1[:256], ((0, 0), (0, padc))).astype(bf)   # (256, 256)
    hwf = jnp.pad(w1[256:], ((0, 0), (0, padc)))              # (2, 256) f32
    hb = jnp.pad(b1, ((0, 0), (0, padc)))
    hg = jnp.pad(g1, ((0, 0), (0, padc)), constant_values=1.0)
    hbe = jnp.pad(be1, ((0, 0), (0, padc)))
    ow = jnp.pad(w2, ((0, padc), (0, 0))).astype(bf)          # (256, 2)

    args, in_specs = [], []

    def add(a, hbm=False):
        args.append(a)
        in_specs.append(pl.BlockSpec(memory_space=pl.ANY) if hbm
                        else _full_spec(a))

    add(slab0)
    add(feat)
    for li in range(4):
        add(wflat[li], hbm=(li >= 2))        # conv2/conv3 weights: manual DMA
        for t in conv_rest[li]:
            add(t)
    for t in (hwp, hwf, hb, hg, hbe, ow, b2):
        add(t)

    scratch = [
        pltpu.VMEM((B, HALO + L0 + CONV_CFG[1][2], c_outs[0]), jnp.float32),
        pltpu.VMEM((B, HALO + L1 + CONV_CFG[2][2], c_outs[1]), jnp.float32),
        pltpu.VMEM((B, HALO + L2 + CONV_CFG[3][2], c_outs[2]), jnp.float32),
        pltpu.VMEM(wflat[2].shape, bf),
        pltpu.VMEM(wflat[3].shape, bf),
        pltpu.SemaphoreType.DMA((2,)),
    ]

    kernel = functools.partial(_fcn1_fused_kernel,
                               B=B, L0=L0, L1=L1, L2=L2, L3=L3)
    return pl.pallas_call(
        kernel,
        out_shape=jax.ShapeDtypeStruct((B, 2), jnp.float32),
        grid=(1,),
        in_specs=in_specs,
        out_specs=pl.BlockSpec((B, 2), lambda i: (0, 0)),
        scratch_shapes=scratch,
        compiler_params=pltpu.CompilerParams(
            dimension_semantics=("arbitrary",)),
    )(*args)


# ----------------------------------------------------------------------------
# Deterministic parameter init (same logical shapes as the PyTorch module)
# ----------------------------------------------------------------------------
def init_params(key, n_in):
    channels = [(n_in, 128), (128, 256), (256, 512), (512, 256)]
    keys = jax.random.split(key, 12)
    ki = 0
    convs = []
    for (cin, cout), (K, _, _) in zip(channels, CONV_CFG):
        bound = 1.0 / np.sqrt(cin * K)
        w = jax.random.uniform(keys[ki], (K, cin, cout), jnp.float32,
                               -bound, bound); ki += 1
        b = jax.random.uniform(keys[ki], (1, cout), jnp.float32,
                               -bound, bound); ki += 1
        g = jnp.ones((1, cout), jnp.float32)
        be = jnp.zeros((1, cout), jnp.float32)
        convs.append((w, b, g, be))

    bound1 = 1.0 / np.sqrt(256 + 2)
    w1 = jax.random.uniform(keys[ki], (258, HEAD_HIDDEN), jnp.float32,
                            -bound1, bound1); ki += 1
    b1 = jax.random.uniform(keys[ki], (1, HEAD_HIDDEN), jnp.float32,
                            -bound1, bound1); ki += 1
    g1 = jnp.ones((1, HEAD_HIDDEN), jnp.float32)
    be1 = jnp.zeros((1, HEAD_HIDDEN), jnp.float32)
    bound2 = 1.0 / np.sqrt(128 + 2)
    w2 = jax.random.uniform(keys[ki], (HEAD_HIDDEN, 2), jnp.float32,
                            -bound2, bound2); ki += 1
    b2 = jax.random.uniform(keys[ki], (1, 2), jnp.float32,
                            -bound2, bound2); ki += 1
    return {"convs": convs, "head": (w1, b1, g1, be1, w2, b2)}


# ----------------------------------------------------------------------------
# Pure-JAX reference that models the kernel's mixed precision (bf16 matmul
# inputs, f32 accumulation) so the comparison is numerically tight.
# ----------------------------------------------------------------------------
def _bf16r(v):
    return v.astype(jnp.bfloat16).astype(jnp.float32)


def ref_forward(x, feat, params):
    h = x
    for (w, b, g, be), (K, d, p) in zip(params["convs"], CONV_CFG):
        w_oik = jnp.transpose(_bf16r(w), (2, 1, 0))          # (C_out, C_in, K)
        y = lax.conv_general_dilated(_bf16r(h), w_oik, window_strides=(1,),
                                     padding=[(p, p)], rhs_dilation=(d,),
                                     dimension_numbers=("NCH", "OIH", "NCH"),
                                     precision=lax.Precision.HIGHEST)
        y = y + b.reshape(1, -1, 1)
        mu = jnp.mean(y, axis=(0, 2), keepdims=True)
        var = jnp.mean((y - mu) ** 2, axis=(0, 2), keepdims=True)
        h = jnp.maximum((y - mu) * (g.reshape(1, -1, 1) / jnp.sqrt(var + EPS))
                        + be.reshape(1, -1, 1), 0.0)
    hp = jnp.mean(h, axis=2)                                  # (B, 256)
    w1, b1, g1, be1, w2, b2 = params["head"]
    z = (jnp.dot(_bf16r(hp), _bf16r(w1[:256]), precision=lax.Precision.HIGHEST)
         + jnp.dot(feat, w1[256:], precision=lax.Precision.HIGHEST) + b1)
    mu = jnp.mean(z, axis=0, keepdims=True)
    var = jnp.mean((z - mu) ** 2, axis=0, keepdims=True)
    a = jnp.maximum((z - mu) * (g1 / jnp.sqrt(var + EPS)) + be1, 0.0)
    return jnp.dot(_bf16r(a), _bf16r(w2), precision=lax.Precision.HIGHEST) + b2


# ----------------------------------------------------------------------------
if __name__ == "__main__":
    key = jax.random.PRNGKey(0)
    kp, kx, kf = jax.random.split(key, 3)

    n_in, B, L = 4, 2, 16
    params = init_params(kp, n_in)
    x = jax.random.normal(kx, (B, n_in, L), jnp.float32)
    feat = jax.random.normal(kf, (B, 2), jnp.float32)

    fwd = jax.jit(fcn1_forward)
    out = jax.block_until_ready(fwd(x, feat, params))

    ref = ref_forward(x, feat, params)
    np.testing.assert_allclose(np.asarray(out), np.asarray(ref),
                               rtol=2e-2, atol=2e-2)

    print("KERNEL_OK")
</pallas_src>

<mosaic_0001>
module attributes {stable_mosaic.version = 11 : i64} {
  func.func @_fcn1_fused_kernel(%arg0: i32, %arg1: memref<32x28xbf16, #tpu.memory_space<vmem>>, %arg2: memref<2x2xf32, #tpu.memory_space<vmem>>, %arg3: memref<28x128xbf16, #tpu.memory_space<vmem>>, %arg4: memref<1x128xf32, #tpu.memory_space<vmem>>, %arg5: memref<1x128xf32, #tpu.memory_space<vmem>>, %arg6: memref<1x128xf32, #tpu.memory_space<vmem>>, %arg7: memref<640x256xbf16, #tpu.memory_space<vmem>>, %arg8: memref<1x256xf32, #tpu.memory_space<vmem>>, %arg9: memref<1x256xf32, #tpu.memory_space<vmem>>, %arg10: memref<1x256xf32, #tpu.memory_space<vmem>>, %arg11: memref<768x512xbf16, #tpu.memory_space<any>>, %arg12: memref<1x512xf32, #tpu.memory_space<vmem>>, %arg13: memref<1x512xf32, #tpu.memory_space<vmem>>, %arg14: memref<1x512xf32, #tpu.memory_space<vmem>>, %arg15: memref<1536x256xbf16, #tpu.memory_space<any>>, %arg16: memref<1x256xf32, #tpu.memory_space<vmem>>, %arg17: memref<1x256xf32, #tpu.memory_space<vmem>>, %arg18: memref<1x256xf32, #tpu.memory_space<vmem>>, %arg19: memref<256x256xbf16, #tpu.memory_space<vmem>>, %arg20: memref<2x256xf32, #tpu.memory_space<vmem>>, %arg21: memref<1x256xf32, #tpu.memory_space<vmem>>, %arg22: memref<1x256xf32, #tpu.memory_space<vmem>>, %arg23: memref<1x256xf32, #tpu.memory_space<vmem>>, %arg24: memref<256x2xbf16, #tpu.memory_space<vmem>>, %arg25: memref<1x2xf32, #tpu.memory_space<vmem>>, %arg26: memref<2x2xf32, #tpu.memory_space<vmem>>, %arg27: memref<2x32x128xf32, #tpu.memory_space<vmem>>, %arg28: memref<2x32x256xf32, #tpu.memory_space<vmem>>, %arg29: memref<2x38x512xf32, #tpu.memory_space<vmem>>, %arg30: memref<768x512xbf16, #tpu.memory_space<vmem>>, %arg31: memref<1536x256xbf16, #tpu.memory_space<vmem>>, %arg32: memref<2x!tpu.dma_semaphore, #tpu.memory_space<semaphore_mem>>) attributes {dimension_semantics = [#tpu.dimension_semantics<arbitrary>], iteration_bounds = array<i64: 1>, scalar_prefetch = 0 : i64, scratch_operands = 6 : i64, tpu.core_type = #tpu.core_type<tc>, window_params = [{pipeline_mode = #tpu.pipeline_mode<synchronous>, transform_indices = @transform_0, window_bounds = array<i64: 32, 28>}, {pipeline_mode = #tpu.pipeline_mode<synchronous>, transform_indices = @transform_1, window_bounds = array<i64: 2, 2>}, {pipeline_mode = #tpu.pipeline_mode<synchronous>, transform_indices = @transform_2, window_bounds = array<i64: 28, 128>}, {pipeline_mode = #tpu.pipeline_mode<synchronous>, transform_indices = @transform_3, window_bounds = array<i64: 1, 128>}, {pipeline_mode = #tpu.pipeline_mode<synchronous>, transform_indices = @transform_4, window_bounds = array<i64: 1, 128>}, {pipeline_mode = #tpu.pipeline_mode<synchronous>, transform_indices = @transform_5, window_bounds = array<i64: 1, 128>}, {pipeline_mode = #tpu.pipeline_mode<synchronous>, transform_indices = @transform_6, window_bounds = array<i64: 640, 256>}, {pipeline_mode = #tpu.pipeline_mode<synchronous>, transform_indices = @transform_7, window_bounds = array<i64: 1, 256>}, {pipeline_mode = #tpu.pipeline_mode<synchronous>, transform_indices = @transform_8, window_bounds = array<i64: 1, 256>}, {pipeline_mode = #tpu.pipeline_mode<synchronous>, transform_indices = @transform_9, window_bounds = array<i64: 1, 256>}, {}, {pipeline_mode = #tpu.pipeline_mode<synchronous>, transform_indices = @transform_11, window_bounds = array<i64: 1, 512>}, {pipeline_mode = #tpu.pipeline_mode<synchronous>, transform_indices = @transform_12, window_bounds = array<i64: 1, 512>}, {pipeline_mode = #tpu.pipeline_mode<synchronous>, transform_indices = @transform_13, window_bounds = array<i64: 1, 512>}, {}, {pipeline_mode = #tpu.pipeline_mode<synchronous>, transform_indices = @transform_15, window_bounds = array<i64: 1, 256>}, {pipeline_mode = #tpu.pipeline_mode<synchronous>, transform_indices = @transform_16, window_bounds = array<i64: 1, 256>}, {pipeline_mode = #tpu.pipeline_mode<synchronous>, transform_indices = @transform_17, window_bounds = array<i64: 1, 256>}, {pipeline_mode = #tpu.pipeline_mode<synchronous>, transform_indices = @transform_18, window_bounds = array<i64: 256, 256>}, {pipeline_mode = #tpu.pipeline_mode<synchronous>, transform_indices = @transform_19, window_bounds = array<i64: 2, 256>}, {pipeline_mode = #tpu.pipeline_mode<synchronous>, transform_indices = @transform_20, window_bounds = array<i64: 1, 256>}, {pipeline_mode = #tpu.pipeline_mode<synchronous>, transform_indices = @transform_21, window_bounds = array<i64: 1, 256>}, {pipeline_mode = #tpu.pipeline_mode<synchronous>, transform_indices = @transform_22, window_bounds = array<i64: 1, 256>}, {pipeline_mode = #tpu.pipeline_mode<synchronous>, transform_indices = @transform_23, window_bounds = array<i64: 256, 2>}, {pipeline_mode = #tpu.pipeline_mode<synchronous>, transform_indices = @transform_24, window_bounds = array<i64: 1, 2>}, {pipeline_mode = #tpu.pipeline_mode<synchronous>, transform_indices = @transform_25, window_bounds = array<i64: 2, 2>}]} {
    %c0_i32 = arith.constant 0 : i32
    %0 = tpu.memref_slice %arg32[%c0_i32] : memref<2x!tpu.dma_semaphore, #tpu.memory_space<semaphore_mem>> -> memref<1x!tpu.dma_semaphore, #tpu.memory_space<semaphore_mem>>
    %1 = tpu.memref_squeeze %0 : memref<1x!tpu.dma_semaphore, #tpu.memory_space<semaphore_mem>> -> memref<!tpu.dma_semaphore, #tpu.memory_space<semaphore_mem>>
    tpu.enqueue_dma source(%arg11 : memref<768x512xbf16, #tpu.memory_space<any>>) target(%arg30 : memref<768x512xbf16, #tpu.memory_space<vmem>>) target_semaphore(%1 : memref<!tpu.dma_semaphore, #tpu.memory_space<semaphore_mem>>)
    %c1_i32 = arith.constant 1 : i32
    %2 = tpu.memref_slice %arg32[%c1_i32] : memref<2x!tpu.dma_semaphore, #tpu.memory_space<semaphore_mem>> -> memref<1x!tpu.dma_semaphore, #tpu.memory_space<semaphore_mem>>
    %3 = tpu.memref_squeeze %2 : memref<1x!tpu.dma_semaphore, #tpu.memory_space<semaphore_mem>> -> memref<!tpu.dma_semaphore, #tpu.memory_space<semaphore_mem>>
    tpu.enqueue_dma source(%arg15 : memref<1536x256xbf16, #tpu.memory_space<any>>) target(%arg31 : memref<1536x256xbf16, #tpu.memory_space<vmem>>) target_semaphore(%3 : memref<!tpu.dma_semaphore, #tpu.memory_space<semaphore_mem>>)
    %cst = arith.constant 0.000000e+00 : f32
    %4 = vector.broadcast %cst : f32 to vector<2x8x128xf32>
    %c0 = arith.constant 0 : index
    %c0_0 = arith.constant 0 : index
    %c0_1 = arith.constant 0 : index
    %5 = vector.load %arg27[%c0, %c0_0, %c0_1] : memref<2x32x128xf32, #tpu.memory_space<vmem>>, vector<2x8x128xf32>
    tpu.vector_store %arg27[%c0, %c0_0, %c0_1], %4 {strides = array<i32>} : memref<2x32x128xf32, #tpu.memory_space<vmem>>, vector<2x8x128xf32>,
    %cst_2 = arith.constant 0.000000e+00 : f32
    %6 = vector.broadcast %cst_2 : f32 to vector<2x8x128xf32>
    %c0_3 = arith.constant 0 : index
    %c24 = arith.constant 24 : index
    %c0_4 = arith.constant 0 : index
    %7 = vector.load %arg27[%c0_3, %c24, %c0_4] : memref<2x32x128xf32, #tpu.memory_space<vmem>>, vector<2x8x128xf32>
    tpu.vector_store %arg27[%c0_3, %c24, %c0_4], %6 {strides = array<i32>} : memref<2x32x128xf32, #tpu.memory_space<vmem>>, vector<2x8x128xf32>,
    %cst_5 = arith.constant 0.000000e+00 : f32
    %8 = vector.broadcast %cst_5 : f32 to vector<2x8x256xf32>
    %c0_6 = arith.constant 0 : index
    %c0_7 = arith.constant 0 : index
    %c0_8 = arith.constant 0 : index
    %9 = vector.load %arg28[%c0_6, %c0_7, %c0_8] : memref<2x32x256xf32, #tpu.memory_space<vmem>>, vector<2x8x256xf32>
    tpu.vector_store %arg28[%c0_6, %c0_7, %c0_8], %8 {strides = array<i32>} : memref<2x32x256xf32, #tpu.memory_space<vmem>>, vector<2x8x256xf32>,
    %cst_9 = arith.constant 0.000000e+00 : f32
    %10 = vector.broadcast %cst_9 : f32 to vector<2x8x256xf32>
    %c0_10 = arith.constant 0 : index
    %c24_11 = arith.constant 24 : index
    %c0_12 = arith.constant 0 : index
    %11 = vector.load %arg28[%c0_10, %c24_11, %c0_12] : memref<2x32x256xf32, #tpu.memory_space<vmem>>, vector<2x8x256xf32>
    tpu.vector_store %arg28[%c0_10, %c24_11, %c0_12], %10 {strides = array<i32>} : memref<2x32x256xf32, #tpu.memory_space<vmem>>, vector<2x8x256xf32>,
    %cst_13 = arith.constant 0.000000e+00 : f32
    %12 = vector.broadcast %cst_13 : f32 to vector<2x8x512xf32>
    %c0_14 = arith.constant 0 : index
    %c0_15 = arith.constant 0 : index
    %c0_16 = arith.constant 0 : index
    %13 = vector.load %arg29[%c0_14, %c0_15, %c0_16] : memref<2x38x512xf32, #tpu.memory_space<vmem>>, vector<2x8x512xf32>
    tpu.vector_store %arg29[%c0_14, %c0_15, %c0_16], %12 {strides = array<i32>} : memref<2x38x512xf32, #tpu.memory_space<vmem>>, vector<2x8x512xf32>,
    %cst_17 = arith.constant 0.000000e+00 : f32
    %14 = vector.broadcast %cst_17 : f32 to vector<2x6x512xf32>
    %c0_18 = arith.constant 0 : index
    %c32 = arith.constant 32 : index
    %c0_19 = arith.constant 0 : index
    %15 = vector.load %arg29[%c0_18, %c32, %c0_19] : memref<2x38x512xf32, #tpu.memory_space<vmem>>, vector<2x6x512xf32>
    tpu.vector_store %arg29[%c0_18, %c32, %c0_19], %14 {strides = array<i32>} : memref<2x38x512xf32, #tpu.memory_space<vmem>>, vector<2x6x512xf32>,
    %c0_20 = arith.constant 0 : index
    %c0_21 = arith.constant 0 : index
    %16 = vector.load %arg1[%c0_20, %c0_21] : memref<32x28xbf16, #tpu.memory_space<vmem>>, vector<32x28xbf16>
    %c0_22 = arith.constant 0 : index
    %c0_23 = arith.constant 0 : index
    %17 = vector.load %arg3[%c0_22, %c0_23] : memref<28x128xbf16, #tpu.memory_space<vmem>>, vector<28x128xbf16>
    %cst_24 = arith.constant dense<0.000000e+00> : vector<32x128xf32>
    %18 = tpu.matmul %16, %17, %cst_24 {dimension_numbers = #tpu.dot_dimension_numbers<[1], [0], [0], [1], [0, 0, 1, 1], [], []>} : vector<32x28xbf16>, vector<28x128xbf16>, vector<32x128xf32> -> vector<32x128xf32>
    %c0_25 = arith.constant 0 : index
    %c0_26 = arith.constant 0 : index
    %19 = vector.load %arg4[%c0_25, %c0_26] : memref<1x128xf32, #tpu.memory_space<vmem>>, vector<1x128xf32>
    %20 = vector.broadcast %19 : vector<1x128xf32> to vector<32x128xf32>
    %21 = arith.addf %18, %20 : vector<32x128xf32>
    %cst_27 = arith.constant dense<0.000000e+00> : vector<128xf32>
    %22 = vector.multi_reduction <add>, %21, %cst_27 [0] : vector<32x128xf32> to vector<128xf32>
    %23 = vector.shape_cast %22 : vector<128xf32> to vector<1x128xf32>
    %cst_28 = arith.constant 3.200000e+01 : f32
    %24 = vector.broadcast %cst_28 : f32 to vector<1x128xf32>
    %25 = arith.divf %23, %24 : vector<1x128xf32>
    %26 = vector.broadcast %25 : vector<1x128xf32> to vector<32x128xf32>
    %27 = arith.subf %21, %26 : vector<32x128xf32>
    %28 = vector.broadcast %25 : vector<1x128xf32> to vector<32x128xf32>
    %29 = arith.subf %21, %28 : vector<32x128xf32>
    %30 = arith.mulf %27, %29 : vector<32x128xf32>
    %cst_29 = arith.constant dense<0.000000e+00> : vector<128xf32>
    %31 = vector.multi_reduction <add>, %30, %cst_29 [0] : vector<32x128xf32> to vector<128xf32>
    %32 = vector.shape_cast %31 : vector<128xf32> to vector<1x128xf32>
    %cst_30 = arith.constant 3.200000e+01 : f32
    %33 = vector.broadcast %cst_30 : f32 to vector<1x128xf32>
    %34 = arith.divf %32, %33 : vector<1x128xf32>
    %35 = vector.broadcast %25 : vector<1x128xf32> to vector<32x128xf32>
    %36 = arith.subf %21, %35 : vector<32x128xf32>
    %c0_31 = arith.constant 0 : index
    %c0_32 = arith.constant 0 : index
    %37 = vector.load %arg5[%c0_31, %c0_32] : memref<1x128xf32, #tpu.memory_space<vmem>>, vector<1x128xf32>
    %cst_33 = arith.constant 9.99999974E-6 : f32
    %38 = vector.broadcast %cst_33 : f32 to vector<1x128xf32>
    %39 = arith.addf %34, %38 : vector<1x128xf32>
    %40 = math.sqrt %39 : vector<1x128xf32>
    %41 = arith.divf %37, %40 : vector<1x128xf32>
    %42 = vector.broadcast %41 : vector<1x128xf32> to vector<32x128xf32>
    %43 = arith.mulf %36, %42 : vector<32x128xf32>
    %c0_34 = arith.constant 0 : index
    %c0_35 = arith.constant 0 : index
    %44 = vector.load %arg6[%c0_34, %c0_35] : memref<1x128xf32, #tpu.memory_space<vmem>>, vector<1x128xf32>
    %45 = vector.broadcast %44 : vector<1x128xf32> to vector<32x128xf32>
    %46 = arith.addf %43, %45 : vector<32x128xf32>
    %cst_36 = arith.constant 0.000000e+00 : f32
    %47 = vector.broadcast %cst_36 : f32 to vector<32x128xf32>
    %48 = arith.maximumf %46, %47 : vector<32x128xf32>
    %49 = vector.extract_strided_slice %48 {offsets = [0, 0], sizes = [16, 128], strides = [1, 1]} : vector<32x128xf32> to vector<16x128xf32>
    %c0_37 = arith.constant 0 : index
    %c8 = arith.constant 8 : index
    %c0_38 = arith.constant 0 : index
    %50 = vector.load %arg27[%c0_37, %c8, %c0_38] : memref<2x32x128xf32, #tpu.memory_space<vmem>>, vector<1x16x128xf32>
    %51 = vector.shape_cast %50 : vector<1x16x128xf32> to vector<16x128xf32>
    %52 = vector.shape_cast %49 : vector<16x128xf32> to vector<1x16x128xf32>
    tpu.vector_store %arg27[%c0_37, %c8, %c0_38], %52 {strides = array<i32>} : memref<2x32x128xf32, #tpu.memory_space<vmem>>, vector<1x16x128xf32>,
    %53 = vector.extract_strided_slice %48 {offsets = [16, 0], sizes = [16, 128], strides = [1, 1]} : vector<32x128xf32> to vector<16x128xf32>
    %c1 = arith.constant 1 : index
    %c8_39 = arith.constant 8 : index
    %c0_40 = arith.constant 0 : index
    %54 = vector.load %arg27[%c1, %c8_39, %c0_40] : memref<2x32x128xf32, #tpu.memory_space<vmem>>, vector<1x16x128xf32>
    %55 = vector.shape_cast %54 : vector<1x16x128xf32> to vector<16x128xf32>
    %56 = vector.shape_cast %53 : vector<16x128xf32> to vector<1x16x128xf32>
    tpu.vector_store %arg27[%c1, %c8_39, %c0_40], %56 {strides = array<i32>} : memref<2x32x128xf32, #tpu.memory_space<vmem>>, vector<1x16x128xf32>,
    %c0_41 = arith.constant 0 : index
    %c0_42 = arith.constant 0 : index
    %c0_43 = arith.constant 0 : index
    %57 = vector.load %arg27[%c0_41, %c0_42, %c0_43] : memref<2x32x128xf32, #tpu.memory_space<vmem>>, vector<1x16x128xf32>
    %58 = vector.shape_cast %57 : vector<1x16x128xf32> to vector<16x128xf32>
    %59 = arith.truncf %58 : vector<16x128xf32> to vector<16x128xbf16>
    %c0_44 = arith.constant 0 : index
    %c4 = arith.constant 4 : index
    %c0_45 = arith.constant 0 : index
    %60 = vector.load %arg27[%c0_44, %c4, %c0_45] : memref<2x32x128xf32, #tpu.memory_space<vmem>>, vector<1x16x128xf32>
    %61 = vector.shape_cast %60 : vector<1x16x128xf32> to vector<16x128xf32>
    %62 = arith.truncf %61 : vector<16x128xf32> to vector<16x128xbf16>
    %c0_46 = arith.constant 0 : index
    %c8_47 = arith.constant 8 : index
    %c0_48 = arith.constant 0 : index
    %63 = vector.load %arg27[%c0_46, %c8_47, %c0_48] : memref<2x32x128xf32, #tpu.memory_space<vmem>>, vector<1x16x128xf32>
    %64 = vector.shape_cast %63 : vector<1x16x128xf32> to vector<16x128xf32>
    %65 = arith.truncf %64 : vector<16x128xf32> to vector<16x128xbf16>
    %c0_49 = arith.constant 0 : index
    %c12 = arith.constant 12 : index
    %c0_50 = arith.constant 0 : index
    %66 = vector.load %arg27[%c0_49, %c12, %c0_50] : memref<2x32x128xf32, #tpu.memory_space<vmem>>, vector<1x16x128xf32>
    %67 = vector.shape_cast %66 : vector<1x16x128xf32> to vector<16x128xf32>
    %68 = arith.truncf %67 : vector<16x128xf32> to vector<16x128xbf16>
    %c0_51 = arith.constant 0 : index
    %c16 = arith.constant 16 : index
    %c0_52 = arith.constant 0 : index
    %69 = vector.load %arg27[%c0_51, %c16, %c0_52] : memref<2x32x128xf32, #tpu.memory_space<vmem>>, vector<1x16x128xf32>
    %70 = vector.shape_cast %69 : vector<1x16x128xf32> to vector<16x128xf32>
    %71 = arith.truncf %70 : vector<16x128xf32> to vector<16x128xbf16>
    %72 = tpu.concatenate %59, %62, %65, %68, %71 in 1 : vector<16x128xbf16>, vector<16x128xbf16>, vector<16x128xbf16>, vector<16x128xbf16>, vector<16x128xbf16> -> vector<16x640xbf16>
    %c1_53 = arith.constant 1 : index
    %c0_54 = arith.constant 0 : index
    %c0_55 = arith.constant 0 : index
    %73 = vector.load %arg27[%c1_53, %c0_54, %c0_55] : memref<2x32x128xf32, #tpu.memory_space<vmem>>, vector<1x16x128xf32>
    %74 = vector.shape_cast %73 : vector<1x16x128xf32> to vector<16x128xf32>
    %75 = arith.truncf %74 : vector<16x128xf32> to vector<16x128xbf16>
    %c1_56 = arith.constant 1 : index
    %c4_57 = arith.constant 4 : index
    %c0_58 = arith.constant 0 : index
    %76 = vector.load %arg27[%c1_56, %c4_57, %c0_58] : memref<2x32x128xf32, #tpu.memory_space<vmem>>, vector<1x16x128xf32>
    %77 = vector.shape_cast %76 : vector<1x16x128xf32> to vector<16x128xf32>
    %78 = arith.truncf %77 : vector<16x128xf32> to vector<16x128xbf16>
    %c1_59 = arith.constant 1 : index
    %c8_60 = arith.constant 8 : index
    %c0_61 = arith.constant 0 : index
    %79 = vector.load %arg27[%c1_59, %c8_60, %c0_61] : memref<2x32x128xf32, #tpu.memory_space<vmem>>, vector<1x16x128xf32>
    %80 = vector.shape_cast %79 : vector<1x16x128xf32> to vector<16x128xf32>
    %81 = arith.truncf %80 : vector<16x128xf32> to vector<16x128xbf16>
    %c1_62 = arith.constant 1 : index
    %c12_63 = arith.constant 12 : index
    %c0_64 = arith.constant 0 : index
    %82 = vector.load %arg27[%c1_62, %c12_63, %c0_64] : memref<2x32x128xf32, #tpu.memory_space<vmem>>, vector<1x16x128xf32>
    %83 = vector.shape_cast %82 : vector<1x16x128xf32> to vector<16x128xf32>
    %84 = arith.truncf %83 : vector<16x128xf32> to vector<16x128xbf16>
    %c1_65 = arith.constant 1 : index
    %c16_66 = arith.constant 16 : index
    %c0_67 = arith.constant 0 : index
    %85 = vector.load %arg27[%c1_65, %c16_66, %c0_67] : memref<2x32x128xf32, #tpu.memory_space<vmem>>, vector<1x16x128xf32>
    %86 = vector.shape_cast %85 : vector<1x16x128xf32> to vector<16x128xf32>
    %87 = arith.truncf %86 : vector<16x128xf32> to vector<16x128xbf16>
    %88 = tpu.concatenate %75, %78, %81, %84, %87 in 1 : vector<16x128xbf16>, vector<16x128xbf16>, vector<16x128xbf16>, vector<16x128xbf16>, vector<16x128xbf16> -> vector<16x640xbf16>
    %89 = tpu.concatenate %72, %88 in 0 : vector<16x640xbf16>, vector<16x640xbf16> -> vector<32x640xbf16>
    %c0_68 = arith.constant 0 : index
    %c0_69 = arith.constant 0 : index
    %90 = vector.load %arg7[%c0_68, %c0_69] : memref<640x256xbf16, #tpu.memory_space<vmem>>, vector<640x256xbf16>
    %cst_70 = arith.constant dense<0.000000e+00> : vector<32x256xf32>
    %91 = tpu.matmul %89, %90, %cst_70 {dimension_numbers = #tpu.dot_dimension_numbers<[1], [0], [0], [1], [0, 0, 1, 1], [], []>} : vector<32x640xbf16>, vector<640x256xbf16>, vector<32x256xf32> -> vector<32x256xf32>
    %c0_71 = arith.constant 0 : index
    %c0_72 = arith.constant 0 : index
    %92 = vector.load %arg8[%c0_71, %c0_72] : memref<1x256xf32, #tpu.memory_space<vmem>>, vector<1x256xf32>
    %93 = vector.broadcast %92 : vector<1x256xf32> to vector<32x256xf32>
    %94 = arith.addf %91, %93 : vector<32x256xf32>
    %cst_73 = arith.constant dense<0.000000e+00> : vector<256xf32>
    %95 = vector.multi_reduction <add>, %94, %cst_73 [0] : vector<32x256xf32> to vector<256xf32>
    %96 = vector.shape_cast %95 : vector<256xf32> to vector<1x256xf32>
    %cst_74 = arith.constant 3.200000e+01 : f32
    %97 = vector.broadcast %cst_74 : f32 to vector<1x256xf32>
    %98 = arith.divf %96, %97 : vector<1x256xf32>
    %99 = vector.broadcast %98 : vector<1x256xf32> to vector<32x256xf32>
    %100 = arith.subf %94, %99 : vector<32x256xf32>
    %101 = vector.broadcast %98 : vector<1x256xf32> to vector<32x256xf32>
    %102 = arith.subf %94, %101 : vector<32x256xf32>
    %103 = arith.mulf %100, %102 : vector<32x256xf32>
    %cst_75 = arith.constant dense<0.000000e+00> : vector<256xf32>
    %104 = vector.multi_reduction <add>, %103, %cst_75 [0] : vector<32x256xf32> to vector<256xf32>
    %105 = vector.shape_cast %104 : vector<256xf32> to vector<1x256xf32>
    %cst_76 = arith.constant 3.200000e+01 : f32
    %106 = vector.broadcast %cst_76 : f32 to vector<1x256xf32>
    %107 = arith.divf %105, %106 : vector<1x256xf32>
    %108 = vector.broadcast %98 : vector<1x256xf32> to vector<32x256xf32>
    %109 = arith.subf %94, %108 : vector<32x256xf32>
    %c0_77 = arith.constant 0 : index
    %c0_78 = arith.constant 0 : index
    %110 = vector.load %arg9[%c0_77, %c0_78] : memref<1x256xf32, #tpu.memory_space<vmem>>, vector<1x256xf32>
    %cst_79 = arith.constant 9.99999974E-6 : f32
    %111 = vector.broadcast %cst_79 : f32 to vector<1x256xf32>
    %112 = arith.addf %107, %111 : vector<1x256xf32>
    %113 = math.sqrt %112 : vector<1x256xf32>
    %114 = arith.divf %110, %113 : vector<1x256xf32>
    %115 = vector.broadcast %114 : vector<1x256xf32> to vector<32x256xf32>
    %116 = arith.mulf %109, %115 : vector<32x256xf32>
    %c0_80 = arith.constant 0 : index
    %c0_81 = arith.constant 0 : index
    %117 = vector.load %arg10[%c0_80, %c0_81] : memref<1x256xf32, #tpu.memory_space<vmem>>, vector<1x256xf32>
    %118 = vector.broadcast %117 : vector<1x256xf32> to vector<32x256xf32>
    %119 = arith.addf %116, %118 : vector<32x256xf32>
    %cst_82 = arith.constant 0.000000e+00 : f32
    %120 = vector.broadcast %cst_82 : f32 to vector<32x256xf32>
    %121 = arith.maximumf %119, %120 : vector<32x256xf32>
    %122 = vector.extract_strided_slice %121 {offsets = [0, 0], sizes = [16, 256], strides = [1, 1]} : vector<32x256xf32> to vector<16x256xf32>
    %c0_83 = arith.constant 0 : index
    %c8_84 = arith.constant 8 : index
    %c0_85 = arith.constant 0 : index
    %123 = vector.load %arg28[%c0_83, %c8_84, %c0_85] : memref<2x32x256xf32, #tpu.memory_space<vmem>>, vector<1x16x256xf32>
    %124 = vector.shape_cast %123 : vector<1x16x256xf32> to vector<16x256xf32>
    %125 = vector.shape_cast %122 : vector<16x256xf32> to vector<1x16x256xf32>
    tpu.vector_store %arg28[%c0_83, %c8_84, %c0_85], %125 {strides = array<i32>} : memref<2x32x256xf32, #tpu.memory_space<vmem>>, vector<1x16x256xf32>,
    %126 = vector.extract_strided_slice %121 {offsets = [16, 0], sizes = [16, 256], strides = [1, 1]} : vector<32x256xf32> to vector<16x256xf32>
    %c1_86 = arith.constant 1 : index
    %c8_87 = arith.constant 8 : index
    %c0_88 = arith.constant 0 : index
    %127 = vector.load %arg28[%c1_86, %c8_87, %c0_88] : memref<2x32x256xf32, #tpu.memory_space<vmem>>, vector<1x16x256xf32>
    %128 = vector.shape_cast %127 : vector<1x16x256xf32> to vector<16x256xf32>
    %129 = vector.shape_cast %126 : vector<16x256xf32> to vector<1x16x256xf32>
    tpu.vector_store %arg28[%c1_86, %c8_87, %c0_88], %129 {strides = array<i32>} : memref<2x32x256xf32, #tpu.memory_space<vmem>>, vector<1x16x256xf32>,
    %c0_i32_89 = arith.constant 0 : i32
    %130 = tpu.memref_slice %arg32[%c0_i32_89] : memref<2x!tpu.dma_semaphore, #tpu.memory_space<semaphore_mem>> -> memref<1x!tpu.dma_semaphore, #tpu.memory_space<semaphore_mem>>
    %131 = tpu.memref_squeeze %130 : memref<1x!tpu.dma_semaphore, #tpu.memory_space<semaphore_mem>> -> memref<!tpu.dma_semaphore, #tpu.memory_space<semaphore_mem>>
    tpu.wait_dma2 semaphore(%131 : memref<!tpu.dma_semaphore, #tpu.memory_space<semaphore_mem>>) src(%arg11 : memref<768x512xbf16, #tpu.memory_space<any>>) dst(%arg30 : memref<768x512xbf16, #tpu.memory_space<vmem>>)
    %c0_90 = arith.constant 0 : index
    %c0_91 = arith.constant 0 : index
    %c0_92 = arith.constant 0 : index
    %132 = vector.load %arg28[%c0_90, %c0_91, %c0_92] : memref<2x32x256xf32, #tpu.memory_space<vmem>>, vector<1x24x256xf32>
    %133 = vector.shape_cast %132 : vector<1x24x256xf32> to vector<24x256xf32>
    %134 = arith.truncf %133 : vector<24x256xf32> to vector<24x256xbf16>
    %c0_93 = arith.constant 0 : index
    %c4_94 = arith.constant 4 : index
    %c0_95 = arith.constant 0 : index
    %135 = vector.load %arg28[%c0_93, %c4_94, %c0_95] : memref<2x32x256xf32, #tpu.memory_space<vmem>>, vector<1x24x256xf32>
    %136 = vector.shape_cast %135 : vector<1x24x256xf32> to vector<24x256xf32>
    %137 = arith.truncf %136 : vector<24x256xf32> to vector<24x256xbf16>
    %c0_96 = arith.constant 0 : index
    %c8_97 = arith.constant 8 : index
    %c0_98 = arith.constant 0 : index
    %138 = vector.load %arg28[%c0_96, %c8_97, %c0_98] : memref<2x32x256xf32, #tpu.memory_space<vmem>>, vector<1x24x256xf32>
    %139 = vector.shape_cast %138 : vector<1x24x256xf32> to vector<24x256xf32>
    %140 = arith.truncf %139 : vector<24x256xf32> to vector<24x256xbf16>
    %141 = tpu.concatenate %134, %137, %140 in 1 : vector<24x256xbf16>, vector<24x256xbf16>, vector<24x256xbf16> -> vector<24x768xbf16>
    %c1_99 = arith.constant 1 : index
    %c0_100 = arith.constant 0 : index
    %c0_101 = arith.constant 0 : index
    %142 = vector.load %arg28[%c1_99, %c0_100, %c0_101] : memref<2x32x256xf32, #tpu.memory_space<vmem>>, vector<1x24x256xf32>
    %143 = vector.shape_cast %142 : vector<1x24x256xf32> to vector<24x256xf32>
    %144 = arith.truncf %143 : vector<24x256xf32> to vector<24x256xbf16>
    %c1_102 = arith.constant 1 : index
    %c4_103 = arith.constant 4 : index
    %c0_104 = arith.constant 0 : index
    %145 = vector.load %arg28[%c1_102, %c4_103, %c0_104] : memref<2x32x256xf32, #tpu.memory_space<vmem>>, vector<1x24x256xf32>
    %146 = vector.shape_cast %145 : vector<1x24x256xf32> to vector<24x256xf32>
    %147 = arith.truncf %146 : vector<24x256xf32> to vector<24x256xbf16>
    %c1_105 = arith.constant 1 : index
    %c8_106 = arith.constant 8 : index
    %c0_107 = arith.constant 0 : index
    %148 = vector.load %arg28[%c1_105, %c8_106, %c0_107] : memref<2x32x256xf32, #tpu.memory_space<vmem>>, vector<1x24x256xf32>
    %149 = vector.shape_cast %148 : vector<1x24x256xf32> to vector<24x256xf32>
    %150 = arith.truncf %149 : vector<24x256xf32> to vector<24x256xbf16>
    %151 = tpu.concatenate %144, %147, %150 in 1 : vector<24x256xbf16>, vector<24x256xbf16>, vector<24x256xbf16> -> vector<24x768xbf16>
    %152 = tpu.concatenate %141, %151 in 0 : vector<24x768xbf16>, vector<24x768xbf16> -> vector<48x768xbf16>
    %c0_108 = arith.constant 0 : index
    %c0_109 = arith.constant 0 : index
    %153 = vector.load %arg30[%c0_108, %c0_109] : memref<768x512xbf16, #tpu.memory_space<vmem>>, vector<768x512xbf16>
    %cst_110 = arith.constant dense<0.000000e+00> : vector<48x512xf32>
    %154 = tpu.matmul %152, %153, %cst_110 {dimension_numbers = #tpu.dot_dimension_numbers<[1], [0], [0], [1], [0, 0, 1, 1], [], []>} : vector<48x768xbf16>, vector<768x512xbf16>, vector<48x512xf32> -> vector<48x512xf32>
    %c0_111 = arith.constant 0 : index
    %c0_112 = arith.constant 0 : index
    %155 = vector.load %arg12[%c0_111, %c0_112] : memref<1x512xf32, #tpu.memory_space<vmem>>, vector<1x512xf32>
    %156 = vector.broadcast %155 : vector<1x512xf32> to vector<48x512xf32>
    %157 = arith.addf %154, %156 : vector<48x512xf32>
    %cst_113 = arith.constant dense<0.000000e+00> : vector<512xf32>
    %158 = vector.multi_reduction <add>, %157, %cst_113 [0] : vector<48x512xf32> to vector<512xf32>
    %159 = vector.shape_cast %158 : vector<512xf32> to vector<1x512xf32>
    %cst_114 = arith.constant 4.800000e+01 : f32
    %160 = vector.broadcast %cst_114 : f32 to vector<1x512xf32>
    %161 = arith.divf %159, %160 : vector<1x512xf32>
    %162 = vector.broadcast %161 : vector<1x512xf32> to vector<48x512xf32>
    %163 = arith.subf %157, %162 : vector<48x512xf32>
    %164 = vector.broadcast %161 : vector<1x512xf32> to vector<48x512xf32>
    %165 = arith.subf %157, %164 : vector<48x512xf32>
    %166 = arith.mulf %163, %165 : vector<48x512xf32>
    %cst_115 = arith.constant dense<0.000000e+00> : vector<512xf32>
    %167 = vector.multi_reduction <add>, %166, %cst_115 [0] : vector<48x512xf32> to vector<512xf32>
    %168 = vector.shape_cast %167 : vector<512xf32> to vector<1x512xf32>
    %cst_116 = arith.constant 4.800000e+01 : f32
    %169 = vector.broadcast %cst_116 : f32 to vector<1x512xf32>
    %170 = arith.divf %168, %169 : vector<1x512xf32>
    %171 = vector.broadcast %161 : vector<1x512xf32> to vector<48x512xf32>
    %172 = arith.subf %157, %171 : vector<48x512xf32>
    %c0_117 = arith.constant 0 : index
    %c0_118 = arith.constant 0 : index
    %173 = vector.load %arg13[%c0_117, %c0_118] : memref<1x512xf32, #tpu.memory_space<vmem>>, vector<1x512xf32>
    %cst_119 = arith.constant 9.99999974E-6 : f32
    %174 = vector.broadcast %cst_119 : f32 to vector<1x512xf32>
    %175 = arith.addf %170, %174 : vector<1x512xf32>
    %176 = math.sqrt %175 : vector<1x512xf32>
    %177 = arith.divf %173, %176 : vector<1x512xf32>
    %178 = vector.broadcast %177 : vector<1x512xf32> to vector<48x512xf32>
    %179 = arith.mulf %172, %178 : vector<48x512xf32>
    %c0_120 = arith.constant 0 : index
    %c0_121 = arith.constant 0 : index
    %180 = vector.load %arg14[%c0_120, %c0_121] : memref<1x512xf32, #tpu.memory_space<vmem>>, vector<1x512xf32>
    %181 = vector.broadcast %180 : vector<1x512xf32> to vector<48x512xf32>
    %182 = arith.addf %179, %181 : vector<48x512xf32>
    %cst_122 = arith.constant 0.000000e+00 : f32
    %183 = vector.broadcast %cst_122 : f32 to vector<48x512xf32>
    %184 = arith.maximumf %182, %183 : vector<48x512xf32>
    %185 = vector.extract_strided_slice %184 {offsets = [0, 0], sizes = [24, 512], strides = [1, 1]} : vector<48x512xf32> to vector<24x512xf32>
    %c0_123 = arith.constant 0 : index
    %c8_124 = arith.constant 8 : index
    %c0_125 = arith.constant 0 : index
    %186 = vector.load %arg29[%c0_123, %c8_124, %c0_125] : memref<2x38x512xf32, #tpu.memory_space<vmem>>, vector<1x24x512xf32>
    %187 = vector.shape_cast %186 : vector<1x24x512xf32> to vector<24x512xf32>
    %188 = vector.shape_cast %185 : vector<24x512xf32> to vector<1x24x512xf32>
    tpu.vector_store %arg29[%c0_123, %c8_124, %c0_125], %188 {strides = array<i32>} : memref<2x38x512xf32, #tpu.memory_space<vmem>>, vector<1x24x512xf32>,
    %189 = vector.extract_strided_slice %184 {offsets = [24, 0], sizes = [24, 512], strides = [1, 1]} : vector<48x512xf32> to vector<24x512xf32>
    %c1_126 = arith.constant 1 : index
    %c8_127 = arith.constant 8 : index
    %c0_128 = arith.constant 0 : index
    %190 = vector.load %arg29[%c1_126, %c8_127, %c0_128] : memref<2x38x512xf32, #tpu.memory_space<vmem>>, vector<1x24x512xf32>
    %191 = vector.shape_cast %190 : vector<1x24x512xf32> to vector<24x512xf32>
    %192 = vector.shape_cast %189 : vector<24x512xf32> to vector<1x24x512xf32>
    tpu.vector_store %arg29[%c1_126, %c8_127, %c0_128], %192 {strides = array<i32>} : memref<2x38x512xf32, #tpu.memory_space<vmem>>, vector<1x24x512xf32>,
    %c1_i32_129 = arith.constant 1 : i32
    %193 = tpu.memref_slice %arg32[%c1_i32_129] : memref<2x!tpu.dma_semaphore, #tpu.memory_space<semaphore_mem>> -> memref<1x!tpu.dma_semaphore, #tpu.memory_space<semaphore_mem>>
    %194 = tpu.memref_squeeze %193 : memref<1x!tpu.dma_semaphore, #tpu.memory_space<semaphore_mem>> -> memref<!tpu.dma_semaphore, #tpu.memory_space<semaphore_mem>>
    tpu.wait_dma2 semaphore(%194 : memref<!tpu.dma_semaphore, #tpu.memory_space<semaphore_mem>>) src(%arg15 : memref<1536x256xbf16, #tpu.memory_space<any>>) dst(%arg31 : memref<1536x256xbf16, #tpu.memory_space<vmem>>)
    %c0_130 = arith.constant 0 : index
    %c2 = arith.constant 2 : index
    %c0_131 = arith.constant 0 : index
    %195 = vector.load %arg29[%c0_130, %c2, %c0_131] : memref<2x38x512xf32, #tpu.memory_space<vmem>>, vector<1x28x512xf32>
    %196 = vector.shape_cast %195 : vector<1x28x512xf32> to vector<28x512xf32>
    %197 = arith.truncf %196 : vector<28x512xf32> to vector<28x512xbf16>
    %c0_132 = arith.constant 0 : index
    %c6 = arith.constant 6 : index
    %c0_133 = arith.constant 0 : index
    %198 = vector.load %arg29[%c0_132, %c6, %c0_133] : memref<2x38x512xf32, #tpu.memory_space<vmem>>, vector<1x28x512xf32>
    %199 = vector.shape_cast %198 : vector<1x28x512xf32> to vector<28x512xf32>
    %200 = arith.truncf %199 : vector<28x512xf32> to vector<28x512xbf16>
    %c0_134 = arith.constant 0 : index
    %c10 = arith.constant 10 : index
    %c0_135 = arith.constant 0 : index
    %201 = vector.load %arg29[%c0_134, %c10, %c0_135] : memref<2x38x512xf32, #tpu.memory_space<vmem>>, vector<1x28x512xf32>
    %202 = vector.shape_cast %201 : vector<1x28x512xf32> to vector<28x512xf32>
    %203 = arith.truncf %202 : vector<28x512xf32> to vector<28x512xbf16>
    %204 = tpu.concatenate %197, %200, %203 in 1 : vector<28x512xbf16>, vector<28x512xbf16>, vector<28x512xbf16> -> vector<28x1536xbf16>
    %c1_136 = arith.constant 1 : index
    %c2_137 = arith.constant 2 : index
    %c0_138 = arith.constant 0 : index
    %205 = vector.load %arg29[%c1_136, %c2_137, %c0_138] : memref<2x38x512xf32, #tpu.memory_space<vmem>>, vector<1x28x512xf32>
    %206 = vector.shape_cast %205 : vector<1x28x512xf32> to vector<28x512xf32>
    %207 = arith.truncf %206 : vector<28x512xf32> to vector<28x512xbf16>
    %c1_139 = arith.constant 1 : index
    %c6_140 = arith.constant 6 : index
    %c0_141 = arith.constant 0 : index
    %208 = vector.load %arg29[%c1_139, %c6_140, %c0_141] : memref<2x38x512xf32, #tpu.memory_space<vmem>>, vector<1x28x512xf32>
    %209 = vector.shape_cast %208 : vector<1x28x512xf32> to vector<28x512xf32>
    %210 = arith.truncf %209 : vector<28x512xf32> to vector<28x512xbf16>
    %c1_142 = arith.constant 1 : index
    %c10_143 = arith.constant 10 : index
    %c0_144 = arith.constant 0 : index
    %211 = vector.load %arg29[%c1_142, %c10_143, %c0_144] : memref<2x38x512xf32, #tpu.memory_space<vmem>>, vector<1x28x512xf32>
    %212 = vector.shape_cast %211 : vector<1x28x512xf32> to vector<28x512xf32>
    %213 = arith.truncf %212 : vector<28x512xf32> to vector<28x512xbf16>
    %214 = tpu.concatenate %207, %210, %213 in 1 : vector<28x512xbf16>, vector<28x512xbf16>, vector<28x512xbf16> -> vector<28x1536xbf16>
    %215 = tpu.concatenate %204, %214 in 0 : vector<28x1536xbf16>, vector<28x1536xbf16> -> vector<56x1536xbf16>
    %c0_145 = arith.constant 0 : index
    %c0_146 = arith.constant 0 : index
    %216 = vector.load %arg31[%c0_145, %c0_146] : memref<1536x256xbf16, #tpu.memory_space<vmem>>, vector<1536x256xbf16>
    %cst_147 = arith.constant dense<0.000000e+00> : vector<56x256xf32>
    %217 = tpu.matmul %215, %216, %cst_147 {dimension_numbers = #tpu.dot_dimension_numbers<[1], [0], [0], [1], [0, 0, 1, 1], [], []>} : vector<56x1536xbf16>, vector<1536x256xbf16>, vector<56x256xf32> -> vector<56x256xf32>
    %c0_148 = arith.constant 0 : index
    %c0_149 = arith.constant 0 : index
    %218 = vector.load %arg16[%c0_148, %c0_149] : memref<1x256xf32, #tpu.memory_space<vmem>>, vector<1x256xf32>
    %219 = vector.broadcast %218 : vector<1x256xf32> to vector<56x256xf32>
    %220 = arith.addf %217, %219 : vector<56x256xf32>
    %cst_150 = arith.constant dense<0.000000e+00> : vector<256xf32>
    %221 = vector.multi_reduction <add>, %220, %cst_150 [0] : vector<56x256xf32> to vector<256xf32>
    %222 = vector.shape_cast %221 : vector<256xf32> to vector<1x256xf32>
    %cst_151 = arith.constant 5.600000e+01 : f32
    %223 = vector.broadcast %cst_151 : f32 to vector<1x256xf32>
    %224 = arith.divf %222, %223 : vector<1x256xf32>
    %225 = vector.broadcast %224 : vector<1x256xf32> to vector<56x256xf32>
    %226 = arith.subf %220, %225 : vector<56x256xf32>
    %227 = vector.broadcast %224 : vector<1x256xf32> to vector<56x256xf32>
    %228 = arith.subf %220, %227 : vector<56x256xf32>
    %229 = arith.mulf %226, %228 : vector<56x256xf32>
    %cst_152 = arith.constant dense<0.000000e+00> : vector<256xf32>
    %230 = vector.multi_reduction <add>, %229, %cst_152 [0] : vector<56x256xf32> to vector<256xf32>
    %231 = vector.shape_cast %230 : vector<256xf32> to vector<1x256xf32>
    %cst_153 = arith.constant 5.600000e+01 : f32
    %232 = vector.broadcast %cst_153 : f32 to vector<1x256xf32>
    %233 = arith.divf %231, %232 : vector<1x256xf32>
    %234 = vector.broadcast %224 : vector<1x256xf32> to vector<56x256xf32>
    %235 = arith.subf %220, %234 : vector<56x256xf32>
    %c0_154 = arith.constant 0 : index
    %c0_155 = arith.constant 0 : index
    %236 = vector.load %arg17[%c0_154, %c0_155] : memref<1x256xf32, #tpu.memory_space<vmem>>, vector<1x256xf32>
    %cst_156 = arith.constant 9.99999974E-6 : f32
    %237 = vector.broadcast %cst_156 : f32 to vector<1x256xf32>
    %238 = arith.addf %233, %237 : vector<1x256xf32>
    %239 = math.sqrt %238 : vector<1x256xf32>
    %240 = arith.divf %236, %239 : vector<1x256xf32>
    %241 = vector.broadcast %240 : vector<1x256xf32> to vector<56x256xf32>
    %242 = arith.mulf %235, %241 : vector<56x256xf32>
    %c0_157 = arith.constant 0 : index
    %c0_158 = arith.constant 0 : index
    %243 = vector.load %arg18[%c0_157, %c0_158] : memref<1x256xf32, #tpu.memory_space<vmem>>, vector<1x256xf32>
    %244 = vector.broadcast %243 : vector<1x256xf32> to vector<56x256xf32>
    %245 = arith.addf %242, %244 : vector<56x256xf32>
    %cst_159 = arith.constant 0.000000e+00 : f32
    %246 = vector.broadcast %cst_159 : f32 to vector<56x256xf32>
    %247 = arith.maximumf %245, %246 : vector<56x256xf32>
    %248 = vector.extract_strided_slice %247 {offsets = [0, 0], sizes = [28, 256], strides = [1, 1]} : vector<56x256xf32> to vector<28x256xf32>
    %cst_160 = arith.constant dense<0.000000e+00> : vector<256xf32>
    %249 = vector.multi_reduction <add>, %248, %cst_160 [0] : vector<28x256xf32> to vector<256xf32>
    %250 = vector.shape_cast %249 : vector<256xf32> to vector<1x256xf32>
    %cst_161 = arith.constant 2.800000e+01 : f32
    %251 = vector.broadcast %cst_161 : f32 to vector<1x256xf32>
    %252 = arith.divf %250, %251 : vector<1x256xf32>
    %253 = vector.extract_strided_slice %247 {offsets = [28, 0], sizes = [28, 256], strides = [1, 1]} : vector<56x256xf32> to vector<28x256xf32>
    %cst_162 = arith.constant dense<0.000000e+00> : vector<256xf32>
    %254 = vector.multi_reduction <add>, %253, %cst_162 [0] : vector<28x256xf32> to vector<256xf32>
    %255 = vector.shape_cast %254 : vector<256xf32> to vector<1x256xf32>
    %cst_163 = arith.constant 2.800000e+01 : f32
    %256 = vector.broadcast %cst_163 : f32 to vector<1x256xf32>
    %257 = arith.divf %255, %256 : vector<1x256xf32>
    %258 = tpu.concatenate %252, %257 in 0 : vector<1x256xf32>, vector<1x256xf32> -> vector<2x256xf32>
    %c0_164 = arith.constant 0 : index
    %c0_165 = arith.constant 0 : index
    %259 = vector.load %arg2[%c0_164, %c0_165] : memref<2x2xf32, #tpu.memory_space<vmem>>, vector<2x2xf32>
    %260 = arith.truncf %258 : vector<2x256xf32> to vector<2x256xbf16>
    %c0_166 = arith.constant 0 : index
    %c0_167 = arith.constant 0 : index
    %261 = vector.load %arg19[%c0_166, %c0_167] : memref<256x256xbf16, #tpu.memory_space<vmem>>, vector<256x256xbf16>
    %cst_168 = arith.constant dense<0.000000e+00> : vector<2x256xf32>
    %262 = tpu.matmul %260, %261, %cst_168 {dimension_numbers = #tpu.dot_dimension_numbers<[1], [0], [0], [1], [0, 0, 1, 1], [], []>} : vector<2x256xbf16>, vector<256x256xbf16>, vector<2x256xf32> -> vector<2x256xf32>
    %263 = vector.extract_strided_slice %259 {offsets = [0, 0], sizes = [2, 1], strides = [1, 1]} : vector<2x2xf32> to vector<2x1xf32>
    %c0_169 = arith.constant 0 : index
    %c0_170 = arith.constant 0 : index
    %264 = vector.load %arg20[%c0_169, %c0_170] : memref<2x256xf32, #tpu.memory_space<vmem>>, vector<1x256xf32>
    %265 = vector.broadcast %263 : vector<2x1xf32> to vector<2x256xf32>
    %266 = vector.broadcast %264 : vector<1x256xf32> to vector<2x256xf32>
    %267 = arith.mulf %265, %266 : vector<2x256xf32>
    %268 = arith.addf %262, %267 : vector<2x256xf32>
    %269 = vector.extract_strided_slice %259 {offsets = [0, 1], sizes = [2, 1], strides = [1, 1]} : vector<2x2xf32> to vector<2x1xf32>
    %c1_171 = arith.constant 1 : index
    %c0_172 = arith.constant 0 : index
    %270 = vector.load %arg20[%c1_171, %c0_172] : memref<2x256xf32, #tpu.memory_space<vmem>>, vector<1x256xf32>
    %271 = vector.broadcast %269 : vector<2x1xf32> to vector<2x256xf32>
    %272 = vector.broadcast %270 : vector<1x256xf32> to vector<2x256xf32>
    %273 = arith.mulf %271, %272 : vector<2x256xf32>
    %274 = arith.addf %268, %273 : vector<2x256xf32>
    %c0_173 = arith.constant 0 : index
    %c0_174 = arith.constant 0 : index
    %275 = vector.load %arg21[%c0_173, %c0_174] : memref<1x256xf32, #tpu.memory_space<vmem>>, vector<1x256xf32>
    %276 = vector.broadcast %275 : vector<1x256xf32> to vector<2x256xf32>
    %277 = arith.addf %274, %276 : vector<2x256xf32>
    %cst_175 = arith.constant dense<0.000000e+00> : vector<256xf32>
    %278 = vector.multi_reduction <add>, %277, %cst_175 [0] : vector<2x256xf32> to vector<256xf32>
    %279 = vector.shape_cast %278 : vector<256xf32> to vector<1x256xf32>
    %cst_176 = arith.constant 2.000000e+00 : f32
    %280 = vector.broadcast %cst_176 : f32 to vector<1x256xf32>
    %281 = arith.divf %279, %280 : vector<1x256xf32>
    %282 = vector.broadcast %281 : vector<1x256xf32> to vector<2x256xf32>
    %283 = arith.subf %277, %282 : vector<2x256xf32>
    %284 = vector.broadcast %281 : vector<1x256xf32> to vector<2x256xf32>
    %285 = arith.subf %277, %284 : vector<2x256xf32>
    %286 = arith.mulf %283, %285 : vector<2x256xf32>
    %cst_177 = arith.constant dense<0.000000e+00> : vector<256xf32>
    %287 = vector.multi_reduction <add>, %286, %cst_177 [0] : vector<2x256xf32> to vector<256xf32>
    %288 = vector.shape_cast %287 : vector<256xf32> to vector<1x256xf32>
    %cst_178 = arith.constant 2.000000e+00 : f32
    %289 = vector.broadcast %cst_178 : f32 to vector<1x256xf32>
    %290 = arith.divf %288, %289 : vector<1x256xf32>
    %291 = vector.broadcast %281 : vector<1x256xf32> to vector<2x256xf32>
    %292 = arith.subf %277, %291 : vector<2x256xf32>
    %c0_179 = arith.constant 0 : index
    %c0_180 = arith.constant 0 : index
    %293 = vector.load %arg22[%c0_179, %c0_180] : memref<1x256xf32, #tpu.memory_space<vmem>>, vector<1x256xf32>
    %cst_181 = arith.constant 9.99999974E-6 : f32
    %294 = vector.broadcast %cst_181 : f32 to vector<1x256xf32>
    %295 = arith.addf %290, %294 : vector<1x256xf32>
    %296 = math.sqrt %295 : vector<1x256xf32>
    %297 = arith.divf %293, %296 : vector<1x256xf32>
    %298 = vector.broadcast %297 : vector<1x256xf32> to vector<2x256xf32>
    %299 = arith.mulf %292, %298 : vector<2x256xf32>
    %c0_182 = arith.constant 0 : index
    %c0_183 = arith.constant 0 : index
    %300 = vector.load %arg23[%c0_182, %c0_183] : memref<1x256xf32, #tpu.memory_space<vmem>>, vector<1x256xf32>
    %301 = vector.broadcast %300 : vector<1x256xf32> to vector<2x256xf32>
    %302 = arith.addf %299, %301 : vector<2x256xf32>
    %cst_184 = arith.constant 0.000000e+00 : f32
    %303 = vector.broadcast %cst_184 : f32 to vector<2x256xf32>
    %304 = arith.maximumf %302, %303 : vector<2x256xf32>
    %305 = arith.truncf %304 : vector<2x256xf32> to vector<2x256xbf16>
    %c0_185 = arith.constant 0 : index
    %c0_186 = arith.constant 0 : index
    %306 = vector.load %arg24[%c0_185, %c0_186] : memref<256x2xbf16, #tpu.memory_space<vmem>>, vector<256x2xbf16>
    %cst_187 = arith.constant dense<0.000000e+00> : vector<2x2xf32>
    %307 = tpu.matmul %305, %306, %cst_187 {dimension_numbers = #tpu.dot_dimension_numbers<[1], [0], [0], [1], [0, 0, 1, 1], [], []>} : vector<2x256xbf16>, vector<256x2xbf16>, vector<2x2xf32> -> vector<2x2xf32>
    %c0_188 = arith.constant 0 : index
    %c0_189 = arith.constant 0 : index
    %308 = vector.load %arg25[%c0_188, %c0_189] : memref<1x2xf32, #tpu.memory_space<vmem>>, vector<1x2xf32>
    %309 = vector.broadcast %308 : vector<1x2xf32> to vector<2x2xf32>
    %310 = arith.addf %307, %309 : vector<2x2xf32>
    %c0_190 = arith.constant 0 : index
    %c0_191 = arith.constant 0 : index
    %311 = vector.load %arg26[%c0_190, %c0_191] : memref<2x2xf32, #tpu.memory_space<vmem>>, vector<2x2xf32>
    tpu.vector_store %arg26[%c0_190, %c0_191], %310 {strides = array<i32>} : memref<2x2xf32, #tpu.memory_space<vmem>>, vector<2x2xf32>,
    return
  }
  func.func @transform_0(%arg0: i32) -> (i32, i32) {
    %c0_i32 = arith.constant 0 : i32
    %c0_i32_0 = arith.constant 0 : i32
    %c0_i32_1 = arith.constant 0 : i32
    return %c0_i32, %c0_i32_0 : i32, i32
  }
  func.func @transform_1(%arg0: i32) -> (i32, i32) {
    %c0_i32 = arith.constant 0 : i32
    %c0_i32_0 = arith.constant 0 : i32
    %c0_i32_1 = arith.constant 0 : i32
    return %c0_i32, %c0_i32_0 : i32, i32
  }
  func.func @transform_2(%arg0: i32) -> (i32, i32) {
    %c0_i32 = arith.constant 0 : i32
    %c0_i32_0 = arith.constant 0 : i32
    %c0_i32_1 = arith.constant 0 : i32
    return %c0_i32, %c0_i32_0 : i32, i32
  }
  func.func @transform_3(%arg0: i32) -> (i32, i32) {
    %c0_i32 = arith.constant 0 : i32
    %c0_i32_0 = arith.constant 0 : i32
    %c0_i32_1 = arith.constant 0 : i32
    return %c0_i32, %c0_i32_0 : i32, i32
  }
  func.func @transform_4(%arg0: i32) -> (i32, i32) {
    %c0_i32 = arith.constant 0 : i32
    %c0_i32_0 = arith.constant 0 : i32
    %c0_i32_1 = arith.constant 0 : i32
    return %c0_i32, %c0_i32_0 : i32, i32
  }
  func.func @transform_5(%arg0: i32) -> (i32, i32) {
    %c0_i32 = arith.constant 0 : i32
    %c0_i32_0 = arith.constant 0 : i32
    %c0_i32_1 = arith.constant 0 : i32
    return %c0_i32, %c0_i32_0 : i32, i32
  }
  func.func @transform_6(%arg0: i32) -> (i32, i32) {
    %c0_i32 = arith.constant 0 : i32
    %c0_i32_0 = arith.constant 0 : i32
    %c0_i32_1 = arith.constant 0 : i32
    return %c0_i32, %c0_i32_0 : i32, i32
  }
  func.func @transform_7(%arg0: i32) -> (i32, i32) {
    %c0_i32 = arith.constant 0 : i32
    %c0_i32_0 = arith.constant 0 : i32
    %c0_i32_1 = arith.constant 0 : i32
    return %c0_i32, %c0_i32_0 : i32, i32
  }
  func.func @transform_8(%arg0: i32) -> (i32, i32) {
    %c0_i32 = arith.constant 0 : i32
    %c0_i32_0 = arith.constant 0 : i32
    %c0_i32_1 = arith.constant 0 : i32
    return %c0_i32, %c0_i32_0 : i32, i32
  }
  func.func @transform_9(%arg0: i32) -> (i32, i32) {
    %c0_i32 = arith.constant 0 : i32
    %c0_i32_0 = arith.constant 0 : i32
    %c0_i32_1 = arith.constant 0 : i32
    return %c0_i32, %c0_i32_0 : i32, i32
  }
  func.func @transform_11(%arg0: i32) -> (i32, i32) {
    %c0_i32 = arith.constant 0 : i32
    %c0_i32_0 = arith.constant 0 : i32
    %c0_i32_1 = arith.constant 0 : i32
    return %c0_i32, %c0_i32_0 : i32, i32
  }
  func.func @transform_12(%arg0: i32) -> (i32, i32) {
    %c0_i32 = arith.constant 0 : i32
    %c0_i32_0 = arith.constant 0 : i32
    %c0_i32_1 = arith.constant 0 : i32
    return %c0_i32, %c0_i32_0 : i32, i32
  }
  func.func @transform_13(%arg0: i32) -> (i32, i32) {
    %c0_i32 = arith.constant 0 : i32
    %c0_i32_0 = arith.constant 0 : i32
    %c0_i32_1 = arith.constant 0 : i32
    return %c0_i32, %c0_i32_0 : i32, i32
  }
  func.func @transform_15(%arg0: i32) -> (i32, i32) {
    %c0_i32 = arith.constant 0 : i32
    %c0_i32_0 = arith.constant 0 : i32
    %c0_i32_1 = arith.constant 0 : i32
    return %c0_i32, %c0_i32_0 : i32, i32
  }
  func.func @transform_16(%arg0: i32) -> (i32, i32) {
    %c0_i32 = arith.constant 0 : i32
    %c0_i32_0 = arith.constant 0 : i32
    %c0_i32_1 = arith.constant 0 : i32
    return %c0_i32, %c0_i32_0 : i32, i32
  }
  func.func @transform_17(%arg0: i32) -> (i32, i32) {
    %c0_i32 = arith.constant 0 : i32
    %c0_i32_0 = arith.constant 0 : i32
    %c0_i32_1 = arith.constant 0 : i32
    return %c0_i32, %c0_i32_0 : i32, i32
  }
  func.func @transform_18(%arg0: i32) -> (i32, i32) {
    %c0_i32 = arith.constant 0 : i32
    %c0_i32_0 = arith.constant 0 : i32
    %c0_i32_1 = arith.constant 0 : i32
    return %c0_i32, %c0_i32_0 : i32, i32
  }
  func.func @transform_19(%arg0: i32) -> (i32, i32) {
    %c0_i32 = arith.constant 0 : i32
    %c0_i32_0 = arith.constant 0 : i32
    %c0_i32_1 = arith.constant 0 : i32
    return %c0_i32, %c0_i32_0 : i32, i32
  }
  func.func @transform_20(%arg0: i32) -> (i32, i32) {
    %c0_i32 = arith.constant 0 : i32
    %c0_i32_0 = arith.constant 0 : i32
    %c0_i32_1 = arith.constant 0 : i32
    return %c0_i32, %c0_i32_0 : i32, i32
  }
  func.func @transform_21(%arg0: i32) -> (i32, i32) {
    %c0_i32 = arith.constant 0 : i32
    %c0_i32_0 = arith.constant 0 : i32
    %c0_i32_1 = arith.constant 0 : i32
    return %c0_i32, %c0_i32_0 : i32, i32
  }
  func.func @transform_22(%arg0: i32) -> (i32, i32) {
    %c0_i32 = arith.constant 0 : i32
    %c0_i32_0 = arith.constant 0 : i32
    %c0_i32_1 = arith.constant 0 : i32
    return %c0_i32, %c0_i32_0 : i32, i32
  }
  func.func @transform_23(%arg0: i32) -> (i32, i32) {
    %c0_i32 = arith.constant 0 : i32
    %c0_i32_0 = arith.constant 0 : i32
    %c0_i32_1 = arith.constant 0 : i32
    return %c0_i32, %c0_i32_0 : i32, i32
  }
  func.func @transform_24(%arg0: i32) -> (i32, i32) {
    %c0_i32 = arith.constant 0 : i32
    %c0_i32_0 = arith.constant 0 : i32
    %c0_i32_1 = arith.constant 0 : i32
    return %c0_i32, %c0_i32_0 : i32, i32
  }
  func.func @transform_25(%arg0: i32) -> (i32, i32) {
    %c0_i32 = arith.constant 0 : i32
    %c0_i32_0 = arith.constant 0 : i32
    %c0_i32_1 = arith.constant 0 : i32
    return %c0_i32, %c0_i32_0 : i32, i32
  }
}

</mosaic_0001>

<llo_original>
// kernel: fcn1_forward.1
$region0: #{fcn1_forward.1}
  #allocation0 [shape = 'u32[]', space=smem, size = 0x4, offset = 0x4, fixed_abs, tag = 'smem constant byte address 0x4 - core index']
  #allocation1 [shape = 'u32[144,128]{1,0:T(1,128)}', space=vmem, size = 0x12000, scoped, tag = 'internal scratch']
  #allocation2 [shape = 'f32[2,32,128]{2,1,0:T(8,128)}', space=vmem, size = 0x8000, scoped, tag = 'scratch operand']
  #allocation3 [shape = 'f32[2,32,256]{2,1,0:T(8,128)}', space=vmem, size = 0x10000, scoped, tag = 'scratch operand']
  #allocation4 [shape = 'f32[2,38,512]{2,1,0:T(8,128)}', space=vmem, size = 0x28000, scoped, tag = 'scratch operand']
  #allocation5 [shape = 'bf16[768,512]{1,0:T(16,128)(2,1)}', space=vmem, size = 0xc0000, scoped, tag = 'scratch operand']
  #allocation6 [shape = 'bf16[1536,256]{1,0:T(16,128)(2,1)}', space=vmem, size = 0xc0000, scoped, tag = 'scratch operand']
  #allocation7 [shape = 's32[2]{0}', space=sflag, size = 0x8, scoped, tag = 'scratch operand']
  #allocation10 [shape = 's32[]', space=sflag, size = 0x4, offset = 0, fixed_abs, tag = 'sflag constant byte address 0x0 - dummy sync flag']
  #allocation11 [shape = 's32[]', space=sflag, size = 0x4, offset = 0, fixed_abs, tag = 'sflag constant byte address 0x0 - dummy sync flag']
  %s0 = inlined_call_operand.vmem [shape: bf16[32,28], index: 0, kind: input, shape index: {}]
  %s1 = inlined_call_operand.vmem [shape: f32[2,2], index: 1, kind: input, shape index: {}]
  %s2 = inlined_call_operand.vmem [shape: bf16[28,128], index: 2, kind: input, shape index: {}]
  %s3 = inlined_call_operand.vmem [shape: f32[1,128], index: 3, kind: input, shape index: {}]
  %s4 = inlined_call_operand.vmem [shape: f32[1,128], index: 4, kind: input, shape index: {}]
  %s5 = inlined_call_operand.vmem [shape: f32[1,128], index: 5, kind: input, shape index: {}]
  %s6 = inlined_call_operand.vmem [shape: bf16[640,256], index: 6, kind: input, shape index: {}]
  %s7 = inlined_call_operand.vmem [shape: f32[1,256], index: 7, kind: input, shape index: {}]
  %s8 = inlined_call_operand.vmem [shape: f32[1,256], index: 8, kind: input, shape index: {}]
  %s9 = inlined_call_operand.vmem [shape: f32[1,256], index: 9, kind: input, shape index: {}]
  %s10 = inlined_call_operand.vmem [shape: bf16[768,512], index: 10, kind: input, shape index: {}]
  %s11 = inlined_call_operand.vmem [shape: f32[1,512], index: 11, kind: input, shape index: {}]
  %s12 = inlined_call_operand.vmem [shape: f32[1,512], index: 12, kind: input, shape index: {}]
  %s13 = inlined_call_operand.vmem [shape: f32[1,512], index: 13, kind: input, shape index: {}]
  %s14 = inlined_call_operand.vmem [shape: bf16[1536,256], index: 14, kind: input, shape index: {}]
  %s15 = inlined_call_operand.vmem [shape: f32[1,256], index: 15, kind: input, shape index: {}]
  %s16 = inlined_call_operand.vmem [shape: f32[1,256], index: 16, kind: input, shape index: {}]
  %s17 = inlined_call_operand.vmem [shape: f32[1,256], index: 17, kind: input, shape index: {}]
  %s18 = inlined_call_operand.vmem [shape: bf16[256,256], index: 18, kind: input, shape index: {}]
  %s19 = inlined_call_operand.vmem [shape: f32[2,256], index: 19, kind: input, shape index: {}]
  %s20 = inlined_call_operand.vmem [shape: f32[1,256], index: 20, kind: input, shape index: {}]
  %s21 = inlined_call_operand.vmem [shape: f32[1,256], index: 21, kind: input, shape index: {}]
  %s22 = inlined_call_operand.vmem [shape: f32[1,256], index: 22, kind: input, shape index: {}]
  %s23 = inlined_call_operand.vmem [shape: bf16[256,2], index: 23, kind: input, shape index: {}]
  %s24 = inlined_call_operand.vmem [shape: f32[1,2], index: 24, kind: input, shape index: {}]
  %s25 = inlined_call_operand.hbm [shape: f32[2,2], index: 25, kind: output, shape index: {}]
  %s26 = sld [smem:[#allocation0]]
  $region176: #{fcn1_forward.1} parent=0
    _
  %s28 = ssub.s32 1, %s26
  %s29 = scalar_select 0, %s28, %s26
  $region1: #{fcn1_forward.1} parent=0
    #allocation8 [shape = 'u8[1024]{0}', space=vmem, size = 0x400, scoped, tag = 'output window, operand 0, single buffered']
    #allocation9 [shape = 's32[1]{0}', space=sflag, size = 0x4, scoped, tag = 'scoped memory for fcn1_forward.1']
    %30 = vsyncpa [#allocation9], 0
    // Predicated region
    $region2: #{fcn1_forward.1} parent=1 // pred_check
      _
    $region3: #{fcn1_forward.1} parent=1 // pred_check_branch
      %32 = sbr.rel (0) target = $region5
    $region4: #{fcn1_forward.1} parent=1 // pred_region
      _
    $region5: #{fcn1_forward.1} parent=1 // pred_fallthru
      _
    // Predicated region
    $region6: #{fcn1_forward.1} parent=1 // pred_check
      _
    $region7: #{fcn1_forward.1} parent=1 // pred_check_branch
      %34 = sbr.rel (0) target = $region9
    $region8: #{fcn1_forward.1} parent=1 // pred_region
      _
    $region9: #{fcn1_forward.1} parent=1 // pred_fallthru
      _
    // Predicated region
    $region10: #{fcn1_forward.1} parent=1 // pred_check
      _
    $region11: #{fcn1_forward.1} parent=1 // pred_check_branch
      %36 = sbr.rel (0) target = $region13
    $region12: #{fcn1_forward.1} parent=1 // pred_region
      _
    $region13: #{fcn1_forward.1} parent=1 // pred_fallthru
      _
    // Predicated region
    $region14: #{fcn1_forward.1} parent=1 // pred_check
      _
    $region15: #{fcn1_forward.1} parent=1 // pred_check_branch
      %38 = sbr.rel (0) target = $region17
    $region16: #{fcn1_forward.1} parent=1 // pred_region
      _
    $region17: #{fcn1_forward.1} parent=1 // pred_fallthru
      _
    // Predicated region
    $region18: #{fcn1_forward.1} parent=1 // pred_check
      _
    $region19: #{fcn1_forward.1} parent=1 // pred_check_branch
      %40 = sbr.rel (0) target = $region21
    $region20: #{fcn1_forward.1} parent=1 // pred_region
      _
    $region21: #{fcn1_forward.1} parent=1 // pred_fallthru
      _
    // Predicated region
    $region22: #{fcn1_forward.1} parent=1 // pred_check
      _
    $region23: #{fcn1_forward.1} parent=1 // pred_check_branch
      %42 = sbr.rel (0) target = $region25
    $region24: #{fcn1_forward.1} parent=1 // pred_region
      _
    $region25: #{fcn1_forward.1} parent=1 // pred_fallthru
      _
    // Predicated region
    $region26: #{fcn1_forward.1} parent=1 // pred_check
      _
    $region27: #{fcn1_forward.1} parent=1 // pred_check_branch
      %44 = sbr.rel (0) target = $region29
    $region28: #{fcn1_forward.1} parent=1 // pred_region
      _
    $region29: #{fcn1_forward.1} parent=1 // pred_fallthru
      _
    // Predicated region
    $region30: #{fcn1_forward.1} parent=1 // pred_check
      _
    $region31: #{fcn1_forward.1} parent=1 // pred_check_branch
      %46 = sbr.rel (0) target = $region33
    $region32: #{fcn1_forward.1} parent=1 // pred_region
      _
    $region33: #{fcn1_forward.1} parent=1 // pred_fallthru
      _
    // Predicated region
    $region34: #{fcn1_forward.1} parent=1 // pred_check
      _
    $region35: #{fcn1_forward.1} parent=1 // pred_check_branch
      %48 = sbr.rel (0) target = $region37
    $region36: #{fcn1_forward.1} parent=1 // pred_region
      _
    $region37: #{fcn1_forward.1} parent=1 // pred_fallthru
      _
    // Predicated region
    $region38: #{fcn1_forward.1} parent=1 // pred_check
      _
    $region39: #{fcn1_forward.1} parent=1 // pred_check_branch
      %50 = sbr.rel (0) target = $region41
    $region40: #{fcn1_forward.1} parent=1 // pred_region
      _
    $region41: #{fcn1_forward.1} parent=1 // pred_fallthru
      _
    // Predicated region
    $region42: #{fcn1_forward.1} parent=1 // pred_check
      _
    $region43: #{fcn1_forward.1} parent=1 // pred_check_branch
      %52 = sbr.rel (0) target = $region45
    $region44: #{fcn1_forward.1} parent=1 // pred_region
      _
    $region45: #{fcn1_forward.1} parent=1 // pred_fallthru
      _
    // Predicated region
    $region46: #{fcn1_forward.1} parent=1 // pred_check
      _
    $region47: #{fcn1_forward.1} parent=1 // pred_check_branch
      %54 = sbr.rel (0) target = $region49
    $region48: #{fcn1_forward.1} parent=1 // pred_region
      _
    $region49: #{fcn1_forward.1} parent=1 // pred_fallthru
      _
    // Predicated region
    $region50: #{fcn1_forward.1} parent=1 // pred_check
      _
    $region51: #{fcn1_forward.1} parent=1 // pred_check_branch
      %56 = sbr.rel (0) target = $region53
    $region52: #{fcn1_forward.1} parent=1 // pred_region
      _
    $region53: #{fcn1_forward.1} parent=1 // pred_fallthru
      _
    // Predicated region
    $region54: #{fcn1_forward.1} parent=1 // pred_check
      _
    $region55: #{fcn1_forward.1} parent=1 // pred_check_branch
      %58 = sbr.rel (0) target = $region57
    $region56: #{fcn1_forward.1} parent=1 // pred_region
      _
    $region57: #{fcn1_forward.1} parent=1 // pred_fallthru
      _
    // Predicated region
    $region58: #{fcn1_forward.1} parent=1 // pred_check
      _
    $region59: #{fcn1_forward.1} parent=1 // pred_check_branch
      %60 = sbr.rel (0) target = $region61
    $region60: #{fcn1_forward.1} parent=1 // pred_region
      _
    $region61: #{fcn1_forward.1} parent=1 // pred_fallthru
      _
    // Predicated region
    $region62: #{fcn1_forward.1} parent=1 // pred_check
      _
    $region63: #{fcn1_forward.1} parent=1 // pred_check_branch
      %62 = sbr.rel (0) target = $region65
    $region64: #{fcn1_forward.1} parent=1 // pred_region
      _
    $region65: #{fcn1_forward.1} parent=1 // pred_fallthru
      _
    // Predicated region
    $region66: #{fcn1_forward.1} parent=1 // pred_check
      _
    $region67: #{fcn1_forward.1} parent=1 // pred_check_branch
      %64 = sbr.rel (0) target = $region69
    $region68: #{fcn1_forward.1} parent=1 // pred_region
      _
    $region69: #{fcn1_forward.1} parent=1 // pred_fallthru
      _
    // Predicated region
    $region70: #{fcn1_forward.1} parent=1 // pred_check
      _
    $region71: #{fcn1_forward.1} parent=1 // pred_check_branch
      %66 = sbr.rel (0) target = $region73
    $region72: #{fcn1_forward.1} parent=1 // pred_region
      _
    $region73: #{fcn1_forward.1} parent=1 // pred_fallthru
      _
    // Predicated region
    $region74: #{fcn1_forward.1} parent=1 // pred_check
      _
    $region75: #{fcn1_forward.1} parent=1 // pred_check_branch
      %68 = sbr.rel (0) target = $region77
    $region76: #{fcn1_forward.1} parent=1 // pred_region
      _
    $region77: #{fcn1_forward.1} parent=1 // pred_fallthru
      _
    // Predicated region
    $region78: #{fcn1_forward.1} parent=1 // pred_check
      _
    $region79: #{fcn1_forward.1} parent=1 // pred_check_branch
      %70 = sbr.rel (0) target = $region81
    $region80: #{fcn1_forward.1} parent=1 // pred_region
      _
    $region81: #{fcn1_forward.1} parent=1 // pred_fallthru
      _
    // Predicated region
    $region82: #{fcn1_forward.1} parent=1 // pred_check
      _
    $region83: #{fcn1_forward.1} parent=1 // pred_check_branch
      %72 = sbr.rel (0) target = $region85
    $region84: #{fcn1_forward.1} parent=1 // pred_region
      _
    $region85: #{fcn1_forward.1} parent=1 // pred_fallthru
      _
    // Predicated region
    $region86: #{fcn1_forward.1} parent=1 // pred_check
      _
    $region87: #{fcn1_forward.1} parent=1 // pred_check_branch
      %74 = sbr.rel (0) target = $region89
    $region88: #{fcn1_forward.1} parent=1 // pred_region
      _
    $region89: #{fcn1_forward.1} parent=1 // pred_fallthru
      _
    // Predicated region
    $region90: #{fcn1_forward.1} parent=1 // pred_check
      _
    $region91: #{fcn1_forward.1} parent=1 // pred_check_branch
      %76 = sbr.rel (0) target = $region93
    $region92: #{fcn1_forward.1} parent=1 // pred_region
      _
    $region93: #{fcn1_forward.1} parent=1 // pred_fallthru
      _
    %p79 = scmp.lt.u32.totalorder 4, 8
    %p80 = pneg %p79
    // Predicated region
    $region94: #{fcn1_forward.1} parent=1 // pred_check
      _
    $region95: #{fcn1_forward.1} parent=1 // pred_check_branch
      %82 = sbr.rel (%p79) target = $region97
    $region96: #{fcn1_forward.1} parent=1 // pred_region
      %s863 = sand.u32 4, 7
      %p864 = scmp.eq.s32.totalorder %s863, 0
      %p865 = pneg %p864
      // Predicated region
      $region109: #{fcn1_forward.1} parent=96 // pred_check
        _
      $region110: #{fcn1_forward.1} parent=96 // pred_check_branch
        %867 = sbr.rel (%p864) target = $region112
      $region111: #{fcn1_forward.1} parent=96 // pred_region
        %s868 = sand.u32 4, 7
        %s869 = ssub.s32 4, %s868
        %s870 = scalar_lea.vmem %s10, %s869
        %s871 = ssub.s32 4, %s868
        %s872 = scalar_lea.vmem [#allocation5], %s871
        loop: start=0, step=1, limit=1
        $region113: #{fcn1_forward.1} parent=111 // loop_pre_header
          _
        $region114: #{fcn1_forward.1} parent=111 // loop_header
          %s874 = sphi 0, %s878
          %p875 = scmp.ge.s32.totalorder %s874, 1
          %s879 = sphi %s10, %s10
          %s880 = sphi [#allocation5], [#allocation5]
        $region115: #{fcn1_forward.1} parent=111 // loop_header_branch
          %877 = sbr.rel (%p875) target = $region119
        $region116: #{fcn1_forward.1} parent=111 // loop_body
          _
        $region117: #{fcn1_forward.1} parent=111 // loop_footer
          %s878 = sadd.s32 1, %s874
        $region118: #{fcn1_forward.1} parent=111 // loop_footer_branch
          %873 = sbr.rel target = $region114
        $region119: #{fcn1_forward.1} parent=111 // loop_exit
          _
        %s881 = sshllo.u32 0, %s868
        loop: start=0, step=1, limit=1
        $region120: #{fcn1_forward.1} parent=111 // loop_pre_header
          _
        $region121: #{fcn1_forward.1} parent=111 // loop_header
          %s883 = sphi 0, %s887
          %p884 = scmp.ge.s32.totalorder %s883, 1
          %s888 = sphi %s870, %s870
          %s889 = sphi %s872, %s872
        $region122: #{fcn1_forward.1} parent=111 // loop_header_branch
          %886 = sbr.rel (%p884) target = $region126
        $region123: #{fcn1_forward.1} parent=111 // loop_body
          %v890 = vld [vmem:[%s888] sm:%s881]
          %891 = vst [vmem:[%s889] sm:%s881] %v890
          %v892 = vld [vmem:[%s888 + $0x10] sm:%s881]
          %893 = vst [vmem:[%s889 + $0x4] sm:%s881] %v892
          %v894 = vld [vmem:[%s888 + $0x4] sm:%s881]
          %895 = vst [vmem:[%s889 + $0x8] sm:%s881] %v894
          %v896 = vld [vmem:[%s888 + $0x14] sm:%s881]
          %897 = vst [vmem:[%s889 + $0xc] sm:%s881] %v896
          %v898 = vld [vmem:[%s888 + $0x8] sm:%s881]
          %899 = vst [vmem:[%s889 + $0x10] sm:%s881] %v898
          %v900 = vld [vmem:[%s888 + $0x18] sm:%s881]
          %901 = vst [vmem:[%s889 + $0x14] sm:%s881] %v900
          %v902 = vld [vmem:[%s888 + $0xc] sm:%s881]
          %903 = vst [vmem:[%s889 + $0x18] sm:%s881] %v902
          %v904 = vld [vmem:[%s888 + $0x1c] sm:%s881]
          %905 = vst [vmem:[%s889 + $0x1c] sm:%s881] %v904
          %v906 = vld [vmem:[%s888 + $0x20] sm:%s881]
          %907 = vst [vmem:[%s889 + $0x20] sm:%s881] %v906
          %v908 = vld [vmem:[%s888 + $0x30] sm:%s881]
          %909 = vst [vmem:[%s889 + $0x24] sm:%s881] %v908
          %v910 = vld [vmem:[%s888 + $0x24] sm:%s881]
          %911 = vst [vmem:[%s889 + $0x28] sm:%s881] %v910
          %v912 = vld [vmem:[%s888 + $0x34] sm:%s881]
          %913 = vst [vmem:[%s889 + $0x2c] sm:%s881] %v912
          %v914 = vld [vmem:[%s888 + $0x28] sm:%s881]
          %915 = vst [vmem:[%s889 + $0x30] sm:%s881] %v914
          %v916 = vld [vmem:[%s888 + $0x38] sm:%s881]
          %917 = vst [vmem:[%s889 + $0x34] sm:%s881] %v916
          %v918 = vld [vmem:[%s888 + $0x2c] sm:%s881]
          %919 = vst [vmem:[%s889 + $0x38] sm:%s881] %v918
          %v920 = vld [vmem:[%s888 + $0x3c] sm:%s881]
          %921 = vst [vmem:[%s889 + $0x3c] sm:%s881] %v920
          %v922 = vld [vmem:[%s888 + $0x40] sm:%s881]
          %923 = vst [vmem:[%s889 + $0x40] sm:%s881] %v922
          %v924 = vld [vmem:[%s888 + $0x50] sm:%s881]
          %925 = vst [vmem:[%s889 + $0x44] sm:%s881] %v924
          %v926 = vld [vmem:[%s888 + $0x44] sm:%s881]
          %927 = vst [vmem:[%s889 + $0x48] sm:%s881] %v926
          %v928 = vld [vmem:[%s888 + $0x54] sm:%s881]
          %929 = vst [vmem:[%s889 + $0x4c] sm:%s881] %v928
          %v930 = vld [vmem:[%s888 + $0x48] sm:%s881]
          %931 = vst [vmem:[%s889 + $0x50] sm:%s881] %v930
          %v932 = vld [vmem:[%s888 + $0x58] sm:%s881]
          %933 = vst [vmem:[%s889 + $0x54] sm:%s881] %v932
          %v934 = vld [vmem:[%s888 + $0x4c] sm:%s881]
          %935 = vst [vmem:[%s889 + $0x58] sm:%s881] %v934
          %v936 = vld [vmem:[%s888 + $0x5c] sm:%s881]
          %937 = vst [vmem:[%s889 + $0x5c] sm:%s881] %v936
          %v938 = vld [vmem:[%s888 + $0x60] sm:%s881]
          %939 = vst [vmem:[%s889 + $0x60] sm:%s881] %v938
          %v940 = vld [vmem:[%s888 + $0x70] sm:%s881]
          %941 = vst [vmem:[%s889 + $0x64] sm:%s881] %v940
          %v942 = vld [vmem:[%s888 + $0x64] sm:%s881]
          %943 = vst [vmem:[%s889 + $0x68] sm:%s881] %v942
          %v944 = vld [vmem:[%s888 + $0x74] sm:%s881]
          %945 = vst [vmem:[%s889 + $0x6c] sm:%s881] %v944
          %v946 = vld [vmem:[%s888 + $0x68] sm:%s881]
          %947 = vst [vmem:[%s889 + $0x70] sm:%s881] %v946
          %v948 = vld [vmem:[%s888 + $0x78] sm:%s881]
          %949 = vst [vmem:[%s889 + $0x74] sm:%s881] %v948
          %v950 = vld [vmem:[%s888 + $0x6c] sm:%s881]
          %951 = vst [vmem:[%s889 + $0x78] sm:%s881] %v950
          %v952 = vld [vmem:[%s888 + $0x7c] sm:%s881]
          %953 = vst [vmem:[%s889 + $0x7c] sm:%s881] %v952
          %v954 = vld [vmem:[%s888 + $0x80] sm:%s881]
          %955 = vst [vmem:[%s889 + $0x80] sm:%s881] %v954
          %v956 = vld [vmem:[%s888 + $0x90] sm:%s881]
          %957 = vst [vmem:[%s889 + $0x84] sm:%s881] %v956
          %v958 = vld [vmem:[%s888 + $0x84] sm:%s881]
          %959 = vst [vmem:[%s889 + $0x88] sm:%s881] %v958
          %v960 = vld [vmem:[%s888 + $0x94] sm:%s881]
          %961 = vst [vmem:[%s889 + $0x8c] sm:%s881] %v960
          %v962 = vld [vmem:[%s888 + $0x88] sm:%s881]
          %963 = vst [vmem:[%s889 + $0x90] sm:%s881] %v962
          %v964 = vld [vmem:[%s888 + $0x98] sm:%s881]
          %965 = vst [vmem:[%s889 + $0x94] sm:%s881] %v964
          %v966 = vld [vmem:[%s888 + $0x8c] sm:%s881]
          %967 = vst [vmem:[%s889 + $0x98] sm:%s881] %v966
          %v968 = vld [vmem:[%s888 + $0x9c] sm:%s881]
          %969 = vst [vmem:[%s889 + $0x9c] sm:%s881] %v968
          %v970 = vld [vmem:[%s888 + $0xa0] sm:%s881]
          %971 = vst [vmem:[%s889 + $0xa0] sm:%s881] %v970
          %v972 = vld [vmem:[%s888 + $0xb0] sm:%s881]
          %973 = vst [vmem:[%s889 + $0xa4] sm:%s881] %v972
          %v974 = vld [vmem:[%s888 + $0xa4] sm:%s881]
          %975 = vst [vmem:[%s889 + $0xa8] sm:%s881] %v974
          %v976 = vld [vmem:[%s888 + $0xb4] sm:%s881]
          %977 = vst [vmem:[%s889 + $0xac] sm:%s881] %v976
          %v978 = vld [vmem:[%s888 + $0xa8] sm:%s881]
          %979 = vst [vmem:[%s889 + $0xb0] sm:%s881] %v978
          %v980 = vld [vmem:[%s888 + $0xb8] sm:%s881]
          %981 = vst [vmem:[%s889 + $0xb4] sm:%s881] %v980
          %v982 = vld [vmem:[%s888 + $0xac] sm:%s881]
          %983 = vst [vmem:[%s889 + $0xb8] sm:%s881] %v982
          %v984 = vld [vmem:[%s888 + $0xbc] sm:%s881]
          %985 = vst [vmem:[%s889 + $0xbc] sm:%s881] %v984
          %v986 = vld [vmem:[%s888 + $0xc0] sm:%s881]
          %987 = vst [vmem:[%s889 + $0xc0] sm:%s881] %v986
          %v988 = vld [vmem:[%s888 + $0xd0] sm:%s881]
          %989 = vst [vmem:[%s889 + $0xc4] sm:%s881] %v988
          %v990 = vld [vmem:[%s888 + $0xc4] sm:%s881]
          %991 = vst [vmem:[%s889 + $0xc8] sm:%s881] %v990
          %v992 = vld [vmem:[%s888 + $0xd4] sm:%s881]
          %993 = vst [vmem:[%s889 + $0xcc] sm:%s881] %v992
          %v994 = vld [vmem:[%s888 + $0xc8] sm:%s881]
          %995 = vst [vmem:[%s889 + $0xd0] sm:%s881] %v994
          %v996 = vld [vmem:[%s888 + $0xd8] sm:%s881]
          %997 = vst [vmem:[%s889 + $0xd4] sm:%s881] %v996
          %v998 = vld [vmem:[%s888 + $0xcc] sm:%s881]
          %999 = vst [vmem:[%s889 + $0xd8] sm:%s881] %v998
          %v1000 = vld [vmem:[%s888 + $0xdc] sm:%s881]
          %1001 = vst [vmem:[%s889 + $0xdc] sm:%s881] %v1000
          %v1002 = vld [vmem:[%s888 + $0xe0] sm:%s881]
          %1003 = vst [vmem:[%s889 + $0xe0] sm:%s881] %v1002
          %v1004 = vld [vmem:[%s888 + $0xf0] sm:%s881]
          %1005 = vst [vmem:[%s889 + $0xe4] sm:%s881] %v1004
          %v1006 = vld [vmem:[%s888 + $0xe4] sm:%s881]
          %1007 = vst [vmem:[%s889 + $0xe8] sm:%s881] %v1006
          %v1008 = vld [vmem:[%s888 + $0xf4] sm:%s881]
          %1009 = vst [vmem:[%s889 + $0xec] sm:%s881] %v1008
          %v1010 = vld [vmem:[%s888 + $0xe8] sm:%s881]
          %1011 = vst [vmem:[%s889 + $0xf0] sm:%s881] %v1010
          %v1012 = vld [vmem:[%s888 + $0xf8] sm:%s881]
          %1013 = vst [vmem:[%s889 + $0xf4] sm:%s881] %v1012
          %v1014 = vld [vmem:[%s888 + $0xec] sm:%s881]
          %1015 = vst [vmem:[%s889 + $0xf8] sm:%s881] %v1014
          %v1016 = vld [vmem:[%s888 + $0xfc] sm:%s881]
          %1017 = vst [vmem:[%s889 + $0xfc] sm:%s881] %v1016
          %v1018 = vld [vmem:[%s888 + $0x100] sm:%s881]
          %1019 = vst [vmem:[%s889 + $0x100] sm:%s881] %v1018
          %v1020 = vld [vmem:[%s888 + $0x110] sm:%s881]
          %1021 = vst [vmem:[%s889 + $0x104] sm:%s881] %v1020
          %v1022 = vld [vmem:[%s888 + $0x104] sm:%s881]
          %1023 = vst [vmem:[%s889 + $0x108] sm:%s881] %v1022
          %v1024 = vld [vmem:[%s888 + $0x114] sm:%s881]
          %1025 = vst [vmem:[%s889 + $0x10c] sm:%s881] %v1024
          %v1026 = vld [vmem:[%s888 + $0x108] sm:%s881]
          %1027 = vst [vmem:[%s889 + $0x110] sm:%s881] %v1026
          %v1028 = vld [vmem:[%s888 + $0x118] sm:%s881]
          %1029 = vst [vmem:[%s889 + $0x114] sm:%s881] %v1028
          %v1030 = vld [vmem:[%s888 + $0x10c] sm:%s881]
          %1031 = vst [vmem:[%s889 + $0x118] sm:%s881] %v1030
          %v1032 = vld [vmem:[%s888 + $0x11c] sm:%s881]
          %1033 = vst [vmem:[%s889 + $0x11c] sm:%s881] %v1032
          %v1034 = vld [vmem:[%s888 + $0x120] sm:%s881]
          %1035 = vst [vmem:[%s889 + $0x120] sm:%s881] %v1034
          %v1036 = vld [vmem:[%s888 + $0x130] sm:%s881]
          %1037 = vst [vmem:[%s889 + $0x124] sm:%s881] %v1036
          %v1038 = vld [vmem:[%s888 + $0x124] sm:%s881]
          %1039 = vst [vmem:[%s889 + $0x128] sm:%s881] %v1038
          %v1040 = vld [vmem:[%s888 + $0x134] sm:%s881]
          %1041 = vst [vmem:[%s889 + $0x12c] sm:%s881] %v1040
          %v1042 = vld [vmem:[%s888 + $0x128] sm:%s881]
          %1043 = vst [vmem:[%s889 + $0x130] sm:%s881] %v1042
          %v1044 = vld [vmem:[%s888 + $0x138] sm:%s881]
          %1045 = vst [vmem:[%s889 + $0x134] sm:%s881] %v1044
          %v1046 = vld [vmem:[%s888 + $0x12c] sm:%s881]
          %1047 = vst [vmem:[%s889 + $0x138] sm:%s881] %v1046
          %v1048 = vld [vmem:[%s888 + $0x13c] sm:%s881]
          %1049 = vst [vmem:[%s889 + $0x13c] sm:%s881] %v1048
          %v1050 = vld [vmem:[%s888 + $0x140] sm:%s881]
          %1051 = vst [vmem:[%s889 + $0x140] sm:%s881] %v1050
          %v1052 = vld [vmem:[%s888 + $0x150] sm:%s881]
          %1053 = vst [vmem:[%s889 + $0x144] sm:%s881] %v1052
          %v1054 = vld [vmem:[%s888 + $0x144] sm:%s881]
          %1055 = vst [vmem:[%s889 + $0x148] sm:%s881] %v1054
          %v1056 = vld [vmem:[%s888 + $0x154] sm:%s881]
          %1057 = vst [vmem:[%s889 + $0x14c] sm:%s881] %v1056
          %v1058 = vld [vmem:[%s888 + $0x148] sm:%s881]
          %1059 = vst [vmem:[%s889 + $0x150] sm:%s881] %v1058
          %v1060 = vld [vmem:[%s888 + $0x158] sm:%s881]
          %1061 = vst [vmem:[%s889 + $0x154] sm:%s881] %v1060
          %v1062 = vld [vmem:[%s888 + $0x14c] sm:%s881]
          %1063 = vst [vmem:[%s889 + $0x158] sm:%s881] %v1062
          %v1064 = vld [vmem:[%s888 + $0x15c] sm:%s881]
          %1065 = vst [vmem:[%s889 + $0x15c] sm:%s881] %v1064
          %v1066 = vld [vmem:[%s888 + $0x160] sm:%s881]
          %1067 = vst [vmem:[%s889 + $0x160] sm:%s881] %v1066
          %v1068 = vld [vmem:[%s888 + $0x170] sm:%s881]
          %1069 = vst [vmem:[%s889 + $0x164] sm:%s881] %v1068
          %v1070 = vld [vmem:[%s888 + $0x164] sm:%s881]
          %1071 = vst [vmem:[%s889 + $0x168] sm:%s881] %v1070
          %v1072 = vld [vmem:[%s888 + $0x174] sm:%s881]
          %1073 = vst [vmem:[%s889 + $0x16c] sm:%s881] %v1072
          %v1074 = vld [vmem:[%s888 + $0x168] sm:%s881]
          %1075 = vst [vmem:[%s889 + $0x170] sm:%s881] %v1074
          %v1076 = vld [vmem:[%s888 + $0x178] sm:%s881]
          %1077 = vst [vmem:[%s889 + $0x174] sm:%s881] %v1076
          %v1078 = vld [vmem:[%s888 + $0x16c] sm:%s881]
          %1079 = vst [vmem:[%s889 + $0x178] sm:%s881] %v1078
          %v1080 = vld [vmem:[%s888 + $0x17c] sm:%s881]
          %1081 = vst [vmem:[%s889 + $0x17c] sm:%s881] %v1080
          %v1082 = vld [vmem:[%s888 + $0x180] sm:%s881]
          %1083 = vst [vmem:[%s889 + $0x180] sm:%s881] %v1082
          %v1084 = vld [vmem:[%s888 + $0x190] sm:%s881]
          %1085 = vst [vmem:[%s889 + $0x184] sm:%s881] %v1084
          %v1086 = vld [vmem:[%s888 + $0x184] sm:%s881]
          %1087 = vst [vmem:[%s889 + $0x188] sm:%s881] %v1086
          %v1088 = vld [vmem:[%s888 + $0x194] sm:%s881]
          %1089 = vst [vmem:[%s889 + $0x18c] sm:%s881] %v1088
          %v1090 = vld [vmem:[%s888 + $0x188] sm:%s881]
          %1091 = vst [vmem:[%s889 + $0x190] sm:%s881] %v1090
          %v1092 = vld [vmem:[%s888 + $0x198] sm:%s881]
          %1093 = vst [vmem:[%s889 + $0x194] sm:%s881] %v1092
          %v1094 = vld [vmem:[%s888 + $0x18c] sm:%s881]
          %1095 = vst [vmem:[%s889 + $0x198] sm:%s881] %v1094
          %v1096 = vld [vmem:[%s888 + $0x19c] sm:%s881]
          %1097 = vst [vmem:[%s889 + $0x19c] sm:%s881] %v1096
          %v1098 = vld [vmem:[%s888 + $0x1a0] sm:%s881]
          %1099 = vst [vmem:[%s889 + $0x1a0] sm:%s881] %v1098
          %v1100 = vld [vmem:[%s888 + $0x1b0] sm:%s881]
          %1101 = vst [vmem:[%s889 + $0x1a4] sm:%s881] %v1100
          %v1102 = vld [vmem:[%s888 + $0x1a4] sm:%s881]
          %1103 = vst [vmem:[%s889 + $0x1a8] sm:%s881] %v1102
          %v1104 = vld [vmem:[%s888 + $0x1b4] sm:%s881]
          %1105 = vst [vmem:[%s889 + $0x1ac] sm:%s881] %v1104
          %v1106 = vld [vmem:[%s888 + $0x1a8] sm:%s881]
          %1107 = vst [vmem:[%s889 + $0x1b0] sm:%s881] %v1106
          %v1108 = vld [vmem:[%s888 + $0x1b8] sm:%s881]
          %1109 = vst [vmem:[%s889 + $0x1b4] sm:%s881] %v1108
          %v1110 = vld [vmem:[%s888 + $0x1ac] sm:%s881]
          %1111 = vst [vmem:[%s889 + $0x1b8] sm:%s881] %v1110
          %v1112 = vld [vmem:[%s888 + $0x1bc] sm:%s881]
          %1113 = vst [vmem:[%s889 + $0x1bc] sm:%s881] %v1112
          %v1114 = vld [vmem:[%s888 + $0x1c0] sm:%s881]
          %1115 = vst [vmem:[%s889 + $0x1c0] sm:%s881] %v1114
          %v1116 = vld [vmem:[%s888 + $0x1d0] sm:%s881]
          %1117 = vst [vmem:[%s889 + $0x1c4] sm:%s881] %v1116
          %v1118 = vld [vmem:[%s888 + $0x1c4] sm:%s881]
          %1119 = vst [vmem:[%s889 + $0x1c8] sm:%s881] %v1118
          %v1120 = vld [vmem:[%s888 + $0x1d4] sm:%s881]
          %1121 = vst [vmem:[%s889 + $0x1cc] sm:%s881] %v1120
          %v1122 = vld [vmem:[%s888 + $0x1c8] sm:%s881]
          %1123 = vst [vmem:[%s889 + $0x1d0] sm:%s881] %v1122
          %v1124 = vld [vmem:[%s888 + $0x1d8] sm:%s881]
          %1125 = vst [vmem:[%s889 + $0x1d4] sm:%s881] %v1124
          %v1126 = vld [vmem:[%s888 + $0x1cc] sm:%s881]
          %1127 = vst [vmem:[%s889 + $0x1d8] sm:%s881] %v1126
          %v1128 = vld [vmem:[%s888 + $0x1dc] sm:%s881]
          %1129 = vst [vmem:[%s889 + $0x1dc] sm:%s881] %v1128
          %v1130 = vld [vmem:[%s888 + $0x1e0] sm:%s881]
          %1131 = vst [vmem:[%s889 + $0x1e0] sm:%s881] %v1130
          %v1132 = vld [vmem:[%s888 + $0x1f0] sm:%s881]
          %1133 = vst [vmem:[%s889 + $0x1e4] sm:%s881] %v1132
          %v1134 = vld [vmem:[%s888 + $0x1e4] sm:%s881]
          %1135 = vst [vmem:[%s889 + $0x1e8] sm:%s881] %v1134
          %v1136 = vld [vmem:[%s888 + $0x1f4] sm:%s881]
          %1137 = vst [vmem:[%s889 + $0x1ec] sm:%s881] %v1136
          %v1138 = vld [vmem:[%s888 + $0x1e8] sm:%s881]
          %1139 = vst [vmem:[%s889 + $0x1f0] sm:%s881] %v1138
          %v1140 = vld [vmem:[%s888 + $0x1f8] sm:%s881]
          %1141 = vst [vmem:[%s889 + $0x1f4] sm:%s881] %v1140
          %v1142 = vld [vmem:[%s888 + $0x1ec] sm:%s881]
          %1143 = vst [vmem:[%s889 + $0x1f8] sm:%s881] %v1142
          %v1144 = vld [vmem:[%s888 + $0x1fc] sm:%s881]
          %1145 = vst [vmem:[%s889 + $0x1fc] sm:%s881] %v1144
          %v1146 = vld [vmem:[%s888 + $0x200] sm:%s881]
          %1147 = vst [vmem:[%s889 + $0x200] sm:%s881] %v1146
          %v1148 = vld [vmem:[%s888 + $0x210] sm:%s881]
          %1149 = vst [vmem:[%s889 + $0x204] sm:%s881] %v1148
          %v1150 = vld [vmem:[%s888 + $0x204] sm:%s881]
          %1151 = vst [vmem:[%s889 + $0x208] sm:%s881] %v1150
          %v1152 = vld [vmem:[%s888 + $0x214] sm:%s881]
          %1153 = vst [vmem:[%s889 + $0x20c] sm:%s881] %v1152
          %v1154 = vld [vmem:[%s888 + $0x208] sm:%s881]
          %1155 = vst [vmem:[%s889 + $0x210] sm:%s881] %v1154
          %v1156 = vld [vmem:[%s888 + $0x218] sm:%s881]
          %1157 = vst [vmem:[%s889 + $0x214] sm:%s881] %v1156
          %v1158 = vld [vmem:[%s888 + $0x20c] sm:%s881]
          %1159 = vst [vmem:[%s889 + $0x218] sm:%s881] %v1158
          %v1160 = vld [vmem:[%s888 + $0x21c] sm:%s881]
          %1161 = vst [vmem:[%s889 + $0x21c] sm:%s881] %v1160
          %v1162 = vld [vmem:[%s888 + $0x220] sm:%s881]
          %1163 = vst [vmem:[%s889 + $0x220] sm:%s881] %v1162
          %v1164 = vld [vmem:[%s888 + $0x230] sm:%s881]
          %1165 = vst [vmem:[%s889 + $0x224] sm:%s881] %v1164
          %v1166 = vld [vmem:[%s888 + $0x224] sm:%s881]
          %1167 = vst [vmem:[%s889 + $0x228] sm:%s881] %v1166
          %v1168 = vld [vmem:[%s888 + $0x234] sm:%s881]
          %1169 = vst [vmem:[%s889 + $0x22c] sm:%s881] %v1168
          %v1170 = vld [vmem:[%s888 + $0x228] sm:%s881]
          %1171 = vst [vmem:[%s889 + $0x230] sm:%s881] %v1170
          %v1172 = vld [vmem:[%s888 + $0x238] sm:%s881]
          %1173 = vst [vmem:[%s889 + $0x234] sm:%s881] %v1172
          %v1174 = vld [vmem:[%s888 + $0x22c] sm:%s881]
          %1175 = vst [vmem:[%s889 + $0x238] sm:%s881] %v1174
          %v1176 = vld [vmem:[%s888 + $0x23c] sm:%s881]
          %1177 = vst [vmem:[%s889 + $0x23c] sm:%s881] %v1176
          %v1178 = vld [vmem:[%s888 + $0x240] sm:%s881]
          %1179 = vst [vmem:[%s889 + $0x240] sm:%s881] %v1178
          %v1180 = vld [vmem:[%s888 + $0x250] sm:%s881]
          %1181 = vst [vmem:[%s889 + $0x244] sm:%s881] %v1180
          %v1182 = vld [vmem:[%s888 + $0x244] sm:%s881]
          %1183 = vst [vmem:[%s889 + $0x248] sm:%s881] %v1182
          %v1184 = vld [vmem:[%s888 + $0x254] sm:%s881]
          %1185 = vst [vmem:[%s889 + $0x24c] sm:%s881] %v1184
          %v1186 = vld [vmem:[%s888 + $0x248] sm:%s881]
          %1187 = vst [vmem:[%s889 + $0x250] sm:%s881] %v1186
          %v1188 = vld [vmem:[%s888 + $0x258] sm:%s881]
          %1189 = vst [vmem:[%s889 + $0x254] sm:%s881] %v1188
          %v1190 = vld [vmem:[%s888 + $0x24c] sm:%s881]
          %1191 = vst [vmem:[%s889 + $0x258] sm:%s881] %v1190
          %v1192 = vld [vmem:[%s888 + $0x25c] sm:%s881]
          %1193 = vst [vmem:[%s889 + $0x25c] sm:%s881] %v1192
          %v1194 = vld [vmem:[%s888 + $0x260] sm:%s881]
          %1195 = vst [vmem:[%s889 + $0x260] sm:%s881] %v1194
          %v1196 = vld [vmem:[%s888 + $0x270] sm:%s881]
          %1197 = vst [vmem:[%s889 + $0x264] sm:%s881] %v1196
          %v1198 = vld [vmem:[%s888 + $0x264] sm:%s881]
          %1199 = vst [vmem:[%s889 + $0x268] sm:%s881] %v1198
          %v1200 = vld [vmem:[%s888 + $0x274] sm:%s881]
          %1201 = vst [vmem:[%s889 + $0x26c] sm:%s881] %v1200
          %v1202 = vld [vmem:[%s888 + $0x268] sm:%s881]
          %1203 = vst [vmem:[%s889 + $0x270] sm:%s881] %v1202
          %v1204 = vld [vmem:[%s888 + $0x278] sm:%s881]
          %1205 = vst [vmem:[%s889 + $0x274] sm:%s881] %v1204
          %v1206 = vld [vmem:[%s888 + $0x26c] sm:%s881]
          %1207 = vst [vmem:[%s889 + $0x278] sm:%s881] %v1206
          %v1208 = vld [vmem:[%s888 + $0x27c] sm:%s881]
          %1209 = vst [vmem:[%s889 + $0x27c] sm:%s881] %v1208
          %v1210 = vld [vmem:[%s888 + $0x280] sm:%s881]
          %1211 = vst [vmem:[%s889 + $0x280] sm:%s881] %v1210
          %v1212 = vld [vmem:[%s888 + $0x290] sm:%s881]
          %1213 = vst [vmem:[%s889 + $0x284] sm:%s881] %v1212
          %v1214 = vld [vmem:[%s888 + $0x284] sm:%s881]
          %1215 = vst [vmem:[%s889 + $0x288] sm:%s881] %v1214
          %v1216 = vld [vmem:[%s888 + $0x294] sm:%s881]
          %1217 = vst [vmem:[%s889 + $0x28c] sm:%s881] %v1216
          %v1218 = vld [vmem:[%s888 + $0x288] sm:%s881]
          %1219 = vst [vmem:[%s889 + $0x290] sm:%s881] %v1218
          %v1220 = vld [vmem:[%s888 + $0x298] sm:%s881]
          %1221 = vst [vmem:[%s889 + $0x294] sm:%s881] %v1220
          %v1222 = vld [vmem:[%s888 + $0x28c] sm:%s881]
          %1223 = vst [vmem:[%s889 + $0x298] sm:%s881] %v1222
          %v1224 = vld [vmem:[%s888 + $0x29c] sm:%s881]
          %1225 = vst [vmem:[%s889 + $0x29c] sm:%s881] %v1224
          %v1226 = vld [vmem:[%s888 + $0x2a0] sm:%s881]
          %1227 = vst [vmem:[%s889 + $0x2a0] sm:%s881] %v1226
          %v1228 = vld [vmem:[%s888 + $0x2b0] sm:%s881]
          %1229 = vst [vmem:[%s889 + $0x2a4] sm:%s881] %v1228
          %v1230 = vld [vmem:[%s888 + $0x2a4] sm:%s881]
          %1231 = vst [vmem:[%s889 + $0x2a8] sm:%s881] %v1230
          %v1232 = vld [vmem:[%s888 + $0x2b4] sm:%s881]
          %1233 = vst [vmem:[%s889 + $0x2ac] sm:%s881] %v1232
          %v1234 = vld [vmem:[%s888 + $0x2a8] sm:%s881]
          %1235 = vst [vmem:[%s889 + $0x2b0] sm:%s881] %v1234
          %v1236 = vld [vmem:[%s888 + $0x2b8] sm:%s881]
          %1237 = vst [vmem:[%s889 + $0x2b4] sm:%s881] %v1236
          %v1238 = vld [vmem:[%s888 + $0x2ac] sm:%s881]
          %1239 = vst [vmem:[%s889 + $0x2b8] sm:%s881] %v1238
          %v1240 = vld [vmem:[%s888 + $0x2bc] sm:%s881]
          %1241 = vst [vmem:[%s889 + $0x2bc] sm:%s881] %v1240
          %v1242 = vld [vmem:[%s888 + $0x2c0] sm:%s881]
          %1243 = vst [vmem:[%s889 + $0x2c0] sm:%s881] %v1242
          %v1244 = vld [vmem:[%s888 + $0x2d0] sm:%s881]
          %1245 = vst [vmem:[%s889 + $0x2c4] sm:%s881] %v1244
          %v1246 = vld [vmem:[%s888 + $0x2c4] sm:%s881]
          %1247 = vst [vmem:[%s889 + $0x2c8] sm:%s881] %v1246
          %v1248 = vld [vmem:[%s888 + $0x2d4] sm:%s881]
          %1249 = vst [vmem:[%s889 + $0x2cc] sm:%s881] %v1248
          %v1250 = vld [vmem:[%s888 + $0x2c8] sm:%s881]
          %1251 = vst [vmem:[%s889 + $0x2d0] sm:%s881] %v1250
          %v1252 = vld [vmem:[%s888 + $0x2d8] sm:%s881]
          %1253 = vst [vmem:[%s889 + $0x2d4] sm:%s881] %v1252
          %v1254 = vld [vmem:[%s888 + $0x2cc] sm:%s881]
          %1255 = vst [vmem:[%s889 + $0x2d8] sm:%s881] %v1254
          %v1256 = vld [vmem:[%s888 + $0x2dc] sm:%s881]
          %1257 = vst [vmem:[%s889 + $0x2dc] sm:%s881] %v1256
          %v1258 = vld [vmem:[%s888 + $0x2e0] sm:%s881]
          %1259 = vst [vmem:[%s889 + $0x2e0] sm:%s881] %v1258
          %v1260 = vld [vmem:[%s888 + $0x2f0] sm:%s881]
          %1261 = vst [vmem:[%s889 + $0x2e4] sm:%s881] %v1260
          %v1262 = vld [vmem:[%s888 + $0x2e4] sm:%s881]
          %1263 = vst [vmem:[%s889 + $0x2e8] sm:%s881] %v1262
          %v1264 = vld [vmem:[%s888 + $0x2f4] sm:%s881]
          %1265 = vst [vmem:[%s889 + $0x2ec] sm:%s881] %v1264
          %v1266 = vld [vmem:[%s888 + $0x2e8] sm:%s881]
          %1267 = vst [vmem:[%s889 + $0x2f0] sm:%s881] %v1266
          %v1268 = vld [vmem:[%s888 + $0x2f8] sm:%s881]
          %1269 = vst [vmem:[%s889 + $0x2f4] sm:%s881] %v1268
          %v1270 = vld [vmem:[%s888 + $0x2ec] sm:%s881]
          %1271 = vst [vmem:[%s889 + $0x2f8] sm:%s881] %v1270
          %v1272 = vld [vmem:[%s888 + $0x2fc] sm:%s881]
          %1273 = vst [vmem:[%s889 + $0x2fc] sm:%s881] %v1272
          %v1274 = vld [vmem:[%s888 + $0x300] sm:%s881]
          %1275 = vst [vmem:[%s889 + $0x300] sm:%s881] %v1274
          %v1276 = vld [vmem:[%s888 + $0x310] sm:%s881]
          %1277 = vst [vmem:[%s889 + $0x304] sm:%s881] %v1276
          %v1278 = vld [vmem:[%s888 + $0x304] sm:%s881]
          %1279 = vst [vmem:[%s889 + $0x308] sm:%s881] %v1278
          %v1280 = vld [vmem:[%s888 + $0x314] sm:%s881]
          %1281 = vst [vmem:[%s889 + $0x30c] sm:%s881] %v1280
          %v1282 = vld [vmem:[%s888 + $0x308] sm:%s881]
          %1283 = vst [vmem:[%s889 + $0x310] sm:%s881] %v1282
          %v1284 = vld [vmem:[%s888 + $0x318] sm:%s881]
          %1285 = vst [vmem:[%s889 + $0x314] sm:%s881] %v1284
          %v1286 = vld [vmem:[%s888 + $0x30c] sm:%s881]
          %1287 = vst [vmem:[%s889 + $0x318] sm:%s881] %v1286
          %v1288 = vld [vmem:[%s888 + $0x31c] sm:%s881]
          %1289 = vst [vmem:[%s889 + $0x31c] sm:%s881] %v1288
          %v1290 = vld [vmem:[%s888 + $0x320] sm:%s881]
          %1291 = vst [vmem:[%s889 + $0x320] sm:%s881] %v1290
          %v1292 = vld [vmem:[%s888 + $0x330] sm:%s881]
          %1293 = vst [vmem:[%s889 + $0x324] sm:%s881] %v1292
          %v1294 = vld [vmem:[%s888 + $0x324] sm:%s881]
          %1295 = vst [vmem:[%s889 + $0x328] sm:%s881] %v1294
          %v1296 = vld [vmem:[%s888 + $0x334] sm:%s881]
          %1297 = vst [vmem:[%s889 + $0x32c] sm:%s881] %v1296
          %v1298 = vld [vmem:[%s888 + $0x328] sm:%s881]
          %1299 = vst [vmem:[%s889 + $0x330] sm:%s881] %v1298
          %v1300 = vld [vmem:[%s888 + $0x338] sm:%s881]
          %1301 = vst [vmem:[%s889 + $0x334] sm:%s881] %v1300
          %v1302 = vld [vmem:[%s888 + $0x32c] sm:%s881]
          %1303 = vst [vmem:[%s889 + $0x338] sm:%s881] %v1302
          %v1304 = vld [vmem:[%s888 + $0x33c] sm:%s881]
          %1305 = vst [vmem:[%s889 + $0x33c] sm:%s881] %v1304
          %v1306 = vld [vmem:[%s888 + $0x340] sm:%s881]
          %1307 = vst [vmem:[%s889 + $0x340] sm:%s881] %v1306
          %v1308 = vld [vmem:[%s888 + $0x350] sm:%s881]
          %1309 = vst [vmem:[%s889 + $0x344] sm:%s881] %v1308
          %v1310 = vld [vmem:[%s888 + $0x344] sm:%s881]
          %1311 = vst [vmem:[%s889 + $0x348] sm:%s881] %v1310
          %v1312 = vld [vmem:[%s888 + $0x354] sm:%s881]
          %1313 = vst [vmem:[%s889 + $0x34c] sm:%s881] %v1312
          %v1314 = vld [vmem:[%s888 + $0x348] sm:%s881]
          %1315 = vst [vmem:[%s889 + $0x350] sm:%s881] %v1314
          %v1316 = vld [vmem:[%s888 + $0x358] sm:%s881]
          %1317 = vst [vmem:[%s889 + $0x354] sm:%s881] %v1316
          %v1318 = vld [vmem:[%s888 + $0x34c] sm:%s881]
          %1319 = vst [vmem:[%s889 + $0x358] sm:%s881] %v1318
          %v1320 = vld [vmem:[%s888 + $0x35c] sm:%s881]
          %1321 = vst [vmem:[%s889 + $0x35c] sm:%s881] %v1320
          %v1322 = vld [vmem:[%s888 + $0x360] sm:%s881]
          %1323 = vst [vmem:[%s889 + $0x360] sm:%s881] %v1322
          %v1324 = vld [vmem:[%s888 + $0x370] sm:%s881]
          %1325 = vst [vmem:[%s889 + $0x364] sm:%s881] %v1324
          %v1326 = vld [vmem:[%s888 + $0x364] sm:%s881]
          %1327 = vst [vmem:[%s889 + $0x368] sm:%s881] %v1326
          %v1328 = vld [vmem:[%s888 + $0x374] sm:%s881]
          %1329 = vst [vmem:[%s889 + $0x36c] sm:%s881] %v1328
          %v1330 = vld [vmem:[%s888 + $0x368] sm:%s881]
          %1331 = vst [vmem:[%s889 + $0x370] sm:%s881] %v1330
          %v1332 = vld [vmem:[%s888 + $0x378] sm:%s881]
          %1333 = vst [vmem:[%s889 + $0x374] sm:%s881] %v1332
          %v1334 = vld [vmem:[%s888 + $0x36c] sm:%s881]
          %1335 = vst [vmem:[%s889 + $0x378] sm:%s881] %v1334
          %v1336 = vld [vmem:[%s888 + $0x37c] sm:%s881]
          %1337 = vst [vmem:[%s889 + $0x37c] sm:%s881] %v1336
          %v1338 = vld [vmem:[%s888 + $0x380] sm:%s881]
          %1339 = vst [vmem:[%s889 + $0x380] sm:%s881] %v1338
          %v1340 = vld [vmem:[%s888 + $0x390] sm:%s881]
          %1341 = vst [vmem:[%s889 + $0x384] sm:%s881] %v1340
          %v1342 = vld [vmem:[%s888 + $0x384] sm:%s881]
          %1343 = vst [vmem:[%s889 + $0x388] sm:%s881] %v1342
          %v1344 = vld [vmem:[%s888 + $0x394] sm:%s881]
          %1345 = vst [vmem:[%s889 + $0x38c] sm:%s881] %v1344
          %v1346 = vld [vmem:[%s888 + $0x388] sm:%s881]
          %1347 = vst [vmem:[%s889 + $0x390] sm:%s881] %v1346
          %v1348 = vld [vmem:[%s888 + $0x398] sm:%s881]
          %1349 = vst [vmem:[%s889 + $0x394] sm:%s881] %v1348
          %v1350 = vld [vmem:[%s888 + $0x38c] sm:%s881]
          %1351 = vst [vmem:[%s889 + $0x398] sm:%s881] %v1350
          %v1352 = vld [vmem:[%s888 + $0x39c] sm:%s881]
          %1353 = vst [vmem:[%s889 + $0x39c] sm:%s881] %v1352
          %v1354 = vld [vmem:[%s888 + $0x3a0] sm:%s881]
          %1355 = vst [vmem:[%s889 + $0x3a0] sm:%s881] %v1354
          %v1356 = vld [vmem:[%s888 + $0x3b0] sm:%s881]
          %1357 = vst [vmem:[%s889 + $0x3a4] sm:%s881] %v1356
          %v1358 = vld [vmem:[%s888 + $0x3a4] sm:%s881]
          %1359 = vst [vmem:[%s889 + $0x3a8] sm:%s881] %v1358
          %v1360 = vld [vmem:[%s888 + $0x3b4] sm:%s881]
          %1361 = vst [vmem:[%s889 + $0x3ac] sm:%s881] %v1360
          %v1362 = vld [vmem:[%s888 + $0x3a8] sm:%s881]
          %1363 = vst [vmem:[%s889 + $0x3b0] sm:%s881] %v1362
          %v1364 = vld [vmem:[%s888 + $0x3b8] sm:%s881]
          %1365 = vst [vmem:[%s889 + $0x3b4] sm:%s881] %v1364
          %v1366 = vld [vmem:[%s888 + $0x3ac] sm:%s881]
          %1367 = vst [vmem:[%s889 + $0x3b8] sm:%s881] %v1366
          %v1368 = vld [vmem:[%s888 + $0x3bc] sm:%s881]
          %1369 = vst [vmem:[%s889 + $0x3bc] sm:%s881] %v1368
          %v1370 = vld [vmem:[%s888 + $0x3c0] sm:%s881]
          %1371 = vst [vmem:[%s889 + $0x3c0] sm:%s881] %v1370
          %v1372 = vld [vmem:[%s888 + $0x3d0] sm:%s881]
          %1373 = vst [vmem:[%s889 + $0x3c4] sm:%s881] %v1372
          %v1374 = vld [vmem:[%s888 + $0x3c4] sm:%s881]
          %1375 = vst [vmem:[%s889 + $0x3c8] sm:%s881] %v1374
          %v1376 = vld [vmem:[%s888 + $0x3d4] sm:%s881]
          %1377 = vst [vmem:[%s889 + $0x3cc] sm:%s881] %v1376
          %v1378 = vld [vmem:[%s888 + $0x3c8] sm:%s881]
          %1379 = vst [vmem:[%s889 + $0x3d0] sm:%s881] %v1378
          %v1380 = vld [vmem:[%s888 + $0x3d8] sm:%s881]
          %1381 = vst [vmem:[%s889 + $0x3d4] sm:%s881] %v1380
          %v1382 = vld [vmem:[%s888 + $0x3cc] sm:%s881]
          %1383 = vst [vmem:[%s889 + $0x3d8] sm:%s881] %v1382
          %v1384 = vld [vmem:[%s888 + $0x3dc] sm:%s881]
          %1385 = vst [vmem:[%s889 + $0x3dc] sm:%s881] %v1384
          %v1386 = vld [vmem:[%s888 + $0x3e0] sm:%s881]
          %1387 = vst [vmem:[%s889 + $0x3e0] sm:%s881] %v1386
          %v1388 = vld [vmem:[%s888 + $0x3f0] sm:%s881]
          %1389 = vst [vmem:[%s889 + $0x3e4] sm:%s881] %v1388
          %v1390 = vld [vmem:[%s888 + $0x3e4] sm:%s881]
          %1391 = vst [vmem:[%s889 + $0x3e8] sm:%s881] %v1390
          %v1392 = vld [vmem:[%s888 + $0x3f4] sm:%s881]
          %1393 = vst [vmem:[%s889 + $0x3ec] sm:%s881] %v1392
          %v1394 = vld [vmem:[%s888 + $0x3e8] sm:%s881]
          %1395 = vst [vmem:[%s889 + $0x3f0] sm:%s881] %v1394
          %v1396 = vld [vmem:[%s888 + $0x3f8] sm:%s881]
          %1397 = vst [vmem:[%s889 + $0x3f4] sm:%s881] %v1396
          %v1398 = vld [vmem:[%s888 + $0x3ec] sm:%s881]
          %1399 = vst [vmem:[%s889 + $0x3f8] sm:%s881] %v1398
          %v1400 = vld [vmem:[%s888 + $0x3fc] sm:%s881]
          %1401 = vst [vmem:[%s889 + $0x3fc] sm:%s881] %v1400
          %v1402 = vld [vmem:[%s888 + $0x400] sm:%s881]
          %1403 = vst [vmem:[%s889 + $0x400] sm:%s881] %v1402
          %v1404 = vld [vmem:[%s888 + $0x410] sm:%s881]
          %1405 = vst [vmem:[%s889 + $0x404] sm:%s881] %v1404
          %v1406 = vld [vmem:[%s888 + $0x404] sm:%s881]
          %1407 = vst [vmem:[%s889 + $0x408] sm:%s881] %v1406
          %v1408 = vld [vmem:[%s888 + $0x414] sm:%s881]
          %1409 = vst [vmem:[%s889 + $0x40c] sm:%s881] %v1408
          %v1410 = vld [vmem:[%s888 + $0x408] sm:%s881]
          %1411 = vst [vmem:[%s889 + $0x410] sm:%s881] %v1410
          %v1412 = vld [vmem:[%s888 + $0x418] sm:%s881]
          %1413 = vst [vmem:[%s889 + $0x414] sm:%s881] %v1412
          %v1414 = vld [vmem:[%s888 + $0x40c] sm:%s881]
          %1415 = vst [vmem:[%s889 + $0x418] sm:%s881] %v1414
          %v1416 = vld [vmem:[%s888 + $0x41c] sm:%s881]
          %1417 = vst [vmem:[%s889 + $0x41c] sm:%s881] %v1416
          %v1418 = vld [vmem:[%s888 + $0x420] sm:%s881]
          %1419 = vst [vmem:[%s889 + $0x420] sm:%s881] %v1418
          %v1420 = vld [vmem:[%s888 + $0x430] sm:%s881]
          %1421 = vst [vmem:[%s889 + $0x424] sm:%s881] %v1420
          %v1422 = vld [vmem:[%s888 + $0x424] sm:%s881]
          %1423 = vst [vmem:[%s889 + $0x428] sm:%s881] %v1422
          %v1424 = vld [vmem:[%s888 + $0x434] sm:%s881]
          %1425 = vst [vmem:[%s889 + $0x42c] sm:%s881] %v1424
          %v1426 = vld [vmem:[%s888 + $0x428] sm:%s881]
          %1427 = vst [vmem:[%s889 + $0x430] sm:%s881] %v1426
          %v1428 = vld [vmem:[%s888 + $0x438] sm:%s881]
          %1429 = vst [vmem:[%s889 + $0x434] sm:%s881] %v1428
          %v1430 = vld [vmem:[%s888 + $0x42c] sm:%s881]
          %1431 = vst [vmem:[%s889 + $0x438] sm:%s881] %v1430
          %v1432 = vld [vmem:[%s888 + $0x43c] sm:%s881]
          %1433 = vst [vmem:[%s889 + $0x43c] sm:%s881] %v1432
          %v1434 = vld [vmem:[%s888 + $0x440] sm:%s881]
          %1435 = vst [vmem:[%s889 + $0x440] sm:%s881] %v1434
          %v1436 = vld [vmem:[%s888 + $0x450] sm:%s881]
          %1437 = vst [vmem:[%s889 + $0x444] sm:%s881] %v1436
          %v1438 = vld [vmem:[%s888 + $0x444] sm:%s881]
          %1439 = vst [vmem:[%s889 + $0x448] sm:%s881] %v1438
          %v1440 = vld [vmem:[%s888 + $0x454] sm:%s881]
          %1441 = vst [vmem:[%s889 + $0x44c] sm:%s881] %v1440
          %v1442 = vld [vmem:[%s888 + $0x448] sm:%s881]
          %1443 = vst [vmem:[%s889 + $0x450] sm:%s881] %v1442
          %v1444 = vld [vmem:[%s888 + $0x458] sm:%s881]
          %1445 = vst [vmem:[%s889 + $0x454] sm:%s881] %v1444
          %v1446 = vld [vmem:[%s888 + $0x44c] sm:%s881]
          %1447 = vst [vmem:[%s889 + $0x458] sm:%s881] %v1446
          %v1448 = vld [vmem:[%s888 + $0x45c] sm:%s881]
          %1449 = vst [vmem:[%s889 + $0x45c] sm:%s881] %v1448
          %v1450 = vld [vmem:[%s888 + $0x460] sm:%s881]
          %1451 = vst [vmem:[%s889 + $0x460] sm:%s881] %v1450
          %v1452 = vld [vmem:[%s888 + $0x470] sm:%s881]
          %1453 = vst [vmem:[%s889 + $0x464] sm:%s881] %v1452
          %v1454 = vld [vmem:[%s888 + $0x464] sm:%s881]
          %1455 = vst [vmem:[%s889 + $0x468] sm:%s881] %v1454
          %v1456 = vld [vmem:[%s888 + $0x474] sm:%s881]
          %1457 = vst [vmem:[%s889 + $0x46c] sm:%s881] %v1456
          %v1458 = vld [vmem:[%s888 + $0x468] sm:%s881]
          %1459 = vst [vmem:[%s889 + $0x470] sm:%s881] %v1458
          %v1460 = vld [vmem:[%s888 + $0x478] sm:%s881]
          %1461 = vst [vmem:[%s889 + $0x474] sm:%s881] %v1460
          %v1462 = vld [vmem:[%s888 + $0x46c] sm:%s881]
          %1463 = vst [vmem:[%s889 + $0x478] sm:%s881] %v1462
          %v1464 = vld [vmem:[%s888 + $0x47c] sm:%s881]
          %1465 = vst [vmem:[%s889 + $0x47c] sm:%s881] %v1464
          %v1466 = vld [vmem:[%s888 + $0x480] sm:%s881]
          %1467 = vst [vmem:[%s889 + $0x480] sm:%s881] %v1466
          %v1468 = vld [vmem:[%s888 + $0x490] sm:%s881]
          %1469 = vst [vmem:[%s889 + $0x484] sm:%s881] %v1468
          %v1470 = vld [vmem:[%s888 + $0x484] sm:%s881]
          %1471 = vst [vmem:[%s889 + $0x488] sm:%s881] %v1470
          %v1472 = vld [vmem:[%s888 + $0x494] sm:%s881]
          %1473 = vst [vmem:[%s889 + $0x48c] sm:%s881] %v1472
          %v1474 = vld [vmem:[%s888 + $0x488] sm:%s881]
          %1475 = vst [vmem:[%s889 + $0x490] sm:%s881] %v1474
          %v1476 = vld [vmem:[%s888 + $0x498] sm:%s881]
          %1477 = vst [vmem:[%s889 + $0x494] sm:%s881] %v1476
          %v1478 = vld [vmem:[%s888 + $0x48c] sm:%s881]
          %1479 = vst [vmem:[%s889 + $0x498] sm:%s881] %v1478
          %v1480 = vld [vmem:[%s888 + $0x49c] sm:%s881]
          %1481 = vst [vmem:[%s889 + $0x49c] sm:%s881] %v1480
          %v1482 = vld [vmem:[%s888 + $0x4a0] sm:%s881]
          %1483 = vst [vmem:[%s889 + $0x4a0] sm:%s881] %v1482
          %v1484 = vld [vmem:[%s888 + $0x4b0] sm:%s881]
          %1485 = vst [vmem:[%s889 + $0x4a4] sm:%s881] %v1484
          %v1486 = vld [vmem:[%s888 + $0x4a4] sm:%s881]
          %1487 = vst [vmem:[%s889 + $0x4a8] sm:%s881] %v1486
          %v1488 = vld [vmem:[%s888 + $0x4b4] sm:%s881]
          %1489 = vst [vmem:[%s889 + $0x4ac] sm:%s881] %v1488
          %v1490 = vld [vmem:[%s888 + $0x4a8] sm:%s881]
          %1491 = vst [vmem:[%s889 + $0x4b0] sm:%s881] %v1490
          %v1492 = vld [vmem:[%s888 + $0x4b8] sm:%s881]
          %1493 = vst [vmem:[%s889 + $0x4b4] sm:%s881] %v1492
          %v1494 = vld [vmem:[%s888 + $0x4ac] sm:%s881]
          %1495 = vst [vmem:[%s889 + $0x4b8] sm:%s881] %v1494
          %v1496 = vld [vmem:[%s888 + $0x4bc] sm:%s881]
          %1497 = vst [vmem:[%s889 + $0x4bc] sm:%s881] %v1496
          %v1498 = vld [vmem:[%s888 + $0x4c0] sm:%s881]
          %1499 = vst [vmem:[%s889 + $0x4c0] sm:%s881] %v1498
          %v1500 = vld [vmem:[%s888 + $0x4d0] sm:%s881]
          %1501 = vst [vmem:[%s889 + $0x4c4] sm:%s881] %v1500
          %v1502 = vld [vmem:[%s888 + $0x4c4] sm:%s881]
          %1503 = vst [vmem:[%s889 + $0x4c8] sm:%s881] %v1502
          %v1504 = vld [vmem:[%s888 + $0x4d4] sm:%s881]
          %1505 = vst [vmem:[%s889 + $0x4cc] sm:%s881] %v1504
          %v1506 = vld [vmem:[%s888 + $0x4c8] sm:%s881]
          %1507 = vst [vmem:[%s889 + $0x4d0] sm:%s881] %v1506
          %v1508 = vld [vmem:[%s888 + $0x4d8] sm:%s881]
          %1509 = vst [vmem:[%s889 + $0x4d4] sm:%s881] %v1508
          %v1510 = vld [vmem:[%s888 + $0x4cc] sm:%s881]
          %1511 = vst [vmem:[%s889 + $0x4d8] sm:%s881] %v1510
          %v1512 = vld [vmem:[%s888 + $0x4dc] sm:%s881]
          %1513 = vst [vmem:[%s889 + $0x4dc] sm:%s881] %v1512
          %v1514 = vld [vmem:[%s888 + $0x4e0] sm:%s881]
          %1515 = vst [vmem:[%s889 + $0x4e0] sm:%s881] %v1514
          %v1516 = vld [vmem:[%s888 + $0x4f0] sm:%s881]
          %1517 = vst [vmem:[%s889 + $0x4e4] sm:%s881] %v1516
          %v1518 = vld [vmem:[%s888 + $0x4e4] sm:%s881]
          %1519 = vst [vmem:[%s889 + $0x4e8] sm:%s881] %v1518
          %v1520 = vld [vmem:[%s888 + $0x4f4] sm:%s881]
          %1521 = vst [vmem:[%s889 + $0x4ec] sm:%s881] %v1520
          %v1522 = vld [vmem:[%s888 + $0x4e8] sm:%s881]
          %1523 = vst [vmem:[%s889 + $0x4f0] sm:%s881] %v1522
          %v1524 = vld [vmem:[%s888 + $0x4f8] sm:%s881]
          %1525 = vst [vmem:[%s889 + $0x4f4] sm:%s881] %v1524
          %v1526 = vld [vmem:[%s888 + $0x4ec] sm:%s881]
          %1527 = vst [vmem:[%s889 + $0x4f8] sm:%s881] %v1526
          %v1528 = vld [vmem:[%s888 + $0x4fc] sm:%s881]
          %1529 = vst [vmem:[%s889 + $0x4fc] sm:%s881] %v1528
          %v1530 = vld [vmem:[%s888 + $0x500] sm:%s881]
          %1531 = vst [vmem:[%s889 + $0x500] sm:%s881] %v1530
          %v1532 = vld [vmem:[%s888 + $0x510] sm:%s881]
          %1533 = vst [vmem:[%s889 + $0x504] sm:%s881] %v1532
          %v1534 = vld [vmem:[%s888 + $0x504] sm:%s881]
          %1535 = vst [vmem:[%s889 + $0x508] sm:%s881] %v1534
          %v1536 = vld [vmem:[%s888 + $0x514] sm:%s881]
          %1537 = vst [vmem:[%s889 + $0x50c] sm:%s881] %v1536
          %v1538 = vld [vmem:[%s888 + $0x508] sm:%s881]
          %1539 = vst [vmem:[%s889 + $0x510] sm:%s881] %v1538
          %v1540 = vld [vmem:[%s888 + $0x518] sm:%s881]
          %1541 = vst [vmem:[%s889 + $0x514] sm:%s881] %v1540
          %v1542 = vld [vmem:[%s888 + $0x50c] sm:%s881]
          %1543 = vst [vmem:[%s889 + $0x518] sm:%s881] %v1542
          %v1544 = vld [vmem:[%s888 + $0x51c] sm:%s881]
          %1545 = vst [vmem:[%s889 + $0x51c] sm:%s881] %v1544
          %v1546 = vld [vmem:[%s888 + $0x520] sm:%s881]
          %1547 = vst [vmem:[%s889 + $0x520] sm:%s881] %v1546
          %v1548 = vld [vmem:[%s888 + $0x530] sm:%s881]
          %1549 = vst [vmem:[%s889 + $0x524] sm:%s881] %v1548
          %v1550 = vld [vmem:[%s888 + $0x524] sm:%s881]
          %1551 = vst [vmem:[%s889 + $0x528] sm:%s881] %v1550
          %v1552 = vld [vmem:[%s888 + $0x534] sm:%s881]
          %1553 = vst [vmem:[%s889 + $0x52c] sm:%s881] %v1552
          %v1554 = vld [vmem:[%s888 + $0x528] sm:%s881]
          %1555 = vst [vmem:[%s889 + $0x530] sm:%s881] %v1554
          %v1556 = vld [vmem:[%s888 + $0x538] sm:%s881]
          %1557 = vst [vmem:[%s889 + $0x534] sm:%s881] %v1556
          %v1558 = vld [vmem:[%s888 + $0x52c] sm:%s881]
          %1559 = vst [vmem:[%s889 + $0x538] sm:%s881] %v1558
          %v1560 = vld [vmem:[%s888 + $0x53c] sm:%s881]
          %1561 = vst [vmem:[%s889 + $0x53c] sm:%s881] %v1560
          %v1562 = vld [vmem:[%s888 + $0x540] sm:%s881]
          %1563 = vst [vmem:[%s889 + $0x540] sm:%s881] %v1562
          %v1564 = vld [vmem:[%s888 + $0x550] sm:%s881]
          %1565 = vst [vmem:[%s889 + $0x544] sm:%s881] %v1564
          %v1566 = vld [vmem:[%s888 + $0x544] sm:%s881]
          %1567 = vst [vmem:[%s889 + $0x548] sm:%s881] %v1566
          %v1568 = vld [vmem:[%s888 + $0x554] sm:%s881]
          %1569 = vst [vmem:[%s889 + $0x54c] sm:%s881] %v1568
          %v1570 = vld [vmem:[%s888 + $0x548] sm:%s881]
          %1571 = vst [vmem:[%s889 + $0x550] sm:%s881] %v1570
          %v1572 = vld [vmem:[%s888 + $0x558] sm:%s881]
          %1573 = vst [vmem:[%s889 + $0x554] sm:%s881] %v1572
          %v1574 = vld [vmem:[%s888 + $0x54c] sm:%s881]
          %1575 = vst [vmem:[%s889 + $0x558] sm:%s881] %v1574
          %v1576 = vld [vmem:[%s888 + $0x55c] sm:%s881]
          %1577 = vst [vmem:[%s889 + $0x55c] sm:%s881] %v1576
          %v1578 = vld [vmem:[%s888 + $0x560] sm:%s881]
          %1579 = vst [vmem:[%s889 + $0x560] sm:%s881] %v1578
          %v1580 = vld [vmem:[%s888 + $0x570] sm:%s881]
          %1581 = vst [vmem:[%s889 + $0x564] sm:%s881] %v1580
          %v1582 = vld [vmem:[%s888 + $0x564] sm:%s881]
          %1583 = vst [vmem:[%s889 + $0x568] sm:%s881] %v1582
          %v1584 = vld [vmem:[%s888 + $0x574] sm:%s881]
          %1585 = vst [vmem:[%s889 + $0x56c] sm:%s881] %v1584
          %v1586 = vld [vmem:[%s888 + $0x568] sm:%s881]
          %1587 = vst [vmem:[%s889 + $0x570] sm:%s881] %v1586
          %v1588 = vld [vmem:[%s888 + $0x578] sm:%s881]
          %1589 = vst [vmem:[%s889 + $0x574] sm:%s881] %v1588
          %v1590 = vld [vmem:[%s888 + $0x56c] sm:%s881]
          %1591 = vst [vmem:[%s889 + $0x578] sm:%s881] %v1590
          %v1592 = vld [vmem:[%s888 + $0x57c] sm:%s881]
          %1593 = vst [vmem:[%s889 + $0x57c] sm:%s881] %v1592
          %v1594 = vld [vmem:[%s888 + $0x580] sm:%s881]
          %1595 = vst [vmem:[%s889 + $0x580] sm:%s881] %v1594
          %v1596 = vld [vmem:[%s888 + $0x590] sm:%s881]
          %1597 = vst [vmem:[%s889 + $0x584] sm:%s881] %v1596
          %v1598 = vld [vmem:[%s888 + $0x584] sm:%s881]
          %1599 = vst [vmem:[%s889 + $0x588] sm:%s881] %v1598
          %v1600 = vld [vmem:[%s888 + $0x594] sm:%s881]
          %1601 = vst [vmem:[%s889 + $0x58c] sm:%s881] %v1600
          %v1602 = vld [vmem:[%s888 + $0x588] sm:%s881]
          %1603 = vst [vmem:[%s889 + $0x590] sm:%s881] %v1602
          %v1604 = vld [vmem:[%s888 + $0x598] sm:%s881]
          %1605 = vst [vmem:[%s889 + $0x594] sm:%s881] %v1604
          %v1606 = vld [vmem:[%s888 + $0x58c] sm:%s881]
          %1607 = vst [vmem:[%s889 + $0x598] sm:%s881] %v1606
          %v1608 = vld [vmem:[%s888 + $0x59c] sm:%s881]
          %1609 = vst [vmem:[%s889 + $0x59c] sm:%s881] %v1608
          %v1610 = vld [vmem:[%s888 + $0x5a0] sm:%s881]
          %1611 = vst [vmem:[%s889 + $0x5a0] sm:%s881] %v1610
          %v1612 = vld [vmem:[%s888 + $0x5b0] sm:%s881]
          %1613 = vst [vmem:[%s889 + $0x5a4] sm:%s881] %v1612
          %v1614 = vld [vmem:[%s888 + $0x5a4] sm:%s881]
          %1615 = vst [vmem:[%s889 + $0x5a8] sm:%s881] %v1614
          %v1616 = vld [vmem:[%s888 + $0x5b4] sm:%s881]
          %1617 = vst [vmem:[%s889 + $0x5ac] sm:%s881] %v1616
          %v1618 = vld [vmem:[%s888 + $0x5a8] sm:%s881]
          %1619 = vst [vmem:[%s889 + $0x5b0] sm:%s881] %v1618
          %v1620 = vld [vmem:[%s888 + $0x5b8] sm:%s881]
          %1621 = vst [vmem:[%s889 + $0x5b4] sm:%s881] %v1620
          %v1622 = vld [vmem:[%s888 + $0x5ac] sm:%s881]
          %1623 = vst [vmem:[%s889 + $0x5b8] sm:%s881] %v1622
          %v1624 = vld [vmem:[%s888 + $0x5bc] sm:%s881]
          %1625 = vst [vmem:[%s889 + $0x5bc] sm:%s881] %v1624
          %v1626 = vld [vmem:[%s888 + $0x5c0] sm:%s881]
          %1627 = vst [vmem:[%s889 + $0x5c0] sm:%s881] %v1626
          %v1628 = vld [vmem:[%s888 + $0x5d0] sm:%s881]
          %1629 = vst [vmem:[%s889 + $0x5c4] sm:%s881] %v1628
          %v1630 = vld [vmem:[%s888 + $0x5c4] sm:%s881]
          %1631 = vst [vmem:[%s889 + $0x5c8] sm:%s881] %v1630
          %v1632 = vld [vmem:[%s888 + $0x5d4] sm:%s881]
          %1633 = vst [vmem:[%s889 + $0x5cc] sm:%s881] %v1632
          %v1634 = vld [vmem:[%s888 + $0x5c8] sm:%s881]
          %1635 = vst [vmem:[%s889 + $0x5d0] sm:%s881] %v1634
          %v1636 = vld [vmem:[%s888 + $0x5d8] sm:%s881]
          %1637 = vst [vmem:[%s889 + $0x5d4] sm:%s881] %v1636
          %v1638 = vld [vmem:[%s888 + $0x5cc] sm:%s881]
          %1639 = vst [vmem:[%s889 + $0x5d8] sm:%s881] %v1638
          %v1640 = vld [vmem:[%s888 + $0x5dc] sm:%s881]
          %1641 = vst [vmem:[%s889 + $0x5dc] sm:%s881] %v1640
          %v1642 = vld [vmem:[%s888 + $0x5e0] sm:%s881]
          %1643 = vst [vmem:[%s889 + $0x5e0] sm:%s881] %v1642
          %v1644 = vld [vmem:[%s888 + $0x5f0] sm:%s881]
          %1645 = vst [vmem:[%s889 + $0x5e4] sm:%s881] %v1644
          %v1646 = vld [vmem:[%s888 + $0x5e4] sm:%s881]
          %1647 = vst [vmem:[%s889 + $0x5e8] sm:%s881] %v1646
          %v1648 = vld [vmem:[%s888 + $0x5f4] sm:%s881]
          %1649 = vst [vmem:[%s889 + $0x5ec] sm:%s881] %v1648
          %v1650 = vld [vmem:[%s888 + $0x5e8] sm:%s881]
          %1651 = vst [vmem:[%s889 + $0x5f0] sm:%s881] %v1650
          %v1652 = vld [vmem:[%s888 + $0x5f8] sm:%s881]
          %1653 = vst [vmem:[%s889 + $0x5f4] sm:%s881] %v1652
          %v1654 = vld [vmem:[%s888 + $0x5ec] sm:%s881]
          %1655 = vst [vmem:[%s889 + $0x5f8] sm:%s881] %v1654
          %v1656 = vld [vmem:[%s888 + $0x5fc] sm:%s881]
          %1657 = vst [vmem:[%s889 + $0x5fc] sm:%s881] %v1656
        $region124: #{fcn1_forward.1} parent=111 // loop_footer
          %s887 = sadd.s32 1, %s883
        $region125: #{fcn1_forward.1} parent=111 // loop_footer_branch
          %882 = sbr.rel target = $region121
        $region126: #{fcn1_forward.1} parent=111 // loop_exit
          _
      $region112: #{fcn1_forward.1} parent=96 // pred_fallthru
        _
    $region97: #{fcn1_forward.1} parent=1 // pred_fallthru
      _
    // Predicated region
    $region98: #{fcn1_forward.1} parent=1 // pred_check
      %p83 = pneg %p79
    $region99: #{fcn1_forward.1} parent=1 // pred_check_branch
      %85 = sbr.rel (%p83) target = $region101
    $region100: #{fcn1_forward.1} parent=1 // pred_region
      %s86 = sshllo.u32 0, 4
      loop: start=0, step=1, limit=1
      $region102: #{fcn1_forward.1} parent=100 // loop_pre_header
        _
      $region103: #{fcn1_forward.1} parent=100 // loop_header
        %s88 = sphi 0, %s92
        %p89 = scmp.ge.s32.totalorder %s88, 1
        %s93 = sphi %s10, %s10
        %s94 = sphi [#allocation5], [#allocation5]
      $region104: #{fcn1_forward.1} parent=100 // loop_header_branch
        %91 = sbr.rel (%p89) target = $region108
      $region105: #{fcn1_forward.1} parent=100 // loop_body
        %v95 = vld [vmem:[%s93] sm:%s86]
        %96 = vst [vmem:[%s94] sm:%s86] %v95
        %v97 = vld [vmem:[%s93 + $0x10] sm:%s86]
        %98 = vst [vmem:[%s94 + $0x4] sm:%s86] %v97
        %v99 = vld [vmem:[%s93 + $0x4] sm:%s86]
        %100 = vst [vmem:[%s94 + $0x8] sm:%s86] %v99
        %v101 = vld [vmem:[%s93 + $0x14] sm:%s86]
        %102 = vst [vmem:[%s94 + $0xc] sm:%s86] %v101
        %v103 = vld [vmem:[%s93 + $0x8] sm:%s86]
        %104 = vst [vmem:[%s94 + $0x10] sm:%s86] %v103
        %v105 = vld [vmem:[%s93 + $0x18] sm:%s86]
        %106 = vst [vmem:[%s94 + $0x14] sm:%s86] %v105
        %v107 = vld [vmem:[%s93 + $0xc] sm:%s86]
        %108 = vst [vmem:[%s94 + $0x18] sm:%s86] %v107
        %v109 = vld [vmem:[%s93 + $0x1c] sm:%s86]
        %110 = vst [vmem:[%s94 + $0x1c] sm:%s86] %v109
        %v111 = vld [vmem:[%s93 + $0x20] sm:%s86]
        %112 = vst [vmem:[%s94 + $0x20] sm:%s86] %v111
        %v113 = vld [vmem:[%s93 + $0x30] sm:%s86]
        %114 = vst [vmem:[%s94 + $0x24] sm:%s86] %v113
        %v115 = vld [vmem:[%s93 + $0x24] sm:%s86]
        %116 = vst [vmem:[%s94 + $0x28] sm:%s86] %v115
        %v117 = vld [vmem:[%s93 + $0x34] sm:%s86]
        %118 = vst [vmem:[%s94 + $0x2c] sm:%s86] %v117
        %v119 = vld [vmem:[%s93 + $0x28] sm:%s86]
        %120 = vst [vmem:[%s94 + $0x30] sm:%s86] %v119
        %v121 = vld [vmem:[%s93 + $0x38] sm:%s86]
        %122 = vst [vmem:[%s94 + $0x34] sm:%s86] %v121
        %v123 = vld [vmem:[%s93 + $0x2c] sm:%s86]
        %124 = vst [vmem:[%s94 + $0x38] sm:%s86] %v123
        %v125 = vld [vmem:[%s93 + $0x3c] sm:%s86]
        %126 = vst [vmem:[%s94 + $0x3c] sm:%s86] %v125
        %v127 = vld [vmem:[%s93 + $0x40] sm:%s86]
        %128 = vst [vmem:[%s94 + $0x40] sm:%s86] %v127
        %v129 = vld [vmem:[%s93 + $0x50] sm:%s86]
        %130 = vst [vmem:[%s94 + $0x44] sm:%s86] %v129
        %v131 = vld [vmem:[%s93 + $0x44] sm:%s86]
        %132 = vst [vmem:[%s94 + $0x48] sm:%s86] %v131
        %v133 = vld [vmem:[%s93 + $0x54] sm:%s86]
        %134 = vst [vmem:[%s94 + $0x4c] sm:%s86] %v133
        %v135 = vld [vmem:[%s93 + $0x48] sm:%s86]
        %136 = vst [vmem:[%s94 + $0x50] sm:%s86] %v135
        %v137 = vld [vmem:[%s93 + $0x58] sm:%s86]
        %138 = vst [vmem:[%s94 + $0x54] sm:%s86] %v137
        %v139 = vld [vmem:[%s93 + $0x4c] sm:%s86]
        %140 = vst [vmem:[%s94 + $0x58] sm:%s86] %v139
        %v141 = vld [vmem:[%s93 + $0x5c] sm:%s86]
        %142 = vst [vmem:[%s94 + $0x5c] sm:%s86] %v141
        %v143 = vld [vmem:[%s93 + $0x60] sm:%s86]
        %144 = vst [vmem:[%s94 + $0x60] sm:%s86] %v143
        %v145 = vld [vmem:[%s93 + $0x70] sm:%s86]
        %146 = vst [vmem:[%s94 + $0x64] sm:%s86] %v145
        %v147 = vld [vmem:[%s93 + $0x64] sm:%s86]
        %148 = vst [vmem:[%s94 + $0x68] sm:%s86] %v147
        %v149 = vld [vmem:[%s93 + $0x74] sm:%s86]
        %150 = vst [vmem:[%s94 + $0x6c] sm:%s86] %v149
        %v151 = vld [vmem:[%s93 + $0x68] sm:%s86]
        %152 = vst [vmem:[%s94 + $0x70] sm:%s86] %v151
        %v153 = vld [vmem:[%s93 + $0x78] sm:%s86]
        %154 = vst [vmem:[%s94 + $0x74] sm:%s86] %v153
        %v155 = vld [vmem:[%s93 + $0x6c] sm:%s86]
        %156 = vst [vmem:[%s94 + $0x78] sm:%s86] %v155
        %v157 = vld [vmem:[%s93 + $0x7c] sm:%s86]
        %158 = vst [vmem:[%s94 + $0x7c] sm:%s86] %v157
        %v159 = vld [vmem:[%s93 + $0x80] sm:%s86]
        %160 = vst [vmem:[%s94 + $0x80] sm:%s86] %v159
        %v161 = vld [vmem:[%s93 + $0x90] sm:%s86]
        %162 = vst [vmem:[%s94 + $0x84] sm:%s86] %v161
        %v163 = vld [vmem:[%s93 + $0x84] sm:%s86]
        %164 = vst [vmem:[%s94 + $0x88] sm:%s86] %v163
        %v165 = vld [vmem:[%s93 + $0x94] sm:%s86]
        %166 = vst [vmem:[%s94 + $0x8c] sm:%s86] %v165
        %v167 = vld [vmem:[%s93 + $0x88] sm:%s86]
        %168 = vst [vmem:[%s94 + $0x90] sm:%s86] %v167
        %v169 = vld [vmem:[%s93 + $0x98] sm:%s86]
        %170 = vst [vmem:[%s94 + $0x94] sm:%s86] %v169
        %v171 = vld [vmem:[%s93 + $0x8c] sm:%s86]
        %172 = vst [vmem:[%s94 + $0x98] sm:%s86] %v171
        %v173 = vld [vmem:[%s93 + $0x9c] sm:%s86]
        %174 = vst [vmem:[%s94 + $0x9c] sm:%s86] %v173
        %v175 = vld [vmem:[%s93 + $0xa0] sm:%s86]
        %176 = vst [vmem:[%s94 + $0xa0] sm:%s86] %v175
        %v177 = vld [vmem:[%s93 + $0xb0] sm:%s86]
        %178 = vst [vmem:[%s94 + $0xa4] sm:%s86] %v177
        %v179 = vld [vmem:[%s93 + $0xa4] sm:%s86]
        %180 = vst [vmem:[%s94 + $0xa8] sm:%s86] %v179
        %v181 = vld [vmem:[%s93 + $0xb4] sm:%s86]
        %182 = vst [vmem:[%s94 + $0xac] sm:%s86] %v181
        %v183 = vld [vmem:[%s93 + $0xa8] sm:%s86]
        %184 = vst [vmem:[%s94 + $0xb0] sm:%s86] %v183
        %v185 = vld [vmem:[%s93 + $0xb8] sm:%s86]
        %186 = vst [vmem:[%s94 + $0xb4] sm:%s86] %v185
        %v187 = vld [vmem:[%s93 + $0xac] sm:%s86]
        %188 = vst [vmem:[%s94 + $0xb8] sm:%s86] %v187
        %v189 = vld [vmem:[%s93 + $0xbc] sm:%s86]
        %190 = vst [vmem:[%s94 + $0xbc] sm:%s86] %v189
        %v191 = vld [vmem:[%s93 + $0xc0] sm:%s86]
        %192 = vst [vmem:[%s94 + $0xc0] sm:%s86] %v191
        %v193 = vld [vmem:[%s93 + $0xd0] sm:%s86]
        %194 = vst [vmem:[%s94 + $0xc4] sm:%s86] %v193
        %v195 = vld [vmem:[%s93 + $0xc4] sm:%s86]
        %196 = vst [vmem:[%s94 + $0xc8] sm:%s86] %v195
        %v197 = vld [vmem:[%s93 + $0xd4] sm:%s86]
        %198 = vst [vmem:[%s94 + $0xcc] sm:%s86] %v197
        %v199 = vld [vmem:[%s93 + $0xc8] sm:%s86]
        %200 = vst [vmem:[%s94 + $0xd0] sm:%s86] %v199
        %v201 = vld [vmem:[%s93 + $0xd8] sm:%s86]
        %202 = vst [vmem:[%s94 + $0xd4] sm:%s86] %v201
        %v203 = vld [vmem:[%s93 + $0xcc] sm:%s86]
        %204 = vst [vmem:[%s94 + $0xd8] sm:%s86] %v203
        %v205 = vld [vmem:[%s93 + $0xdc] sm:%s86]
        %206 = vst [vmem:[%s94 + $0xdc] sm:%s86] %v205
        %v207 = vld [vmem:[%s93 + $0xe0] sm:%s86]
        %208 = vst [vmem:[%s94 + $0xe0] sm:%s86] %v207
        %v209 = vld [vmem:[%s93 + $0xf0] sm:%s86]
        %210 = vst [vmem:[%s94 + $0xe4] sm:%s86] %v209
        %v211 = vld [vmem:[%s93 + $0xe4] sm:%s86]
        %212 = vst [vmem:[%s94 + $0xe8] sm:%s86] %v211
        %v213 = vld [vmem:[%s93 + $0xf4] sm:%s86]
        %214 = vst [vmem:[%s94 + $0xec] sm:%s86] %v213
        %v215 = vld [vmem:[%s93 + $0xe8] sm:%s86]
        %216 = vst [vmem:[%s94 + $0xf0] sm:%s86] %v215
        %v217 = vld [vmem:[%s93 + $0xf8] sm:%s86]
        %218 = vst [vmem:[%s94 + $0xf4] sm:%s86] %v217
        %v219 = vld [vmem:[%s93 + $0xec] sm:%s86]
        %220 = vst [vmem:[%s94 + $0xf8] sm:%s86] %v219
        %v221 = vld [vmem:[%s93 + $0xfc] sm:%s86]
        %222 = vst [vmem:[%s94 + $0xfc] sm:%s86] %v221
        %v223 = vld [vmem:[%s93 + $0x100] sm:%s86]
        %224 = vst [vmem:[%s94 + $0x100] sm:%s86] %v223
        %v225 = vld [vmem:[%s93 + $0x110] sm:%s86]
        %226 = vst [vmem:[%s94 + $0x104] sm:%s86] %v225
        %v227 = vld [vmem:[%s93 + $0x104] sm:%s86]
        %228 = vst [vmem:[%s94 + $0x108] sm:%s86] %v227
        %v229 = vld [vmem:[%s93 + $0x114] sm:%s86]
        %230 = vst [vmem:[%s94 + $0x10c] sm:%s86] %v229
        %v231 = vld [vmem:[%s93 + $0x108] sm:%s86]
        %232 = vst [vmem:[%s94 + $0x110] sm:%s86] %v231
        %v233 = vld [vmem:[%s93 + $0x118] sm:%s86]
        %234 = vst [vmem:[%s94 + $0x114] sm:%s86] %v233
        %v235 = vld [vmem:[%s93 + $0x10c] sm:%s86]
        %236 = vst [vmem:[%s94 + $0x118] sm:%s86] %v235
        %v237 = vld [vmem:[%s93 + $0x11c] sm:%s86]
        %238 = vst [vmem:[%s94 + $0x11c] sm:%s86] %v237
        %v239 = vld [vmem:[%s93 + $0x120] sm:%s86]
        %240 = vst [vmem:[%s94 + $0x120] sm:%s86] %v239
        %v241 = vld [vmem:[%s93 + $0x130] sm:%s86]
        %242 = vst [vmem:[%s94 + $0x124] sm:%s86] %v241
        %v243 = vld [vmem:[%s93 + $0x124] sm:%s86]
        %244 = vst [vmem:[%s94 + $0x128] sm:%s86] %v243
        %v245 = vld [vmem:[%s93 + $0x134] sm:%s86]
        %246 = vst [vmem:[%s94 + $0x12c] sm:%s86] %v245
        %v247 = vld [vmem:[%s93 + $0x128] sm:%s86]
        %248 = vst [vmem:[%s94 + $0x130] sm:%s86] %v247
        %v249 = vld [vmem:[%s93 + $0x138] sm:%s86]
        %250 = vst [vmem:[%s94 + $0x134] sm:%s86] %v249
        %v251 = vld [vmem:[%s93 + $0x12c] sm:%s86]
        %252 = vst [vmem:[%s94 + $0x138] sm:%s86] %v251
        %v253 = vld [vmem:[%s93 + $0x13c] sm:%s86]
        %254 = vst [vmem:[%s94 + $0x13c] sm:%s86] %v253
        %v255 = vld [vmem:[%s93 + $0x140] sm:%s86]
        %256 = vst [vmem:[%s94 + $0x140] sm:%s86] %v255
        %v257 = vld [vmem:[%s93 + $0x150] sm:%s86]
        %258 = vst [vmem:[%s94 + $0x144] sm:%s86] %v257
        %v259 = vld [vmem:[%s93 + $0x144] sm:%s86]
        %260 = vst [vmem:[%s94 + $0x148] sm:%s86] %v259
        %v261 = vld [vmem:[%s93 + $0x154] sm:%s86]
        %262 = vst [vmem:[%s94 + $0x14c] sm:%s86] %v261
        %v263 = vld [vmem:[%s93 + $0x148] sm:%s86]
        %264 = vst [vmem:[%s94 + $0x150] sm:%s86] %v263
        %v265 = vld [vmem:[%s93 + $0x158] sm:%s86]
        %266 = vst [vmem:[%s94 + $0x154] sm:%s86] %v265
        %v267 = vld [vmem:[%s93 + $0x14c] sm:%s86]
        %268 = vst [vmem:[%s94 + $0x158] sm:%s86] %v267
        %v269 = vld [vmem:[%s93 + $0x15c] sm:%s86]
        %270 = vst [vmem:[%s94 + $0x15c] sm:%s86] %v269
        %v271 = vld [vmem:[%s93 + $0x160] sm:%s86]
        %272 = vst [vmem:[%s94 + $0x160] sm:%s86] %v271
        %v273 = vld [vmem:[%s93 + $0x170] sm:%s86]
        %274 = vst [vmem:[%s94 + $0x164] sm:%s86] %v273
        %v275 = vld [vmem:[%s93 + $0x164] sm:%s86]
        %276 = vst [vmem:[%s94 + $0x168] sm:%s86] %v275
        %v277 = vld [vmem:[%s93 + $0x174] sm:%s86]
        %278 = vst [vmem:[%s94 + $0x16c] sm:%s86] %v277
        %v279 = vld [vmem:[%s93 + $0x168] sm:%s86]
        %280 = vst [vmem:[%s94 + $0x170] sm:%s86] %v279
        %v281 = vld [vmem:[%s93 + $0x178] sm:%s86]
        %282 = vst [vmem:[%s94 + $0x174] sm:%s86] %v281
        %v283 = vld [vmem:[%s93 + $0x16c] sm:%s86]
        %284 = vst [vmem:[%s94 + $0x178] sm:%s86] %v283
        %v285 = vld [vmem:[%s93 + $0x17c] sm:%s86]
        %286 = vst [vmem:[%s94 + $0x17c] sm:%s86] %v285
        %v287 = vld [vmem:[%s93 + $0x180] sm:%s86]
        %288 = vst [vmem:[%s94 + $0x180] sm:%s86] %v287
        %v289 = vld [vmem:[%s93 + $0x190] sm:%s86]
        %290 = vst [vmem:[%s94 + $0x184] sm:%s86] %v289
        %v291 = vld [vmem:[%s93 + $0x184] sm:%s86]
        %292 = vst [vmem:[%s94 + $0x188] sm:%s86] %v291
        %v293 = vld [vmem:[%s93 + $0x194] sm:%s86]
        %294 = vst [vmem:[%s94 + $0x18c] sm:%s86] %v293
        %v295 = vld [vmem:[%s93 + $0x188] sm:%s86]
        %296 = vst [vmem:[%s94 + $0x190] sm:%s86] %v295
        %v297 = vld [vmem:[%s93 + $0x198] sm:%s86]
        %298 = vst [vmem:[%s94 + $0x194] sm:%s86] %v297
        %v299 = vld [vmem:[%s93 + $0x18c] sm:%s86]
        %300 = vst [vmem:[%s94 + $0x198] sm:%s86] %v299
        %v301 = vld [vmem:[%s93 + $0x19c] sm:%s86]
        %302 = vst [vmem:[%s94 + $0x19c] sm:%s86] %v301
        %v303 = vld [vmem:[%s93 + $0x1a0] sm:%s86]
        %304 = vst [vmem:[%s94 + $0x1a0] sm:%s86] %v303
        %v305 = vld [vmem:[%s93 + $0x1b0] sm:%s86]
        %306 = vst [vmem:[%s94 + $0x1a4] sm:%s86] %v305
        %v307 = vld [vmem:[%s93 + $0x1a4] sm:%s86]
        %308 = vst [vmem:[%s94 + $0x1a8] sm:%s86] %v307
        %v309 = vld [vmem:[%s93 + $0x1b4] sm:%s86]
        %310 = vst [vmem:[%s94 + $0x1ac] sm:%s86] %v309
        %v311 = vld [vmem:[%s93 + $0x1a8] sm:%s86]
        %312 = vst [vmem:[%s94 + $0x1b0] sm:%s86] %v311
        %v313 = vld [vmem:[%s93 + $0x1b8] sm:%s86]
        %314 = vst [vmem:[%s94 + $0x1b4] sm:%s86] %v313
        %v315 = vld [vmem:[%s93 + $0x1ac] sm:%s86]
        %316 = vst [vmem:[%s94 + $0x1b8] sm:%s86] %v315
        %v317 = vld [vmem:[%s93 + $0x1bc] sm:%s86]
        %318 = vst [vmem:[%s94 + $0x1bc] sm:%s86] %v317
        %v319 = vld [vmem:[%s93 + $0x1c0] sm:%s86]
        %320 = vst [vmem:[%s94 + $0x1c0] sm:%s86] %v319
        %v321 = vld [vmem:[%s93 + $0x1d0] sm:%s86]
        %322 = vst [vmem:[%s94 + $0x1c4] sm:%s86] %v321
        %v323 = vld [vmem:[%s93 + $0x1c4] sm:%s86]
        %324 = vst [vmem:[%s94 + $0x1c8] sm:%s86] %v323
        %v325 = vld [vmem:[%s93 + $0x1d4] sm:%s86]
        %326 = vst [vmem:[%s94 + $0x1cc] sm:%s86] %v325
        %v327 = vld [vmem:[%s93 + $0x1c8] sm:%s86]
        %328 = vst [vmem:[%s94 + $0x1d0] sm:%s86] %v327
        %v329 = vld [vmem:[%s93 + $0x1d8] sm:%s86]
        %330 = vst [vmem:[%s94 + $0x1d4] sm:%s86] %v329
        %v331 = vld [vmem:[%s93 + $0x1cc] sm:%s86]
        %332 = vst [vmem:[%s94 + $0x1d8] sm:%s86] %v331
        %v333 = vld [vmem:[%s93 + $0x1dc] sm:%s86]
        %334 = vst [vmem:[%s94 + $0x1dc] sm:%s86] %v333
        %v335 = vld [vmem:[%s93 + $0x1e0] sm:%s86]
        %336 = vst [vmem:[%s94 + $0x1e0] sm:%s86] %v335
        %v337 = vld [vmem:[%s93 + $0x1f0] sm:%s86]
        %338 = vst [vmem:[%s94 + $0x1e4] sm:%s86] %v337
        %v339 = vld [vmem:[%s93 + $0x1e4] sm:%s86]
        %340 = vst [vmem:[%s94 + $0x1e8] sm:%s86] %v339
        %v341 = vld [vmem:[%s93 + $0x1f4] sm:%s86]
        %342 = vst [vmem:[%s94 + $0x1ec] sm:%s86] %v341
        %v343 = vld [vmem:[%s93 + $0x1e8] sm:%s86]
        %344 = vst [vmem:[%s94 + $0x1f0] sm:%s86] %v343
        %v345 = vld [vmem:[%s93 + $0x1f8] sm:%s86]
        %346 = vst [vmem:[%s94 + $0x1f4] sm:%s86] %v345
        %v347 = vld [vmem:[%s93 + $0x1ec] sm:%s86]
        %348 = vst [vmem:[%s94 + $0x1f8] sm:%s86] %v347
        %v349 = vld [vmem:[%s93 + $0x1fc] sm:%s86]
        %350 = vst [vmem:[%s94 + $0x1fc] sm:%s86] %v349
        %v351 = vld [vmem:[%s93 + $0x200] sm:%s86]
        %352 = vst [vmem:[%s94 + $0x200] sm:%s86] %v351
        %v353 = vld [vmem:[%s93 + $0x210] sm:%s86]
        %354 = vst [vmem:[%s94 + $0x204] sm:%s86] %v353
        %v355 = vld [vmem:[%s93 + $0x204] sm:%s86]
        %356 = vst [vmem:[%s94 + $0x208] sm:%s86] %v355
        %v357 = vld [vmem:[%s93 + $0x214] sm:%s86]
        %358 = vst [vmem:[%s94 + $0x20c] sm:%s86] %v357
        %v359 = vld [vmem:[%s93 + $0x208] sm:%s86]
        %360 = vst [vmem:[%s94 + $0x210] sm:%s86] %v359
        %v361 = vld [vmem:[%s93 + $0x218] sm:%s86]
        %362 = vst [vmem:[%s94 + $0x214] sm:%s86] %v361
        %v363 = vld [vmem:[%s93 + $0x20c] sm:%s86]
        %364 = vst [vmem:[%s94 + $0x218] sm:%s86] %v363
        %v365 = vld [vmem:[%s93 + $0x21c] sm:%s86]
        %366 = vst [vmem:[%s94 + $0x21c] sm:%s86] %v365
        %v367 = vld [vmem:[%s93 + $0x220] sm:%s86]
        %368 = vst [vmem:[%s94 + $0x220] sm:%s86] %v367
        %v369 = vld [vmem:[%s93 + $0x230] sm:%s86]
        %370 = vst [vmem:[%s94 + $0x224] sm:%s86] %v369
        %v371 = vld [vmem:[%s93 + $0x224] sm:%s86]
        %372 = vst [vmem:[%s94 + $0x228] sm:%s86] %v371
        %v373 = vld [vmem:[%s93 + $0x234] sm:%s86]
        %374 = vst [vmem:[%s94 + $0x22c] sm:%s86] %v373
        %v375 = vld [vmem:[%s93 + $0x228] sm:%s86]
        %376 = vst [vmem:[%s94 + $0x230] sm:%s86] %v375
        %v377 = vld [vmem:[%s93 + $0x238] sm:%s86]
        %378 = vst [vmem:[%s94 + $0x234] sm:%s86] %v377
        %v379 = vld [vmem:[%s93 + $0x22c] sm:%s86]
        %380 = vst [vmem:[%s94 + $0x238] sm:%s86] %v379
        %v381 = vld [vmem:[%s93 + $0x23c] sm:%s86]
        %382 = vst [vmem:[%s94 + $0x23c] sm:%s86] %v381
        %v383 = vld [vmem:[%s93 + $0x240] sm:%s86]
        %384 = vst [vmem:[%s94 + $0x240] sm:%s86] %v383
        %v385 = vld [vmem:[%s93 + $0x250] sm:%s86]
        %386 = vst [vmem:[%s94 + $0x244] sm:%s86] %v385
        %v387 = vld [vmem:[%s93 + $0x244] sm:%s86]
        %388 = vst [vmem:[%s94 + $0x248] sm:%s86] %v387
        %v389 = vld [vmem:[%s93 + $0x254] sm:%s86]
        %390 = vst [vmem:[%s94 + $0x24c] sm:%s86] %v389
        %v391 = vld [vmem:[%s93 + $0x248] sm:%s86]
        %392 = vst [vmem:[%s94 + $0x250] sm:%s86] %v391
        %v393 = vld [vmem:[%s93 + $0x258] sm:%s86]
        %394 = vst [vmem:[%s94 + $0x254] sm:%s86] %v393
        %v395 = vld [vmem:[%s93 + $0x24c] sm:%s86]
        %396 = vst [vmem:[%s94 + $0x258] sm:%s86] %v395
        %v397 = vld [vmem:[%s93 + $0x25c] sm:%s86]
        %398 = vst [vmem:[%s94 + $0x25c] sm:%s86] %v397
        %v399 = vld [vmem:[%s93 + $0x260] sm:%s86]
        %400 = vst [vmem:[%s94 + $0x260] sm:%s86] %v399
        %v401 = vld [vmem:[%s93 + $0x270] sm:%s86]
        %402 = vst [vmem:[%s94 + $0x264] sm:%s86] %v401
        %v403 = vld [vmem:[%s93 + $0x264] sm:%s86]
        %404 = vst [vmem:[%s94 + $0x268] sm:%s86] %v403
        %v405 = vld [vmem:[%s93 + $0x274] sm:%s86]
        %406 = vst [vmem:[%s94 + $0x26c] sm:%s86] %v405
        %v407 = vld [vmem:[%s93 + $0x268] sm:%s86]
        %408 = vst [vmem:[%s94 + $0x270] sm:%s86] %v407
        %v409 = vld [vmem:[%s93 + $0x278] sm:%s86]
        %410 = vst [vmem:[%s94 + $0x274] sm:%s86] %v409
        %v411 = vld [vmem:[%s93 + $0x26c] sm:%s86]
        %412 = vst [vmem:[%s94 + $0x278] sm:%s86] %v411
        %v413 = vld [vmem:[%s93 + $0x27c] sm:%s86]
        %414 = vst [vmem:[%s94 + $0x27c] sm:%s86] %v413
        %v415 = vld [vmem:[%s93 + $0x280] sm:%s86]
        %416 = vst [vmem:[%s94 + $0x280] sm:%s86] %v415
        %v417 = vld [vmem:[%s93 + $0x290] sm:%s86]
        %418 = vst [vmem:[%s94 + $0x284] sm:%s86] %v417
        %v419 = vld [vmem:[%s93 + $0x284] sm:%s86]
        %420 = vst [vmem:[%s94 + $0x288] sm:%s86] %v419
        %v421 = vld [vmem:[%s93 + $0x294] sm:%s86]
        %422 = vst [vmem:[%s94 + $0x28c] sm:%s86] %v421
        %v423 = vld [vmem:[%s93 + $0x288] sm:%s86]
        %424 = vst [vmem:[%s94 + $0x290] sm:%s86] %v423
        %v425 = vld [vmem:[%s93 + $0x298] sm:%s86]
        %426 = vst [vmem:[%s94 + $0x294] sm:%s86] %v425
        %v427 = vld [vmem:[%s93 + $0x28c] sm:%s86]
        %428 = vst [vmem:[%s94 + $0x298] sm:%s86] %v427
        %v429 = vld [vmem:[%s93 + $0x29c] sm:%s86]
        %430 = vst [vmem:[%s94 + $0x29c] sm:%s86] %v429
        %v431 = vld [vmem:[%s93 + $0x2a0] sm:%s86]
        %432 = vst [vmem:[%s94 + $0x2a0] sm:%s86] %v431
        %v433 = vld [vmem:[%s93 + $0x2b0] sm:%s86]
        %434 = vst [vmem:[%s94 + $0x2a4] sm:%s86] %v433
        %v435 = vld [vmem:[%s93 + $0x2a4] sm:%s86]
        %436 = vst [vmem:[%s94 + $0x2a8] sm:%s86] %v435
        %v437 = vld [vmem:[%s93 + $0x2b4] sm:%s86]
        %438 = vst [vmem:[%s94 + $0x2ac] sm:%s86] %v437
        %v439 = vld [vmem:[%s93 + $0x2a8] sm:%s86]
        %440 = vst [vmem:[%s94 + $0x2b0] sm:%s86] %v439
        %v441 = vld [vmem:[%s93 + $0x2b8] sm:%s86]
        %442 = vst [vmem:[%s94 + $0x2b4] sm:%s86] %v441
        %v443 = vld [vmem:[%s93 + $0x2ac] sm:%s86]
        %444 = vst [vmem:[%s94 + $0x2b8] sm:%s86] %v443
        %v445 = vld [vmem:[%s93 + $0x2bc] sm:%s86]
        %446 = vst [vmem:[%s94 + $0x2bc] sm:%s86] %v445
        %v447 = vld [vmem:[%s93 + $0x2c0] sm:%s86]
        %448 = vst [vmem:[%s94 + $0x2c0] sm:%s86] %v447
        %v449 = vld [vmem:[%s93 + $0x2d0] sm:%s86]
        %450 = vst [vmem:[%s94 + $0x2c4] sm:%s86] %v449
        %v451 = vld [vmem:[%s93 + $0x2c4] sm:%s86]
        %452 = vst [vmem:[%s94 + $0x2c8] sm:%s86] %v451
        %v453 = vld [vmem:[%s93 + $0x2d4] sm:%s86]
        %454 = vst [vmem:[%s94 + $0x2cc] sm:%s86] %v453
        %v455 = vld [vmem:[%s93 + $0x2c8] sm:%s86]
        %456 = vst [vmem:[%s94 + $0x2d0] sm:%s86] %v455
        %v457 = vld [vmem:[%s93 + $0x2d8] sm:%s86]
        %458 = vst [vmem:[%s94 + $0x2d4] sm:%s86] %v457
        %v459 = vld [vmem:[%s93 + $0x2cc] sm:%s86]
        %460 = vst [vmem:[%s94 + $0x2d8] sm:%s86] %v459
        %v461 = vld [vmem:[%s93 + $0x2dc] sm:%s86]
        %462 = vst [vmem:[%s94 + $0x2dc] sm:%s86] %v461
        %v463 = vld [vmem:[%s93 + $0x2e0] sm:%s86]
        %464 = vst [vmem:[%s94 + $0x2e0] sm:%s86] %v463
        %v465 = vld [vmem:[%s93 + $0x2f0] sm:%s86]
        %466 = vst [vmem:[%s94 + $0x2e4] sm:%s86] %v465
        %v467 = vld [vmem:[%s93 + $0x2e4] sm:%s86]
        %468 = vst [vmem:[%s94 + $0x2e8] sm:%s86] %v467
        %v469 = vld [vmem:[%s93 + $0x2f4] sm:%s86]
        %470 = vst [vmem:[%s94 + $0x2ec] sm:%s86] %v469
        %v471 = vld [vmem:[%s93 + $0x2e8] sm:%s86]
        %472 = vst [vmem:[%s94 + $0x2f0] sm:%s86] %v471
        %v473 = vld [vmem:[%s93 + $0x2f8] sm:%s86]
        %474 = vst [vmem:[%s94 + $0x2f4] sm:%s86] %v473
        %v475 = vld [vmem:[%s93 + $0x2ec] sm:%s86]
        %476 = vst [vmem:[%s94 + $0x2f8] sm:%s86] %v475
        %v477 = vld [vmem:[%s93 + $0x2fc] sm:%s86]
        %478 = vst [vmem:[%s94 + $0x2fc] sm:%s86] %v477
        %v479 = vld [vmem:[%s93 + $0x300] sm:%s86]
        %480 = vst [vmem:[%s94 + $0x300] sm:%s86] %v479
        %v481 = vld [vmem:[%s93 + $0x310] sm:%s86]
        %482 = vst [vmem:[%s94 + $0x304] sm:%s86] %v481
        %v483 = vld [vmem:[%s93 + $0x304] sm:%s86]
        %484 = vst [vmem:[%s94 + $0x308] sm:%s86] %v483
        %v485 = vld [vmem:[%s93 + $0x314] sm:%s86]
        %486 = vst [vmem:[%s94 + $0x30c] sm:%s86] %v485
        %v487 = vld [vmem:[%s93 + $0x308] sm:%s86]
        %488 = vst [vmem:[%s94 + $0x310] sm:%s86] %v487
        %v489 = vld [vmem:[%s93 + $0x318] sm:%s86]
        %490 = vst [vmem:[%s94 + $0x314] sm:%s86] %v489
        %v491 = vld [vmem:[%s93 + $0x30c] sm:%s86]
        %492 = vst [vmem:[%s94 + $0x318] sm:%s86] %v491
        %v493 = vld [vmem:[%s93 + $0x31c] sm:%s86]
        %494 = vst [vmem:[%s94 + $0x31c] sm:%s86] %v493
        %v495 = vld [vmem:[%s93 + $0x320] sm:%s86]
        %496 = vst [vmem:[%s94 + $0x320] sm:%s86] %v495
        %v497 = vld [vmem:[%s93 + $0x330] sm:%s86]
        %498 = vst [vmem:[%s94 + $0x324] sm:%s86] %v497
        %v499 = vld [vmem:[%s93 + $0x324] sm:%s86]
        %500 = vst [vmem:[%s94 + $0x328] sm:%s86] %v499
        %v501 = vld [vmem:[%s93 + $0x334] sm:%s86]
        %502 = vst [vmem:[%s94 + $0x32c] sm:%s86] %v501
        %v503 = vld [vmem:[%s93 + $0x328] sm:%s86]
        %504 = vst [vmem:[%s94 + $0x330] sm:%s86] %v503
        %v505 = vld [vmem:[%s93 + $0x338] sm:%s86]
        %506 = vst [vmem:[%s94 + $0x334] sm:%s86] %v505
        %v507 = vld [vmem:[%s93 + $0x32c] sm:%s86]
        %508 = vst [vmem:[%s94 + $0x338] sm:%s86] %v507
        %v509 = vld [vmem:[%s93 + $0x33c] sm:%s86]
        %510 = vst [vmem:[%s94 + $0x33c] sm:%s86] %v509
        %v511 = vld [vmem:[%s93 + $0x340] sm:%s86]
        %512 = vst [vmem:[%s94 + $0x340] sm:%s86] %v511
        %v513 = vld [vmem:[%s93 + $0x350] sm:%s86]
        %514 = vst [vmem:[%s94 + $0x344] sm:%s86] %v513
        %v515 = vld [vmem:[%s93 + $0x344] sm:%s86]
        %516 = vst [vmem:[%s94 + $0x348] sm:%s86] %v515
        %v517 = vld [vmem:[%s93 + $0x354] sm:%s86]
        %518 = vst [vmem:[%s94 + $0x34c] sm:%s86] %v517
        %v519 = vld [vmem:[%s93 + $0x348] sm:%s86]
        %520 = vst [vmem:[%s94 + $0x350] sm:%s86] %v519
        %v521 = vld [vmem:[%s93 + $0x358] sm:%s86]
        %522 = vst [vmem:[%s94 + $0x354] sm:%s86] %v521
        %v523 = vld [vmem:[%s93 + $0x34c] sm:%s86]
        %524 = vst [vmem:[%s94 + $0x358] sm:%s86] %v523
        %v525 = vld [vmem:[%s93 + $0x35c] sm:%s86]
        %526 = vst [vmem:[%s94 + $0x35c] sm:%s86] %v525
        %v527 = vld [vmem:[%s93 + $0x360] sm:%s86]
        %528 = vst [vmem:[%s94 + $0x360] sm:%s86] %v527
        %v529 = vld [vmem:[%s93 + $0x370] sm:%s86]
        %530 = vst [vmem:[%s94 + $0x364] sm:%s86] %v529
        %v531 = vld [vmem:[%s93 + $0x364] sm:%s86]
        %532 = vst [vmem:[%s94 + $0x368] sm:%s86] %v531
        %v533 = vld [vmem:[%s93 + $0x374] sm:%s86]
        %534 = vst [vmem:[%s94 + $0x36c] sm:%s86] %v533
        %v535 = vld [vmem:[%s93 + $0x368] sm:%s86]
        %536 = vst [vmem:[%s94 + $0x370] sm:%s86] %v535
        %v537 = vld [vmem:[%s93 + $0x378] sm:%s86]
        %538 = vst [vmem:[%s94 + $0x374] sm:%s86] %v537
        %v539 = vld [vmem:[%s93 + $0x36c] sm:%s86]
        %540 = vst [vmem:[%s94 + $0x378] sm:%s86] %v539
        %v541 = vld [vmem:[%s93 + $0x37c] sm:%s86]
        %542 = vst [vmem:[%s94 + $0x37c] sm:%s86] %v541
        %v543 = vld [vmem:[%s93 + $0x380] sm:%s86]
        %544 = vst [vmem:[%s94 + $0x380] sm:%s86] %v543
        %v545 = vld [vmem:[%s93 + $0x390] sm:%s86]
        %546 = vst [vmem:[%s94 + $0x384] sm:%s86] %v545
        %v547 = vld [vmem:[%s93 + $0x384] sm:%s86]
        %548 = vst [vmem:[%s94 + $0x388] sm:%s86] %v547
        %v549 = vld [vmem:[%s93 + $0x394] sm:%s86]
        %550 = vst [vmem:[%s94 + $0x38c] sm:%s86] %v549
        %v551 = vld [vmem:[%s93 + $0x388] sm:%s86]
        %552 = vst [vmem:[%s94 + $0x390] sm:%s86] %v551
        %v553 = vld [vmem:[%s93 + $0x398] sm:%s86]
        %554 = vst [vmem:[%s94 + $0x394] sm:%s86] %v553
        %v555 = vld [vmem:[%s93 + $0x38c] sm:%s86]
        %556 = vst [vmem:[%s94 + $0x398] sm:%s86] %v555
        %v557 = vld [vmem:[%s93 + $0x39c] sm:%s86]
        %558 = vst [vmem:[%s94 + $0x39c] sm:%s86] %v557
        %v559 = vld [vmem:[%s93 + $0x3a0] sm:%s86]
        %560 = vst [vmem:[%s94 + $0x3a0] sm:%s86] %v559
        %v561 = vld [vmem:[%s93 + $0x3b0] sm:%s86]
        %562 = vst [vmem:[%s94 + $0x3a4] sm:%s86] %v561
        %v563 = vld [vmem:[%s93 + $0x3a4] sm:%s86]
        %564 = vst [vmem:[%s94 + $0x3a8] sm:%s86] %v563
        %v565 = vld [vmem:[%s93 + $0x3b4] sm:%s86]
        %566 = vst [vmem:[%s94 + $0x3ac] sm:%s86] %v565
        %v567 = vld [vmem:[%s93 + $0x3a8] sm:%s86]
        %568 = vst [vmem:[%s94 + $0x3b0] sm:%s86] %v567
        %v569 = vld [vmem:[%s93 + $0x3b8] sm:%s86]
        %570 = vst [vmem:[%s94 + $0x3b4] sm:%s86] %v569
        %v571 = vld [vmem:[%s93 + $0x3ac] sm:%s86]
        %572 = vst [vmem:[%s94 + $0x3b8] sm:%s86] %v571
        %v573 = vld [vmem:[%s93 + $0x3bc] sm:%s86]
        %574 = vst [vmem:[%s94 + $0x3bc] sm:%s86] %v573
        %v575 = vld [vmem:[%s93 + $0x3c0] sm:%s86]
        %576 = vst [vmem:[%s94 + $0x3c0] sm:%s86] %v575
        %v577 = vld [vmem:[%s93 + $0x3d0] sm:%s86]
        %578 = vst [vmem:[%s94 + $0x3c4] sm:%s86] %v577
        %v579 = vld [vmem:[%s93 + $0x3c4] sm:%s86]
        %580 = vst [vmem:[%s94 + $0x3c8] sm:%s86] %v579
        %v581 = vld [vmem:[%s93 + $0x3d4] sm:%s86]
        %582 = vst [vmem:[%s94 + $0x3cc] sm:%s86] %v581
        %v583 = vld [vmem:[%s93 + $0x3c8] sm:%s86]
        %584 = vst [vmem:[%s94 + $0x3d0] sm:%s86] %v583
        %v585 = vld [vmem:[%s93 + $0x3d8] sm:%s86]
        %586 = vst [vmem:[%s94 + $0x3d4] sm:%s86] %v585
        %v587 = vld [vmem:[%s93 + $0x3cc] sm:%s86]
        %588 = vst [vmem:[%s94 + $0x3d8] sm:%s86] %v587
        %v589 = vld [vmem:[%s93 + $0x3dc] sm:%s86]
        %590 = vst [vmem:[%s94 + $0x3dc] sm:%s86] %v589
        %v591 = vld [vmem:[%s93 + $0x3e0] sm:%s86]
        %592 = vst [vmem:[%s94 + $0x3e0] sm:%s86] %v591
        %v593 = vld [vmem:[%s93 + $0x3f0] sm:%s86]
        %594 = vst [vmem:[%s94 + $0x3e4] sm:%s86] %v593
        %v595 = vld [vmem:[%s93 + $0x3e4] sm:%s86]
        %596 = vst [vmem:[%s94 + $0x3e8] sm:%s86] %v595
        %v597 = vld [vmem:[%s93 + $0x3f4] sm:%s86]
        %598 = vst [vmem:[%s94 + $0x3ec] sm:%s86] %v597
        %v599 = vld [vmem:[%s93 + $0x3e8] sm:%s86]
        %600 = vst [vmem:[%s94 + $0x3f0] sm:%s86] %v599
        %v601 = vld [vmem:[%s93 + $0x3f8] sm:%s86]
        %602 = vst [vmem:[%s94 + $0x3f4] sm:%s86] %v601
        %v603 = vld [vmem:[%s93 + $0x3ec] sm:%s86]
        %604 = vst [vmem:[%s94 + $0x3f8] sm:%s86] %v603
        %v605 = vld [vmem:[%s93 + $0x3fc] sm:%s86]
        %606 = vst [vmem:[%s94 + $0x3fc] sm:%s86] %v605
        %v607 = vld [vmem:[%s93 + $0x400] sm:%s86]
        %608 = vst [vmem:[%s94 + $0x400] sm:%s86] %v607
        %v609 = vld [vmem:[%s93 + $0x410] sm:%s86]
        %610 = vst [vmem:[%s94 + $0x404] sm:%s86] %v609
        %v611 = vld [vmem:[%s93 + $0x404] sm:%s86]
        %612 = vst [vmem:[%s94 + $0x408] sm:%s86] %v611
        %v613 = vld [vmem:[%s93 + $0x414] sm:%s86]
        %614 = vst [vmem:[%s94 + $0x40c] sm:%s86] %v613
        %v615 = vld [vmem:[%s93 + $0x408] sm:%s86]
        %616 = vst [vmem:[%s94 + $0x410] sm:%s86] %v615
        %v617 = vld [vmem:[%s93 + $0x418] sm:%s86]
        %618 = vst [vmem:[%s94 + $0x414] sm:%s86] %v617
        %v619 = vld [vmem:[%s93 + $0x40c] sm:%s86]
        %620 = vst [vmem:[%s94 + $0x418] sm:%s86] %v619
        %v621 = vld [vmem:[%s93 + $0x41c] sm:%s86]
        %622 = vst [vmem:[%s94 + $0x41c] sm:%s86] %v621
        %v623 = vld [vmem:[%s93 + $0x420] sm:%s86]
        %624 = vst [vmem:[%s94 + $0x420] sm:%s86] %v623
        %v625 = vld [vmem:[%s93 + $0x430] sm:%s86]
        %626 = vst [vmem:[%s94 + $0x424] sm:%s86] %v625
        %v627 = vld [vmem:[%s93 + $0x424] sm:%s86]
        %628 = vst [vmem:[%s94 + $0x428] sm:%s86] %v627
        %v629 = vld [vmem:[%s93 + $0x434] sm:%s86]
        %630 = vst [vmem:[%s94 + $0x42c] sm:%s86] %v629
        %v631 = vld [vmem:[%s93 + $0x428] sm:%s86]
        %632 = vst [vmem:[%s94 + $0x430] sm:%s86] %v631
        %v633 = vld [vmem:[%s93 + $0x438] sm:%s86]
        %634 = vst [vmem:[%s94 + $0x434] sm:%s86] %v633
        %v635 = vld [vmem:[%s93 + $0x42c] sm:%s86]
        %636 = vst [vmem:[%s94 + $0x438] sm:%s86] %v635
        %v637 = vld [vmem:[%s93 + $0x43c] sm:%s86]
        %638 = vst [vmem:[%s94 + $0x43c] sm:%s86] %v637
        %v639 = vld [vmem:[%s93 + $0x440] sm:%s86]
        %640 = vst [vmem:[%s94 + $0x440] sm:%s86] %v639
        %v641 = vld [vmem:[%s93 + $0x450] sm:%s86]
        %642 = vst [vmem:[%s94 + $0x444] sm:%s86] %v641
        %v643 = vld [vmem:[%s93 + $0x444] sm:%s86]
        %644 = vst [vmem:[%s94 + $0x448] sm:%s86] %v643
        %v645 = vld [vmem:[%s93 + $0x454] sm:%s86]
        %646 = vst [vmem:[%s94 + $0x44c] sm:%s86] %v645
        %v647 = vld [vmem:[%s93 + $0x448] sm:%s86]
        %648 = vst [vmem:[%s94 + $0x450] sm:%s86] %v647
        %v649 = vld [vmem:[%s93 + $0x458] sm:%s86]
        %650 = vst [vmem:[%s94 + $0x454] sm:%s86] %v649
        %v651 = vld [vmem:[%s93 + $0x44c] sm:%s86]
        %652 = vst [vmem:[%s94 + $0x458] sm:%s86] %v651
        %v653 = vld [vmem:[%s93 + $0x45c] sm:%s86]
        %654 = vst [vmem:[%s94 + $0x45c] sm:%s86] %v653
        %v655 = vld [vmem:[%s93 + $0x460] sm:%s86]
        %656 = vst [vmem:[%s94 + $0x460] sm:%s86] %v655
        %v657 = vld [vmem:[%s93 + $0x470] sm:%s86]
        %658 = vst [vmem:[%s94 + $0x464] sm:%s86] %v657
        %v659 = vld [vmem:[%s93 + $0x464] sm:%s86]
        %660 = vst [vmem:[%s94 + $0x468] sm:%s86] %v659
        %v661 = vld [vmem:[%s93 + $0x474] sm:%s86]
        %662 = vst [vmem:[%s94 + $0x46c] sm:%s86] %v661
        %v663 = vld [vmem:[%s93 + $0x468] sm:%s86]
        %664 = vst [vmem:[%s94 + $0x470] sm:%s86] %v663
        %v665 = vld [vmem:[%s93 + $0x478] sm:%s86]
        %666 = vst [vmem:[%s94 + $0x474] sm:%s86] %v665
        %v667 = vld [vmem:[%s93 + $0x46c] sm:%s86]
        %668 = vst [vmem:[%s94 + $0x478] sm:%s86] %v667
        %v669 = vld [vmem:[%s93 + $0x47c] sm:%s86]
        %670 = vst [vmem:[%s94 + $0x47c] sm:%s86] %v669
        %v671 = vld [vmem:[%s93 + $0x480] sm:%s86]
        %672 = vst [vmem:[%s94 + $0x480] sm:%s86] %v671
        %v673 = vld [vmem:[%s93 + $0x490] sm:%s86]
        %674 = vst [vmem:[%s94 + $0x484] sm:%s86] %v673
        %v675 = vld [vmem:[%s93 + $0x484] sm:%s86]
        %676 = vst [vmem:[%s94 + $0x488] sm:%s86] %v675
        %v677 = vld [vmem:[%s93 + $0x494] sm:%s86]
        %678 = vst [vmem:[%s94 + $0x48c] sm:%s86] %v677
        %v679 = vld [vmem:[%s93 + $0x488] sm:%s86]
        %680 = vst [vmem:[%s94 + $0x490] sm:%s86] %v679
        %v681 = vld [vmem:[%s93 + $0x498] sm:%s86]
        %682 = vst [vmem:[%s94 + $0x494] sm:%s86] %v681
        %v683 = vld [vmem:[%s93 + $0x48c] sm:%s86]
        %684 = vst [vmem:[%s94 + $0x498] sm:%s86] %v683
        %v685 = vld [vmem:[%s93 + $0x49c] sm:%s86]
        %686 = vst [vmem:[%s94 + $0x49c] sm:%s86] %v685
        %v687 = vld [vmem:[%s93 + $0x4a0] sm:%s86]
        %688 = vst [vmem:[%s94 + $0x4a0] sm:%s86] %v687
        %v689 = vld [vmem:[%s93 + $0x4b0] sm:%s86]
        %690 = vst [vmem:[%s94 + $0x4a4] sm:%s86] %v689
        %v691 = vld [vmem:[%s93 + $0x4a4] sm:%s86]
        %692 = vst [vmem:[%s94 + $0x4a8] sm:%s86] %v691
        %v693 = vld [vmem:[%s93 + $0x4b4] sm:%s86]
        %694 = vst [vmem:[%s94 + $0x4ac] sm:%s86] %v693
        %v695 = vld [vmem:[%s93 + $0x4a8] sm:%s86]
        %696 = vst [vmem:[%s94 + $0x4b0] sm:%s86] %v695
        %v697 = vld [vmem:[%s93 + $0x4b8] sm:%s86]
        %698 = vst [vmem:[%s94 + $0x4b4] sm:%s86] %v697
        %v699 = vld [vmem:[%s93 + $0x4ac] sm:%s86]
        %700 = vst [vmem:[%s94 + $0x4b8] sm:%s86] %v699
        %v701 = vld [vmem:[%s93 + $0x4bc] sm:%s86]
        %702 = vst [vmem:[%s94 + $0x4bc] sm:%s86] %v701
        %v703 = vld [vmem:[%s93 + $0x4c0] sm:%s86]
        %704 = vst [vmem:[%s94 + $0x4c0] sm:%s86] %v703
        %v705 = vld [vmem:[%s93 + $0x4d0] sm:%s86]
        %706 = vst [vmem:[%s94 + $0x4c4] sm:%s86] %v705
        %v707 = vld [vmem:[%s93 + $0x4c4] sm:%s86]
        %708 = vst [vmem:[%s94 + $0x4c8] sm:%s86] %v707
        %v709 = vld [vmem:[%s93 + $0x4d4] sm:%s86]
        %710 = vst [vmem:[%s94 + $0x4cc] sm:%s86] %v709
        %v711 = vld [vmem:[%s93 + $0x4c8] sm:%s86]
        %712 = vst [vmem:[%s94 + $0x4d0] sm:%s86] %v711
        %v713 = vld [vmem:[%s93 + $0x4d8] sm:%s86]
        %714 = vst [vmem:[%s94 + $0x4d4] sm:%s86] %v713
        %v715 = vld [vmem:[%s93 + $0x4cc] sm:%s86]
        %716 = vst [vmem:[%s94 + $0x4d8] sm:%s86] %v715
        %v717 = vld [vmem:[%s93 + $0x4dc] sm:%s86]
        %718 = vst [vmem:[%s94 + $0x4dc] sm:%s86] %v717
        %v719 = vld [vmem:[%s93 + $0x4e0] sm:%s86]
        %720 = vst [vmem:[%s94 + $0x4e0] sm:%s86] %v719
        %v721 = vld [vmem:[%s93 + $0x4f0] sm:%s86]
        %722 = vst [vmem:[%s94 + $0x4e4] sm:%s86] %v721
        %v723 = vld [vmem:[%s93 + $0x4e4] sm:%s86]
        %724 = vst [vmem:[%s94 + $0x4e8] sm:%s86] %v723
        %v725 = vld [vmem:[%s93 + $0x4f4] sm:%s86]
        %726 = vst [vmem:[%s94 + $0x4ec] sm:%s86] %v725
        %v727 = vld [vmem:[%s93 + $0x4e8] sm:%s86]
        %728 = vst [vmem:[%s94 + $0x4f0] sm:%s86] %v727
        %v729 = vld [vmem:[%s93 + $0x4f8] sm:%s86]
        %730 = vst [vmem:[%s94 + $0x4f4] sm:%s86] %v729
        %v731 = vld [vmem:[%s93 + $0x4ec] sm:%s86]
        %732 = vst [vmem:[%s94 + $0x4f8] sm:%s86] %v731
        %v733 = vld [vmem:[%s93 + $0x4fc] sm:%s86]
        %734 = vst [vmem:[%s94 + $0x4fc] sm:%s86] %v733
        %v735 = vld [vmem:[%s93 + $0x500] sm:%s86]
        %736 = vst [vmem:[%s94 + $0x500] sm:%s86] %v735
        %v737 = vld [vmem:[%s93 + $0x510] sm:%s86]
        %738 = vst [vmem:[%s94 + $0x504] sm:%s86] %v737
        %v739 = vld [vmem:[%s93 + $0x504] sm:%s86]
        %740 = vst [vmem:[%s94 + $0x508] sm:%s86] %v739
        %v741 = vld [vmem:[%s93 + $0x514] sm:%s86]
        %742 = vst [vmem:[%s94 + $0x50c] sm:%s86] %v741
        %v743 = vld [vmem:[%s93 + $0x508] sm:%s86]
        %744 = vst [vmem:[%s94 + $0x510] sm:%s86] %v743
        %v745 = vld [vmem:[%s93 + $0x518] sm:%s86]
        %746 = vst [vmem:[%s94 + $0x514] sm:%s86] %v745
        %v747 = vld [vmem:[%s93 + $0x50c] sm:%s86]
        %748 = vst [vmem:[%s94 + $0x518] sm:%s86] %v747
        %v749 = vld [vmem:[%s93 + $0x51c] sm:%s86]
        %750 = vst [vmem:[%s94 + $0x51c] sm:%s86] %v749
        %v751 = vld [vmem:[%s93 + $0x520] sm:%s86]
        %752 = vst [vmem:[%s94 + $0x520] sm:%s86] %v751
        %v753 = vld [vmem:[%s93 + $0x530] sm:%s86]
        %754 = vst [vmem:[%s94 + $0x524] sm:%s86] %v753
        %v755 = vld [vmem:[%s93 + $0x524] sm:%s86]
        %756 = vst [vmem:[%s94 + $0x528] sm:%s86] %v755
        %v757 = vld [vmem:[%s93 + $0x534] sm:%s86]
        %758 = vst [vmem:[%s94 + $0x52c] sm:%s86] %v757
        %v759 = vld [vmem:[%s93 + $0x528] sm:%s86]
        %760 = vst [vmem:[%s94 + $0x530] sm:%s86] %v759
        %v761 = vld [vmem:[%s93 + $0x538] sm:%s86]
        %762 = vst [vmem:[%s94 + $0x534] sm:%s86] %v761
        %v763 = vld [vmem:[%s93 + $0x52c] sm:%s86]
        %764 = vst [vmem:[%s94 + $0x538] sm:%s86] %v763
        %v765 = vld [vmem:[%s93 + $0x53c] sm:%s86]
        %766 = vst [vmem:[%s94 + $0x53c] sm:%s86] %v765
        %v767 = vld [vmem:[%s93 + $0x540] sm:%s86]
        %768 = vst [vmem:[%s94 + $0x540] sm:%s86] %v767
        %v769 = vld [vmem:[%s93 + $0x550] sm:%s86]
        %770 = vst [vmem:[%s94 + $0x544] sm:%s86] %v769
        %v771 = vld [vmem:[%s93 + $0x544] sm:%s86]
        %772 = vst [vmem:[%s94 + $0x548] sm:%s86] %v771
        %v773 = vld [vmem:[%s93 + $0x554] sm:%s86]
        %774 = vst [vmem:[%s94 + $0x54c] sm:%s86] %v773
        %v775 = vld [vmem:[%s93 + $0x548] sm:%s86]
        %776 = vst [vmem:[%s94 + $0x550] sm:%s86] %v775
        %v777 = vld [vmem:[%s93 + $0x558] sm:%s86]
        %778 = vst [vmem:[%s94 + $0x554] sm:%s86] %v777
        %v779 = vld [vmem:[%s93 + $0x54c] sm:%s86]
        %780 = vst [vmem:[%s94 + $0x558] sm:%s86] %v779
        %v781 = vld [vmem:[%s93 + $0x55c] sm:%s86]
        %782 = vst [vmem:[%s94 + $0x55c] sm:%s86] %v781
        %v783 = vld [vmem:[%s93 + $0x560] sm:%s86]
        %784 = vst [vmem:[%s94 + $0x560] sm:%s86] %v783
        %v785 = vld [vmem:[%s93 + $0x570] sm:%s86]
        %786 = vst [vmem:[%s94 + $0x564] sm:%s86] %v785
        %v787 = vld [vmem:[%s93 + $0x564] sm:%s86]
        %788 = vst [vmem:[%s94 + $0x568] sm:%s86] %v787
        %v789 = vld [vmem:[%s93 + $0x574] sm:%s86]
        %790 = vst [vmem:[%s94 + $0x56c] sm:%s86] %v789
        %v791 = vld [vmem:[%s93 + $0x568] sm:%s86]
        %792 = vst [vmem:[%s94 + $0x570] sm:%s86] %v791
        %v793 = vld [vmem:[%s93 + $0x578] sm:%s86]
        %794 = vst [vmem:[%s94 + $0x574] sm:%s86] %v793
        %v795 = vld [vmem:[%s93 + $0x56c] sm:%s86]
        %796 = vst [vmem:[%s94 + $0x578] sm:%s86] %v795
        %v797 = vld [vmem:[%s93 + $0x57c] sm:%s86]
        %798 = vst [vmem:[%s94 + $0x57c] sm:%s86] %v797
        %v799 = vld [vmem:[%s93 + $0x580] sm:%s86]
        %800 = vst [vmem:[%s94 + $0x580] sm:%s86] %v799
        %v801 = vld [vmem:[%s93 + $0x590] sm:%s86]
        %802 = vst [vmem:[%s94 + $0x584] sm:%s86] %v801
        %v803 = vld [vmem:[%s93 + $0x584] sm:%s86]
        %804 = vst [vmem:[%s94 + $0x588] sm:%s86] %v803
        %v805 = vld [vmem:[%s93 + $0x594] sm:%s86]
        %806 = vst [vmem:[%s94 + $0x58c] sm:%s86] %v805
        %v807 = vld [vmem:[%s93 + $0x588] sm:%s86]
        %808 = vst [vmem:[%s94 + $0x590] sm:%s86] %v807
        %v809 = vld [vmem:[%s93 + $0x598] sm:%s86]
        %810 = vst [vmem:[%s94 + $0x594] sm:%s86] %v809
        %v811 = vld [vmem:[%s93 + $0x58c] sm:%s86]
        %812 = vst [vmem:[%s94 + $0x598] sm:%s86] %v811
        %v813 = vld [vmem:[%s93 + $0x59c] sm:%s86]
        %814 = vst [vmem:[%s94 + $0x59c] sm:%s86] %v813
        %v815 = vld [vmem:[%s93 + $0x5a0] sm:%s86]
        %816 = vst [vmem:[%s94 + $0x5a0] sm:%s86] %v815
        %v817 = vld [vmem:[%s93 + $0x5b0] sm:%s86]
        %818 = vst [vmem:[%s94 + $0x5a4] sm:%s86] %v817
        %v819 = vld [vmem:[%s93 + $0x5a4] sm:%s86]
        %820 = vst [vmem:[%s94 + $0x5a8] sm:%s86] %v819
        %v821 = vld [vmem:[%s93 + $0x5b4] sm:%s86]
        %822 = vst [vmem:[%s94 + $0x5ac] sm:%s86] %v821
        %v823 = vld [vmem:[%s93 + $0x5a8] sm:%s86]
        %824 = vst [vmem:[%s94 + $0x5b0] sm:%s86] %v823
        %v825 = vld [vmem:[%s93 + $0x5b8] sm:%s86]
        %826 = vst [vmem:[%s94 + $0x5b4] sm:%s86] %v825
        %v827 = vld [vmem:[%s93 + $0x5ac] sm:%s86]
        %828 = vst [vmem:[%s94 + $0x5b8] sm:%s86] %v827
        %v829 = vld [vmem:[%s93 + $0x5bc] sm:%s86]
        %830 = vst [vmem:[%s94 + $0x5bc] sm:%s86] %v829
        %v831 = vld [vmem:[%s93 + $0x5c0] sm:%s86]
        %832 = vst [vmem:[%s94 + $0x5c0] sm:%s86] %v831
        %v833 = vld [vmem:[%s93 + $0x5d0] sm:%s86]
        %834 = vst [vmem:[%s94 + $0x5c4] sm:%s86] %v833
        %v835 = vld [vmem:[%s93 + $0x5c4] sm:%s86]
        %836 = vst [vmem:[%s94 + $0x5c8] sm:%s86] %v835
        %v837 = vld [vmem:[%s93 + $0x5d4] sm:%s86]
        %838 = vst [vmem:[%s94 + $0x5cc] sm:%s86] %v837
        %v839 = vld [vmem:[%s93 + $0x5c8] sm:%s86]
        %840 = vst [vmem:[%s94 + $0x5d0] sm:%s86] %v839
        %v841 = vld [vmem:[%s93 + $0x5d8] sm:%s86]
        %842 = vst [vmem:[%s94 + $0x5d4] sm:%s86] %v841
        %v843 = vld [vmem:[%s93 + $0x5cc] sm:%s86]
        %844 = vst [vmem:[%s94 + $0x5d8] sm:%s86] %v843
        %v845 = vld [vmem:[%s93 + $0x5dc] sm:%s86]
        %846 = vst [vmem:[%s94 + $0x5dc] sm:%s86] %v845
        %v847 = vld [vmem:[%s93 + $0x5e0] sm:%s86]
        %848 = vst [vmem:[%s94 + $0x5e0] sm:%s86] %v847
        %v849 = vld [vmem:[%s93 + $0x5f0] sm:%s86]
        %850 = vst [vmem:[%s94 + $0x5e4] sm:%s86] %v849
        %v851 = vld [vmem:[%s93 + $0x5e4] sm:%s86]
        %852 = vst [vmem:[%s94 + $0x5e8] sm:%s86] %v851
        %v853 = vld [vmem:[%s93 + $0x5f4] sm:%s86]
        %854 = vst [vmem:[%s94 + $0x5ec] sm:%s86] %v853
        %v855 = vld [vmem:[%s93 + $0x5e8] sm:%s86]
        %856 = vst [vmem:[%s94 + $0x5f0] sm:%s86] %v855
        %v857 = vld [vmem:[%s93 + $0x5f8] sm:%s86]
        %858 = vst [vmem:[%s94 + $0x5f4] sm:%s86] %v857
        %v859 = vld [vmem:[%s93 + $0x5ec] sm:%s86]
        %860 = vst [vmem:[%s94 + $0x5f8] sm:%s86] %v859
        %v861 = vld [vmem:[%s93 + $0x5fc] sm:%s86]
        %862 = vst [vmem:[%s94 + $0x5fc] sm:%s86] %v861
      $region106: #{fcn1_forward.1} parent=100 // loop_footer
        %s92 = sadd.s32 1, %s88
      $region107: #{fcn1_forward.1} parent=100 // loop_footer_branch
        %87 = sbr.rel target = $region103
      $region108: #{fcn1_forward.1} parent=100 // loop_exit
        _
    $region101: #{fcn1_forward.1} parent=1 // pred_fallthru
      _
    // Predicated region
    $region127: #{fcn1_forward.1} parent=1 // pred_check
      _
    $region128: #{fcn1_forward.1} parent=1 // pred_check_branch
      %1660 = sbr.rel (0) target = $region130
    $region129: #{fcn1_forward.1} parent=1 // pred_region
      %1661 = vsyncadd [#allocation7], 24576
    $region130: #{fcn1_forward.1} parent=1 // pred_fallthru
      _
    %s1662 = scalar_lea.sflag [#allocation7], 1
    %p1664 = scmp.lt.u32.totalorder 4, 8
    %p1665 = pneg %p1664
    // Predicated region
    $region131: #{fcn1_forward.1} parent=1 // pred_check
      _
    $region132: #{fcn1_forward.1} parent=1 // pred_check_branch
      %1667 = sbr.rel (%p1664) target = $region134
    $region133: #{fcn1_forward.1} parent=1 // pred_region
      %s2448 = sand.u32 4, 7
      %p2449 = scmp.eq.s32.totalorder %s2448, 0
      %p2450 = pneg %p2449
      // Predicated region
      $region146: #{fcn1_forward.1} parent=133 // pred_check
        _
      $region147: #{fcn1_forward.1} parent=133 // pred_check_branch
        %2452 = sbr.rel (%p2449) target = $region149
      $region148: #{fcn1_forward.1} parent=133 // pred_region
        %s2453 = sand.u32 4, 7
        %s2454 = ssub.s32 4, %s2453
        %s2455 = scalar_lea.vmem %s14, %s2454
        %s2456 = ssub.s32 4, %s2453
        %s2457 = scalar_lea.vmem [#allocation6], %s2456
        loop: start=0, step=1, limit=1
        $region150: #{fcn1_forward.1} parent=148 // loop_pre_header
          _
        $region151: #{fcn1_forward.1} parent=148 // loop_header
          %s2459 = sphi 0, %s2463
          %p2460 = scmp.ge.s32.totalorder %s2459, 1
          %s2464 = sphi %s14, %s14
          %s2465 = sphi [#allocation6], [#allocation6]
        $region152: #{fcn1_forward.1} parent=148 // loop_header_branch
          %2462 = sbr.rel (%p2460) target = $region156
        $region153: #{fcn1_forward.1} parent=148 // loop_body
          _
        $region154: #{fcn1_forward.1} parent=148 // loop_footer
          %s2463 = sadd.s32 1, %s2459
        $region155: #{fcn1_forward.1} parent=148 // loop_footer_branch
          %2458 = sbr.rel target = $region151
        $region156: #{fcn1_forward.1} parent=148 // loop_exit
          _
        %s2466 = sshllo.u32 0, %s2453
        loop: start=0, step=1, limit=1
        $region157: #{fcn1_forward.1} parent=148 // loop_pre_header
          _
        $region158: #{fcn1_forward.1} parent=148 // loop_header
          %s2468 = sphi 0, %s2472
          %p2469 = scmp.ge.s32.totalorder %s2468, 1
          %s2473 = sphi %s2455, %s2455
          %s2474 = sphi %s2457, %s2457
        $region159: #{fcn1_forward.1} parent=148 // loop_header_branch
          %2471 = sbr.rel (%p2469) target = $region163
        $region160: #{fcn1_forward.1} parent=148 // loop_body
          %v2475 = vld [vmem:[%s2473] sm:%s2466]
          %2476 = vst [vmem:[%s2474] sm:%s2466] %v2475
          %v2477 = vld [vmem:[%s2473 + $0x8] sm:%s2466]
          %2478 = vst [vmem:[%s2474 + $0x4] sm:%s2466] %v2477
          %v2479 = vld [vmem:[%s2473 + $0x4] sm:%s2466]
          %2480 = vst [vmem:[%s2474 + $0x8] sm:%s2466] %v2479
          %v2481 = vld [vmem:[%s2473 + $0xc] sm:%s2466]
          %2482 = vst [vmem:[%s2474 + $0xc] sm:%s2466] %v2481
          %v2483 = vld [vmem:[%s2473 + $0x10] sm:%s2466]
          %2484 = vst [vmem:[%s2474 + $0x10] sm:%s2466] %v2483
          %v2485 = vld [vmem:[%s2473 + $0x18] sm:%s2466]
          %2486 = vst [vmem:[%s2474 + $0x14] sm:%s2466] %v2485
          %v2487 = vld [vmem:[%s2473 + $0x14] sm:%s2466]
          %2488 = vst [vmem:[%s2474 + $0x18] sm:%s2466] %v2487
          %v2489 = vld [vmem:[%s2473 + $0x1c] sm:%s2466]
          %2490 = vst [vmem:[%s2474 + $0x1c] sm:%s2466] %v2489
          %v2491 = vld [vmem:[%s2473 + $0x20] sm:%s2466]
          %2492 = vst [vmem:[%s2474 + $0x20] sm:%s2466] %v2491
          %v2493 = vld [vmem:[%s2473 + $0x28] sm:%s2466]
          %2494 = vst [vmem:[%s2474 + $0x24] sm:%s2466] %v2493
          %v2495 = vld [vmem:[%s2473 + $0x24] sm:%s2466]
          %2496 = vst [vmem:[%s2474 + $0x28] sm:%s2466] %v2495
          %v2497 = vld [vmem:[%s2473 + $0x2c] sm:%s2466]
          %2498 = vst [vmem:[%s2474 + $0x2c] sm:%s2466] %v2497
          %v2499 = vld [vmem:[%s2473 + $0x30] sm:%s2466]
          %2500 = vst [vmem:[%s2474 + $0x30] sm:%s2466] %v2499
          %v2501 = vld [vmem:[%s2473 + $0x38] sm:%s2466]
          %2502 = vst [vmem:[%s2474 + $0x34] sm:%s2466] %v2501
          %v2503 = vld [vmem:[%s2473 + $0x34] sm:%s2466]
          %2504 = vst [vmem:[%s2474 + $0x38] sm:%s2466] %v2503
          %v2505 = vld [vmem:[%s2473 + $0x3c] sm:%s2466]
          %2506 = vst [vmem:[%s2474 + $0x3c] sm:%s2466] %v2505
          %v2507 = vld [vmem:[%s2473 + $0x40] sm:%s2466]
          %2508 = vst [vmem:[%s2474 + $0x40] sm:%s2466] %v2507
          %v2509 = vld [vmem:[%s2473 + $0x48] sm:%s2466]
          %2510 = vst [vmem:[%s2474 + $0x44] sm:%s2466] %v2509
          %v2511 = vld [vmem:[%s2473 + $0x44] sm:%s2466]
          %2512 = vst [vmem:[%s2474 + $0x48] sm:%s2466] %v2511
          %v2513 = vld [vmem:[%s2473 + $0x4c] sm:%s2466]
          %2514 = vst [vmem:[%s2474 + $0x4c] sm:%s2466] %v2513
          %v2515 = vld [vmem:[%s2473 + $0x50] sm:%s2466]
          %2516 = vst [vmem:[%s2474 + $0x50] sm:%s2466] %v2515
          %v2517 = vld [vmem:[%s2473 + $0x58] sm:%s2466]
          %2518 = vst [vmem:[%s2474 + $0x54] sm:%s2466] %v2517
          %v2519 = vld [vmem:[%s2473 + $0x54] sm:%s2466]
          %2520 = vst [vmem:[%s2474 + $0x58] sm:%s2466] %v2519
          %v2521 = vld [vmem:[%s2473 + $0x5c] sm:%s2466]
          %2522 = vst [vmem:[%s2474 + $0x5c] sm:%s2466] %v2521
          %v2523 = vld [vmem:[%s2473 + $0x60] sm:%s2466]
          %2524 = vst [vmem:[%s2474 + $0x60] sm:%s2466] %v2523
          %v2525 = vld [vmem:[%s2473 + $0x68] sm:%s2466]
          %2526 = vst [vmem:[%s2474 + $0x64] sm:%s2466] %v2525
          %v2527 = vld [vmem:[%s2473 + $0x64] sm:%s2466]
          %2528 = vst [vmem:[%s2474 + $0x68] sm:%s2466] %v2527
          %v2529 = vld [vmem:[%s2473 + $0x6c] sm:%s2466]
          %2530 = vst [vmem:[%s2474 + $0x6c] sm:%s2466] %v2529
          %v2531 = vld [vmem:[%s2473 + $0x70] sm:%s2466]
          %2532 = vst [vmem:[%s2474 + $0x70] sm:%s2466] %v2531
          %v2533 = vld [vmem:[%s2473 + $0x78] sm:%s2466]
          %2534 = vst [vmem:[%s2474 + $0x74] sm:%s2466] %v2533
          %v2535 = vld [vmem:[%s2473 + $0x74] sm:%s2466]
          %2536 = vst [vmem:[%s2474 + $0x78] sm:%s2466] %v2535
          %v2537 = vld [vmem:[%s2473 + $0x7c] sm:%s2466]
          %2538 = vst [vmem:[%s2474 + $0x7c] sm:%s2466] %v2537
          %v2539 = vld [vmem:[%s2473 + $0x80] sm:%s2466]
          %2540 = vst [vmem:[%s2474 + $0x80] sm:%s2466] %v2539
          %v2541 = vld [vmem:[%s2473 + $0x88] sm:%s2466]
          %2542 = vst [vmem:[%s2474 + $0x84] sm:%s2466] %v2541
          %v2543 = vld [vmem:[%s2473 + $0x84] sm:%s2466]
          %2544 = vst [vmem:[%s2474 + $0x88] sm:%s2466] %v2543
          %v2545 = vld [vmem:[%s2473 + $0x8c] sm:%s2466]
          %2546 = vst [vmem:[%s2474 + $0x8c] sm:%s2466] %v2545
          %v2547 = vld [vmem:[%s2473 + $0x90] sm:%s2466]
          %2548 = vst [vmem:[%s2474 + $0x90] sm:%s2466] %v2547
          %v2549 = vld [vmem:[%s2473 + $0x98] sm:%s2466]
          %2550 = vst [vmem:[%s2474 + $0x94] sm:%s2466] %v2549
          %v2551 = vld [vmem:[%s2473 + $0x94] sm:%s2466]
          %2552 = vst [vmem:[%s2474 + $0x98] sm:%s2466] %v2551
          %v2553 = vld [vmem:[%s2473 + $0x9c] sm:%s2466]
          %2554 = vst [vmem:[%s2474 + $0x9c] sm:%s2466] %v2553
          %v2555 = vld [vmem:[%s2473 + $0xa0] sm:%s2466]
          %2556 = vst [vmem:[%s2474 + $0xa0] sm:%s2466] %v2555
          %v2557 = vld [vmem:[%s2473 + $0xa8] sm:%s2466]
          %2558 = vst [vmem:[%s2474 + $0xa4] sm:%s2466] %v2557
          %v2559 = vld [vmem:[%s2473 + $0xa4] sm:%s2466]
          %2560 = vst [vmem:[%s2474 + $0xa8] sm:%s2466] %v2559
          %v2561 = vld [vmem:[%s2473 + $0xac] sm:%s2466]
          %2562 = vst [vmem:[%s2474 + $0xac] sm:%s2466] %v2561
          %v2563 = vld [vmem:[%s2473 + $0xb0] sm:%s2466]
          %2564 = vst [vmem:[%s2474 + $0xb0] sm:%s2466] %v2563
          %v2565 = vld [vmem:[%s2473 + $0xb8] sm:%s2466]
          %2566 = vst [vmem:[%s2474 + $0xb4] sm:%s2466] %v2565
          %v2567 = vld [vmem:[%s2473 + $0xb4] sm:%s2466]
          %2568 = vst [vmem:[%s2474 + $0xb8] sm:%s2466] %v2567
          %v2569 = vld [vmem:[%s2473 + $0xbc] sm:%s2466]
          %2570 = vst [vmem:[%s2474 + $0xbc] sm:%s2466] %v2569
          %v2571 = vld [vmem:[%s2473 + $0xc0] sm:%s2466]
          %2572 = vst [vmem:[%s2474 + $0xc0] sm:%s2466] %v2571
          %v2573 = vld [vmem:[%s2473 + $0xc8] sm:%s2466]
          %2574 = vst [vmem:[%s2474 + $0xc4] sm:%s2466] %v2573
          %v2575 = vld [vmem:[%s2473 + $0xc4] sm:%s2466]
          %2576 = vst [vmem:[%s2474 + $0xc8] sm:%s2466] %v2575
          %v2577 = vld [vmem:[%s2473 + $0xcc] sm:%s2466]
          %2578 = vst [vmem:[%s2474 + $0xcc] sm:%s2466] %v2577
          %v2579 = vld [vmem:[%s2473 + $0xd0] sm:%s2466]
          %2580 = vst [vmem:[%s2474 + $0xd0] sm:%s2466] %v2579
          %v2581 = vld [vmem:[%s2473 + $0xd8] sm:%s2466]
          %2582 = vst [vmem:[%s2474 + $0xd4] sm:%s2466] %v2581
          %v2583 = vld [vmem:[%s2473 + $0xd4] sm:%s2466]
          %2584 = vst [vmem:[%s2474 + $0xd8] sm:%s2466] %v2583
          %v2585 = vld [vmem:[%s2473 + $0xdc] sm:%s2466]
          %2586 = vst [vmem:[%s2474 + $0xdc] sm:%s2466] %v2585
          %v2587 = vld [vmem:[%s2473 + $0xe0] sm:%s2466]
          %2588 = vst [vmem:[%s2474 + $0xe0] sm:%s2466] %v2587
          %v2589 = vld [vmem:[%s2473 + $0xe8] sm:%s2466]
          %2590 = vst [vmem:[%s2474 + $0xe4] sm:%s2466] %v2589
          %v2591 = vld [vmem:[%s2473 + $0xe4] sm:%s2466]
          %2592 = vst [vmem:[%s2474 + $0xe8] sm:%s2466] %v2591
          %v2593 = vld [vmem:[%s2473 + $0xec] sm:%s2466]
          %2594 = vst [vmem:[%s2474 + $0xec] sm:%s2466] %v2593
          %v2595 = vld [vmem:[%s2473 + $0xf0] sm:%s2466]
          %2596 = vst [vmem:[%s2474 + $0xf0] sm:%s2466] %v2595
          %v2597 = vld [vmem:[%s2473 + $0xf8] sm:%s2466]
          %2598 = vst [vmem:[%s2474 + $0xf4] sm:%s2466] %v2597
          %v2599 = vld [vmem:[%s2473 + $0xf4] sm:%s2466]
          %2600 = vst [vmem:[%s2474 + $0xf8] sm:%s2466] %v2599
          %v2601 = vld [vmem:[%s2473 + $0xfc] sm:%s2466]
          %2602 = vst [vmem:[%s2474 + $0xfc] sm:%s2466] %v2601
          %v2603 = vld [vmem:[%s2473 + $0x100] sm:%s2466]
          %2604 = vst [vmem:[%s2474 + $0x100] sm:%s2466] %v2603
          %v2605 = vld [vmem:[%s2473 + $0x108] sm:%s2466]
          %2606 = vst [vmem:[%s2474 + $0x104] sm:%s2466] %v2605
          %v2607 = vld [vmem:[%s2473 + $0x104] sm:%s2466]
          %2608 = vst [vmem:[%s2474 + $0x108] sm:%s2466] %v2607
          %v2609 = vld [vmem:[%s2473 + $0x10c] sm:%s2466]
          %2610 = vst [vmem:[%s2474 + $0x10c] sm:%s2466] %v2609
          %v2611 = vld [vmem:[%s2473 + $0x110] sm:%s2466]
          %2612 = vst [vmem:[%s2474 + $0x110] sm:%s2466] %v2611
          %v2613 = vld [vmem:[%s2473 + $0x118] sm:%s2466]
          %2614 = vst [vmem:[%s2474 + $0x114] sm:%s2466] %v2613
          %v2615 = vld [vmem:[%s2473 + $0x114] sm:%s2466]
          %2616 = vst [vmem:[%s2474 + $0x118] sm:%s2466] %v2615
          %v2617 = vld [vmem:[%s2473 + $0x11c] sm:%s2466]
          %2618 = vst [vmem:[%s2474 + $0x11c] sm:%s2466] %v2617
          %v2619 = vld [vmem:[%s2473 + $0x120] sm:%s2466]
          %2620 = vst [vmem:[%s2474 + $0x120] sm:%s2466] %v2619
          %v2621 = vld [vmem:[%s2473 + $0x128] sm:%s2466]
          %2622 = vst [vmem:[%s2474 + $0x124] sm:%s2466] %v2621
          %v2623 = vld [vmem:[%s2473 + $0x124] sm:%s2466]
          %2624 = vst [vmem:[%s2474 + $0x128] sm:%s2466] %v2623
          %v2625 = vld [vmem:[%s2473 + $0x12c] sm:%s2466]
          %2626 = vst [vmem:[%s2474 + $0x12c] sm:%s2466] %v2625
          %v2627 = vld [vmem:[%s2473 + $0x130] sm:%s2466]
          %2628 = vst [vmem:[%s2474 + $0x130] sm:%s2466] %v2627
          %v2629 = vld [vmem:[%s2473 + $0x138] sm:%s2466]
          %2630 = vst [vmem:[%s2474 + $0x134] sm:%s2466] %v2629
          %v2631 = vld [vmem:[%s2473 + $0x134] sm:%s2466]
          %2632 = vst [vmem:[%s2474 + $0x138] sm:%s2466] %v2631
          %v2633 = vld [vmem:[%s2473 + $0x13c] sm:%s2466]
          %2634 = vst [vmem:[%s2474 + $0x13c] sm:%s2466] %v2633
          %v2635 = vld [vmem:[%s2473 + $0x140] sm:%s2466]
          %2636 = vst [vmem:[%s2474 + $0x140] sm:%s2466] %v2635
          %v2637 = vld [vmem:[%s2473 + $0x148] sm:%s2466]
          %2638 = vst [vmem:[%s2474 + $0x144] sm:%s2466] %v2637
          %v2639 = vld [vmem:[%s2473 + $0x144] sm:%s2466]
          %2640 = vst [vmem:[%s2474 + $0x148] sm:%s2466] %v2639
          %v2641 = vld [vmem:[%s2473 + $0x14c] sm:%s2466]
          %2642 = vst [vmem:[%s2474 + $0x14c] sm:%s2466] %v2641
          %v2643 = vld [vmem:[%s2473 + $0x150] sm:%s2466]
          %2644 = vst [vmem:[%s2474 + $0x150] sm:%s2466] %v2643
          %v2645 = vld [vmem:[%s2473 + $0x158] sm:%s2466]
          %2646 = vst [vmem:[%s2474 + $0x154] sm:%s2466] %v2645
          %v2647 = vld [vmem:[%s2473 + $0x154] sm:%s2466]
          %2648 = vst [vmem:[%s2474 + $0x158] sm:%s2466] %v2647
          %v2649 = vld [vmem:[%s2473 + $0x15c] sm:%s2466]
          %2650 = vst [vmem:[%s2474 + $0x15c] sm:%s2466] %v2649
          %v2651 = vld [vmem:[%s2473 + $0x160] sm:%s2466]
          %2652 = vst [vmem:[%s2474 + $0x160] sm:%s2466] %v2651
          %v2653 = vld [vmem:[%s2473 + $0x168] sm:%s2466]
          %2654 = vst [vmem:[%s2474 + $0x164] sm:%s2466] %v2653
          %v2655 = vld [vmem:[%s2473 + $0x164] sm:%s2466]
          %2656 = vst [vmem:[%s2474 + $0x168] sm:%s2466] %v2655
          %v2657 = vld [vmem:[%s2473 + $0x16c] sm:%s2466]
          %2658 = vst [vmem:[%s2474 + $0x16c] sm:%s2466] %v2657
          %v2659 = vld [vmem:[%s2473 + $0x170] sm:%s2466]
          %2660 = vst [vmem:[%s2474 + $0x170] sm:%s2466] %v2659
          %v2661 = vld [vmem:[%s2473 + $0x178] sm:%s2466]
          %2662 = vst [vmem:[%s2474 + $0x174] sm:%s2466] %v2661
          %v2663 = vld [vmem:[%s2473 + $0x174] sm:%s2466]
          %2664 = vst [vmem:[%s2474 + $0x178] sm:%s2466] %v2663
          %v2665 = vld [vmem:[%s2473 + $0x17c] sm:%s2466]
          %2666 = vst [vmem:[%s2474 + $0x17c] sm:%s2466] %v2665
          %v2667 = vld [vmem:[%s2473 + $0x180] sm:%s2466]
          %2668 = vst [vmem:[%s2474 + $0x180] sm:%s2466] %v2667
          %v2669 = vld [vmem:[%s2473 + $0x188] sm:%s2466]
          %2670 = vst [vmem:[%s2474 + $0x184] sm:%s2466] %v2669
          %v2671 = vld [vmem:[%s2473 + $0x184] sm:%s2466]
          %2672 = vst [vmem:[%s2474 + $0x188] sm:%s2466] %v2671
          %v2673 = vld [vmem:[%s2473 + $0x18c] sm:%s2466]
          %2674 = vst [vmem:[%s2474 + $0x18c] sm:%s2466] %v2673
          %v2675 = vld [vmem:[%s2473 + $0x190] sm:%s2466]
          %2676 = vst [vmem:[%s2474 + $0x190] sm:%s2466] %v2675
          %v2677 = vld [vmem:[%s2473 + $0x198] sm:%s2466]
          %2678 = vst [vmem:[%s2474 + $0x194] sm:%s2466] %v2677
          %v2679 = vld [vmem:[%s2473 + $0x194] sm:%s2466]
          %2680 = vst [vmem:[%s2474 + $0x198] sm:%s2466] %v2679
          %v2681 = vld [vmem:[%s2473 + $0x19c] sm:%s2466]
          %2682 = vst [vmem:[%s2474 + $0x19c] sm:%s2466] %v2681
          %v2683 = vld [vmem:[%s2473 + $0x1a0] sm:%s2466]
          %2684 = vst [vmem:[%s2474 + $0x1a0] sm:%s2466] %v2683
          %v2685 = vld [vmem:[%s2473 + $0x1a8] sm:%s2466]
          %2686 = vst [vmem:[%s2474 + $0x1a4] sm:%s2466] %v2685
          %v2687 = vld [vmem:[%s2473 + $0x1a4] sm:%s2466]
          %2688 = vst [vmem:[%s2474 + $0x1a8] sm:%s2466] %v2687
          %v2689 = vld [vmem:[%s2473 + $0x1ac] sm:%s2466]
          %2690 = vst [vmem:[%s2474 + $0x1ac] sm:%s2466] %v2689
          %v2691 = vld [vmem:[%s2473 + $0x1b0] sm:%s2466]
          %2692 = vst [vmem:[%s2474 + $0x1b0] sm:%s2466] %v2691
          %v2693 = vld [vmem:[%s2473 + $0x1b8] sm:%s2466]
          %2694 = vst [vmem:[%s2474 + $0x1b4] sm:%s2466] %v2693
          %v2695 = vld [vmem:[%s2473 + $0x1b4] sm:%s2466]
          %2696 = vst [vmem:[%s2474 + $0x1b8] sm:%s2466] %v2695
          %v2697 = vld [vmem:[%s2473 + $0x1bc] sm:%s2466]
          %2698 = vst [vmem:[%s2474 + $0x1bc] sm:%s2466] %v2697
          %v2699 = vld [vmem:[%s2473 + $0x1c0] sm:%s2466]
          %2700 = vst [vmem:[%s2474 + $0x1c0] sm:%s2466] %v2699
          %v2701 = vld [vmem:[%s2473 + $0x1c8] sm:%s2466]
          %2702 = vst [vmem:[%s2474 + $0x1c4] sm:%s2466] %v2701
          %v2703 = vld [vmem:[%s2473 + $0x1c4] sm:%s2466]
          %2704 = vst [vmem:[%s2474 + $0x1c8] sm:%s2466] %v2703
          %v2705 = vld [vmem:[%s2473 + $0x1cc] sm:%s2466]
          %2706 = vst [vmem:[%s2474 + $0x1cc] sm:%s2466] %v2705
          %v2707 = vld [vmem:[%s2473 + $0x1d0] sm:%s2466]
          %2708 = vst [vmem:[%s2474 + $0x1d0] sm:%s2466] %v2707
          %v2709 = vld [vmem:[%s2473 + $0x1d8] sm:%s2466]
          %2710 = vst [vmem:[%s2474 + $0x1d4] sm:%s2466] %v2709
          %v2711 = vld [vmem:[%s2473 + $0x1d4] sm:%s2466]
          %2712 = vst [vmem:[%s2474 + $0x1d8] sm:%s2466] %v2711
          %v2713 = vld [vmem:[%s2473 + $0x1dc] sm:%s2466]
          %2714 = vst [vmem:[%s2474 + $0x1dc] sm:%s2466] %v2713
          %v2715 = vld [vmem:[%s2473 + $0x1e0] sm:%s2466]
          %2716 = vst [vmem:[%s2474 + $0x1e0] sm:%s2466] %v2715
          %v2717 = vld [vmem:[%s2473 + $0x1e8] sm:%s2466]
          %2718 = vst [vmem:[%s2474 + $0x1e4] sm:%s2466] %v2717
          %v2719 = vld [vmem:[%s2473 + $0x1e4] sm:%s2466]
          %2720 = vst [vmem:[%s2474 + $0x1e8] sm:%s2466] %v2719
          %v2721 = vld [vmem:[%s2473 + $0x1ec] sm:%s2466]
          %2722 = vst [vmem:[%s2474 + $0x1ec] sm:%s2466] %v2721
          %v2723 = vld [vmem:[%s2473 + $0x1f0] sm:%s2466]
          %2724 = vst [vmem:[%s2474 + $0x1f0] sm:%s2466] %v2723
          %v2725 = vld [vmem:[%s2473 + $0x1f8] sm:%s2466]
          %2726 = vst [vmem:[%s2474 + $0x1f4] sm:%s2466] %v2725
          %v2727 = vld [vmem:[%s2473 + $0x1f4] sm:%s2466]
          %2728 = vst [vmem:[%s2474 + $0x1f8] sm:%s2466] %v2727
          %v2729 = vld [vmem:[%s2473 + $0x1fc] sm:%s2466]
          %2730 = vst [vmem:[%s2474 + $0x1fc] sm:%s2466] %v2729
          %v2731 = vld [vmem:[%s2473 + $0x200] sm:%s2466]
          %2732 = vst [vmem:[%s2474 + $0x200] sm:%s2466] %v2731
          %v2733 = vld [vmem:[%s2473 + $0x208] sm:%s2466]
          %2734 = vst [vmem:[%s2474 + $0x204] sm:%s2466] %v2733
          %v2735 = vld [vmem:[%s2473 + $0x204] sm:%s2466]
          %2736 = vst [vmem:[%s2474 + $0x208] sm:%s2466] %v2735
          %v2737 = vld [vmem:[%s2473 + $0x20c] sm:%s2466]
          %2738 = vst [vmem:[%s2474 + $0x20c] sm:%s2466] %v2737
          %v2739 = vld [vmem:[%s2473 + $0x210] sm:%s2466]
          %2740 = vst [vmem:[%s2474 + $0x210] sm:%s2466] %v2739
          %v2741 = vld [vmem:[%s2473 + $0x218] sm:%s2466]
          %2742 = vst [vmem:[%s2474 + $0x214] sm:%s2466] %v2741
          %v2743 = vld [vmem:[%s2473 + $0x214] sm:%s2466]
          %2744 = vst [vmem:[%s2474 + $0x218] sm:%s2466] %v2743
          %v2745 = vld [vmem:[%s2473 + $0x21c] sm:%s2466]
          %2746 = vst [vmem:[%s2474 + $0x21c] sm:%s2466] %v2745
          %v2747 = vld [vmem:[%s2473 + $0x220] sm:%s2466]
          %2748 = vst [vmem:[%s2474 + $0x220] sm:%s2466] %v2747
          %v2749 = vld [vmem:[%s2473 + $0x228] sm:%s2466]
          %2750 = vst [vmem:[%s2474 + $0x224] sm:%s2466] %v2749
          %v2751 = vld [vmem:[%s2473 + $0x224] sm:%s2466]
          %2752 = vst [vmem:[%s2474 + $0x228] sm:%s2466] %v2751
          %v2753 = vld [vmem:[%s2473 + $0x22c] sm:%s2466]
          %2754 = vst [vmem:[%s2474 + $0x22c] sm:%s2466] %v2753
          %v2755 = vld [vmem:[%s2473 + $0x230] sm:%s2466]
          %2756 = vst [vmem:[%s2474 + $0x230] sm:%s2466] %v2755
          %v2757 = vld [vmem:[%s2473 + $0x238] sm:%s2466]
          %2758 = vst [vmem:[%s2474 + $0x234] sm:%s2466] %v2757
          %v2759 = vld [vmem:[%s2473 + $0x234] sm:%s2466]
          %2760 = vst [vmem:[%s2474 + $0x238] sm:%s2466] %v2759
          %v2761 = vld [vmem:[%s2473 + $0x23c] sm:%s2466]
          %2762 = vst [vmem:[%s2474 + $0x23c] sm:%s2466] %v2761
          %v2763 = vld [vmem:[%s2473 + $0x240] sm:%s2466]
          %2764 = vst [vmem:[%s2474 + $0x240] sm:%s2466] %v2763
          %v2765 = vld [vmem:[%s2473 + $0x248] sm:%s2466]
          %2766 = vst [vmem:[%s2474 + $0x244] sm:%s2466] %v2765
          %v2767 = vld [vmem:[%s2473 + $0x244] sm:%s2466]
          %2768 = vst [vmem:[%s2474 + $0x248] sm:%s2466] %v2767
          %v2769 = vld [vmem:[%s2473 + $0x24c] sm:%s2466]
          %2770 = vst [vmem:[%s2474 + $0x24c] sm:%s2466] %v2769
          %v2771 = vld [vmem:[%s2473 + $0x250] sm:%s2466]
          %2772 = vst [vmem:[%s2474 + $0x250] sm:%s2466] %v2771
          %v2773 = vld [vmem:[%s2473 + $0x258] sm:%s2466]
          %2774 = vst [vmem:[%s2474 + $0x254] sm:%s2466] %v2773
          %v2775 = vld [vmem:[%s2473 + $0x254] sm:%s2466]
          %2776 = vst [vmem:[%s2474 + $0x258] sm:%s2466] %v2775
          %v2777 = vld [vmem:[%s2473 + $0x25c] sm:%s2466]
          %2778 = vst [vmem:[%s2474 + $0x25c] sm:%s2466] %v2777
          %v2779 = vld [vmem:[%s2473 + $0x260] sm:%s2466]
          %2780 = vst [vmem:[%s2474 + $0x260] sm:%s2466] %v2779
          %v2781 = vld [vmem:[%s2473 + $0x268] sm:%s2466]
          %2782 = vst [vmem:[%s2474 + $0x264] sm:%s2466] %v2781
          %v2783 = vld [vmem:[%s2473 + $0x264] sm:%s2466]
          %2784 = vst [vmem:[%s2474 + $0x268] sm:%s2466] %v2783
          %v2785 = vld [vmem:[%s2473 + $0x26c] sm:%s2466]
          %2786 = vst [vmem:[%s2474 + $0x26c] sm:%s2466] %v2785
          %v2787 = vld [vmem:[%s2473 + $0x270] sm:%s2466]
          %2788 = vst [vmem:[%s2474 + $0x270] sm:%s2466] %v2787
          %v2789 = vld [vmem:[%s2473 + $0x278] sm:%s2466]
          %2790 = vst [vmem:[%s2474 + $0x274] sm:%s2466] %v2789
          %v2791 = vld [vmem:[%s2473 + $0x274] sm:%s2466]
          %2792 = vst [vmem:[%s2474 + $0x278] sm:%s2466] %v2791
          %v2793 = vld [vmem:[%s2473 + $0x27c] sm:%s2466]
          %2794 = vst [vmem:[%s2474 + $0x27c] sm:%s2466] %v2793
          %v2795 = vld [vmem:[%s2473 + $0x280] sm:%s2466]
          %2796 = vst [vmem:[%s2474 + $0x280] sm:%s2466] %v2795
          %v2797 = vld [vmem:[%s2473 + $0x288] sm:%s2466]
          %2798 = vst [vmem:[%s2474 + $0x284] sm:%s2466] %v2797
          %v2799 = vld [vmem:[%s2473 + $0x284] sm:%s2466]
          %2800 = vst [vmem:[%s2474 + $0x288] sm:%s2466] %v2799
          %v2801 = vld [vmem:[%s2473 + $0x28c] sm:%s2466]
          %2802 = vst [vmem:[%s2474 + $0x28c] sm:%s2466] %v2801
          %v2803 = vld [vmem:[%s2473 + $0x290] sm:%s2466]
          %2804 = vst [vmem:[%s2474 + $0x290] sm:%s2466] %v2803
          %v2805 = vld [vmem:[%s2473 + $0x298] sm:%s2466]
          %2806 = vst [vmem:[%s2474 + $0x294] sm:%s2466] %v2805
          %v2807 = vld [vmem:[%s2473 + $0x294] sm:%s2466]
          %2808 = vst [vmem:[%s2474 + $0x298] sm:%s2466] %v2807
          %v2809 = vld [vmem:[%s2473 + $0x29c] sm:%s2466]
          %2810 = vst [vmem:[%s2474 + $0x29c] sm:%s2466] %v2809
          %v2811 = vld [vmem:[%s2473 + $0x2a0] sm:%s2466]
          %2812 = vst [vmem:[%s2474 + $0x2a0] sm:%s2466] %v2811
          %v2813 = vld [vmem:[%s2473 + $0x2a8] sm:%s2466]
          %2814 = vst [vmem:[%s2474 + $0x2a4] sm:%s2466] %v2813
          %v2815 = vld [vmem:[%s2473 + $0x2a4] sm:%s2466]
          %2816 = vst [vmem:[%s2474 + $0x2a8] sm:%s2466] %v2815
          %v2817 = vld [vmem:[%s2473 + $0x2ac] sm:%s2466]
          %2818 = vst [vmem:[%s2474 + $0x2ac] sm:%s2466] %v2817
          %v2819 = vld [vmem:[%s2473 + $0x2b0] sm:%s2466]
          %2820 = vst [vmem:[%s2474 + $0x2b0] sm:%s2466] %v2819
          %v2821 = vld [vmem:[%s2473 + $0x2b8] sm:%s2466]
          %2822 = vst [vmem:[%s2474 + $0x2b4] sm:%s2466] %v2821
          %v2823 = vld [vmem:[%s2473 + $0x2b4] sm:%s2466]
          %2824 = vst [vmem:[%s2474 + $0x2b8] sm:%s2466] %v2823
          %v2825 = vld [vmem:[%s2473 + $0x2bc] sm:%s2466]
          %2826 = vst [vmem:[%s2474 + $0x2bc] sm:%s2466] %v2825
          %v2827 = vld [vmem:[%s2473 + $0x2c0] sm:%s2466]
          %2828 = vst [vmem:[%s2474 + $0x2c0] sm:%s2466] %v2827
          %v2829 = vld [vmem:[%s2473 + $0x2c8] sm:%s2466]
          %2830 = vst [vmem:[%s2474 + $0x2c4] sm:%s2466] %v2829
          %v2831 = vld [vmem:[%s2473 + $0x2c4] sm:%s2466]
          %2832 = vst [vmem:[%s2474 + $0x2c8] sm:%s2466] %v2831
          %v2833 = vld [vmem:[%s2473 + $0x2cc] sm:%s2466]
          %2834 = vst [vmem:[%s2474 + $0x2cc] sm:%s2466] %v2833
          %v2835 = vld [vmem:[%s2473 + $0x2d0] sm:%s2466]
          %2836 = vst [vmem:[%s2474 + $0x2d0] sm:%s2466] %v2835
          %v2837 = vld [vmem:[%s2473 + $0x2d8] sm:%s2466]
          %2838 = vst [vmem:[%s2474 + $0x2d4] sm:%s2466] %v2837
          %v2839 = vld [vmem:[%s2473 + $0x2d4] sm:%s2466]
          %2840 = vst [vmem:[%s2474 + $0x2d8] sm:%s2466] %v2839
          %v2841 = vld [vmem:[%s2473 + $0x2dc] sm:%s2466]
          %2842 = vst [vmem:[%s2474 + $0x2dc] sm:%s2466] %v2841
          %v2843 = vld [vmem:[%s2473 + $0x2e0] sm:%s2466]
          %2844 = vst [vmem:[%s2474 + $0x2e0] sm:%s2466] %v2843
          %v2845 = vld [vmem:[%s2473 + $0x2e8] sm:%s2466]
          %2846 = vst [vmem:[%s2474 + $0x2e4] sm:%s2466] %v2845
          %v2847 = vld [vmem:[%s2473 + $0x2e4] sm:%s2466]
          %2848 = vst [vmem:[%s2474 + $0x2e8] sm:%s2466] %v2847
          %v2849 = vld [vmem:[%s2473 + $0x2ec] sm:%s2466]
          %2850 = vst [vmem:[%s2474 + $0x2ec] sm:%s2466] %v2849
          %v2851 = vld [vmem:[%s2473 + $0x2f0] sm:%s2466]
          %2852 = vst [vmem:[%s2474 + $0x2f0] sm:%s2466] %v2851
          %v2853 = vld [vmem:[%s2473 + $0x2f8] sm:%s2466]
          %2854 = vst [vmem:[%s2474 + $0x2f4] sm:%s2466] %v2853
          %v2855 = vld [vmem:[%s2473 + $0x2f4] sm:%s2466]
          %2856 = vst [vmem:[%s2474 + $0x2f8] sm:%s2466] %v2855
          %v2857 = vld [vmem:[%s2473 + $0x2fc] sm:%s2466]
          %2858 = vst [vmem:[%s2474 + $0x2fc] sm:%s2466] %v2857
          %v2859 = vld [vmem:[%s2473 + $0x300] sm:%s2466]
          %2860 = vst [vmem:[%s2474 + $0x300] sm:%s2466] %v2859
          %v2861 = vld [vmem:[%s2473 + $0x308] sm:%s2466]
          %2862 = vst [vmem:[%s2474 + $0x304] sm:%s2466] %v2861
          %v2863 = vld [vmem:[%s2473 + $0x304] sm:%s2466]
          %2864 = vst [vmem:[%s2474 + $0x308] sm:%s2466] %v2863
          %v2865 = vld [vmem:[%s2473 + $0x30c] sm:%s2466]
          %2866 = vst [vmem:[%s2474 + $0x30c] sm:%s2466] %v2865
          %v2867 = vld [vmem:[%s2473 + $0x310] sm:%s2466]
          %2868 = vst [vmem:[%s2474 + $0x310] sm:%s2466] %v2867
          %v2869 = vld [vmem:[%s2473 + $0x318] sm:%s2466]
          %2870 = vst [vmem:[%s2474 + $0x314] sm:%s2466] %v2869
          %v2871 = vld [vmem:[%s2473 + $0x314] sm:%s2466]
          %2872 = vst [vmem:[%s2474 + $0x318] sm:%s2466] %v2871
          %v2873 = vld [vmem:[%s2473 + $0x31c] sm:%s2466]
          %2874 = vst [vmem:[%s2474 + $0x31c] sm:%s2466] %v2873
          %v2875 = vld [vmem:[%s2473 + $0x320] sm:%s2466]
          %2876 = vst [vmem:[%s2474 + $0x320] sm:%s2466] %v2875
          %v2877 = vld [vmem:[%s2473 + $0x328] sm:%s2466]
          %2878 = vst [vmem:[%s2474 + $0x324] sm:%s2466] %v2877
          %v2879 = vld [vmem:[%s2473 + $0x324] sm:%s2466]
          %2880 = vst [vmem:[%s2474 + $0x328] sm:%s2466] %v2879
          %v2881 = vld [vmem:[%s2473 + $0x32c] sm:%s2466]
          %2882 = vst [vmem:[%s2474 + $0x32c] sm:%s2466] %v2881
          %v2883 = vld [vmem:[%s2473 + $0x330] sm:%s2466]
          %2884 = vst [vmem:[%s2474 + $0x330] sm:%s2466] %v2883
          %v2885 = vld [vmem:[%s2473 + $0x338] sm:%s2466]
          %2886 = vst [vmem:[%s2474 + $0x334] sm:%s2466] %v2885
          %v2887 = vld [vmem:[%s2473 + $0x334] sm:%s2466]
          %2888 = vst [vmem:[%s2474 + $0x338] sm:%s2466] %v2887
          %v2889 = vld [vmem:[%s2473 + $0x33c] sm:%s2466]
          %2890 = vst [vmem:[%s2474 + $0x33c] sm:%s2466] %v2889
          %v2891 = vld [vmem:[%s2473 + $0x340] sm:%s2466]
          %2892 = vst [vmem:[%s2474 + $0x340] sm:%s2466] %v2891
          %v2893 = vld [vmem:[%s2473 + $0x348] sm:%s2466]
          %2894 = vst [vmem:[%s2474 + $0x344] sm:%s2466] %v2893
          %v2895 = vld [vmem:[%s2473 + $0x344] sm:%s2466]
          %2896 = vst [vmem:[%s2474 + $0x348] sm:%s2466] %v2895
          %v2897 = vld [vmem:[%s2473 + $0x34c] sm:%s2466]
          %2898 = vst [vmem:[%s2474 + $0x34c] sm:%s2466] %v2897
          %v2899 = vld [vmem:[%s2473 + $0x350] sm:%s2466]
          %2900 = vst [vmem:[%s2474 + $0x350] sm:%s2466] %v2899
          %v2901 = vld [vmem:[%s2473 + $0x358] sm:%s2466]
          %2902 = vst [vmem:[%s2474 + $0x354] sm:%s2466] %v2901
          %v2903 = vld [vmem:[%s2473 + $0x354] sm:%s2466]
          %2904 = vst [vmem:[%s2474 + $0x358] sm:%s2466] %v2903
          %v2905 = vld [vmem:[%s2473 + $0x35c] sm:%s2466]
          %2906 = vst [vmem:[%s2474 + $0x35c] sm:%s2466] %v2905
          %v2907 = vld [vmem:[%s2473 + $0x360] sm:%s2466]
          %2908 = vst [vmem:[%s2474 + $0x360] sm:%s2466] %v2907
          %v2909 = vld [vmem:[%s2473 + $0x368] sm:%s2466]
          %2910 = vst [vmem:[%s2474 + $0x364] sm:%s2466] %v2909
          %v2911 = vld [vmem:[%s2473 + $0x364] sm:%s2466]
          %2912 = vst [vmem:[%s2474 + $0x368] sm:%s2466] %v2911
          %v2913 = vld [vmem:[%s2473 + $0x36c] sm:%s2466]
          %2914 = vst [vmem:[%s2474 + $0x36c] sm:%s2466] %v2913
          %v2915 = vld [vmem:[%s2473 + $0x370] sm:%s2466]
          %2916 = vst [vmem:[%s2474 + $0x370] sm:%s2466] %v2915
          %v2917 = vld [vmem:[%s2473 + $0x378] sm:%s2466]
          %2918 = vst [vmem:[%s2474 + $0x374] sm:%s2466] %v2917
          %v2919 = vld [vmem:[%s2473 + $0x374] sm:%s2466]
          %2920 = vst [vmem:[%s2474 + $0x378] sm:%s2466] %v2919
          %v2921 = vld [vmem:[%s2473 + $0x37c] sm:%s2466]
          %2922 = vst [vmem:[%s2474 + $0x37c] sm:%s2466] %v2921
          %v2923 = vld [vmem:[%s2473 + $0x380] sm:%s2466]
          %2924 = vst [vmem:[%s2474 + $0x380] sm:%s2466] %v2923
          %v2925 = vld [vmem:[%s2473 + $0x388] sm:%s2466]
          %2926 = vst [vmem:[%s2474 + $0x384] sm:%s2466] %v2925
          %v2927 = vld [vmem:[%s2473 + $0x384] sm:%s2466]
          %2928 = vst [vmem:[%s2474 + $0x388] sm:%s2466] %v2927
          %v2929 = vld [vmem:[%s2473 + $0x38c] sm:%s2466]
          %2930 = vst [vmem:[%s2474 + $0x38c] sm:%s2466] %v2929
          %v2931 = vld [vmem:[%s2473 + $0x390] sm:%s2466]
          %2932 = vst [vmem:[%s2474 + $0x390] sm:%s2466] %v2931
          %v2933 = vld [vmem:[%s2473 + $0x398] sm:%s2466]
          %2934 = vst [vmem:[%s2474 + $0x394] sm:%s2466] %v2933
          %v2935 = vld [vmem:[%s2473 + $0x394] sm:%s2466]
          %2936 = vst [vmem:[%s2474 + $0x398] sm:%s2466] %v2935
          %v2937 = vld [vmem:[%s2473 + $0x39c] sm:%s2466]
          %2938 = vst [vmem:[%s2474 + $0x39c] sm:%s2466] %v2937
          %v2939 = vld [vmem:[%s2473 + $0x3a0] sm:%s2466]
          %2940 = vst [vmem:[%s2474 + $0x3a0] sm:%s2466] %v2939
          %v2941 = vld [vmem:[%s2473 + $0x3a8] sm:%s2466]
          %2942 = vst [vmem:[%s2474 + $0x3a4] sm:%s2466] %v2941
          %v2943 = vld [vmem:[%s2473 + $0x3a4] sm:%s2466]
          %2944 = vst [vmem:[%s2474 + $0x3a8] sm:%s2466] %v2943
          %v2945 = vld [vmem:[%s2473 + $0x3ac] sm:%s2466]
          %2946 = vst [vmem:[%s2474 + $0x3ac] sm:%s2466] %v2945
          %v2947 = vld [vmem:[%s2473 + $0x3b0] sm:%s2466]
          %2948 = vst [vmem:[%s2474 + $0x3b0] sm:%s2466] %v2947
          %v2949 = vld [vmem:[%s2473 + $0x3b8] sm:%s2466]
          %2950 = vst [vmem:[%s2474 + $0x3b4] sm:%s2466] %v2949
          %v2951 = vld [vmem:[%s2473 + $0x3b4] sm:%s2466]
          %2952 = vst [vmem:[%s2474 + $0x3b8] sm:%s2466] %v2951
          %v2953 = vld [vmem:[%s2473 + $0x3bc] sm:%s2466]
          %2954 = vst [vmem:[%s2474 + $0x3bc] sm:%s2466] %v2953
          %v2955 = vld [vmem:[%s2473 + $0x3c0] sm:%s2466]
          %2956 = vst [vmem:[%s2474 + $0x3c0] sm:%s2466] %v2955
          %v2957 = vld [vmem:[%s2473 + $0x3c8] sm:%s2466]
          %2958 = vst [vmem:[%s2474 + $0x3c4] sm:%s2466] %v2957
          %v2959 = vld [vmem:[%s2473 + $0x3c4] sm:%s2466]
          %2960 = vst [vmem:[%s2474 + $0x3c8] sm:%s2466] %v2959
          %v2961 = vld [vmem:[%s2473 + $0x3cc] sm:%s2466]
          %2962 = vst [vmem:[%s2474 + $0x3cc] sm:%s2466] %v2961
          %v2963 = vld [vmem:[%s2473 + $0x3d0] sm:%s2466]
          %2964 = vst [vmem:[%s2474 + $0x3d0] sm:%s2466] %v2963
          %v2965 = vld [vmem:[%s2473 + $0x3d8] sm:%s2466]
          %2966 = vst [vmem:[%s2474 + $0x3d4] sm:%s2466] %v2965
          %v2967 = vld [vmem:[%s2473 + $0x3d4] sm:%s2466]
          %2968 = vst [vmem:[%s2474 + $0x3d8] sm:%s2466] %v2967
          %v2969 = vld [vmem:[%s2473 + $0x3dc] sm:%s2466]
          %2970 = vst [vmem:[%s2474 + $0x3dc] sm:%s2466] %v2969
          %v2971 = vld [vmem:[%s2473 + $0x3e0] sm:%s2466]
          %2972 = vst [vmem:[%s2474 + $0x3e0] sm:%s2466] %v2971
          %v2973 = vld [vmem:[%s2473 + $0x3e8] sm:%s2466]
          %2974 = vst [vmem:[%s2474 + $0x3e4] sm:%s2466] %v2973
          %v2975 = vld [vmem:[%s2473 + $0x3e4] sm:%s2466]
          %2976 = vst [vmem:[%s2474 + $0x3e8] sm:%s2466] %v2975
          %v2977 = vld [vmem:[%s2473 + $0x3ec] sm:%s2466]
          %2978 = vst [vmem:[%s2474 + $0x3ec] sm:%s2466] %v2977
          %v2979 = vld [vmem:[%s2473 + $0x3f0] sm:%s2466]
          %2980 = vst [vmem:[%s2474 + $0x3f0] sm:%s2466] %v2979
          %v2981 = vld [vmem:[%s2473 + $0x3f8] sm:%s2466]
          %2982 = vst [vmem:[%s2474 + $0x3f4] sm:%s2466] %v2981
          %v2983 = vld [vmem:[%s2473 + $0x3f4] sm:%s2466]
          %2984 = vst [vmem:[%s2474 + $0x3f8] sm:%s2466] %v2983
          %v2985 = vld [vmem:[%s2473 + $0x3fc] sm:%s2466]
          %2986 = vst [vmem:[%s2474 + $0x3fc] sm:%s2466] %v2985
          %v2987 = vld [vmem:[%s2473 + $0x400] sm:%s2466]
          %2988 = vst [vmem:[%s2474 + $0x400] sm:%s2466] %v2987
          %v2989 = vld [vmem:[%s2473 + $0x408] sm:%s2466]
          %2990 = vst [vmem:[%s2474 + $0x404] sm:%s2466] %v2989
          %v2991 = vld [vmem:[%s2473 + $0x404] sm:%s2466]
          %2992 = vst [vmem:[%s2474 + $0x408] sm:%s2466] %v2991
          %v2993 = vld [vmem:[%s2473 + $0x40c] sm:%s2466]
          %2994 = vst [vmem:[%s2474 + $0x40c] sm:%s2466] %v2993
          %v2995 = vld [vmem:[%s2473 + $0x410] sm:%s2466]
          %2996 = vst [vmem:[%s2474 + $0x410] sm:%s2466] %v2995
          %v2997 = vld [vmem:[%s2473 + $0x418] sm:%s2466]
          %2998 = vst [vmem:[%s2474 + $0x414] sm:%s2466] %v2997
          %v2999 = vld [vmem:[%s2473 + $0x414] sm:%s2466]
          %3000 = vst [vmem:[%s2474 + $0x418] sm:%s2466] %v2999
          %v3001 = vld [vmem:[%s2473 + $0x41c] sm:%s2466]
          %3002 = vst [vmem:[%s2474 + $0x41c] sm:%s2466] %v3001
          %v3003 = vld [vmem:[%s2473 + $0x420] sm:%s2466]
          %3004 = vst [vmem:[%s2474 + $0x420] sm:%s2466] %v3003
          %v3005 = vld [vmem:[%s2473 + $0x428] sm:%s2466]
          %3006 = vst [vmem:[%s2474 + $0x424] sm:%s2466] %v3005
          %v3007 = vld [vmem:[%s2473 + $0x424] sm:%s2466]
          %3008 = vst [vmem:[%s2474 + $0x428] sm:%s2466] %v3007
          %v3009 = vld [vmem:[%s2473 + $0x42c] sm:%s2466]
          %3010 = vst [vmem:[%s2474 + $0x42c] sm:%s2466] %v3009
          %v3011 = vld [vmem:[%s2473 + $0x430] sm:%s2466]
          %3012 = vst [vmem:[%s2474 + $0x430] sm:%s2466] %v3011
          %v3013 = vld [vmem:[%s2473 + $0x438] sm:%s2466]
          %3014 = vst [vmem:[%s2474 + $0x434] sm:%s2466] %v3013
          %v3015 = vld [vmem:[%s2473 + $0x434] sm:%s2466]
          %3016 = vst [vmem:[%s2474 + $0x438] sm:%s2466] %v3015
          %v3017 = vld [vmem:[%s2473 + $0x43c] sm:%s2466]
          %3018 = vst [vmem:[%s2474 + $0x43c] sm:%s2466] %v3017
          %v3019 = vld [vmem:[%s2473 + $0x440] sm:%s2466]
          %3020 = vst [vmem:[%s2474 + $0x440] sm:%s2466] %v3019
          %v3021 = vld [vmem:[%s2473 + $0x448] sm:%s2466]
          %3022 = vst [vmem:[%s2474 + $0x444] sm:%s2466] %v3021
          %v3023 = vld [vmem:[%s2473 + $0x444] sm:%s2466]
          %3024 = vst [vmem:[%s2474 + $0x448] sm:%s2466] %v3023
          %v3025 = vld [vmem:[%s2473 + $0x44c] sm:%s2466]
          %3026 = vst [vmem:[%s2474 + $0x44c] sm:%s2466] %v3025
          %v3027 = vld [vmem:[%s2473 + $0x450] sm:%s2466]
          %3028 = vst [vmem:[%s2474 + $0x450] sm:%s2466] %v3027
          %v3029 = vld [vmem:[%s2473 + $0x458] sm:%s2466]
          %3030 = vst [vmem:[%s2474 + $0x454] sm:%s2466] %v3029
          %v3031 = vld [vmem:[%s2473 + $0x454] sm:%s2466]
          %3032 = vst [vmem:[%s2474 + $0x458] sm:%s2466] %v3031
          %v3033 = vld [vmem:[%s2473 + $0x45c] sm:%s2466]
          %3034 = vst [vmem:[%s2474 + $0x45c] sm:%s2466] %v3033
          %v3035 = vld [vmem:[%s2473 + $0x460] sm:%s2466]
          %3036 = vst [vmem:[%s2474 + $0x460] sm:%s2466] %v3035
          %v3037 = vld [vmem:[%s2473 + $0x468] sm:%s2466]
          %3038 = vst [vmem:[%s2474 + $0x464] sm:%s2466] %v3037
          %v3039 = vld [vmem:[%s2473 + $0x464] sm:%s2466]
          %3040 = vst [vmem:[%s2474 + $0x468] sm:%s2466] %v3039
          %v3041 = vld [vmem:[%s2473 + $0x46c] sm:%s2466]
          %3042 = vst [vmem:[%s2474 + $0x46c] sm:%s2466] %v3041
          %v3043 = vld [vmem:[%s2473 + $0x470] sm:%s2466]
          %3044 = vst [vmem:[%s2474 + $0x470] sm:%s2466] %v3043
          %v3045 = vld [vmem:[%s2473 + $0x478] sm:%s2466]
          %3046 = vst [vmem:[%s2474 + $0x474] sm:%s2466] %v3045
          %v3047 = vld [vmem:[%s2473 + $0x474] sm:%s2466]
          %3048 = vst [vmem:[%s2474 + $0x478] sm:%s2466] %v3047
          %v3049 = vld [vmem:[%s2473 + $0x47c] sm:%s2466]
          %3050 = vst [vmem:[%s2474 + $0x47c] sm:%s2466] %v3049
          %v3051 = vld [vmem:[%s2473 + $0x480] sm:%s2466]
          %3052 = vst [vmem:[%s2474 + $0x480] sm:%s2466] %v3051
          %v3053 = vld [vmem:[%s2473 + $0x488] sm:%s2466]
          %3054 = vst [vmem:[%s2474 + $0x484] sm:%s2466] %v3053
          %v3055 = vld [vmem:[%s2473 + $0x484] sm:%s2466]
          %3056 = vst [vmem:[%s2474 + $0x488] sm:%s2466] %v3055
          %v3057 = vld [vmem:[%s2473 + $0x48c] sm:%s2466]
          %3058 = vst [vmem:[%s2474 + $0x48c] sm:%s2466] %v3057
          %v3059 = vld [vmem:[%s2473 + $0x490] sm:%s2466]
          %3060 = vst [vmem:[%s2474 + $0x490] sm:%s2466] %v3059
          %v3061 = vld [vmem:[%s2473 + $0x498] sm:%s2466]
          %3062 = vst [vmem:[%s2474 + $0x494] sm:%s2466] %v3061
          %v3063 = vld [vmem:[%s2473 + $0x494] sm:%s2466]
          %3064 = vst [vmem:[%s2474 + $0x498] sm:%s2466] %v3063
          %v3065 = vld [vmem:[%s2473 + $0x49c] sm:%s2466]
          %3066 = vst [vmem:[%s2474 + $0x49c] sm:%s2466] %v3065
          %v3067 = vld [vmem:[%s2473 + $0x4a0] sm:%s2466]
          %3068 = vst [vmem:[%s2474 + $0x4a0] sm:%s2466] %v3067
          %v3069 = vld [vmem:[%s2473 + $0x4a8] sm:%s2466]
          %3070 = vst [vmem:[%s2474 + $0x4a4] sm:%s2466] %v3069
          %v3071 = vld [vmem:[%s2473 + $0x4a4] sm:%s2466]
          %3072 = vst [vmem:[%s2474 + $0x4a8] sm:%s2466] %v3071
          %v3073 = vld [vmem:[%s2473 + $0x4ac] sm:%s2466]
          %3074 = vst [vmem:[%s2474 + $0x4ac] sm:%s2466] %v3073
          %v3075 = vld [vmem:[%s2473 + $0x4b0] sm:%s2466]
          %3076 = vst [vmem:[%s2474 + $0x4b0] sm:%s2466] %v3075
          %v3077 = vld [vmem:[%s2473 + $0x4b8] sm:%s2466]
          %3078 = vst [vmem:[%s2474 + $0x4b4] sm:%s2466] %v3077
          %v3079 = vld [vmem:[%s2473 + $0x4b4] sm:%s2466]
          %3080 = vst [vmem:[%s2474 + $0x4b8] sm:%s2466] %v3079
          %v3081 = vld [vmem:[%s2473 + $0x4bc] sm:%s2466]
          %3082 = vst [vmem:[%s2474 + $0x4bc] sm:%s2466] %v3081
          %v3083 = vld [vmem:[%s2473 + $0x4c0] sm:%s2466]
          %3084 = vst [vmem:[%s2474 + $0x4c0] sm:%s2466] %v3083
          %v3085 = vld [vmem:[%s2473 + $0x4c8] sm:%s2466]
          %3086 = vst [vmem:[%s2474 + $0x4c4] sm:%s2466] %v3085
          %v3087 = vld [vmem:[%s2473 + $0x4c4] sm:%s2466]
          %3088 = vst [vmem:[%s2474 + $0x4c8] sm:%s2466] %v3087
          %v3089 = vld [vmem:[%s2473 + $0x4cc] sm:%s2466]
          %3090 = vst [vmem:[%s2474 + $0x4cc] sm:%s2466] %v3089
          %v3091 = vld [vmem:[%s2473 + $0x4d0] sm:%s2466]
          %3092 = vst [vmem:[%s2474 + $0x4d0] sm:%s2466] %v3091
          %v3093 = vld [vmem:[%s2473 + $0x4d8] sm:%s2466]
          %3094 = vst [vmem:[%s2474 + $0x4d4] sm:%s2466] %v3093
          %v3095 = vld [vmem:[%s2473 + $0x4d4] sm:%s2466]
          %3096 = vst [vmem:[%s2474 + $0x4d8] sm:%s2466] %v3095
          %v3097 = vld [vmem:[%s2473 + $0x4dc] sm:%s2466]
          %3098 = vst [vmem:[%s2474 + $0x4dc] sm:%s2466] %v3097
          %v3099 = vld [vmem:[%s2473 + $0x4e0] sm:%s2466]
          %3100 = vst [vmem:[%s2474 + $0x4e0] sm:%s2466] %v3099
          %v3101 = vld [vmem:[%s2473 + $0x4e8] sm:%s2466]
          %3102 = vst [vmem:[%s2474 + $0x4e4] sm:%s2466] %v3101
          %v3103 = vld [vmem:[%s2473 + $0x4e4] sm:%s2466]
          %3104 = vst [vmem:[%s2474 + $0x4e8] sm:%s2466] %v3103
          %v3105 = vld [vmem:[%s2473 + $0x4ec] sm:%s2466]
          %3106 = vst [vmem:[%s2474 + $0x4ec] sm:%s2466] %v3105
          %v3107 = vld [vmem:[%s2473 + $0x4f0] sm:%s2466]
          %3108 = vst [vmem:[%s2474 + $0x4f0] sm:%s2466] %v3107
          %v3109 = vld [vmem:[%s2473 + $0x4f8] sm:%s2466]
          %3110 = vst [vmem:[%s2474 + $0x4f4] sm:%s2466] %v3109
          %v3111 = vld [vmem:[%s2473 + $0x4f4] sm:%s2466]
          %3112 = vst [vmem:[%s2474 + $0x4f8] sm:%s2466] %v3111
          %v3113 = vld [vmem:[%s2473 + $0x4fc] sm:%s2466]
          %3114 = vst [vmem:[%s2474 + $0x4fc] sm:%s2466] %v3113
          %v3115 = vld [vmem:[%s2473 + $0x500] sm:%s2466]
          %3116 = vst [vmem:[%s2474 + $0x500] sm:%s2466] %v3115
          %v3117 = vld [vmem:[%s2473 + $0x508] sm:%s2466]
          %3118 = vst [vmem:[%s2474 + $0x504] sm:%s2466] %v3117
          %v3119 = vld [vmem:[%s2473 + $0x504] sm:%s2466]
          %3120 = vst [vmem:[%s2474 + $0x508] sm:%s2466] %v3119
          %v3121 = vld [vmem:[%s2473 + $0x50c] sm:%s2466]
          %3122 = vst [vmem:[%s2474 + $0x50c] sm:%s2466] %v3121
          %v3123 = vld [vmem:[%s2473 + $0x510] sm:%s2466]
          %3124 = vst [vmem:[%s2474 + $0x510] sm:%s2466] %v3123
          %v3125 = vld [vmem:[%s2473 + $0x518] sm:%s2466]
          %3126 = vst [vmem:[%s2474 + $0x514] sm:%s2466] %v3125
          %v3127 = vld [vmem:[%s2473 + $0x514] sm:%s2466]
          %3128 = vst [vmem:[%s2474 + $0x518] sm:%s2466] %v3127
          %v3129 = vld [vmem:[%s2473 + $0x51c] sm:%s2466]
          %3130 = vst [vmem:[%s2474 + $0x51c] sm:%s2466] %v3129
          %v3131 = vld [vmem:[%s2473 + $0x520] sm:%s2466]
          %3132 = vst [vmem:[%s2474 + $0x520] sm:%s2466] %v3131
          %v3133 = vld [vmem:[%s2473 + $0x528] sm:%s2466]
          %3134 = vst [vmem:[%s2474 + $0x524] sm:%s2466] %v3133
          %v3135 = vld [vmem:[%s2473 + $0x524] sm:%s2466]
          %3136 = vst [vmem:[%s2474 + $0x528] sm:%s2466] %v3135
          %v3137 = vld [vmem:[%s2473 + $0x52c] sm:%s2466]
          %3138 = vst [vmem:[%s2474 + $0x52c] sm:%s2466] %v3137
          %v3139 = vld [vmem:[%s2473 + $0x530] sm:%s2466]
          %3140 = vst [vmem:[%s2474 + $0x530] sm:%s2466] %v3139
          %v3141 = vld [vmem:[%s2473 + $0x538] sm:%s2466]
          %3142 = vst [vmem:[%s2474 + $0x534] sm:%s2466] %v3141
          %v3143 = vld [vmem:[%s2473 + $0x534] sm:%s2466]
          %3144 = vst [vmem:[%s2474 + $0x538] sm:%s2466] %v3143
          %v3145 = vld [vmem:[%s2473 + $0x53c] sm:%s2466]
          %3146 = vst [vmem:[%s2474 + $0x53c] sm:%s2466] %v3145
          %v3147 = vld [vmem:[%s2473 + $0x540] sm:%s2466]
          %3148 = vst [vmem:[%s2474 + $0x540] sm:%s2466] %v3147
          %v3149 = vld [vmem:[%s2473 + $0x548] sm:%s2466]
          %3150 = vst [vmem:[%s2474 + $0x544] sm:%s2466] %v3149
          %v3151 = vld [vmem:[%s2473 + $0x544] sm:%s2466]
          %3152 = vst [vmem:[%s2474 + $0x548] sm:%s2466] %v3151
          %v3153 = vld [vmem:[%s2473 + $0x54c] sm:%s2466]
          %3154 = vst [vmem:[%s2474 + $0x54c] sm:%s2466] %v3153
          %v3155 = vld [vmem:[%s2473 + $0x550] sm:%s2466]
          %3156 = vst [vmem:[%s2474 + $0x550] sm:%s2466] %v3155
          %v3157 = vld [vmem:[%s2473 + $0x558] sm:%s2466]
          %3158 = vst [vmem:[%s2474 + $0x554] sm:%s2466] %v3157
          %v3159 = vld [vmem:[%s2473 + $0x554] sm:%s2466]
          %3160 = vst [vmem:[%s2474 + $0x558] sm:%s2466] %v3159
          %v3161 = vld [vmem:[%s2473 + $0x55c] sm:%s2466]
          %3162 = vst [vmem:[%s2474 + $0x55c] sm:%s2466] %v3161
          %v3163 = vld [vmem:[%s2473 + $0x560] sm:%s2466]
          %3164 = vst [vmem:[%s2474 + $0x560] sm:%s2466] %v3163
          %v3165 = vld [vmem:[%s2473 + $0x568] sm:%s2466]
          %3166 = vst [vmem:[%s2474 + $0x564] sm:%s2466] %v3165
          %v3167 = vld [vmem:[%s2473 + $0x564] sm:%s2466]
          %3168 = vst [vmem:[%s2474 + $0x568] sm:%s2466] %v3167
          %v3169 = vld [vmem:[%s2473 + $0x56c] sm:%s2466]
          %3170 = vst [vmem:[%s2474 + $0x56c] sm:%s2466] %v3169
          %v3171 = vld [vmem:[%s2473 + $0x570] sm:%s2466]
          %3172 = vst [vmem:[%s2474 + $0x570] sm:%s2466] %v3171
          %v3173 = vld [vmem:[%s2473 + $0x578] sm:%s2466]
          %3174 = vst [vmem:[%s2474 + $0x574] sm:%s2466] %v3173
          %v3175 = vld [vmem:[%s2473 + $0x574] sm:%s2466]
          %3176 = vst [vmem:[%s2474 + $0x578] sm:%s2466] %v3175
          %v3177 = vld [vmem:[%s2473 + $0x57c] sm:%s2466]
          %3178 = vst [vmem:[%s2474 + $0x57c] sm:%s2466] %v3177
          %v3179 = vld [vmem:[%s2473 + $0x580] sm:%s2466]
          %3180 = vst [vmem:[%s2474 + $0x580] sm:%s2466] %v3179
          %v3181 = vld [vmem:[%s2473 + $0x588] sm:%s2466]
          %3182 = vst [vmem:[%s2474 + $0x584] sm:%s2466] %v3181
          %v3183 = vld [vmem:[%s2473 + $0x584] sm:%s2466]
          %3184 = vst [vmem:[%s2474 + $0x588] sm:%s2466] %v3183
          %v3185 = vld [vmem:[%s2473 + $0x58c] sm:%s2466]
          %3186 = vst [vmem:[%s2474 + $0x58c] sm:%s2466] %v3185
          %v3187 = vld [vmem:[%s2473 + $0x590] sm:%s2466]
          %3188 = vst [vmem:[%s2474 + $0x590] sm:%s2466] %v3187
          %v3189 = vld [vmem:[%s2473 + $0x598] sm:%s2466]
          %3190 = vst [vmem:[%s2474 + $0x594] sm:%s2466] %v3189
          %v3191 = vld [vmem:[%s2473 + $0x594] sm:%s2466]
          %3192 = vst [vmem:[%s2474 + $0x598] sm:%s2466] %v3191
          %v3193 = vld [vmem:[%s2473 + $0x59c] sm:%s2466]
          %3194 = vst [vmem:[%s2474 + $0x59c] sm:%s2466] %v3193
          %v3195 = vld [vmem:[%s2473 + $0x5a0] sm:%s2466]
          %3196 = vst [vmem:[%s2474 + $0x5a0] sm:%s2466] %v3195
          %v3197 = vld [vmem:[%s2473 + $0x5a8] sm:%s2466]
          %3198 = vst [vmem:[%s2474 + $0x5a4] sm:%s2466] %v3197
          %v3199 = vld [vmem:[%s2473 + $0x5a4] sm:%s2466]
          %3200 = vst [vmem:[%s2474 + $0x5a8] sm:%s2466] %v3199
          %v3201 = vld [vmem:[%s2473 + $0x5ac] sm:%s2466]
          %3202 = vst [vmem:[%s2474 + $0x5ac] sm:%s2466] %v3201
          %v3203 = vld [vmem:[%s2473 + $0x5b0] sm:%s2466]
          %3204 = vst [vmem:[%s2474 + $0x5b0] sm:%s2466] %v3203
          %v3205 = vld [vmem:[%s2473 + $0x5b8] sm:%s2466]
          %3206 = vst [vmem:[%s2474 + $0x5b4] sm:%s2466] %v3205
          %v3207 = vld [vmem:[%s2473 + $0x5b4] sm:%s2466]
          %3208 = vst [vmem:[%s2474 + $0x5b8] sm:%s2466] %v3207
          %v3209 = vld [vmem:[%s2473 + $0x5bc] sm:%s2466]
          %3210 = vst [vmem:[%s2474 + $0x5bc] sm:%s2466] %v3209
          %v3211 = vld [vmem:[%s2473 + $0x5c0] sm:%s2466]
          %3212 = vst [vmem:[%s2474 + $0x5c0] sm:%s2466] %v3211
          %v3213 = vld [vmem:[%s2473 + $0x5c8] sm:%s2466]
          %3214 = vst [vmem:[%s2474 + $0x5c4] sm:%s2466] %v3213
          %v3215 = vld [vmem:[%s2473 + $0x5c4] sm:%s2466]
          %3216 = vst [vmem:[%s2474 + $0x5c8] sm:%s2466] %v3215
          %v3217 = vld [vmem:[%s2473 + $0x5cc] sm:%s2466]
          %3218 = vst [vmem:[%s2474 + $0x5cc] sm:%s2466] %v3217
          %v3219 = vld [vmem:[%s2473 + $0x5d0] sm:%s2466]
          %3220 = vst [vmem:[%s2474 + $0x5d0] sm:%s2466] %v3219
          %v3221 = vld [vmem:[%s2473 + $0x5d8] sm:%s2466]
          %3222 = vst [vmem:[%s2474 + $0x5d4] sm:%s2466] %v3221
          %v3223 = vld [vmem:[%s2473 + $0x5d4] sm:%s2466]
          %3224 = vst [vmem:[%s2474 + $0x5d8] sm:%s2466] %v3223
          %v3225 = vld [vmem:[%s2473 + $0x5dc] sm:%s2466]
          %3226 = vst [vmem:[%s2474 + $0x5dc] sm:%s2466] %v3225
          %v3227 = vld [vmem:[%s2473 + $0x5e0] sm:%s2466]
          %3228 = vst [vmem:[%s2474 + $0x5e0] sm:%s2466] %v3227
          %v3229 = vld [vmem:[%s2473 + $0x5e8] sm:%s2466]
          %3230 = vst [vmem:[%s2474 + $0x5e4] sm:%s2466] %v3229
          %v3231 = vld [vmem:[%s2473 + $0x5e4] sm:%s2466]
          %3232 = vst [vmem:[%s2474 + $0x5e8] sm:%s2466] %v3231
          %v3233 = vld [vmem:[%s2473 + $0x5ec] sm:%s2466]
          %3234 = vst [vmem:[%s2474 + $0x5ec] sm:%s2466] %v3233
          %v3235 = vld [vmem:[%s2473 + $0x5f0] sm:%s2466]
          %3236 = vst [vmem:[%s2474 + $0x5f0] sm:%s2466] %v3235
          %v3237 = vld [vmem:[%s2473 + $0x5f8] sm:%s2466]
          %3238 = vst [vmem:[%s2474 + $0x5f4] sm:%s2466] %v3237
          %v3239 = vld [vmem:[%s2473 + $0x5f4] sm:%s2466]
          %3240 = vst [vmem:[%s2474 + $0x5f8] sm:%s2466] %v3239
          %v3241 = vld [vmem:[%s2473 + $0x5fc] sm:%s2466]
          %3242 = vst [vmem:[%s2474 + $0x5fc] sm:%s2466] %v3241
        $region161: #{fcn1_forward.1} parent=148 // loop_footer
          %s2472 = sadd.s32 1, %s2468
        $region162: #{fcn1_forward.1} parent=148 // loop_footer_branch
          %2467 = sbr.rel target = $region158
        $region163: #{fcn1_forward.1} parent=148 // loop_exit
          _
      $region149: #{fcn1_forward.1} parent=133 // pred_fallthru
        _
    $region134: #{fcn1_forward.1} parent=1 // pred_fallthru
      _
    // Predicated region
    $region135: #{fcn1_forward.1} parent=1 // pred_check
      %p1668 = pneg %p1664
    $region136: #{fcn1_forward.1} parent=1 // pred_check_branch
      %1670 = sbr.rel (%p1668) target = $region138
    $region137: #{fcn1_forward.1} parent=1 // pred_region
      %s1671 = sshllo.u32 0, 4
      loop: start=0, step=1, limit=1
      $region139: #{fcn1_forward.1} parent=137 // loop_pre_header
        _
      $region140: #{fcn1_forward.1} parent=137 // loop_header
        %s1673 = sphi 0, %s1677
        %p1674 = scmp.ge.s32.totalorder %s1673, 1
        %s1678 = sphi %s14, %s14
        %s1679 = sphi [#allocation6], [#allocation6]
      $region141: #{fcn1_forward.1} parent=137 // loop_header_branch
        %1676 = sbr.rel (%p1674) target = $region145
      $region142: #{fcn1_forward.1} parent=137 // loop_body
        %v1680 = vld [vmem:[%s1678] sm:%s1671]
        %1681 = vst [vmem:[%s1679] sm:%s1671] %v1680
        %v1682 = vld [vmem:[%s1678 + $0x8] sm:%s1671]
        %1683 = vst [vmem:[%s1679 + $0x4] sm:%s1671] %v1682
        %v1684 = vld [vmem:[%s1678 + $0x4] sm:%s1671]
        %1685 = vst [vmem:[%s1679 + $0x8] sm:%s1671] %v1684
        %v1686 = vld [vmem:[%s1678 + $0xc] sm:%s1671]
        %1687 = vst [vmem:[%s1679 + $0xc] sm:%s1671] %v1686
        %v1688 = vld [vmem:[%s1678 + $0x10] sm:%s1671]
        %1689 = vst [vmem:[%s1679 + $0x10] sm:%s1671] %v1688
        %v1690 = vld [vmem:[%s1678 + $0x18] sm:%s1671]
        %1691 = vst [vmem:[%s1679 + $0x14] sm:%s1671] %v1690
        %v1692 = vld [vmem:[%s1678 + $0x14] sm:%s1671]
        %1693 = vst [vmem:[%s1679 + $0x18] sm:%s1671] %v1692
        %v1694 = vld [vmem:[%s1678 + $0x1c] sm:%s1671]
        %1695 = vst [vmem:[%s1679 + $0x1c] sm:%s1671] %v1694
        %v1696 = vld [vmem:[%s1678 + $0x20] sm:%s1671]
        %1697 = vst [vmem:[%s1679 + $0x20] sm:%s1671] %v1696
        %v1698 = vld [vmem:[%s1678 + $0x28] sm:%s1671]
        %1699 = vst [vmem:[%s1679 + $0x24] sm:%s1671] %v1698
        %v1700 = vld [vmem:[%s1678 + $0x24] sm:%s1671]
        %1701 = vst [vmem:[%s1679 + $0x28] sm:%s1671] %v1700
        %v1702 = vld [vmem:[%s1678 + $0x2c] sm:%s1671]
        %1703 = vst [vmem:[%s1679 + $0x2c] sm:%s1671] %v1702
        %v1704 = vld [vmem:[%s1678 + $0x30] sm:%s1671]
        %1705 = vst [vmem:[%s1679 + $0x30] sm:%s1671] %v1704
        %v1706 = vld [vmem:[%s1678 + $0x38] sm:%s1671]
        %1707 = vst [vmem:[%s1679 + $0x34] sm:%s1671] %v1706
        %v1708 = vld [vmem:[%s1678 + $0x34] sm:%s1671]
        %1709 = vst [vmem:[%s1679 + $0x38] sm:%s1671] %v1708
        %v1710 = vld [vmem:[%s1678 + $0x3c] sm:%s1671]
        %1711 = vst [vmem:[%s1679 + $0x3c] sm:%s1671] %v1710
        %v1712 = vld [vmem:[%s1678 + $0x40] sm:%s1671]
        %1713 = vst [vmem:[%s1679 + $0x40] sm:%s1671] %v1712
        %v1714 = vld [vmem:[%s1678 + $0x48] sm:%s1671]
        %1715 = vst [vmem:[%s1679 + $0x44] sm:%s1671] %v1714
        %v1716 = vld [vmem:[%s1678 + $0x44] sm:%s1671]
        %1717 = vst [vmem:[%s1679 + $0x48] sm:%s1671] %v1716
        %v1718 = vld [vmem:[%s1678 + $0x4c] sm:%s1671]
        %1719 = vst [vmem:[%s1679 + $0x4c] sm:%s1671] %v1718
        %v1720 = vld [vmem:[%s1678 + $0x50] sm:%s1671]
        %1721 = vst [vmem:[%s1679 + $0x50] sm:%s1671] %v1720
        %v1722 = vld [vmem:[%s1678 + $0x58] sm:%s1671]
        %1723 = vst [vmem:[%s1679 + $0x54] sm:%s1671] %v1722
        %v1724 = vld [vmem:[%s1678 + $0x54] sm:%s1671]
        %1725 = vst [vmem:[%s1679 + $0x58] sm:%s1671] %v1724
        %v1726 = vld [vmem:[%s1678 + $0x5c] sm:%s1671]
        %1727 = vst [vmem:[%s1679 + $0x5c] sm:%s1671] %v1726
        %v1728 = vld [vmem:[%s1678 + $0x60] sm:%s1671]
        %1729 = vst [vmem:[%s1679 + $0x60] sm:%s1671] %v1728
        %v1730 = vld [vmem:[%s1678 + $0x68] sm:%s1671]
        %1731 = vst [vmem:[%s1679 + $0x64] sm:%s1671] %v1730
        %v1732 = vld [vmem:[%s1678 + $0x64] sm:%s1671]
        %1733 = vst [vmem:[%s1679 + $0x68] sm:%s1671] %v1732
        %v1734 = vld [vmem:[%s1678 + $0x6c] sm:%s1671]
        %1735 = vst [vmem:[%s1679 + $0x6c] sm:%s1671] %v1734
        %v1736 = vld [vmem:[%s1678 + $0x70] sm:%s1671]
        %1737 = vst [vmem:[%s1679 + $0x70] sm:%s1671] %v1736
        %v1738 = vld [vmem:[%s1678 + $0x78] sm:%s1671]
        %1739 = vst [vmem:[%s1679 + $0x74] sm:%s1671] %v1738
        %v1740 = vld [vmem:[%s1678 + $0x74] sm:%s1671]
        %1741 = vst [vmem:[%s1679 + $0x78] sm:%s1671] %v1740
        %v1742 = vld [vmem:[%s1678 + $0x7c] sm:%s1671]
        %1743 = vst [vmem:[%s1679 + $0x7c] sm:%s1671] %v1742
        %v1744 = vld [vmem:[%s1678 + $0x80] sm:%s1671]
        %1745 = vst [vmem:[%s1679 + $0x80] sm:%s1671] %v1744
        %v1746 = vld [vmem:[%s1678 + $0x88] sm:%s1671]
        %1747 = vst [vmem:[%s1679 + $0x84] sm:%s1671] %v1746
        %v1748 = vld [vmem:[%s1678 + $0x84] sm:%s1671]
        %1749 = vst [vmem:[%s1679 + $0x88] sm:%s1671] %v1748
        %v1750 = vld [vmem:[%s1678 + $0x8c] sm:%s1671]
        %1751 = vst [vmem:[%s1679 + $0x8c] sm:%s1671] %v1750
        %v1752 = vld [vmem:[%s1678 + $0x90] sm:%s1671]
        %1753 = vst [vmem:[%s1679 + $0x90] sm:%s1671] %v1752
        %v1754 = vld [vmem:[%s1678 + $0x98] sm:%s1671]
        %1755 = vst [vmem:[%s1679 + $0x94] sm:%s1671] %v1754
        %v1756 = vld [vmem:[%s1678 + $0x94] sm:%s1671]
        %1757 = vst [vmem:[%s1679 + $0x98] sm:%s1671] %v1756
        %v1758 = vld [vmem:[%s1678 + $0x9c] sm:%s1671]
        %1759 = vst [vmem:[%s1679 + $0x9c] sm:%s1671] %v1758
        %v1760 = vld [vmem:[%s1678 + $0xa0] sm:%s1671]
        %1761 = vst [vmem:[%s1679 + $0xa0] sm:%s1671] %v1760
        %v1762 = vld [vmem:[%s1678 + $0xa8] sm:%s1671]
        %1763 = vst [vmem:[%s1679 + $0xa4] sm:%s1671] %v1762
        %v1764 = vld [vmem:[%s1678 + $0xa4] sm:%s1671]
        %1765 = vst [vmem:[%s1679 + $0xa8] sm:%s1671] %v1764
        %v1766 = vld [vmem:[%s1678 + $0xac] sm:%s1671]
        %1767 = vst [vmem:[%s1679 + $0xac] sm:%s1671] %v1766
        %v1768 = vld [vmem:[%s1678 + $0xb0] sm:%s1671]
        %1769 = vst [vmem:[%s1679 + $0xb0] sm:%s1671] %v1768
        %v1770 = vld [vmem:[%s1678 + $0xb8] sm:%s1671]
        %1771 = vst [vmem:[%s1679 + $0xb4] sm:%s1671] %v1770
        %v1772 = vld [vmem:[%s1678 + $0xb4] sm:%s1671]
        %1773 = vst [vmem:[%s1679 + $0xb8] sm:%s1671] %v1772
        %v1774 = vld [vmem:[%s1678 + $0xbc] sm:%s1671]
        %1775 = vst [vmem:[%s1679 + $0xbc] sm:%s1671] %v1774
        %v1776 = vld [vmem:[%s1678 + $0xc0] sm:%s1671]
        %1777 = vst [vmem:[%s1679 + $0xc0] sm:%s1671] %v1776
        %v1778 = vld [vmem:[%s1678 + $0xc8] sm:%s1671]
        %1779 = vst [vmem:[%s1679 + $0xc4] sm:%s1671] %v1778
        %v1780 = vld [vmem:[%s1678 + $0xc4] sm:%s1671]
        %1781 = vst [vmem:[%s1679 + $0xc8] sm:%s1671] %v1780
        %v1782 = vld [vmem:[%s1678 + $0xcc] sm:%s1671]
        %1783 = vst [vmem:[%s1679 + $0xcc] sm:%s1671] %v1782
        %v1784 = vld [vmem:[%s1678 + $0xd0] sm:%s1671]
        %1785 = vst [vmem:[%s1679 + $0xd0] sm:%s1671] %v1784
        %v1786 = vld [vmem:[%s1678 + $0xd8] sm:%s1671]
        %1787 = vst [vmem:[%s1679 + $0xd4] sm:%s1671] %v1786
        %v1788 = vld [vmem:[%s1678 + $0xd4] sm:%s1671]
        %1789 = vst [vmem:[%s1679 + $0xd8] sm:%s1671] %v1788
        %v1790 = vld [vmem:[%s1678 + $0xdc] sm:%s1671]
        %1791 = vst [vmem:[%s1679 + $0xdc] sm:%s1671] %v1790
        %v1792 = vld [vmem:[%s1678 + $0xe0] sm:%s1671]
        %1793 = vst [vmem:[%s1679 + $0xe0] sm:%s1671] %v1792
        %v1794 = vld [vmem:[%s1678 + $0xe8] sm:%s1671]
        %1795 = vst [vmem:[%s1679 + $0xe4] sm:%s1671] %v1794
        %v1796 = vld [vmem:[%s1678 + $0xe4] sm:%s1671]
        %1797 = vst [vmem:[%s1679 + $0xe8] sm:%s1671] %v1796
        %v1798 = vld [vmem:[%s1678 + $0xec] sm:%s1671]
        %1799 = vst [vmem:[%s1679 + $0xec] sm:%s1671] %v1798
        %v1800 = vld [vmem:[%s1678 + $0xf0] sm:%s1671]
        %1801 = vst [vmem:[%s1679 + $0xf0] sm:%s1671] %v1800
        %v1802 = vld [vmem:[%s1678 + $0xf8] sm:%s1671]
        %1803 = vst [vmem:[%s1679 + $0xf4] sm:%s1671] %v1802
        %v1804 = vld [vmem:[%s1678 + $0xf4] sm:%s1671]
        %1805 = vst [vmem:[%s1679 + $0xf8] sm:%s1671] %v1804
        %v1806 = vld [vmem:[%s1678 + $0xfc] sm:%s1671]
        %1807 = vst [vmem:[%s1679 + $0xfc] sm:%s1671] %v1806
        %v1808 = vld [vmem:[%s1678 + $0x100] sm:%s1671]
        %1809 = vst [vmem:[%s1679 + $0x100] sm:%s1671] %v1808
        %v1810 = vld [vmem:[%s1678 + $0x108] sm:%s1671]
        %1811 = vst [vmem:[%s1679 + $0x104] sm:%s1671] %v1810
        %v1812 = vld [vmem:[%s1678 + $0x104] sm:%s1671]
        %1813 = vst [vmem:[%s1679 + $0x108] sm:%s1671] %v1812
        %v1814 = vld [vmem:[%s1678 + $0x10c] sm:%s1671]
        %1815 = vst [vmem:[%s1679 + $0x10c] sm:%s1671] %v1814
        %v1816 = vld [vmem:[%s1678 + $0x110] sm:%s1671]
        %1817 = vst [vmem:[%s1679 + $0x110] sm:%s1671] %v1816
        %v1818 = vld [vmem:[%s1678 + $0x118] sm:%s1671]
        %1819 = vst [vmem:[%s1679 + $0x114] sm:%s1671] %v1818
        %v1820 = vld [vmem:[%s1678 + $0x114] sm:%s1671]
        %1821 = vst [vmem:[%s1679 + $0x118] sm:%s1671] %v1820
        %v1822 = vld [vmem:[%s1678 + $0x11c] sm:%s1671]
        %1823 = vst [vmem:[%s1679 + $0x11c] sm:%s1671] %v1822
        %v1824 = vld [vmem:[%s1678 + $0x120] sm:%s1671]
        %1825 = vst [vmem:[%s1679 + $0x120] sm:%s1671] %v1824
        %v1826 = vld [vmem:[%s1678 + $0x128] sm:%s1671]
        %1827 = vst [vmem:[%s1679 + $0x124] sm:%s1671] %v1826
        %v1828 = vld [vmem:[%s1678 + $0x124] sm:%s1671]
        %1829 = vst [vmem:[%s1679 + $0x128] sm:%s1671] %v1828
        %v1830 = vld [vmem:[%s1678 + $0x12c] sm:%s1671]
        %1831 = vst [vmem:[%s1679 + $0x12c] sm:%s1671] %v1830
        %v1832 = vld [vmem:[%s1678 + $0x130] sm:%s1671]
        %1833 = vst [vmem:[%s1679 + $0x130] sm:%s1671] %v1832
        %v1834 = vld [vmem:[%s1678 + $0x138] sm:%s1671]
        %1835 = vst [vmem:[%s1679 + $0x134] sm:%s1671] %v1834
        %v1836 = vld [vmem:[%s1678 + $0x134] sm:%s1671]
        %1837 = vst [vmem:[%s1679 + $0x138] sm:%s1671] %v1836
        %v1838 = vld [vmem:[%s1678 + $0x13c] sm:%s1671]
        %1839 = vst [vmem:[%s1679 + $0x13c] sm:%s1671] %v1838
        %v1840 = vld [vmem:[%s1678 + $0x140] sm:%s1671]
        %1841 = vst [vmem:[%s1679 + $0x140] sm:%s1671] %v1840
        %v1842 = vld [vmem:[%s1678 + $0x148] sm:%s1671]
        %1843 = vst [vmem:[%s1679 + $0x144] sm:%s1671] %v1842
        %v1844 = vld [vmem:[%s1678 + $0x144] sm:%s1671]
        %1845 = vst [vmem:[%s1679 + $0x148] sm:%s1671] %v1844
        %v1846 = vld [vmem:[%s1678 + $0x14c] sm:%s1671]
        %1847 = vst [vmem:[%s1679 + $0x14c] sm:%s1671] %v1846
        %v1848 = vld [vmem:[%s1678 + $0x150] sm:%s1671]
        %1849 = vst [vmem:[%s1679 + $0x150] sm:%s1671] %v1848
        %v1850 = vld [vmem:[%s1678 + $0x158] sm:%s1671]
        %1851 = vst [vmem:[%s1679 + $0x154] sm:%s1671] %v1850
        %v1852 = vld [vmem:[%s1678 + $0x154] sm:%s1671]
        %1853 = vst [vmem:[%s1679 + $0x158] sm:%s1671] %v1852
        %v1854 = vld [vmem:[%s1678 + $0x15c] sm:%s1671]
        %1855 = vst [vmem:[%s1679 + $0x15c] sm:%s1671] %v1854
        %v1856 = vld [vmem:[%s1678 + $0x160] sm:%s1671]
        %1857 = vst [vmem:[%s1679 + $0x160] sm:%s1671] %v1856
        %v1858 = vld [vmem:[%s1678 + $0x168] sm:%s1671]
        %1859 = vst [vmem:[%s1679 + $0x164] sm:%s1671] %v1858
        %v1860 = vld [vmem:[%s1678 + $0x164] sm:%s1671]
        %1861 = vst [vmem:[%s1679 + $0x168] sm:%s1671] %v1860
        %v1862 = vld [vmem:[%s1678 + $0x16c] sm:%s1671]
        %1863 = vst [vmem:[%s1679 + $0x16c] sm:%s1671] %v1862
        %v1864 = vld [vmem:[%s1678 + $0x170] sm:%s1671]
        %1865 = vst [vmem:[%s1679 + $0x170] sm:%s1671] %v1864
        %v1866 = vld [vmem:[%s1678 + $0x178] sm:%s1671]
        %1867 = vst [vmem:[%s1679 + $0x174] sm:%s1671] %v1866
        %v1868 = vld [vmem:[%s1678 + $0x174] sm:%s1671]
        %1869 = vst [vmem:[%s1679 + $0x178] sm:%s1671] %v1868
        %v1870 = vld [vmem:[%s1678 + $0x17c] sm:%s1671]
        %1871 = vst [vmem:[%s1679 + $0x17c] sm:%s1671] %v1870
        %v1872 = vld [vmem:[%s1678 + $0x180] sm:%s1671]
        %1873 = vst [vmem:[%s1679 + $0x180] sm:%s1671] %v1872
        %v1874 = vld [vmem:[%s1678 + $0x188] sm:%s1671]
        %1875 = vst [vmem:[%s1679 + $0x184] sm:%s1671] %v1874
        %v1876 = vld [vmem:[%s1678 + $0x184] sm:%s1671]
        %1877 = vst [vmem:[%s1679 + $0x188] sm:%s1671] %v1876
        %v1878 = vld [vmem:[%s1678 + $0x18c] sm:%s1671]
        %1879 = vst [vmem:[%s1679 + $0x18c] sm:%s1671] %v1878
        %v1880 = vld [vmem:[%s1678 + $0x190] sm:%s1671]
        %1881 = vst [vmem:[%s1679 + $0x190] sm:%s1671] %v1880
        %v1882 = vld [vmem:[%s1678 + $0x198] sm:%s1671]
        %1883 = vst [vmem:[%s1679 + $0x194] sm:%s1671] %v1882
        %v1884 = vld [vmem:[%s1678 + $0x194] sm:%s1671]
        %1885 = vst [vmem:[%s1679 + $0x198] sm:%s1671] %v1884
        %v1886 = vld [vmem:[%s1678 + $0x19c] sm:%s1671]
        %1887 = vst [vmem:[%s1679 + $0x19c] sm:%s1671] %v1886
        %v1888 = vld [vmem:[%s1678 + $0x1a0] sm:%s1671]
        %1889 = vst [vmem:[%s1679 + $0x1a0] sm:%s1671] %v1888
        %v1890 = vld [vmem:[%s1678 + $0x1a8] sm:%s1671]
        %1891 = vst [vmem:[%s1679 + $0x1a4] sm:%s1671] %v1890
        %v1892 = vld [vmem:[%s1678 + $0x1a4] sm:%s1671]
        %1893 = vst [vmem:[%s1679 + $0x1a8] sm:%s1671] %v1892
        %v1894 = vld [vmem:[%s1678 + $0x1ac] sm:%s1671]
        %1895 = vst [vmem:[%s1679 + $0x1ac] sm:%s1671] %v1894
        %v1896 = vld [vmem:[%s1678 + $0x1b0] sm:%s1671]
        %1897 = vst [vmem:[%s1679 + $0x1b0] sm:%s1671] %v1896
        %v1898 = vld [vmem:[%s1678 + $0x1b8] sm:%s1671]
        %1899 = vst [vmem:[%s1679 + $0x1b4] sm:%s1671] %v1898
        %v1900 = vld [vmem:[%s1678 + $0x1b4] sm:%s1671]
        %1901 = vst [vmem:[%s1679 + $0x1b8] sm:%s1671] %v1900
        %v1902 = vld [vmem:[%s1678 + $0x1bc] sm:%s1671]
        %1903 = vst [vmem:[%s1679 + $0x1bc] sm:%s1671] %v1902
        %v1904 = vld [vmem:[%s1678 + $0x1c0] sm:%s1671]
        %1905 = vst [vmem:[%s1679 + $0x1c0] sm:%s1671] %v1904
        %v1906 = vld [vmem:[%s1678 + $0x1c8] sm:%s1671]
        %1907 = vst [vmem:[%s1679 + $0x1c4] sm:%s1671] %v1906
        %v1908 = vld [vmem:[%s1678 + $0x1c4] sm:%s1671]
        %1909 = vst [vmem:[%s1679 + $0x1c8] sm:%s1671] %v1908
        %v1910 = vld [vmem:[%s1678 + $0x1cc] sm:%s1671]
        %1911 = vst [vmem:[%s1679 + $0x1cc] sm:%s1671] %v1910
        %v1912 = vld [vmem:[%s1678 + $0x1d0] sm:%s1671]
        %1913 = vst [vmem:[%s1679 + $0x1d0] sm:%s1671] %v1912
        %v1914 = vld [vmem:[%s1678 + $0x1d8] sm:%s1671]
        %1915 = vst [vmem:[%s1679 + $0x1d4] sm:%s1671] %v1914
        %v1916 = vld [vmem:[%s1678 + $0x1d4] sm:%s1671]
        %1917 = vst [vmem:[%s1679 + $0x1d8] sm:%s1671] %v1916
        %v1918 = vld [vmem:[%s1678 + $0x1dc] sm:%s1671]
        %1919 = vst [vmem:[%s1679 + $0x1dc] sm:%s1671] %v1918
        %v1920 = vld [vmem:[%s1678 + $0x1e0] sm:%s1671]
        %1921 = vst [vmem:[%s1679 + $0x1e0] sm:%s1671] %v1920
        %v1922 = vld [vmem:[%s1678 + $0x1e8] sm:%s1671]
        %1923 = vst [vmem:[%s1679 + $0x1e4] sm:%s1671] %v1922
        %v1924 = vld [vmem:[%s1678 + $0x1e4] sm:%s1671]
        %1925 = vst [vmem:[%s1679 + $0x1e8] sm:%s1671] %v1924
        %v1926 = vld [vmem:[%s1678 + $0x1ec] sm:%s1671]
        %1927 = vst [vmem:[%s1679 + $0x1ec] sm:%s1671] %v1926
        %v1928 = vld [vmem:[%s1678 + $0x1f0] sm:%s1671]
        %1929 = vst [vmem:[%s1679 + $0x1f0] sm:%s1671] %v1928
        %v1930 = vld [vmem:[%s1678 + $0x1f8] sm:%s1671]
        %1931 = vst [vmem:[%s1679 + $0x1f4] sm:%s1671] %v1930
        %v1932 = vld [vmem:[%s1678 + $0x1f4] sm:%s1671]
        %1933 = vst [vmem:[%s1679 + $0x1f8] sm:%s1671] %v1932
        %v1934 = vld [vmem:[%s1678 + $0x1fc] sm:%s1671]
        %1935 = vst [vmem:[%s1679 + $0x1fc] sm:%s1671] %v1934
        %v1936 = vld [vmem:[%s1678 + $0x200] sm:%s1671]
        %1937 = vst [vmem:[%s1679 + $0x200] sm:%s1671] %v1936
        %v1938 = vld [vmem:[%s1678 + $0x208] sm:%s1671]
        %1939 = vst [vmem:[%s1679 + $0x204] sm:%s1671] %v1938
        %v1940 = vld [vmem:[%s1678 + $0x204] sm:%s1671]
        %1941 = vst [vmem:[%s1679 + $0x208] sm:%s1671] %v1940
        %v1942 = vld [vmem:[%s1678 + $0x20c] sm:%s1671]
        %1943 = vst [vmem:[%s1679 + $0x20c] sm:%s1671] %v1942
        %v1944 = vld [vmem:[%s1678 + $0x210] sm:%s1671]
        %1945 = vst [vmem:[%s1679 + $0x210] sm:%s1671] %v1944
        %v1946 = vld [vmem:[%s1678 + $0x218] sm:%s1671]
        %1947 = vst [vmem:[%s1679 + $0x214] sm:%s1671] %v1946
        %v1948 = vld [vmem:[%s1678 + $0x214] sm:%s1671]
        %1949 = vst [vmem:[%s1679 + $0x218] sm:%s1671] %v1948
        %v1950 = vld [vmem:[%s1678 + $0x21c] sm:%s1671]
        %1951 = vst [vmem:[%s1679 + $0x21c] sm:%s1671] %v1950
        %v1952 = vld [vmem:[%s1678 + $0x220] sm:%s1671]
        %1953 = vst [vmem:[%s1679 + $0x220] sm:%s1671] %v1952
        %v1954 = vld [vmem:[%s1678 + $0x228] sm:%s1671]
        %1955 = vst [vmem:[%s1679 + $0x224] sm:%s1671] %v1954
        %v1956 = vld [vmem:[%s1678 + $0x224] sm:%s1671]
        %1957 = vst [vmem:[%s1679 + $0x228] sm:%s1671] %v1956
        %v1958 = vld [vmem:[%s1678 + $0x22c] sm:%s1671]
        %1959 = vst [vmem:[%s1679 + $0x22c] sm:%s1671] %v1958
        %v1960 = vld [vmem:[%s1678 + $0x230] sm:%s1671]
        %1961 = vst [vmem:[%s1679 + $0x230] sm:%s1671] %v1960
        %v1962 = vld [vmem:[%s1678 + $0x238] sm:%s1671]
        %1963 = vst [vmem:[%s1679 + $0x234] sm:%s1671] %v1962
        %v1964 = vld [vmem:[%s1678 + $0x234] sm:%s1671]
        %1965 = vst [vmem:[%s1679 + $0x238] sm:%s1671] %v1964
        %v1966 = vld [vmem:[%s1678 + $0x23c] sm:%s1671]
        %1967 = vst [vmem:[%s1679 + $0x23c] sm:%s1671] %v1966
        %v1968 = vld [vmem:[%s1678 + $0x240] sm:%s1671]
        %1969 = vst [vmem:[%s1679 + $0x240] sm:%s1671] %v1968
        %v1970 = vld [vmem:[%s1678 + $0x248] sm:%s1671]
        %1971 = vst [vmem:[%s1679 + $0x244] sm:%s1671] %v1970
        %v1972 = vld [vmem:[%s1678 + $0x244] sm:%s1671]
        %1973 = vst [vmem:[%s1679 + $0x248] sm:%s1671] %v1972
        %v1974 = vld [vmem:[%s1678 + $0x24c] sm:%s1671]
        %1975 = vst [vmem:[%s1679 + $0x24c] sm:%s1671] %v1974
        %v1976 = vld [vmem:[%s1678 + $0x250] sm:%s1671]
        %1977 = vst [vmem:[%s1679 + $0x250] sm:%s1671] %v1976
        %v1978 = vld [vmem:[%s1678 + $0x258] sm:%s1671]
        %1979 = vst [vmem:[%s1679 + $0x254] sm:%s1671] %v1978
        %v1980 = vld [vmem:[%s1678 + $0x254] sm:%s1671]
        %1981 = vst [vmem:[%s1679 + $0x258] sm:%s1671] %v1980
        %v1982 = vld [vmem:[%s1678 + $0x25c] sm:%s1671]
        %1983 = vst [vmem:[%s1679 + $0x25c] sm:%s1671] %v1982
        %v1984 = vld [vmem:[%s1678 + $0x260] sm:%s1671]
        %1985 = vst [vmem:[%s1679 + $0x260] sm:%s1671] %v1984
        %v1986 = vld [vmem:[%s1678 + $0x268] sm:%s1671]
        %1987 = vst [vmem:[%s1679 + $0x264] sm:%s1671] %v1986
        %v1988 = vld [vmem:[%s1678 + $0x264] sm:%s1671]
        %1989 = vst [vmem:[%s1679 + $0x268] sm:%s1671] %v1988
        %v1990 = vld [vmem:[%s1678 + $0x26c] sm:%s1671]
        %1991 = vst [vmem:[%s1679 + $0x26c] sm:%s1671] %v1990
        %v1992 = vld [vmem:[%s1678 + $0x270] sm:%s1671]
        %1993 = vst [vmem:[%s1679 + $0x270] sm:%s1671] %v1992
        %v1994 = vld [vmem:[%s1678 + $0x278] sm:%s1671]
        %1995 = vst [vmem:[%s1679 + $0x274] sm:%s1671] %v1994
        %v1996 = vld [vmem:[%s1678 + $0x274] sm:%s1671]
        %1997 = vst [vmem:[%s1679 + $0x278] sm:%s1671] %v1996
        %v1998 = vld [vmem:[%s1678 + $0x27c] sm:%s1671]
        %1999 = vst [vmem:[%s1679 + $0x27c] sm:%s1671] %v1998
        %v2000 = vld [vmem:[%s1678 + $0x280] sm:%s1671]
        %2001 = vst [vmem:[%s1679 + $0x280] sm:%s1671] %v2000
        %v2002 = vld [vmem:[%s1678 + $0x288] sm:%s1671]
        %2003 = vst [vmem:[%s1679 + $0x284] sm:%s1671] %v2002
        %v2004 = vld [vmem:[%s1678 + $0x284] sm:%s1671]
        %2005 = vst [vmem:[%s1679 + $0x288] sm:%s1671] %v2004
        %v2006 = vld [vmem:[%s1678 + $0x28c] sm:%s1671]
        %2007 = vst [vmem:[%s1679 + $0x28c] sm:%s1671] %v2006
        %v2008 = vld [vmem:[%s1678 + $0x290] sm:%s1671]
        %2009 = vst [vmem:[%s1679 + $0x290] sm:%s1671] %v2008
        %v2010 = vld [vmem:[%s1678 + $0x298] sm:%s1671]
        %2011 = vst [vmem:[%s1679 + $0x294] sm:%s1671] %v2010
        %v2012 = vld [vmem:[%s1678 + $0x294] sm:%s1671]
        %2013 = vst [vmem:[%s1679 + $0x298] sm:%s1671] %v2012
        %v2014 = vld [vmem:[%s1678 + $0x29c] sm:%s1671]
        %2015 = vst [vmem:[%s1679 + $0x29c] sm:%s1671] %v2014
        %v2016 = vld [vmem:[%s1678 + $0x2a0] sm:%s1671]
        %2017 = vst [vmem:[%s1679 + $0x2a0] sm:%s1671] %v2016
        %v2018 = vld [vmem:[%s1678 + $0x2a8] sm:%s1671]
        %2019 = vst [vmem:[%s1679 + $0x2a4] sm:%s1671] %v2018
        %v2020 = vld [vmem:[%s1678 + $0x2a4] sm:%s1671]
        %2021 = vst [vmem:[%s1679 + $0x2a8] sm:%s1671] %v2020
        %v2022 = vld [vmem:[%s1678 + $0x2ac] sm:%s1671]
        %2023 = vst [vmem:[%s1679 + $0x2ac] sm:%s1671] %v2022
        %v2024 = vld [vmem:[%s1678 + $0x2b0] sm:%s1671]
        %2025 = vst [vmem:[%s1679 + $0x2b0] sm:%s1671] %v2024
        %v2026 = vld [vmem:[%s1678 + $0x2b8] sm:%s1671]
        %2027 = vst [vmem:[%s1679 + $0x2b4] sm:%s1671] %v2026
        %v2028 = vld [vmem:[%s1678 + $0x2b4] sm:%s1671]
        %2029 = vst [vmem:[%s1679 + $0x2b8] sm:%s1671] %v2028
        %v2030 = vld [vmem:[%s1678 + $0x2bc] sm:%s1671]
        %2031 = vst [vmem:[%s1679 + $0x2bc] sm:%s1671] %v2030
        %v2032 = vld [vmem:[%s1678 + $0x2c0] sm:%s1671]
        %2033 = vst [vmem:[%s1679 + $0x2c0] sm:%s1671] %v2032
        %v2034 = vld [vmem:[%s1678 + $0x2c8] sm:%s1671]
        %2035 = vst [vmem:[%s1679 + $0x2c4] sm:%s1671] %v2034
        %v2036 = vld [vmem:[%s1678 + $0x2c4] sm:%s1671]
        %2037 = vst [vmem:[%s1679 + $0x2c8] sm:%s1671] %v2036
        %v2038 = vld [vmem:[%s1678 + $0x2cc] sm:%s1671]
        %2039 = vst [vmem:[%s1679 + $0x2cc] sm:%s1671] %v2038
        %v2040 = vld [vmem:[%s1678 + $0x2d0] sm:%s1671]
        %2041 = vst [vmem:[%s1679 + $0x2d0] sm:%s1671] %v2040
        %v2042 = vld [vmem:[%s1678 + $0x2d8] sm:%s1671]
        %2043 = vst [vmem:[%s1679 + $0x2d4] sm:%s1671] %v2042
        %v2044 = vld [vmem:[%s1678 + $0x2d4] sm:%s1671]
        %2045 = vst [vmem:[%s1679 + $0x2d8] sm:%s1671] %v2044
        %v2046 = vld [vmem:[%s1678 + $0x2dc] sm:%s1671]
        %2047 = vst [vmem:[%s1679 + $0x2dc] sm:%s1671] %v2046
        %v2048 = vld [vmem:[%s1678 + $0x2e0] sm:%s1671]
        %2049 = vst [vmem:[%s1679 + $0x2e0] sm:%s1671] %v2048
        %v2050 = vld [vmem:[%s1678 + $0x2e8] sm:%s1671]
        %2051 = vst [vmem:[%s1679 + $0x2e4] sm:%s1671] %v2050
        %v2052 = vld [vmem:[%s1678 + $0x2e4] sm:%s1671]
        %2053 = vst [vmem:[%s1679 + $0x2e8] sm:%s1671] %v2052
        %v2054 = vld [vmem:[%s1678 + $0x2ec] sm:%s1671]
        %2055 = vst [vmem:[%s1679 + $0x2ec] sm:%s1671] %v2054
        %v2056 = vld [vmem:[%s1678 + $0x2f0] sm:%s1671]
        %2057 = vst [vmem:[%s1679 + $0x2f0] sm:%s1671] %v2056
        %v2058 = vld [vmem:[%s1678 + $0x2f8] sm:%s1671]
        %2059 = vst [vmem:[%s1679 + $0x2f4] sm:%s1671] %v2058
        %v2060 = vld [vmem:[%s1678 + $0x2f4] sm:%s1671]
        %2061 = vst [vmem:[%s1679 + $0x2f8] sm:%s1671] %v2060
        %v2062 = vld [vmem:[%s1678 + $0x2fc] sm:%s1671]
        %2063 = vst [vmem:[%s1679 + $0x2fc] sm:%s1671] %v2062
        %v2064 = vld [vmem:[%s1678 + $0x300] sm:%s1671]
        %2065 = vst [vmem:[%s1679 + $0x300] sm:%s1671] %v2064
        %v2066 = vld [vmem:[%s1678 + $0x308] sm:%s1671]
        %2067 = vst [vmem:[%s1679 + $0x304] sm:%s1671] %v2066
        %v2068 = vld [vmem:[%s1678 + $0x304] sm:%s1671]
        %2069 = vst [vmem:[%s1679 + $0x308] sm:%s1671] %v2068
        %v2070 = vld [vmem:[%s1678 + $0x30c] sm:%s1671]
        %2071 = vst [vmem:[%s1679 + $0x30c] sm:%s1671] %v2070
        %v2072 = vld [vmem:[%s1678 + $0x310] sm:%s1671]
        %2073 = vst [vmem:[%s1679 + $0x310] sm:%s1671] %v2072
        %v2074 = vld [vmem:[%s1678 + $0x318] sm:%s1671]
        %2075 = vst [vmem:[%s1679 + $0x314] sm:%s1671] %v2074
        %v2076 = vld [vmem:[%s1678 + $0x314] sm:%s1671]
        %2077 = vst [vmem:[%s1679 + $0x318] sm:%s1671] %v2076
        %v2078 = vld [vmem:[%s1678 + $0x31c] sm:%s1671]
        %2079 = vst [vmem:[%s1679 + $0x31c] sm:%s1671] %v2078
        %v2080 = vld [vmem:[%s1678 + $0x320] sm:%s1671]
        %2081 = vst [vmem:[%s1679 + $0x320] sm:%s1671] %v2080
        %v2082 = vld [vmem:[%s1678 + $0x328] sm:%s1671]
        %2083 = vst [vmem:[%s1679 + $0x324] sm:%s1671] %v2082
        %v2084 = vld [vmem:[%s1678 + $0x324] sm:%s1671]
        %2085 = vst [vmem:[%s1679 + $0x328] sm:%s1671] %v2084
        %v2086 = vld [vmem:[%s1678 + $0x32c] sm:%s1671]
        %2087 = vst [vmem:[%s1679 + $0x32c] sm:%s1671] %v2086
        %v2088 = vld [vmem:[%s1678 + $0x330] sm:%s1671]
        %2089 = vst [vmem:[%s1679 + $0x330] sm:%s1671] %v2088
        %v2090 = vld [vmem:[%s1678 + $0x338] sm:%s1671]
        %2091 = vst [vmem:[%s1679 + $0x334] sm:%s1671] %v2090
        %v2092 = vld [vmem:[%s1678 + $0x334] sm:%s1671]
        %2093 = vst [vmem:[%s1679 + $0x338] sm:%s1671] %v2092
        %v2094 = vld [vmem:[%s1678 + $0x33c] sm:%s1671]
        %2095 = vst [vmem:[%s1679 + $0x33c] sm:%s1671] %v2094
        %v2096 = vld [vmem:[%s1678 + $0x340] sm:%s1671]
        %2097 = vst [vmem:[%s1679 + $0x340] sm:%s1671] %v2096
        %v2098 = vld [vmem:[%s1678 + $0x348] sm:%s1671]
        %2099 = vst [vmem:[%s1679 + $0x344] sm:%s1671] %v2098
        %v2100 = vld [vmem:[%s1678 + $0x344] sm:%s1671]
        %2101 = vst [vmem:[%s1679 + $0x348] sm:%s1671] %v2100
        %v2102 = vld [vmem:[%s1678 + $0x34c] sm:%s1671]
        %2103 = vst [vmem:[%s1679 + $0x34c] sm:%s1671] %v2102
        %v2104 = vld [vmem:[%s1678 + $0x350] sm:%s1671]
        %2105 = vst [vmem:[%s1679 + $0x350] sm:%s1671] %v2104
        %v2106 = vld [vmem:[%s1678 + $0x358] sm:%s1671]
        %2107 = vst [vmem:[%s1679 + $0x354] sm:%s1671] %v2106
        %v2108 = vld [vmem:[%s1678 + $0x354] sm:%s1671]
        %2109 = vst [vmem:[%s1679 + $0x358] sm:%s1671] %v2108
        %v2110 = vld [vmem:[%s1678 + $0x35c] sm:%s1671]
        %2111 = vst [vmem:[%s1679 + $0x35c] sm:%s1671] %v2110
        %v2112 = vld [vmem:[%s1678 + $0x360] sm:%s1671]
        %2113 = vst [vmem:[%s1679 + $0x360] sm:%s1671] %v2112
        %v2114 = vld [vmem:[%s1678 + $0x368] sm:%s1671]
        %2115 = vst [vmem:[%s1679 + $0x364] sm:%s1671] %v2114
        %v2116 = vld [vmem:[%s1678 + $0x364] sm:%s1671]
        %2117 = vst [vmem:[%s1679 + $0x368] sm:%s1671] %v2116
        %v2118 = vld [vmem:[%s1678 + $0x36c] sm:%s1671]
        %2119 = vst [vmem:[%s1679 + $0x36c] sm:%s1671] %v2118
        %v2120 = vld [vmem:[%s1678 + $0x370] sm:%s1671]
        %2121 = vst [vmem:[%s1679 + $0x370] sm:%s1671] %v2120
        %v2122 = vld [vmem:[%s1678 + $0x378] sm:%s1671]
        %2123 = vst [vmem:[%s1679 + $0x374] sm:%s1671] %v2122
        %v2124 = vld [vmem:[%s1678 + $0x374] sm:%s1671]
        %2125 = vst [vmem:[%s1679 + $0x378] sm:%s1671] %v2124
        %v2126 = vld [vmem:[%s1678 + $0x37c] sm:%s1671]
        %2127 = vst [vmem:[%s1679 + $0x37c] sm:%s1671] %v2126
        %v2128 = vld [vmem:[%s1678 + $0x380] sm:%s1671]
        %2129 = vst [vmem:[%s1679 + $0x380] sm:%s1671] %v2128
        %v2130 = vld [vmem:[%s1678 + $0x388] sm:%s1671]
        %2131 = vst [vmem:[%s1679 + $0x384] sm:%s1671] %v2130
        %v2132 = vld [vmem:[%s1678 + $0x384] sm:%s1671]
        %2133 = vst [vmem:[%s1679 + $0x388] sm:%s1671] %v2132
        %v2134 = vld [vmem:[%s1678 + $0x38c] sm:%s1671]
        %2135 = vst [vmem:[%s1679 + $0x38c] sm:%s1671] %v2134
        %v2136 = vld [vmem:[%s1678 + $0x390] sm:%s1671]
        %2137 = vst [vmem:[%s1679 + $0x390] sm:%s1671] %v2136
        %v2138 = vld [vmem:[%s1678 + $0x398] sm:%s1671]
        %2139 = vst [vmem:[%s1679 + $0x394] sm:%s1671] %v2138
        %v2140 = vld [vmem:[%s1678 + $0x394] sm:%s1671]
        %2141 = vst [vmem:[%s1679 + $0x398] sm:%s1671] %v2140
        %v2142 = vld [vmem:[%s1678 + $0x39c] sm:%s1671]
        %2143 = vst [vmem:[%s1679 + $0x39c] sm:%s1671] %v2142
        %v2144 = vld [vmem:[%s1678 + $0x3a0] sm:%s1671]
        %2145 = vst [vmem:[%s1679 + $0x3a0] sm:%s1671] %v2144
        %v2146 = vld [vmem:[%s1678 + $0x3a8] sm:%s1671]
        %2147 = vst [vmem:[%s1679 + $0x3a4] sm:%s1671] %v2146
        %v2148 = vld [vmem:[%s1678 + $0x3a4] sm:%s1671]
        %2149 = vst [vmem:[%s1679 + $0x3a8] sm:%s1671] %v2148
        %v2150 = vld [vmem:[%s1678 + $0x3ac] sm:%s1671]
        %2151 = vst [vmem:[%s1679 + $0x3ac] sm:%s1671] %v2150
        %v2152 = vld [vmem:[%s1678 + $0x3b0] sm:%s1671]
        %2153 = vst [vmem:[%s1679 + $0x3b0] sm:%s1671] %v2152
        %v2154 = vld [vmem:[%s1678 + $0x3b8] sm:%s1671]
        %2155 = vst [vmem:[%s1679 + $0x3b4] sm:%s1671] %v2154
        %v2156 = vld [vmem:[%s1678 + $0x3b4] sm:%s1671]
        %2157 = vst [vmem:[%s1679 + $0x3b8] sm:%s1671] %v2156
        %v2158 = vld [vmem:[%s1678 + $0x3bc] sm:%s1671]
        %2159 = vst [vmem:[%s1679 + $0x3bc] sm:%s1671] %v2158
        %v2160 = vld [vmem:[%s1678 + $0x3c0] sm:%s1671]
        %2161 = vst [vmem:[%s1679 + $0x3c0] sm:%s1671] %v2160
        %v2162 = vld [vmem:[%s1678 + $0x3c8] sm:%s1671]
        %2163 = vst [vmem:[%s1679 + $0x3c4] sm:%s1671] %v2162
        %v2164 = vld [vmem:[%s1678 + $0x3c4] sm:%s1671]
        %2165 = vst [vmem:[%s1679 + $0x3c8] sm:%s1671] %v2164
        %v2166 = vld [vmem:[%s1678 + $0x3cc] sm:%s1671]
        %2167 = vst [vmem:[%s1679 + $0x3cc] sm:%s1671] %v2166
        %v2168 = vld [vmem:[%s1678 + $0x3d0] sm:%s1671]
        %2169 = vst [vmem:[%s1679 + $0x3d0] sm:%s1671] %v2168
        %v2170 = vld [vmem:[%s1678 + $0x3d8] sm:%s1671]
        %2171 = vst [vmem:[%s1679 + $0x3d4] sm:%s1671] %v2170
        %v2172 = vld [vmem:[%s1678 + $0x3d4] sm:%s1671]
        %2173 = vst [vmem:[%s1679 + $0x3d8] sm:%s1671] %v2172
        %v2174 = vld [vmem:[%s1678 + $0x3dc] sm:%s1671]
        %2175 = vst [vmem:[%s1679 + $0x3dc] sm:%s1671] %v2174
        %v2176 = vld [vmem:[%s1678 + $0x3e0] sm:%s1671]
        %2177 = vst [vmem:[%s1679 + $0x3e0] sm:%s1671] %v2176
        %v2178 = vld [vmem:[%s1678 + $0x3e8] sm:%s1671]
        %2179 = vst [vmem:[%s1679 + $0x3e4] sm:%s1671] %v2178
        %v2180 = vld [vmem:[%s1678 + $0x3e4] sm:%s1671]
        %2181 = vst [vmem:[%s1679 + $0x3e8] sm:%s1671] %v2180
        %v2182 = vld [vmem:[%s1678 + $0x3ec] sm:%s1671]
        %2183 = vst [vmem:[%s1679 + $0x3ec] sm:%s1671] %v2182
        %v2184 = vld [vmem:[%s1678 + $0x3f0] sm:%s1671]
        %2185 = vst [vmem:[%s1679 + $0x3f0] sm:%s1671] %v2184
        %v2186 = vld [vmem:[%s1678 + $0x3f8] sm:%s1671]
        %2187 = vst [vmem:[%s1679 + $0x3f4] sm:%s1671] %v2186
        %v2188 = vld [vmem:[%s1678 + $0x3f4] sm:%s1671]
        %2189 = vst [vmem:[%s1679 + $0x3f8] sm:%s1671] %v2188
        %v2190 = vld [vmem:[%s1678 + $0x3fc] sm:%s1671]
        %2191 = vst [vmem:[%s1679 + $0x3fc] sm:%s1671] %v2190
        %v2192 = vld [vmem:[%s1678 + $0x400] sm:%s1671]
        %2193 = vst [vmem:[%s1679 + $0x400] sm:%s1671] %v2192
        %v2194 = vld [vmem:[%s1678 + $0x408] sm:%s1671]
        %2195 = vst [vmem:[%s1679 + $0x404] sm:%s1671] %v2194
        %v2196 = vld [vmem:[%s1678 + $0x404] sm:%s1671]
        %2197 = vst [vmem:[%s1679 + $0x408] sm:%s1671] %v2196
        %v2198 = vld [vmem:[%s1678 + $0x40c] sm:%s1671]
        %2199 = vst [vmem:[%s1679 + $0x40c] sm:%s1671] %v2198
        %v2200 = vld [vmem:[%s1678 + $0x410] sm:%s1671]
        %2201 = vst [vmem:[%s1679 + $0x410] sm:%s1671] %v2200
        %v2202 = vld [vmem:[%s1678 + $0x418] sm:%s1671]
        %2203 = vst [vmem:[%s1679 + $0x414] sm:%s1671] %v2202
        %v2204 = vld [vmem:[%s1678 + $0x414] sm:%s1671]
        %2205 = vst [vmem:[%s1679 + $0x418] sm:%s1671] %v2204
        %v2206 = vld [vmem:[%s1678 + $0x41c] sm:%s1671]
        %2207 = vst [vmem:[%s1679 + $0x41c] sm:%s1671] %v2206
        %v2208 = vld [vmem:[%s1678 + $0x420] sm:%s1671]
        %2209 = vst [vmem:[%s1679 + $0x420] sm:%s1671] %v2208
        %v2210 = vld [vmem:[%s1678 + $0x428] sm:%s1671]
        %2211 = vst [vmem:[%s1679 + $0x424] sm:%s1671] %v2210
        %v2212 = vld [vmem:[%s1678 + $0x424] sm:%s1671]
        %2213 = vst [vmem:[%s1679 + $0x428] sm:%s1671] %v2212
        %v2214 = vld [vmem:[%s1678 + $0x42c] sm:%s1671]
        %2215 = vst [vmem:[%s1679 + $0x42c] sm:%s1671] %v2214
        %v2216 = vld [vmem:[%s1678 + $0x430] sm:%s1671]
        %2217 = vst [vmem:[%s1679 + $0x430] sm:%s1671] %v2216
        %v2218 = vld [vmem:[%s1678 + $0x438] sm:%s1671]
        %2219 = vst [vmem:[%s1679 + $0x434] sm:%s1671] %v2218
        %v2220 = vld [vmem:[%s1678 + $0x434] sm:%s1671]
        %2221 = vst [vmem:[%s1679 + $0x438] sm:%s1671] %v2220
        %v2222 = vld [vmem:[%s1678 + $0x43c] sm:%s1671]
        %2223 = vst [vmem:[%s1679 + $0x43c] sm:%s1671] %v2222
        %v2224 = vld [vmem:[%s1678 + $0x440] sm:%s1671]
        %2225 = vst [vmem:[%s1679 + $0x440] sm:%s1671] %v2224
        %v2226 = vld [vmem:[%s1678 + $0x448] sm:%s1671]
        %2227 = vst [vmem:[%s1679 + $0x444] sm:%s1671] %v2226
        %v2228 = vld [vmem:[%s1678 + $0x444] sm:%s1671]
        %2229 = vst [vmem:[%s1679 + $0x448] sm:%s1671] %v2228
        %v2230 = vld [vmem:[%s1678 + $0x44c] sm:%s1671]
        %2231 = vst [vmem:[%s1679 + $0x44c] sm:%s1671] %v2230
        %v2232 = vld [vmem:[%s1678 + $0x450] sm:%s1671]
        %2233 = vst [vmem:[%s1679 + $0x450] sm:%s1671] %v2232
        %v2234 = vld [vmem:[%s1678 + $0x458] sm:%s1671]
        %2235 = vst [vmem:[%s1679 + $0x454] sm:%s1671] %v2234
        %v2236 = vld [vmem:[%s1678 + $0x454] sm:%s1671]
        %2237 = vst [vmem:[%s1679 + $0x458] sm:%s1671] %v2236
        %v2238 = vld [vmem:[%s1678 + $0x45c] sm:%s1671]
        %2239 = vst [vmem:[%s1679 + $0x45c] sm:%s1671] %v2238
        %v2240 = vld [vmem:[%s1678 + $0x460] sm:%s1671]
        %2241 = vst [vmem:[%s1679 + $0x460] sm:%s1671] %v2240
        %v2242 = vld [vmem:[%s1678 + $0x468] sm:%s1671]
        %2243 = vst [vmem:[%s1679 + $0x464] sm:%s1671] %v2242
        %v2244 = vld [vmem:[%s1678 + $0x464] sm:%s1671]
        %2245 = vst [vmem:[%s1679 + $0x468] sm:%s1671] %v2244
        %v2246 = vld [vmem:[%s1678 + $0x46c] sm:%s1671]
        %2247 = vst [vmem:[%s1679 + $0x46c] sm:%s1671] %v2246
        %v2248 = vld [vmem:[%s1678 + $0x470] sm:%s1671]
        %2249 = vst [vmem:[%s1679 + $0x470] sm:%s1671] %v2248
        %v2250 = vld [vmem:[%s1678 + $0x478] sm:%s1671]
        %2251 = vst [vmem:[%s1679 + $0x474] sm:%s1671] %v2250
        %v2252 = vld [vmem:[%s1678 + $0x474] sm:%s1671]
        %2253 = vst [vmem:[%s1679 + $0x478] sm:%s1671] %v2252
        %v2254 = vld [vmem:[%s1678 + $0x47c] sm:%s1671]
        %2255 = vst [vmem:[%s1679 + $0x47c] sm:%s1671] %v2254
        %v2256 = vld [vmem:[%s1678 + $0x480] sm:%s1671]
        %2257 = vst [vmem:[%s1679 + $0x480] sm:%s1671] %v2256
        %v2258 = vld [vmem:[%s1678 + $0x488] sm:%s1671]
        %2259 = vst [vmem:[%s1679 + $0x484] sm:%s1671] %v2258
        %v2260 = vld [vmem:[%s1678 + $0x484] sm:%s1671]
        %2261 = vst [vmem:[%s1679 + $0x488] sm:%s1671] %v2260
        %v2262 = vld [vmem:[%s1678 + $0x48c] sm:%s1671]
        %2263 = vst [vmem:[%s1679 + $0x48c] sm:%s1671] %v2262
        %v2264 = vld [vmem:[%s1678 + $0x490] sm:%s1671]
        %2265 = vst [vmem:[%s1679 + $0x490] sm:%s1671] %v2264
        %v2266 = vld [vmem:[%s1678 + $0x498] sm:%s1671]
        %2267 = vst [vmem:[%s1679 + $0x494] sm:%s1671] %v2266
        %v2268 = vld [vmem:[%s1678 + $0x494] sm:%s1671]
        %2269 = vst [vmem:[%s1679 + $0x498] sm:%s1671] %v2268
        %v2270 = vld [vmem:[%s1678 + $0x49c] sm:%s1671]
        %2271 = vst [vmem:[%s1679 + $0x49c] sm:%s1671] %v2270
        %v2272 = vld [vmem:[%s1678 + $0x4a0] sm:%s1671]
        %2273 = vst [vmem:[%s1679 + $0x4a0] sm:%s1671] %v2272
        %v2274 = vld [vmem:[%s1678 + $0x4a8] sm:%s1671]
        %2275 = vst [vmem:[%s1679 + $0x4a4] sm:%s1671] %v2274
        %v2276 = vld [vmem:[%s1678 + $0x4a4] sm:%s1671]
        %2277 = vst [vmem:[%s1679 + $0x4a8] sm:%s1671] %v2276
        %v2278 = vld [vmem:[%s1678 + $0x4ac] sm:%s1671]
        %2279 = vst [vmem:[%s1679 + $0x4ac] sm:%s1671] %v2278
        %v2280 = vld [vmem:[%s1678 + $0x4b0] sm:%s1671]
        %2281 = vst [vmem:[%s1679 + $0x4b0] sm:%s1671] %v2280
        %v2282 = vld [vmem:[%s1678 + $0x4b8] sm:%s1671]
        %2283 = vst [vmem:[%s1679 + $0x4b4] sm:%s1671] %v2282
        %v2284 = vld [vmem:[%s1678 + $0x4b4] sm:%s1671]
        %2285 = vst [vmem:[%s1679 + $0x4b8] sm:%s1671] %v2284
        %v2286 = vld [vmem:[%s1678 + $0x4bc] sm:%s1671]
        %2287 = vst [vmem:[%s1679 + $0x4bc] sm:%s1671] %v2286
        %v2288 = vld [vmem:[%s1678 + $0x4c0] sm:%s1671]
        %2289 = vst [vmem:[%s1679 + $0x4c0] sm:%s1671] %v2288
        %v2290 = vld [vmem:[%s1678 + $0x4c8] sm:%s1671]
        %2291 = vst [vmem:[%s1679 + $0x4c4] sm:%s1671] %v2290
        %v2292 = vld [vmem:[%s1678 + $0x4c4] sm:%s1671]
        %2293 = vst [vmem:[%s1679 + $0x4c8] sm:%s1671] %v2292
        %v2294 = vld [vmem:[%s1678 + $0x4cc] sm:%s1671]
        %2295 = vst [vmem:[%s1679 + $0x4cc] sm:%s1671] %v2294
        %v2296 = vld [vmem:[%s1678 + $0x4d0] sm:%s1671]
        %2297 = vst [vmem:[%s1679 + $0x4d0] sm:%s1671] %v2296
        %v2298 = vld [vmem:[%s1678 + $0x4d8] sm:%s1671]
        %2299 = vst [vmem:[%s1679 + $0x4d4] sm:%s1671] %v2298
        %v2300 = vld [vmem:[%s1678 + $0x4d4] sm:%s1671]
        %2301 = vst [vmem:[%s1679 + $0x4d8] sm:%s1671] %v2300
        %v2302 = vld [vmem:[%s1678 + $0x4dc] sm:%s1671]
        %2303 = vst [vmem:[%s1679 + $0x4dc] sm:%s1671] %v2302
        %v2304 = vld [vmem:[%s1678 + $0x4e0] sm:%s1671]
        %2305 = vst [vmem:[%s1679 + $0x4e0] sm:%s1671] %v2304
        %v2306 = vld [vmem:[%s1678 + $0x4e8] sm:%s1671]
        %2307 = vst [vmem:[%s1679 + $0x4e4] sm:%s1671] %v2306
        %v2308 = vld [vmem:[%s1678 + $0x4e4] sm:%s1671]
        %2309 = vst [vmem:[%s1679 + $0x4e8] sm:%s1671] %v2308
        %v2310 = vld [vmem:[%s1678 + $0x4ec] sm:%s1671]
        %2311 = vst [vmem:[%s1679 + $0x4ec] sm:%s1671] %v2310
        %v2312 = vld [vmem:[%s1678 + $0x4f0] sm:%s1671]
        %2313 = vst [vmem:[%s1679 + $0x4f0] sm:%s1671] %v2312
        %v2314 = vld [vmem:[%s1678 + $0x4f8] sm:%s1671]
        %2315 = vst [vmem:[%s1679 + $0x4f4] sm:%s1671] %v2314
        %v2316 = vld [vmem:[%s1678 + $0x4f4] sm:%s1671]
        %2317 = vst [vmem:[%s1679 + $0x4f8] sm:%s1671] %v2316
        %v2318 = vld [vmem:[%s1678 + $0x4fc] sm:%s1671]
        %2319 = vst [vmem:[%s1679 + $0x4fc] sm:%s1671] %v2318
        %v2320 = vld [vmem:[%s1678 + $0x500] sm:%s1671]
        %2321 = vst [vmem:[%s1679 + $0x500] sm:%s1671] %v2320
        %v2322 = vld [vmem:[%s1678 + $0x508] sm:%s1671]
        %2323 = vst [vmem:[%s1679 + $0x504] sm:%s1671] %v2322
        %v2324 = vld [vmem:[%s1678 + $0x504] sm:%s1671]
        %2325 = vst [vmem:[%s1679 + $0x508] sm:%s1671] %v2324
        %v2326 = vld [vmem:[%s1678 + $0x50c] sm:%s1671]
        %2327 = vst [vmem:[%s1679 + $0x50c] sm:%s1671] %v2326
        %v2328 = vld [vmem:[%s1678 + $0x510] sm:%s1671]
        %2329 = vst [vmem:[%s1679 + $0x510] sm:%s1671] %v2328
        %v2330 = vld [vmem:[%s1678 + $0x518] sm:%s1671]
        %2331 = vst [vmem:[%s1679 + $0x514] sm:%s1671] %v2330
        %v2332 = vld [vmem:[%s1678 + $0x514] sm:%s1671]
        %2333 = vst [vmem:[%s1679 + $0x518] sm:%s1671] %v2332
        %v2334 = vld [vmem:[%s1678 + $0x51c] sm:%s1671]
        %2335 = vst [vmem:[%s1679 + $0x51c] sm:%s1671] %v2334
        %v2336 = vld [vmem:[%s1678 + $0x520] sm:%s1671]
        %2337 = vst [vmem:[%s1679 + $0x520] sm:%s1671] %v2336
        %v2338 = vld [vmem:[%s1678 + $0x528] sm:%s1671]
        %2339 = vst [vmem:[%s1679 + $0x524] sm:%s1671] %v2338
        %v2340 = vld [vmem:[%s1678 + $0x524] sm:%s1671]
        %2341 = vst [vmem:[%s1679 + $0x528] sm:%s1671] %v2340
        %v2342 = vld [vmem:[%s1678 + $0x52c] sm:%s1671]
        %2343 = vst [vmem:[%s1679 + $0x52c] sm:%s1671] %v2342
        %v2344 = vld [vmem:[%s1678 + $0x530] sm:%s1671]
        %2345 = vst [vmem:[%s1679 + $0x530] sm:%s1671] %v2344
        %v2346 = vld [vmem:[%s1678 + $0x538] sm:%s1671]
        %2347 = vst [vmem:[%s1679 + $0x534] sm:%s1671] %v2346
        %v2348 = vld [vmem:[%s1678 + $0x534] sm:%s1671]
        %2349 = vst [vmem:[%s1679 + $0x538] sm:%s1671] %v2348
        %v2350 = vld [vmem:[%s1678 + $0x53c] sm:%s1671]
        %2351 = vst [vmem:[%s1679 + $0x53c] sm:%s1671] %v2350
        %v2352 = vld [vmem:[%s1678 + $0x540] sm:%s1671]
        %2353 = vst [vmem:[%s1679 + $0x540] sm:%s1671] %v2352
        %v2354 = vld [vmem:[%s1678 + $0x548] sm:%s1671]
        %2355 = vst [vmem:[%s1679 + $0x544] sm:%s1671] %v2354
        %v2356 = vld [vmem:[%s1678 + $0x544] sm:%s1671]
        %2357 = vst [vmem:[%s1679 + $0x548] sm:%s1671] %v2356
        %v2358 = vld [vmem:[%s1678 + $0x54c] sm:%s1671]
        %2359 = vst [vmem:[%s1679 + $0x54c] sm:%s1671] %v2358
        %v2360 = vld [vmem:[%s1678 + $0x550] sm:%s1671]
        %2361 = vst [vmem:[%s1679 + $0x550] sm:%s1671] %v2360
        %v2362 = vld [vmem:[%s1678 + $0x558] sm:%s1671]
        %2363 = vst [vmem:[%s1679 + $0x554] sm:%s1671] %v2362
        %v2364 = vld [vmem:[%s1678 + $0x554] sm:%s1671]
        %2365 = vst [vmem:[%s1679 + $0x558] sm:%s1671] %v2364
        %v2366 = vld [vmem:[%s1678 + $0x55c] sm:%s1671]
        %2367 = vst [vmem:[%s1679 + $0x55c] sm:%s1671] %v2366
        %v2368 = vld [vmem:[%s1678 + $0x560] sm:%s1671]
        %2369 = vst [vmem:[%s1679 + $0x560] sm:%s1671] %v2368
        %v2370 = vld [vmem:[%s1678 + $0x568] sm:%s1671]
        %2371 = vst [vmem:[%s1679 + $0x564] sm:%s1671] %v2370
        %v2372 = vld [vmem:[%s1678 + $0x564] sm:%s1671]
        %2373 = vst [vmem:[%s1679 + $0x568] sm:%s1671] %v2372
        %v2374 = vld [vmem:[%s1678 + $0x56c] sm:%s1671]
        %2375 = vst [vmem:[%s1679 + $0x56c] sm:%s1671] %v2374
        %v2376 = vld [vmem:[%s1678 + $0x570] sm:%s1671]
        %2377 = vst [vmem:[%s1679 + $0x570] sm:%s1671] %v2376
        %v2378 = vld [vmem:[%s1678 + $0x578] sm:%s1671]
        %2379 = vst [vmem:[%s1679 + $0x574] sm:%s1671] %v2378
        %v2380 = vld [vmem:[%s1678 + $0x574] sm:%s1671]
        %2381 = vst [vmem:[%s1679 + $0x578] sm:%s1671] %v2380
        %v2382 = vld [vmem:[%s1678 + $0x57c] sm:%s1671]
        %2383 = vst [vmem:[%s1679 + $0x57c] sm:%s1671] %v2382
        %v2384 = vld [vmem:[%s1678 + $0x580] sm:%s1671]
        %2385 = vst [vmem:[%s1679 + $0x580] sm:%s1671] %v2384
        %v2386 = vld [vmem:[%s1678 + $0x588] sm:%s1671]
        %2387 = vst [vmem:[%s1679 + $0x584] sm:%s1671] %v2386
        %v2388 = vld [vmem:[%s1678 + $0x584] sm:%s1671]
        %2389 = vst [vmem:[%s1679 + $0x588] sm:%s1671] %v2388
        %v2390 = vld [vmem:[%s1678 + $0x58c] sm:%s1671]
        %2391 = vst [vmem:[%s1679 + $0x58c] sm:%s1671] %v2390
        %v2392 = vld [vmem:[%s1678 + $0x590] sm:%s1671]
        %2393 = vst [vmem:[%s1679 + $0x590] sm:%s1671] %v2392
        %v2394 = vld [vmem:[%s1678 + $0x598] sm:%s1671]
        %2395 = vst [vmem:[%s1679 + $0x594] sm:%s1671] %v2394
        %v2396 = vld [vmem:[%s1678 + $0x594] sm:%s1671]
        %2397 = vst [vmem:[%s1679 + $0x598] sm:%s1671] %v2396
        %v2398 = vld [vmem:[%s1678 + $0x59c] sm:%s1671]
        %2399 = vst [vmem:[%s1679 + $0x59c] sm:%s1671] %v2398
        %v2400 = vld [vmem:[%s1678 + $0x5a0] sm:%s1671]
        %2401 = vst [vmem:[%s1679 + $0x5a0] sm:%s1671] %v2400
        %v2402 = vld [vmem:[%s1678 + $0x5a8] sm:%s1671]
        %2403 = vst [vmem:[%s1679 + $0x5a4] sm:%s1671] %v2402
        %v2404 = vld [vmem:[%s1678 + $0x5a4] sm:%s1671]
        %2405 = vst [vmem:[%s1679 + $0x5a8] sm:%s1671] %v2404
        %v2406 = vld [vmem:[%s1678 + $0x5ac] sm:%s1671]
        %2407 = vst [vmem:[%s1679 + $0x5ac] sm:%s1671] %v2406
        %v2408 = vld [vmem:[%s1678 + $0x5b0] sm:%s1671]
        %2409 = vst [vmem:[%s1679 + $0x5b0] sm:%s1671] %v2408
        %v2410 = vld [vmem:[%s1678 + $0x5b8] sm:%s1671]
        %2411 = vst [vmem:[%s1679 + $0x5b4] sm:%s1671] %v2410
        %v2412 = vld [vmem:[%s1678 + $0x5b4] sm:%s1671]
        %2413 = vst [vmem:[%s1679 + $0x5b8] sm:%s1671] %v2412
        %v2414 = vld [vmem:[%s1678 + $0x5bc] sm:%s1671]
        %2415 = vst [vmem:[%s1679 + $0x5bc] sm:%s1671] %v2414
        %v2416 = vld [vmem:[%s1678 + $0x5c0] sm:%s1671]
        %2417 = vst [vmem:[%s1679 + $0x5c0] sm:%s1671] %v2416
        %v2418 = vld [vmem:[%s1678 + $0x5c8] sm:%s1671]
        %2419 = vst [vmem:[%s1679 + $0x5c4] sm:%s1671] %v2418
        %v2420 = vld [vmem:[%s1678 + $0x5c4] sm:%s1671]
        %2421 = vst [vmem:[%s1679 + $0x5c8] sm:%s1671] %v2420
        %v2422 = vld [vmem:[%s1678 + $0x5cc] sm:%s1671]
        %2423 = vst [vmem:[%s1679 + $0x5cc] sm:%s1671] %v2422
        %v2424 = vld [vmem:[%s1678 + $0x5d0] sm:%s1671]
        %2425 = vst [vmem:[%s1679 + $0x5d0] sm:%s1671] %v2424
        %v2426 = vld [vmem:[%s1678 + $0x5d8] sm:%s1671]
        %2427 = vst [vmem:[%s1679 + $0x5d4] sm:%s1671] %v2426
        %v2428 = vld [vmem:[%s1678 + $0x5d4] sm:%s1671]
        %2429 = vst [vmem:[%s1679 + $0x5d8] sm:%s1671] %v2428
        %v2430 = vld [vmem:[%s1678 + $0x5dc] sm:%s1671]
        %2431 = vst [vmem:[%s1679 + $0x5dc] sm:%s1671] %v2430
        %v2432 = vld [vmem:[%s1678 + $0x5e0] sm:%s1671]
        %2433 = vst [vmem:[%s1679 + $0x5e0] sm:%s1671] %v2432
        %v2434 = vld [vmem:[%s1678 + $0x5e8] sm:%s1671]
        %2435 = vst [vmem:[%s1679 + $0x5e4] sm:%s1671] %v2434
        %v2436 = vld [vmem:[%s1678 + $0x5e4] sm:%s1671]
        %2437 = vst [vmem:[%s1679 + $0x5e8] sm:%s1671] %v2436
        %v2438 = vld [vmem:[%s1678 + $0x5ec] sm:%s1671]
        %2439 = vst [vmem:[%s1679 + $0x5ec] sm:%s1671] %v2438
        %v2440 = vld [vmem:[%s1678 + $0x5f0] sm:%s1671]
        %2441 = vst [vmem:[%s1679 + $0x5f0] sm:%s1671] %v2440
        %v2442 = vld [vmem:[%s1678 + $0x5f8] sm:%s1671]
        %2443 = vst [vmem:[%s1679 + $0x5f4] sm:%s1671] %v2442
        %v2444 = vld [vmem:[%s1678 + $0x5f4] sm:%s1671]
        %2445 = vst [vmem:[%s1679 + $0x5f8] sm:%s1671] %v2444
        %v2446 = vld [vmem:[%s1678 + $0x5fc] sm:%s1671]
        %2447 = vst [vmem:[%s1679 + $0x5fc] sm:%s1671] %v2446
      $region143: #{fcn1_forward.1} parent=137 // loop_footer
        %s1677 = sadd.s32 1, %s1673
      $region144: #{fcn1_forward.1} parent=137 // loop_footer_branch
        %1672 = sbr.rel target = $region140
      $region145: #{fcn1_forward.1} parent=137 // loop_exit
        _
    $region138: #{fcn1_forward.1} parent=1 // pred_fallthru
      _
    // Predicated region
    $region164: #{fcn1_forward.1} parent=1 // pred_check
      _
    $region165: #{fcn1_forward.1} parent=1 // pred_check_branch
      %3245 = sbr.rel (0) target = $region167
    $region166: #{fcn1_forward.1} parent=1 // pred_region
      %3246 = vsyncadd %s1662, 24576
    $region167: #{fcn1_forward.1} parent=1 // pred_fallthru
      _
    %3247 = vst [vmem:[#allocation2] sm:$0xff] 0.0
    %3248 = vst [vmem:[#allocation2 + $0x20] sm:$0xff] 0.0
    %3249 = vst [vmem:[#allocation2 + $0x18] sm:$0xff] 0.0
    %3250 = vst [vmem:[#allocation2 + $0x38] sm:$0xff] 0.0
    %3251 = vst [vmem:[#allocation3] sm:$0xff] 0.0
    %3252 = vst [vmem:[#allocation3 + $0x8] sm:$0xff] 0.0
    %3253 = vst [vmem:[#allocation3 + $0x40] sm:$0xff] 0.0
    %3254 = vst [vmem:[#allocation3 + $0x48] sm:$0xff] 0.0
    %3255 = vst [vmem:[#allocation3 + $0x30] sm:$0xff] 0.0
    %3256 = vst [vmem:[#allocation3 + $0x38] sm:$0xff] 0.0
    %3257 = vst [vmem:[#allocation3 + $0x70] sm:$0xff] 0.0
    %3258 = vst [vmem:[#allocation3 + $0x78] sm:$0xff] 0.0
    %3259 = vst [vmem:[#allocation4] sm:$0xff] 0.0
    %3260 = vst [vmem:[#allocation4 + $0x8] sm:$0xff] 0.0
    %3261 = vst [vmem:[#allocation4 + $0x10] sm:$0xff] 0.0
    %3262 = vst [vmem:[#allocation4 + $0x18] sm:$0xff] 0.0
    %3263 = vst [vmem:[#allocation4 + $0xa0] sm:$0xff] 0.0
    %3264 = vst [vmem:[#allocation4 + $0xa8] sm:$0xff] 0.0
    %3265 = vst [vmem:[#allocation4 + $0xb0] sm:$0xff] 0.0
    %3266 = vst [vmem:[#allocation4 + $0xb8] sm:$0xff] 0.0
    %3267 = vst [vmem:[#allocation4 + $0x80] sm:$0x3f] 0.0
    %3268 = vst [vmem:[#allocation4 + $0x88] sm:$0x3f] 0.0
    %3269 = vst [vmem:[#allocation4 + $0x90] sm:$0x3f] 0.0
    %3270 = vst [vmem:[#allocation4 + $0x98] sm:$0x3f] 0.0
    %3271 = vst [vmem:[#allocation4 + $0x120] sm:$0x3f] 0.0
    %3272 = vst [vmem:[#allocation4 + $0x128] sm:$0x3f] 0.0
    %3273 = vst [vmem:[#allocation4 + $0x130] sm:$0x3f] 0.0
    %3274 = vst [vmem:[#allocation4 + $0x138] sm:$0x3f] 0.0
    %v3275 = vld [vmem:[%s0] sm:$0xf]
    %v3276 = vld [vmem:[%s0 + $0x4] sm:$0xf]
    %v3277 = vld [vmem:[%s0 + $0x8] sm:$0xf]
    %v3278 = vld [vmem:[%s0 + $0xc] sm:$0xf]
    %v3279 = vld [vmem:[%s2] sm:$0xf]
    %v3280 = vld [vmem:[%s2 + $0x4] sm:$0xf]
    %v3281 = vld [vmem:[%s2 + $0x8] sm:$0xf]
    %v3282 = vld [vmem:[%s2 + $0xc] sm:$0x3]
    %v3283 = vld [vmem:[%s3] sm:$0x1]
    %v3285 = vlaneseq
    %v3286 = vshrl.u32 %v3285, 7
    %v3287 = vsub.s32 0, %v3286
    %v3288 = vrot.slane %v3283, %v3287
    %v3294 = vunpack.c.l.b16 %v3275
    %v3295 = vunpack.c.l.b16 %v3276
    %v3296 = vunpack.c.l.b16 %v3277
    %v3297 = vunpack.c.l.b16 %v3278
    %v3298 = vpack.c.b16 %v3295, %v3294
    %v3299 = vpack.c.b16 %v3297, %v3296
    %v3304 = vunpack.c.l.b16 %v3279
    %v3305 = vunpack.c.l.b16 %v3280
    %v3306 = vunpack.c.l.b16 %v3281
    %v3307 = vunpack.c.l.b16 %v3282
    %v3308 = vpack.c.b16 %v3305, %v3304
    %v3309 = vpack.c.b16 %v3307, %v3306
    %vm3311 = vcmask 228352
    %v3313 = vsel %vm3311, %v3298, 0
    %v3316 = vsel %vm3311, %v3299, 0
    %vm3318 = vcmask 1045504
    %v3320 = vsel %vm3318, %v3309, 0
    %3322 = vmatprep.subr.bf16.mxu0 0
    %3323 = vmatpush1.bf16.msra.mxu0 %v3308
    %3324 = vmatprep.subr.bf16.mxu0 0
    %3325 = vmatpush1.bf16.msra.mxu0 %v3320
    %3326 = vmatprep.subr.bf16.mxu0 0
    %3327 = vmatpush1.bf16.msra.mxu0 0
    %3328 = vmatprep.subr.bf16.mxu0 0
    %3329 = vmatpush1.bf16.msra.mxu0 0
    %3330 = vmatprep.subr.bf16.mxu0 0
    %3331 = vmatpush1.bf16.msra.mxu0 0
    %3332 = vmatprep.subr.bf16.mxu0 0
    %3333 = vmatpush1.bf16.msra.mxu0 0
    %3334 = vmatprep.subr.bf16.mxu0 0
    %3335 = vmatpush1.bf16.msra.mxu0 0
    %3336 = vmatprep.subr.bf16.mxu0 0
    %3337 = vmatpush1.bf16.msra.mxu0 0
    %3338 = vmatprep.subr.bf16.mxu0 0
    %3339 = vmatpush1.bf16.msra.mxu0 0
    %3340 = vmatprep.subr.bf16.mxu0 0
    %3341 = vmatpush1.bf16.msra.mxu0 0
    %3342 = vmatprep.subr.bf16.mxu0 0
    %3343 = vmatpush1.bf16.msra.mxu0 0
    %3344 = vmatprep.subr.bf16.mxu0 0
    %3345 = vmatpush1.bf16.msra.mxu0 0
    %3346 = vmatprep.subr.bf16.mxu0 0
    %3347 = vmatpush1.bf16.msra.mxu0 0
    %3348 = vmatprep.subr.bf16.mxu0 0
    %3349 = vmatpush1.bf16.msra.mxu0 0
    %3350 = vmatprep.subr.bf16.mxu0 0
    %3351 = vmatpush1.bf16.msra.mxu0 0
    %3352 = vmatprep.subr.bf16.mxu0 0
    %3353 = vmatpush1.bf16.msra.mxu0 0
    %3354 = vmatprep.mubr.bf16.mxu0 0
    %3355 = vmatmul.mubr.bf16.gmra.mrb[0].mxu0 %v3313
    %v3356 = vpop.f32.mrb[0].mxu0
    %v3357 = vadd.f32 %v3288, %v3356
    %v3358 = vpop.f32.mrb[0].mxu0
    %v3359 = vpop.f32.mrb[0].mxu0
    %v3360 = vadd.f32 %v3288, %v3359
    %v3361 = vpop.f32.mrb[0].mxu0
    %3362 = vmatprep.mubr.bf16.mxu0 0
    %3363 = vmatmul.mubr.bf16.gmra.mrb[0].mxu0 %v3316
    %v3364 = vpop.f32.mrb[0].mxu0
    %v3365 = vadd.f32 %v3288, %v3364
    %v3366 = vpop.f32.mrb[0].mxu0
    %v3367 = vpop.f32.mrb[0].mxu0
    %v3368 = vadd.f32 %v3288, %v3367
    %v3369 = vpop.f32.mrb[0].mxu0
    %3370 = vdwg.mxu0
    %v3371 = vadd.f32 %v3357, %v3360
    %v3372 = vadd.f32 %v3371, %v3365
    %v3373 = vadd.f32 %v3372, %v3368
    %v3374 = vrot.slane %v3373, 4
    %v3375 = vadd.f32 %v3373, %v3374
    %v3376 = vrot.slane %v3375, 2
    %v3377 = vadd.f32 %v3375, %v3376
    %v3378 = vrot.slane %v3377, 1
    %v3379 = vadd.f32 %v3377, %v3378
    %v3380 = vrcp.pop 32.0
    %v3381 = vmul.f32 %v3379, %v3380
    %v3382 = vsub.f32 %v3357, %v3381
    %v3383 = vsub.f32 %v3360, %v3381
    %v3384 = vsub.f32 %v3365, %v3381
    %v3385 = vsub.f32 %v3368, %v3381
    %v3386 = vmul.f32 %v3382, %v3382
    %v3387 = vmul.f32 %v3383, %v3383
    %v3388 = vmul.f32 %v3384, %v3384
    %v3389 = vmul.f32 %v3385, %v3385
    %v3390 = vadd.f32 %v3386, %v3387
    %v3391 = vadd.f32 %v3390, %v3388
    %v3392 = vadd.f32 %v3391, %v3389
    %v3393 = vrot.slane %v3392, 4
    %v3394 = vadd.f32 %v3392, %v3393
    %v3395 = vrot.slane %v3394, 2
    %v3396 = vadd.f32 %v3394, %v3395
    %v3397 = vrot.slane %v3396, 1
    %v3398 = vadd.f32 %v3396, %v3397
    %v3399 = vmul.f32 %v3398, %v3380
    %v3400 = vld [vmem:[%s4] sm:$0x1]
    %v3401 = vadd.f32 %v3399, 1e-05
    %v3402 = vrsqrt.pop %v3401
    %v3403 = vmul.f32 %v3401, %v3402
    %vm3404 = vcmp.eq.f32.partialorder %v3401, inf
    %v3405 = vsel %vm3404, %v3401, %v3403
    %vm3406 = vcmp.eq.f32.partialorder %v3401, 0.0
    %v3407 = vand.u32 %v3401, 2147483648
    %v3408 = vsel %vm3406, %v3407, %v3405
    %v3409 = vrcp.pop %v3408
    %v3410 = vmul.f32 %v3400, %v3409
    %v3412 = vlaneseq
    %v3413 = vshrl.u32 %v3412, 7
    %v3414 = vsub.s32 0, %v3413
    %v3415 = vrot.slane %v3410, %v3414
    %v3417 = vmul.f32 %v3382, %v3415
    %v3418 = vmul.f32 %v3383, %v3415
    %v3419 = vmul.f32 %v3384, %v3415
    %v3420 = vmul.f32 %v3385, %v3415
    %v3421 = vld [vmem:[%s5] sm:$0x1]
    %v3423 = vlaneseq
    %v3424 = vshrl.u32 %v3423, 7
    %v3425 = vsub.s32 0, %v3424
    %v3426 = vrot.slane %v3421, %v3425
    %v3428 = vadd.f32 %v3417, %v3426
    %v3429 = vadd.f32 %v3418, %v3426
    %v3430 = vadd.f32 %v3419, %v3426
    %v3431 = vadd.f32 %v3420, %v3426
    %v3432 = vmax.f32 %v3428, 0.0
    %v3433 = vmax.f32 %v3429, 0.0
    %v3434 = vmax.f32 %v3430, 0.0
    %v3435 = vmax.f32 %v3431, 0.0
    %3436 = vst [vmem:[#allocation2 + $0x8] sm:$0xff] %v3432
    %3437 = vst [vmem:[#allocation2 + $0x10] sm:$0xff] %v3433
    %s3438 = scalar_lea.vmem [#allocation2], 32
    %3439 = vst [vmem:[%s3438 + $0x8] sm:$0xff] %v3434
    %3440 = vst [vmem:[%s3438 + $0x10] sm:$0xff] %v3435
    %v3441 = vld [vmem:[#allocation2] sm:$0xff]
    %v3442 = vld [vmem:[#allocation2 + $0x8] sm:$0xff]
    %v3443 = vpack.c.bf16 %v3442, %v3441
    %v3444 = vld [vmem:[#allocation2 + $0x4] sm:$0xff]
    %v3445 = vld [vmem:[#allocation2 + $0xc] sm:$0xff]
    %v3446 = vpack.c.bf16 %v3445, %v3444
    %v3447 = vld [vmem:[#allocation2 + $0x10] sm:$0xff]
    %v3448 = vpack.c.bf16 %v3447, %v3442
    %v3449 = vld [vmem:[#allocation2 + $0x14] sm:$0xff]
    %v3450 = vpack.c.bf16 %v3449, %v3445
    %v3451 = vld [vmem:[#allocation2 + $0x18] sm:$0xff]
    %v3452 = vpack.c.bf16 %v3451, %v3447
    %v3453 = vld [vmem:[%s3438] sm:$0xff]
    %v3454 = vld [vmem:[%s3438 + $0x8] sm:$0xff]
    %v3455 = vpack.c.bf16 %v3454, %v3453
    %v3456 = vld [vmem:[%s3438 + $0x4] sm:$0xff]
    %v3457 = vld [vmem:[%s3438 + $0xc] sm:$0xff]
    %v3458 = vpack.c.bf16 %v3457, %v3456
    %v3459 = vld [vmem:[%s3438 + $0x10] sm:$0xff]
    %v3460 = vpack.c.bf16 %v3459, %v3454
    %v3461 = vld [vmem:[%s3438 + $0x14] sm:$0xff]
    %v3462 = vpack.c.bf16 %v3461, %v3457
    %v3463 = vld [vmem:[%s3438 + $0x18] sm:$0xff]
    %v3464 = vpack.c.bf16 %v3463, %v3459
    %v3465 = vld [vmem:[%s6] sm:$0xff]
    %v3466 = vld [vmem:[%s6 + $0x8] sm:$0xff]
    %v3467 = vld [vmem:[%s6 + $0x10] sm:$0xff]
    %v3468 = vld [vmem:[%s6 + $0x18] sm:$0xff]
    %v3469 = vld [vmem:[%s6 + $0x20] sm:$0xff]
    %v3470 = vld [vmem:[%s6 + $0x28] sm:$0xff]
    %v3471 = vld [vmem:[%s6 + $0x30] sm:$0xff]
    %v3472 = vld [vmem:[%s6 + $0x38] sm:$0xff]
    %v3473 = vld [vmem:[%s6 + $0x40] sm:$0xff]
    %v3474 = vld [vmem:[%s6 + $0x48] sm:$0xff]
    %v3475 = vld [vmem:[%s6 + $0x50] sm:$0xff]
    %v3476 = vld [vmem:[%s6 + $0x58] sm:$0xff]
    %v3477 = vld [vmem:[%s6 + $0x60] sm:$0xff]
    %v3478 = vld [vmem:[%s6 + $0x68] sm:$0xff]
    %v3479 = vld [vmem:[%s6 + $0x70] sm:$0xff]
    %v3480 = vld [vmem:[%s6 + $0x78] sm:$0xff]
    %v3481 = vld [vmem:[%s6 + $0x80] sm:$0xff]
    %v3482 = vld [vmem:[%s6 + $0x88] sm:$0xff]
    %v3483 = vld [vmem:[%s6 + $0x90] sm:$0xff]
    %v3484 = vld [vmem:[%s6 + $0x98] sm:$0xff]
    %v3485 = vld [vmem:[%s6 + $0xa0] sm:$0xff]
    %v3486 = vld [vmem:[%s6 + $0xa8] sm:$0xff]
    %v3487 = vld [vmem:[%s6 + $0xb0] sm:$0xff]
    %v3488 = vld [vmem:[%s6 + $0xb8] sm:$0xff]
    %v3489 = vld [vmem:[%s6 + $0xc0] sm:$0xff]
    %v3490 = vld [vmem:[%s6 + $0xc8] sm:$0xff]
    %v3491 = vld [vmem:[%s6 + $0xd0] sm:$0xff]
    %v3492 = vld [vmem:[%s6 + $0xd8] sm:$0xff]
    %v3493 = vld [vmem:[%s6 + $0xe0] sm:$0xff]
    %v3494 = vld [vmem:[%s6 + $0xe8] sm:$0xff]
    %v3495 = vld [vmem:[%s6 + $0xf0] sm:$0xff]
    %v3496 = vld [vmem:[%s6 + $0xf8] sm:$0xff]
    %v3497 = vld [vmem:[%s6 + $0x100] sm:$0xff]
    %v3498 = vld [vmem:[%s6 + $0x108] sm:$0xff]
    %v3499 = vld [vmem:[%s6 + $0x110] sm:$0xff]
    %v3500 = vld [vmem:[%s6 + $0x118] sm:$0xff]
    %v3501 = vld [vmem:[%s6 + $0x120] sm:$0xff]
    %v3502 = vld [vmem:[%s6 + $0x128] sm:$0xff]
    %v3503 = vld [vmem:[%s6 + $0x130] sm:$0xff]
    %v3504 = vld [vmem:[%s6 + $0x138] sm:$0xff]
    %v3505 = vld [vmem:[%s6 + $0x140] sm:$0xff]
    %v3506 = vld [vmem:[%s6 + $0x148] sm:$0xff]
    %v3507 = vld [vmem:[%s6 + $0x150] sm:$0xff]
    %v3508 = vld [vmem:[%s6 + $0x158] sm:$0xff]
    %v3509 = vld [vmem:[%s6 + $0x160] sm:$0xff]
    %v3510 = vld [vmem:[%s6 + $0x168] sm:$0xff]
    %v3511 = vld [vmem:[%s6 + $0x170] sm:$0xff]
    %v3512 = vld [vmem:[%s6 + $0x178] sm:$0xff]
    %v3513 = vld [vmem:[%s6 + $0x180] sm:$0xff]
    %v3514 = vld [vmem:[%s6 + $0x188] sm:$0xff]
    %v3515 = vld [vmem:[%s6 + $0x190] sm:$0xff]
    %v3516 = vld [vmem:[%s6 + $0x198] sm:$0xff]
    %v3517 = vld [vmem:[%s6 + $0x1a0] sm:$0xff]
    %v3518 = vld [vmem:[%s6 + $0x1a8] sm:$0xff]
    %v3519 = vld [vmem:[%s6 + $0x1b0] sm:$0xff]
    %v3520 = vld [vmem:[%s6 + $0x1b8] sm:$0xff]
    %v3521 = vld [vmem:[%s6 + $0x1c0] sm:$0xff]
    %v3522 = vld [vmem:[%s6 + $0x1c8] sm:$0xff]
    %v3523 = vld [vmem:[%s6 + $0x1d0] sm:$0xff]
    %v3524 = vld [vmem:[%s6 + $0x1d8] sm:$0xff]
    %v3525 = vld [vmem:[%s6 + $0x1e0] sm:$0xff]
    %v3526 = vld [vmem:[%s6 + $0x1e8] sm:$0xff]
    %v3527 = vld [vmem:[%s6 + $0x1f0] sm:$0xff]
    %v3528 = vld [vmem:[%s6 + $0x1f8] sm:$0xff]
    %v3529 = vld [vmem:[%s6 + $0x200] sm:$0xff]
    %v3530 = vld [vmem:[%s6 + $0x208] sm:$0xff]
    %v3531 = vld [vmem:[%s6 + $0x210] sm:$0xff]
    %v3532 = vld [vmem:[%s6 + $0x218] sm:$0xff]
    %v3533 = vld [vmem:[%s6 + $0x220] sm:$0xff]
    %v3534 = vld [vmem:[%s6 + $0x228] sm:$0xff]
    %v3535 = vld [vmem:[%s6 + $0x230] sm:$0xff]
    %v3536 = vld [vmem:[%s6 + $0x238] sm:$0xff]
    %v3537 = vld [vmem:[%s6 + $0x240] sm:$0xff]
    %v3538 = vld [vmem:[%s6 + $0x248] sm:$0xff]
    %v3539 = vld [vmem:[%s6 + $0x250] sm:$0xff]
    %v3540 = vld [vmem:[%s6 + $0x258] sm:$0xff]
    %v3541 = vld [vmem:[%s6 + $0x260] sm:$0xff]
    %v3542 = vld [vmem:[%s6 + $0x268] sm:$0xff]
    %v3543 = vld [vmem:[%s6 + $0x270] sm:$0xff]
    %v3544 = vld [vmem:[%s6 + $0x278] sm:$0xff]
    %v3545 = vld [vmem:[%s7] sm:$0x3]
    %v3547 = vlaneseq
    %v3548 = vshrl.u32 %v3547, 7
    %v3549 = vsub.s32 0, %v3548
    %v3550 = vrot.slane %v3545, %v3549
    %v3551 = vlaneseq
    %v3552 = vshrl.u32 %v3551, 7
    %v3553 = vsub.s32 1, %v3552
    %v3554 = vrot.slane %v3545, %v3553
    %v3637 = vunpack.c.l.b16 %v3465
    %v3638 = vunpack.c.h.b16 %v3465
    %v3639 = vunpack.c.l.b16 %v3466
    %v3640 = vunpack.c.h.b16 %v3466
    %v3641 = vunpack.c.l.b16 %v3467
    %v3642 = vunpack.c.h.b16 %v3467
    %v3643 = vunpack.c.l.b16 %v3468
    %v3644 = vunpack.c.h.b16 %v3468
    %v3645 = vunpack.c.l.b16 %v3469
    %v3646 = vunpack.c.h.b16 %v3469
    %v3647 = vunpack.c.l.b16 %v3470
    %v3648 = vunpack.c.h.b16 %v3470
    %v3649 = vunpack.c.l.b16 %v3471
    %v3650 = vunpack.c.h.b16 %v3471
    %v3651 = vunpack.c.l.b16 %v3472
    %v3652 = vunpack.c.h.b16 %v3472
    %v3653 = vunpack.c.l.b16 %v3473
    %v3654 = vunpack.c.h.b16 %v3473
    %v3655 = vunpack.c.l.b16 %v3474
    %v3656 = vunpack.c.h.b16 %v3474
    %v3657 = vunpack.c.l.b16 %v3475
    %v3658 = vunpack.c.h.b16 %v3475
    %v3659 = vunpack.c.l.b16 %v3476
    %v3660 = vunpack.c.h.b16 %v3476
    %v3661 = vunpack.c.l.b16 %v3477
    %v3662 = vunpack.c.h.b16 %v3477
    %v3663 = vunpack.c.l.b16 %v3478
    %v3664 = vunpack.c.h.b16 %v3478
    %v3665 = vunpack.c.l.b16 %v3479
    %v3666 = vunpack.c.h.b16 %v3479
    %v3667 = vunpack.c.l.b16 %v3480
    %v3668 = vunpack.c.h.b16 %v3480
    %v3669 = vunpack.c.l.b16 %v3481
    %v3670 = vunpack.c.h.b16 %v3481
    %v3671 = vunpack.c.l.b16 %v3482
    %v3672 = vunpack.c.h.b16 %v3482
    %v3673 = vunpack.c.l.b16 %v3483
    %v3674 = vunpack.c.h.b16 %v3483
    %v3675 = vunpack.c.l.b16 %v3484
    %v3676 = vunpack.c.h.b16 %v3484
    %v3677 = vunpack.c.l.b16 %v3485
    %v3678 = vunpack.c.h.b16 %v3485
    %v3679 = vunpack.c.l.b16 %v3486
    %v3680 = vunpack.c.h.b16 %v3486
    %v3681 = vunpack.c.l.b16 %v3487
    %v3682 = vunpack.c.h.b16 %v3487
    %v3683 = vunpack.c.l.b16 %v3488
    %v3684 = vunpack.c.h.b16 %v3488
    %v3685 = vunpack.c.l.b16 %v3489
    %v3686 = vunpack.c.h.b16 %v3489
    %v3687 = vunpack.c.l.b16 %v3490
    %v3688 = vunpack.c.h.b16 %v3490
    %v3689 = vunpack.c.l.b16 %v3491
    %v3690 = vunpack.c.h.b16 %v3491
    %v3691 = vunpack.c.l.b16 %v3492
    %v3692 = vunpack.c.h.b16 %v3492
    %v3693 = vunpack.c.l.b16 %v3493
    %v3694 = vunpack.c.h.b16 %v3493
    %v3695 = vunpack.c.l.b16 %v3494
    %v3696 = vunpack.c.h.b16 %v3494
    %v3697 = vunpack.c.l.b16 %v3495
    %v3698 = vunpack.c.h.b16 %v3495
    %v3699 = vunpack.c.l.b16 %v3496
    %v3700 = vunpack.c.h.b16 %v3496
    %v3701 = vunpack.c.l.b16 %v3497
    %v3702 = vunpack.c.h.b16 %v3497
    %v3703 = vunpack.c.l.b16 %v3498
    %v3704 = vunpack.c.h.b16 %v3498
    %v3705 = vunpack.c.l.b16 %v3499
    %v3706 = vunpack.c.h.b16 %v3499
    %v3707 = vunpack.c.l.b16 %v3500
    %v3708 = vunpack.c.h.b16 %v3500
    %v3709 = vunpack.c.l.b16 %v3501
    %v3710 = vunpack.c.h.b16 %v3501
    %v3711 = vunpack.c.l.b16 %v3502
    %v3712 = vunpack.c.h.b16 %v3502
    %v3713 = vunpack.c.l.b16 %v3503
    %v3714 = vunpack.c.h.b16 %v3503
    %v3715 = vunpack.c.l.b16 %v3504
    %v3716 = vunpack.c.h.b16 %v3504
    %v3717 = vunpack.c.l.b16 %v3505
    %v3718 = vunpack.c.h.b16 %v3505
    %v3719 = vunpack.c.l.b16 %v3506
    %v3720 = vunpack.c.h.b16 %v3506
    %v3721 = vunpack.c.l.b16 %v3507
    %v3722 = vunpack.c.h.b16 %v3507
    %v3723 = vunpack.c.l.b16 %v3508
    %v3724 = vunpack.c.h.b16 %v3508
    %v3725 = vunpack.c.l.b16 %v3509
    %v3726 = vunpack.c.h.b16 %v3509
    %v3727 = vunpack.c.l.b16 %v3510
    %v3728 = vunpack.c.h.b16 %v3510
    %v3729 = vunpack.c.l.b16 %v3511
    %v3730 = vunpack.c.h.b16 %v3511
    %v3731 = vunpack.c.l.b16 %v3512
    %v3732 = vunpack.c.h.b16 %v3512
    %v3733 = vunpack.c.l.b16 %v3513
    %v3734 = vunpack.c.h.b16 %v3513
    %v3735 = vunpack.c.l.b16 %v3514
    %v3736 = vunpack.c.h.b16 %v3514
    %v3737 = vunpack.c.l.b16 %v3515
    %v3738 = vunpack.c.h.b16 %v3515
    %v3739 = vunpack.c.l.b16 %v3516
    %v3740 = vunpack.c.h.b16 %v3516
    %v3741 = vunpack.c.l.b16 %v3517
    %v3742 = vunpack.c.h.b16 %v3517
    %v3743 = vunpack.c.l.b16 %v3518
    %v3744 = vunpack.c.h.b16 %v3518
    %v3745 = vunpack.c.l.b16 %v3519
    %v3746 = vunpack.c.h.b16 %v3519
    %v3747 = vunpack.c.l.b16 %v3520
    %v3748 = vunpack.c.h.b16 %v3520
    %v3749 = vunpack.c.l.b16 %v3521
    %v3750 = vunpack.c.h.b16 %v3521
    %v3751 = vunpack.c.l.b16 %v3522
    %v3752 = vunpack.c.h.b16 %v3522
    %v3753 = vunpack.c.l.b16 %v3523
    %v3754 = vunpack.c.h.b16 %v3523
    %v3755 = vunpack.c.l.b16 %v3524
    %v3756 = vunpack.c.h.b16 %v3524
    %v3757 = vunpack.c.l.b16 %v3525
    %v3758 = vunpack.c.h.b16 %v3525
    %v3759 = vunpack.c.l.b16 %v3526
    %v3760 = vunpack.c.h.b16 %v3526
    %v3761 = vunpack.c.l.b16 %v3527
    %v3762 = vunpack.c.h.b16 %v3527
    %v3763 = vunpack.c.l.b16 %v3528
    %v3764 = vunpack.c.h.b16 %v3528
    %v3765 = vunpack.c.l.b16 %v3529
    %v3766 = vunpack.c.h.b16 %v3529
    %v3767 = vunpack.c.l.b16 %v3530
    %v3768 = vunpack.c.h.b16 %v3530
    %v3769 = vunpack.c.l.b16 %v3531
    %v3770 = vunpack.c.h.b16 %v3531
    %v3771 = vunpack.c.l.b16 %v3532
    %v3772 = vunpack.c.h.b16 %v3532
    %v3773 = vunpack.c.l.b16 %v3533
    %v3774 = vunpack.c.h.b16 %v3533
    %v3775 = vunpack.c.l.b16 %v3534
    %v3776 = vunpack.c.h.b16 %v3534
    %v3777 = vunpack.c.l.b16 %v3535
    %v3778 = vunpack.c.h.b16 %v3535
    %v3779 = vunpack.c.l.b16 %v3536
    %v3780 = vunpack.c.h.b16 %v3536
    %v3781 = vunpack.c.l.b16 %v3537
    %v3782 = vunpack.c.h.b16 %v3537
    %v3783 = vunpack.c.l.b16 %v3538
    %v3784 = vunpack.c.h.b16 %v3538
    %v3785 = vunpack.c.l.b16 %v3539
    %v3786 = vunpack.c.h.b16 %v3539
    %v3787 = vunpack.c.l.b16 %v3540
    %v3788 = vunpack.c.h.b16 %v3540
    %v3789 = vunpack.c.l.b16 %v3541
    %v3790 = vunpack.c.h.b16 %v3541
    %v3791 = vunpack.c.l.b16 %v3542
    %v3792 = vunpack.c.h.b16 %v3542
    %v3793 = vunpack.c.l.b16 %v3543
    %v3794 = vunpack.c.h.b16 %v3543
    %v3795 = vunpack.c.l.b16 %v3544
    %v3796 = vunpack.c.h.b16 %v3544
    %v3797 = vpack.c.b16 %v3639, %v3637
    %v3798 = vpack.c.b16 %v3640, %v3638
    %v3799 = vpack.c.b16 %v3643, %v3641
    %v3800 = vpack.c.b16 %v3644, %v3642
    %v3801 = vpack.c.b16 %v3647, %v3645
    %v3802 = vpack.c.b16 %v3648, %v3646
    %v3803 = vpack.c.b16 %v3651, %v3649
    %v3804 = vpack.c.b16 %v3652, %v3650
    %v3805 = vpack.c.b16 %v3655, %v3653
    %v3806 = vpack.c.b16 %v3656, %v3654
    %v3807 = vpack.c.b16 %v3659, %v3657
    %v3808 = vpack.c.b16 %v3660, %v3658
    %v3809 = vpack.c.b16 %v3663, %v3661
    %v3810 = vpack.c.b16 %v3664, %v3662
    %v3811 = vpack.c.b16 %v3667, %v3665
    %v3812 = vpack.c.b16 %v3668, %v3666
    %v3813 = vpack.c.b16 %v3671, %v3669
    %v3814 = vpack.c.b16 %v3672, %v3670
    %v3815 = vpack.c.b16 %v3675, %v3673
    %v3816 = vpack.c.b16 %v3676, %v3674
    %v3817 = vpack.c.b16 %v3679, %v3677
    %v3818 = vpack.c.b16 %v3680, %v3678
    %v3819 = vpack.c.b16 %v3683, %v3681
    %v3820 = vpack.c.b16 %v3684, %v3682
    %v3821 = vpack.c.b16 %v3687, %v3685
    %v3822 = vpack.c.b16 %v3688, %v3686
    %v3823 = vpack.c.b16 %v3691, %v3689
    %v3824 = vpack.c.b16 %v3692, %v3690
    %v3825 = vpack.c.b16 %v3695, %v3693
    %v3826 = vpack.c.b16 %v3696, %v3694
    %v3827 = vpack.c.b16 %v3699, %v3697
    %v3828 = vpack.c.b16 %v3700, %v3698
    %v3829 = vpack.c.b16 %v3703, %v3701
    %v3830 = vpack.c.b16 %v3704, %v3702
    %v3831 = vpack.c.b16 %v3707, %v3705
    %v3832 = vpack.c.b16 %v3708, %v3706
    %v3833 = vpack.c.b16 %v3711, %v3709
    %v3834 = vpack.c.b16 %v3712, %v3710
    %v3835 = vpack.c.b16 %v3715, %v3713
    %v3836 = vpack.c.b16 %v3716, %v3714
    %v3837 = vpack.c.b16 %v3719, %v3717
    %v3838 = vpack.c.b16 %v3720, %v3718
    %v3839 = vpack.c.b16 %v3723, %v3721
    %v3840 = vpack.c.b16 %v3724, %v3722
    %v3841 = vpack.c.b16 %v3727, %v3725
    %v3842 = vpack.c.b16 %v3728, %v3726
    %v3843 = vpack.c.b16 %v3731, %v3729
    %v3844 = vpack.c.b16 %v3732, %v3730
    %v3845 = vpack.c.b16 %v3735, %v3733
    %v3846 = vpack.c.b16 %v3736, %v3734
    %v3847 = vpack.c.b16 %v3739, %v3737
    %v3848 = vpack.c.b16 %v3740, %v3738
    %v3849 = vpack.c.b16 %v3743, %v3741
    %v3850 = vpack.c.b16 %v3744, %v3742
    %v3851 = vpack.c.b16 %v3747, %v3745
    %v3852 = vpack.c.b16 %v3748, %v3746
    %v3853 = vpack.c.b16 %v3751, %v3749
    %v3854 = vpack.c.b16 %v3752, %v3750
    %v3855 = vpack.c.b16 %v3755, %v3753
    %v3856 = vpack.c.b16 %v3756, %v3754
    %v3857 = vpack.c.b16 %v3759, %v3757
    %v3858 = vpack.c.b16 %v3760, %v3758
    %v3859 = vpack.c.b16 %v3763, %v3761
    %v3860 = vpack.c.b16 %v3764, %v3762
    %v3861 = vpack.c.b16 %v3767, %v3765
    %v3862 = vpack.c.b16 %v3768, %v3766
    %v3863 = vpack.c.b16 %v3771, %v3769
    %v3864 = vpack.c.b16 %v3772, %v3770
    %v3865 = vpack.c.b16 %v3775, %v3773
    %v3866 = vpack.c.b16 %v3776, %v3774
    %v3867 = vpack.c.b16 %v3779, %v3777
    %v3868 = vpack.c.b16 %v3780, %v3778
    %v3869 = vpack.c.b16 %v3783, %v3781
    %v3870 = vpack.c.b16 %v3784, %v3782
    %v3871 = vpack.c.b16 %v3787, %v3785
    %v3872 = vpack.c.b16 %v3788, %v3786
    %v3873 = vpack.c.b16 %v3791, %v3789
    %v3874 = vpack.c.b16 %v3792, %v3790
    %v3875 = vpack.c.b16 %v3795, %v3793
    %v3876 = vpack.c.b16 %v3796, %v3794
    %3957 = vmatprep.subr.bf16.mxu0 %v3798
    %3958 = vmatpush1.bf16.msra.mxu0 %v3797
    %3959 = vmatprep.subr.bf16.mxu0 %v3800
    %3960 = vmatpush1.bf16.msra.mxu0 %v3799
    %3961 = vmatprep.subr.bf16.mxu0 %v3802
    %3962 = vmatpush1.bf16.msra.mxu0 %v3801
    %3963 = vmatprep.subr.bf16.mxu0 %v3804
    %3964 = vmatpush1.bf16.msra.mxu0 %v3803
    %3965 = vmatprep.subr.bf16.mxu0 %v3806
    %3966 = vmatpush1.bf16.msra.mxu0 %v3805
    %3967 = vmatprep.subr.bf16.mxu0 %v3808
    %3968 = vmatpush1.bf16.msra.mxu0 %v3807
    %3969 = vmatprep.subr.bf16.mxu0 %v3810
    %3970 = vmatpush1.bf16.msra.mxu0 %v3809
    %3971 = vmatprep.subr.bf16.mxu0 %v3812
    %3972 = vmatpush1.bf16.msra.mxu0 %v3811
    %3973 = vmatprep.subr.bf16.mxu0 %v3814
    %3974 = vmatpush1.bf16.msra.mxu0 %v3813
    %3975 = vmatprep.subr.bf16.mxu0 %v3816
    %3976 = vmatpush1.bf16.msra.mxu0 %v3815
    %3977 = vmatprep.subr.bf16.mxu0 %v3818
    %3978 = vmatpush1.bf16.msra.mxu0 %v3817
    %3979 = vmatprep.subr.bf16.mxu0 %v3820
    %3980 = vmatpush1.bf16.msra.mxu0 %v3819
    %3981 = vmatprep.subr.bf16.mxu0 %v3822
    %3982 = vmatpush1.bf16.msra.mxu0 %v3821
    %3983 = vmatprep.subr.bf16.mxu0 %v3824
    %3984 = vmatpush1.bf16.msra.mxu0 %v3823
    %3985 = vmatprep.subr.bf16.mxu0 %v3826
    %3986 = vmatpush1.bf16.msra.mxu0 %v3825
    %3987 = vmatprep.subr.bf16.mxu0 %v3828
    %3988 = vmatpush1.bf16.msra.mxu0 %v3827
    %3989 = vmatprep.mubr.bf16.mxu0 %v3446
    %3990 = vmatmul.mubr.bf16.gmra.mrb[0].mxu0 %v3443
    %v3991 = vpop.f32.mrb[0].mxu0
    %v3992 = vadd.f32 %v3550, %v3991
    %v3993 = vpop.f32.mrb[0].mxu0
    %v3994 = vadd.f32 %v3554, %v3993
    %v3995 = vpop.f32.mrb[0].mxu0
    %v3996 = vadd.f32 %v3550, %v3995
    %v3997 = vpop.f32.mrb[0].mxu0
    %v3998 = vadd.f32 %v3554, %v3997
    %3999 = vmatprep.mubr.bf16.mxu0 %v3458
    %4000 = vmatmul.mubr.bf16.gmra.mrb[0].mxu0 %v3455
    %v4001 = vpop.f32.mrb[0].mxu0
    %v4002 = vadd.f32 %v3550, %v4001
    %v4003 = vpop.f32.mrb[0].mxu0
    %v4004 = vadd.f32 %v3554, %v4003
    %v4005 = vpop.f32.mrb[0].mxu0
    %v4006 = vadd.f32 %v3550, %v4005
    %v4007 = vpop.f32.mrb[0].mxu0
    %v4008 = vadd.f32 %v3554, %v4007
    %4009 = vdwg.mxu0
    %4010 = vmatprep.subr.bf16.mxu0 %v3830
    %4011 = vmatpush1.bf16.msra.mxu0 %v3829
    %4012 = vmatprep.subr.bf16.mxu0 %v3832
    %4013 = vmatpush1.bf16.msra.mxu0 %v3831
    %4014 = vmatprep.subr.bf16.mxu0 %v3834
    %4015 = vmatpush1.bf16.msra.mxu0 %v3833
    %4016 = vmatprep.subr.bf16.mxu0 %v3836
    %4017 = vmatpush1.bf16.msra.mxu0 %v3835
    %4018 = vmatprep.subr.bf16.mxu0 %v3838
    %4019 = vmatpush1.bf16.msra.mxu0 %v3837
    %4020 = vmatprep.subr.bf16.mxu0 %v3840
    %4021 = vmatpush1.bf16.msra.mxu0 %v3839
    %4022 = vmatprep.subr.bf16.mxu0 %v3842
    %4023 = vmatpush1.bf16.msra.mxu0 %v3841
    %4024 = vmatprep.subr.bf16.mxu0 %v3844
    %4025 = vmatpush1.bf16.msra.mxu0 %v3843
    %4026 = vmatprep.subr.bf16.mxu0 %v3846
    %4027 = vmatpush1.bf16.msra.mxu0 %v3845
    %4028 = vmatprep.subr.bf16.mxu0 %v3848
    %4029 = vmatpush1.bf16.msra.mxu0 %v3847
    %4030 = vmatprep.subr.bf16.mxu0 %v3850
    %4031 = vmatpush1.bf16.msra.mxu0 %v3849
    %4032 = vmatprep.subr.bf16.mxu0 %v3852
    %4033 = vmatpush1.bf16.msra.mxu0 %v3851
    %4034 = vmatprep.subr.bf16.mxu0 %v3854
    %4035 = vmatpush1.bf16.msra.mxu0 %v3853
    %4036 = vmatprep.subr.bf16.mxu0 %v3856
    %4037 = vmatpush1.bf16.msra.mxu0 %v3855
    %4038 = vmatprep.subr.bf16.mxu0 %v3858
    %4039 = vmatpush1.bf16.msra.mxu0 %v3857
    %4040 = vmatprep.subr.bf16.mxu0 %v3860
    %4041 = vmatpush1.bf16.msra.mxu0 %v3859
    %4042 = vmatprep.mubr.bf16.mxu0 %v3450
    %4043 = vmatmul.mubr.bf16.gmra.mrb[0].mxu0 %v3448
    %v4044 = vpop.f32.mrb[0].mxu0
    %v4045 = vadd.f32 %v3992, %v4044
    %v4046 = vpop.f32.mrb[0].mxu0
    %v4047 = vadd.f32 %v3994, %v4046
    %v4048 = vpop.f32.mrb[0].mxu0
    %v4049 = vadd.f32 %v3996, %v4048
    %v4050 = vpop.f32.mrb[0].mxu0
    %v4051 = vadd.f32 %v3998, %v4050
    %4052 = vmatprep.mubr.bf16.mxu0 %v3462
    %4053 = vmatmul.mubr.bf16.gmra.mrb[0].mxu0 %v3460
    %v4054 = vpop.f32.mrb[0].mxu0
    %v4055 = vadd.f32 %v4002, %v4054
    %v4056 = vpop.f32.mrb[0].mxu0
    %v4057 = vadd.f32 %v4004, %v4056
    %v4058 = vpop.f32.mrb[0].mxu0
    %v4059 = vadd.f32 %v4006, %v4058
    %v4060 = vpop.f32.mrb[0].mxu0
    %v4061 = vadd.f32 %v4008, %v4060
    %4062 = vdwg.mxu0
    %4063 = vmatprep.subr.bf16.mxu0 %v3862
    %4064 = vmatpush1.bf16.msra.mxu0 %v3861
    %4065 = vmatprep.subr.bf16.mxu0 %v3864
    %4066 = vmatpush1.bf16.msra.mxu0 %v3863
    %4067 = vmatprep.subr.bf16.mxu0 %v3866
    %4068 = vmatpush1.bf16.msra.mxu0 %v3865
    %4069 = vmatprep.subr.bf16.mxu0 %v3868
    %4070 = vmatpush1.bf16.msra.mxu0 %v3867
    %4071 = vmatprep.subr.bf16.mxu0 %v3870
    %4072 = vmatpush1.bf16.msra.mxu0 %v3869
    %4073 = vmatprep.subr.bf16.mxu0 %v3872
    %4074 = vmatpush1.bf16.msra.mxu0 %v3871
    %4075 = vmatprep.subr.bf16.mxu0 %v3874
    %4076 = vmatpush1.bf16.msra.mxu0 %v3873
    %4077 = vmatprep.subr.bf16.mxu0 %v3876
    %4078 = vmatpush1.bf16.msra.mxu0 %v3875
    %4079 = vmatprep.subr.bf16.mxu0 0
    %4080 = vmatpush1.bf16.msra.mxu0 0
    %4081 = vmatprep.subr.bf16.mxu0 0
    %4082 = vmatpush1.bf16.msra.mxu0 0
    %4083 = vmatprep.subr.bf16.mxu0 0
    %4084 = vmatpush1.bf16.msra.mxu0 0
    %4085 = vmatprep.subr.bf16.mxu0 0
    %4086 = vmatpush1.bf16.msra.mxu0 0
    %4087 = vmatprep.subr.bf16.mxu0 0
    %4088 = vmatpush1.bf16.msra.mxu0 0
    %4089 = vmatprep.subr.bf16.mxu0 0
    %4090 = vmatpush1.bf16.msra.mxu0 0
    %4091 = vmatprep.subr.bf16.mxu0 0
    %4092 = vmatpush1.bf16.msra.mxu0 0
    %4093 = vmatprep.subr.bf16.mxu0 0
    %4094 = vmatpush1.bf16.msra.mxu0 0
    %4095 = vmatprep.mubr.bf16.mxu0 0
    %4096 = vmatmul.mubr.bf16.gmra.mrb[0].mxu0 %v3452
    %v4097 = vpop.f32.mrb[0].mxu0
    %v4098 = vadd.f32 %v4045, %v4097
    %v4099 = vpop.f32.mrb[0].mxu0
    %v4100 = vadd.f32 %v4047, %v4099
    %v4101 = vpop.f32.mrb[0].mxu0
    %v4102 = vadd.f32 %v4049, %v4101
    %v4103 = vpop.f32.mrb[0].mxu0
    %v4104 = vadd.f32 %v4051, %v4103
    %4105 = vmatprep.mubr.bf16.mxu0 0
    %4106 = vmatmul.mubr.bf16.gmra.mrb[0].mxu0 %v3464
    %v4107 = vpop.f32.mrb[0].mxu0
    %v4108 = vadd.f32 %v4055, %v4107
    %v4109 = vpop.f32.mrb[0].mxu0
    %v4110 = vadd.f32 %v4057, %v4109
    %v4111 = vpop.f32.mrb[0].mxu0
    %v4112 = vadd.f32 %v4059, %v4111
    %v4113 = vpop.f32.mrb[0].mxu0
    %v4114 = vadd.f32 %v4061, %v4113
    %4115 = vdwg.mxu0
    %v4116 = vadd.f32 %v4098, %v4102
    %v4117 = vadd.f32 %v4116, %v4108
    %v4118 = vadd.f32 %v4117, %v4112
    %v4119 = vrot.slane %v4118, 4
    %v4120 = vadd.f32 %v4118, %v4119
    %v4121 = vrot.slane %v4120, 2
    %v4122 = vadd.f32 %v4120, %v4121
    %v4123 = vrot.slane %v4122, 1
    %v4124 = vadd.f32 %v4122, %v4123
    %v4125 = vadd.f32 %v4100, %v4104
    %v4126 = vadd.f32 %v4125, %v4110
    %v4127 = vadd.f32 %v4126, %v4114
    %v4128 = vrot.slane %v4127, 4
    %v4129 = vadd.f32 %v4127, %v4128
    %v4130 = vrot.slane %v4129, 2
    %v4131 = vadd.f32 %v4129, %v4130
    %v4132 = vrot.slane %v4131, 1
    %v4133 = vadd.f32 %v4131, %v4132
    %v4134 = vmul.f32 %v4124, %v3380
    %v4135 = vmul.f32 %v4133, %v3380
    %v4136 = vsub.f32 %v4098, %v4134
    %v4137 = vsub.f32 %v4100, %v4135
    %v4138 = vsub.f32 %v4102, %v4134
    %v4139 = vsub.f32 %v4104, %v4135
    %v4140 = vsub.f32 %v4108, %v4134
    %v4141 = vsub.f32 %v4110, %v4135
    %v4142 = vsub.f32 %v4112, %v4134
    %v4143 = vsub.f32 %v4114, %v4135
    %v4144 = vmul.f32 %v4136, %v4136
    %v4145 = vmul.f32 %v4137, %v4137
    %v4146 = vmul.f32 %v4138, %v4138
    %v4147 = vmul.f32 %v4139, %v4139
    %v4148 = vmul.f32 %v4140, %v4140
    %v4149 = vmul.f32 %v4141, %v4141
    %v4150 = vmul.f32 %v4142, %v4142
    %v4151 = vmul.f32 %v4143, %v4143
    %v4152 = vadd.f32 %v4144, %v4146
    %v4153 = vadd.f32 %v4152, %v4148
    %v4154 = vadd.f32 %v4153, %v4150
    %v4155 = vrot.slane %v4154, 4
    %v4156 = vadd.f32 %v4154, %v4155
    %v4157 = vrot.slane %v4156, 2
    %v4158 = vadd.f32 %v4156, %v4157
    %v4159 = vrot.slane %v4158, 1
    %v4160 = vadd.f32 %v4158, %v4159
    %v4161 = vadd.f32 %v4145, %v4147
    %v4162 = vadd.f32 %v4161, %v4149
    %v4163 = vadd.f32 %v4162, %v4151
    %v4164 = vrot.slane %v4163, 4
    %v4165 = vadd.f32 %v4163, %v4164
    %v4166 = vrot.slane %v4165, 2
    %v4167 = vadd.f32 %v4165, %v4166
    %v4168 = vrot.slane %v4167, 1
    %v4169 = vadd.f32 %v4167, %v4168
    %v4170 = vmul.f32 %v4160, %v3380
    %v4171 = vmul.f32 %v4169, %v3380
    %v4172 = vld [vmem:[%s8] sm:$0x3]
    %v4173 = vadd.f32 %v4170, 1e-05
    %v4174 = vadd.f32 %v4171, 1e-05
    %v4175 = vrsqrt.pop %v4173
    %v4176 = vmul.f32 %v4173, %v4175
    %vm4177 = vcmp.eq.f32.partialorder %v4173, inf
    %v4178 = vsel %vm4177, %v4173, %v4176
    %vm4179 = vcmp.eq.f32.partialorder %v4173, 0.0
    %v4180 = vand.u32 %v4173, 2147483648
    %v4181 = vsel %vm4179, %v4180, %v4178
    %v4182 = vrsqrt.pop %v4174
    %v4183 = vmul.f32 %v4174, %v4182
    %vm4184 = vcmp.eq.f32.partialorder %v4174, inf
    %v4185 = vsel %vm4184, %v4174, %v4183
    %vm4186 = vcmp.eq.f32.partialorder %v4174, 0.0
    %v4187 = vand.u32 %v4174, 2147483648
    %v4188 = vsel %vm4186, %v4187, %v4185
    %v4191 = vcombine.low %v4181, %v4188
    %v4193 = vunpack.c.l.s4 1966171168
    %v4194 = vunpack.c.0.s8 %v4193
    %v4195 = vlaneseq
    %v4196 = vshrl.u32 %v4195, 7
    %v4197 = vsub.s32 %v4194, %v4196
    %v4198 = vrot.slane %v4191, %v4197
    %v4200 = vunpack.c.l.s4 1966171168
    %v4201 = vunpack.c.0.s8 %v4200
    %v4202 = vlaneseq
    %v4203 = vshrl.u32 %v4202, 7
    %v4204 = vsub.s32 %v4201, %v4203
    %v4205 = vrot.slane %v4198, %v4204
    %v4207 = vrcp.pop %v4205
    %v4208 = vmul.f32 %v4172, %v4207
    %v4210 = vlaneseq
    %v4211 = vshrl.u32 %v4210, 7
    %v4212 = vsub.s32 0, %v4211
    %v4213 = vrot.slane %v4208, %v4212
    %v4214 = vlaneseq
    %v4215 = vshrl.u32 %v4214, 7
    %v4216 = vsub.s32 1, %v4215
    %v4217 = vrot.slane %v4208, %v4216
    %v4220 = vmul.f32 %v4136, %v4213
    %v4221 = vmul.f32 %v4137, %v4217
    %v4222 = vmul.f32 %v4138, %v4213
    %v4223 = vmul.f32 %v4139, %v4217
    %v4224 = vmul.f32 %v4140, %v4213
    %v4225 = vmul.f32 %v4141, %v4217
    %v4226 = vmul.f32 %v4142, %v4213
    %v4227 = vmul.f32 %v4143, %v4217
    %v4228 = vld [vmem:[%s9] sm:$0x3]
    %v4230 = vlaneseq
    %v4231 = vshrl.u32 %v4230, 7
    %v4232 = vsub.s32 0, %v4231
    %v4233 = vrot.slane %v4228, %v4232
    %v4234 = vlaneseq
    %v4235 = vshrl.u32 %v4234, 7
    %v4236 = vsub.s32 1, %v4235
    %v4237 = vrot.slane %v4228, %v4236
    %v4240 = vadd.f32 %v4220, %v4233
    %v4241 = vadd.f32 %v4221, %v4237
    %v4242 = vadd.f32 %v4222, %v4233
    %v4243 = vadd.f32 %v4223, %v4237
    %v4244 = vadd.f32 %v4224, %v4233
    %v4245 = vadd.f32 %v4225, %v4237
    %v4246 = vadd.f32 %v4226, %v4233
    %v4247 = vadd.f32 %v4227, %v4237
    %v4248 = vmax.f32 %v4240, 0.0
    %v4249 = vmax.f32 %v4241, 0.0
    %v4250 = vmax.f32 %v4242, 0.0
    %v4251 = vmax.f32 %v4243, 0.0
    %v4252 = vmax.f32 %v4244, 0.0
    %v4253 = vmax.f32 %v4245, 0.0
    %v4254 = vmax.f32 %v4246, 0.0
    %v4255 = vmax.f32 %v4247, 0.0
    %4256 = vst [vmem:[#allocation3 + $0x10] sm:$0xff] %v4248
    %4257 = vst [vmem:[#allocation3 + $0x18] sm:$0xff] %v4249
    %4258 = vst [vmem:[#allocation3 + $0x20] sm:$0xff] %v4250
    %4259 = vst [vmem:[#allocation3 + $0x28] sm:$0xff] %v4251
    %s4260 = scalar_lea.vmem [#allocation3], 64
    %4261 = vst [vmem:[%s4260 + $0x10] sm:$0xff] %v4252
    %4262 = vst [vmem:[%s4260 + $0x18] sm:$0xff] %v4253
    %4263 = vst [vmem:[%s4260 + $0x20] sm:$0xff] %v4254
    %4264 = vst [vmem:[%s4260 + $0x28] sm:$0xff] %v4255
    %s4265 = smul.u32 4, 96
    %s4266 = smul.u32 %s4265, 4
    %s4267 = sshll.u32 %s4266, 4
    %4268 = dma.done [#allocation7], %s4267
    %v4269 = vld [vmem:[#allocation3] sm:$0xff]
    %v4270 = vld [vmem:[#allocation3 + $0x8] sm:$0xff]
    %v4271 = vld [vmem:[#allocation3 + $0x10] sm:$0xff]
    %v4272 = vld [vmem:[#allocation3 + $0x18] sm:$0xff]
    %v4273 = vld [vmem:[#allocation3 + $0x20] sm:$0xff]
    %v4274 = vld [vmem:[#allocation3 + $0x28] sm:$0xff]
    %v4275 = vpack.c.bf16 %v4271, %v4269
    %v4276 = vpack.c.bf16 %v4272, %v4270
    %v4277 = vpack.c.bf16 %v4273, %v4273
    %v4278 = vpack.c.bf16 %v4274, %v4274
    %v4279 = vld [vmem:[#allocation3] sm:$0xf0]
    %v4280 = vld [vmem:[#allocation3 + $0x8] sm:$0xf0]
    %v4281 = vld [vmem:[#allocation3 + $0x30] sm:$0xf]
    %v4282 = vld [vmem:[#allocation3 + $0x38] sm:$0xf]
    %v4283 = vpack.c.bf16 %v4271, %v4279
    %v4284 = vpack.c.bf16 %v4272, %v4280
    %v4285 = vpack.c.bf16 %v4281, %v4273
    %v4286 = vpack.c.bf16 %v4282, %v4274
    %v4287 = vld [vmem:[#allocation3 + $0x30] sm:$0xff]
    %v4288 = vld [vmem:[#allocation3 + $0x38] sm:$0xff]
    %v4289 = vpack.c.bf16 %v4273, %v4271
    %v4290 = vpack.c.bf16 %v4274, %v4272
    %v4291 = vpack.c.bf16 %v4287, %v4287
    %v4292 = vpack.c.bf16 %v4288, %v4288
    %vm4297 = vcmask 1045504
    %v4298 = vrot.slane %v4283, 2
    %v4299 = vrot.slane %v4285, 2
    %v4300 = vsel %vm4297, %v4298, %v4299
    %v4301 = vrot.slane %v4284, 2
    %v4302 = vrot.slane %v4286, 2
    %v4303 = vsel %vm4297, %v4301, %v4302
    %v4306 = vld [vmem:[%s4260] sm:$0xff]
    %v4307 = vld [vmem:[%s4260 + $0x8] sm:$0xff]
    %v4308 = vld [vmem:[%s4260 + $0x10] sm:$0xff]
    %v4309 = vld [vmem:[%s4260 + $0x18] sm:$0xff]
    %v4310 = vld [vmem:[%s4260 + $0x20] sm:$0xff]
    %v4311 = vld [vmem:[%s4260 + $0x28] sm:$0xff]
    %v4312 = vpack.c.bf16 %v4308, %v4306
    %v4313 = vpack.c.bf16 %v4309, %v4307
    %v4314 = vpack.c.bf16 %v4310, %v4310
    %v4315 = vpack.c.bf16 %v4311, %v4311
    %v4316 = vld [vmem:[%s4260] sm:$0xf0]
    %v4317 = vld [vmem:[%s4260 + $0x8] sm:$0xf0]
    %v4318 = vld [vmem:[%s4260 + $0x30] sm:$0xf]
    %v4319 = vld [vmem:[%s4260 + $0x38] sm:$0xf]
    %v4320 = vpack.c.bf16 %v4308, %v4316
    %v4321 = vpack.c.bf16 %v4309, %v4317
    %v4322 = vpack.c.bf16 %v4318, %v4310
    %v4323 = vpack.c.bf16 %v4319, %v4311
    %v4324 = vld [vmem:[%s4260 + $0x30] sm:$0xff]
    %v4325 = vld [vmem:[%s4260 + $0x38] sm:$0xff]
    %v4326 = vpack.c.bf16 %v4310, %v4308
    %v4327 = vpack.c.bf16 %v4311, %v4309
    %v4328 = vpack.c.bf16 %v4324, %v4324
    %v4329 = vpack.c.bf16 %v4325, %v4325
    %v4334 = vrot.slane %v4320, 2
    %v4335 = vrot.slane %v4322, 2
    %v4336 = vsel %vm4297, %v4334, %v4335
    %v4337 = vrot.slane %v4321, 2
    %v4338 = vrot.slane %v4323, 2
    %v4339 = vsel %vm4297, %v4337, %v4338
    %vm4348 = vcmask 1043456
    %v4349 = vrot.slane %v4312, 4
    %v4350 = vrot.slane %v4313, 4
    %v4351 = vrot.slane %v4336, 4
    %v4352 = vrot.slane %v4339, 4
    %v4353 = vrot.slane %v4326, 4
    %v4354 = vrot.slane %v4327, 4
    %v4355 = vrot.slane %v4314, 4
    %v4356 = vsel %vm4348, %v4349, %v4355
    %v4357 = vrot.slane %v4315, 4
    %v4358 = vsel %vm4348, %v4350, %v4357
    %v4359 = vrot.slane %v4335, 4
    %v4360 = vsel %vm4348, %v4351, %v4359
    %v4361 = vrot.slane %v4338, 4
    %v4362 = vsel %vm4348, %v4352, %v4361
    %v4363 = vrot.slane %v4328, 4
    %v4364 = vsel %vm4348, %v4353, %v4363
    %v4365 = vrot.slane %v4329, 4
    %v4366 = vsel %vm4348, %v4354, %v4365
    %vm4373 = vcmask 1043456
    %v4376 = vsel %vm4373, %v4277, %v4349
    %v4380 = vsel %vm4373, %v4278, %v4350
    %v4384 = vsel %vm4373, %v4299, %v4351
    %v4388 = vsel %vm4373, %v4302, %v4352
    %v4392 = vsel %vm4373, %v4291, %v4353
    %v4396 = vsel %vm4373, %v4292, %v4354
    %v4398 = vld [vmem:[#allocation5] sm:$0xff]
    %v4399 = vld [vmem:[#allocation5 + $0x8] sm:$0xff]
    %v4400 = vld [vmem:[#allocation5 + $0x10] sm:$0xff]
    %v4401 = vld [vmem:[#allocation5 + $0x18] sm:$0xff]
    %v4402 = vld [vmem:[#allocation5 + $0x20] sm:$0xff]
    %v4403 = vld [vmem:[#allocation5 + $0x28] sm:$0xff]
    %v4404 = vld [vmem:[#allocation5 + $0x30] sm:$0xff]
    %v4405 = vld [vmem:[#allocation5 + $0x38] sm:$0xff]
    %v4406 = vld [vmem:[#allocation5 + $0x40] sm:$0xff]
    %v4407 = vld [vmem:[#allocation5 + $0x48] sm:$0xff]
    %v4408 = vld [vmem:[#allocation5 + $0x50] sm:$0xff]
    %v4409 = vld [vmem:[#allocation5 + $0x58] sm:$0xff]
    %v4410 = vld [vmem:[#allocation5 + $0x60] sm:$0xff]
    %v4411 = vld [vmem:[#allocation5 + $0x68] sm:$0xff]
    %v4412 = vld [vmem:[#allocation5 + $0x70] sm:$0xff]
    %v4413 = vld [vmem:[#allocation5 + $0x78] sm:$0xff]
    %v4414 = vld [vmem:[#allocation5 + $0x80] sm:$0xff]
    %v4415 = vld [vmem:[#allocation5 + $0x88] sm:$0xff]
    %v4416 = vld [vmem:[#allocation5 + $0x90] sm:$0xff]
    %v4417 = vld [vmem:[#allocation5 + $0x98] sm:$0xff]
    %v4418 = vld [vmem:[#allocation5 + $0xa0] sm:$0xff]
    %v4419 = vld [vmem:[#allocation5 + $0xa8] sm:$0xff]
    %v4420 = vld [vmem:[#allocation5 + $0xb0] sm:$0xff]
    %v4421 = vld [vmem:[#allocation5 + $0xb8] sm:$0xff]
    %v4422 = vld [vmem:[#allocation5 + $0xc0] sm:$0xff]
    %v4423 = vld [vmem:[#allocation5 + $0xc8] sm:$0xff]
    %v4424 = vld [vmem:[#allocation5 + $0xd0] sm:$0xff]
    %v4425 = vld [vmem:[#allocation5 + $0xd8] sm:$0xff]
    %v4426 = vld [vmem:[#allocation5 + $0xe0] sm:$0xff]
    %v4427 = vld [vmem:[#allocation5 + $0xe8] sm:$0xff]
    %v4428 = vld [vmem:[#allocation5 + $0xf0] sm:$0xff]
    %v4429 = vld [vmem:[#allocation5 + $0xf8] sm:$0xff]
    %v4430 = vld [vmem:[#allocation5 + $0x100] sm:$0xff]
    %v4431 = vld [vmem:[#allocation5 + $0x108] sm:$0xff]
    %v4432 = vld [vmem:[#allocation5 + $0x110] sm:$0xff]
    %v4433 = vld [vmem:[#allocation5 + $0x118] sm:$0xff]
    %v4434 = vld [vmem:[#allocation5 + $0x120] sm:$0xff]
    %v4435 = vld [vmem:[#allocation5 + $0x128] sm:$0xff]
    %v4436 = vld [vmem:[#allocation5 + $0x130] sm:$0xff]
    %v4437 = vld [vmem:[#allocation5 + $0x138] sm:$0xff]
    %v4438 = vld [vmem:[#allocation5 + $0x140] sm:$0xff]
    %v4439 = vld [vmem:[#allocation5 + $0x148] sm:$0xff]
    %v4440 = vld [vmem:[#allocation5 + $0x150] sm:$0xff]
    %v4441 = vld [vmem:[#allocation5 + $0x158] sm:$0xff]
    %v4442 = vld [vmem:[#allocation5 + $0x160] sm:$0xff]
    %v4443 = vld [vmem:[#allocation5 + $0x168] sm:$0xff]
    %v4444 = vld [vmem:[#allocation5 + $0x170] sm:$0xff]
    %v4445 = vld [vmem:[#allocation5 + $0x178] sm:$0xff]
    %v4446 = vld [vmem:[#allocation5 + $0x180] sm:$0xff]
    %v4447 = vld [vmem:[#allocation5 + $0x188] sm:$0xff]
    %v4448 = vld [vmem:[#allocation5 + $0x190] sm:$0xff]
    %v4449 = vld [vmem:[#allocation5 + $0x198] sm:$0xff]
    %v4450 = vld [vmem:[#allocation5 + $0x1a0] sm:$0xff]
    %v4451 = vld [vmem:[#allocation5 + $0x1a8] sm:$0xff]
    %v4452 = vld [vmem:[#allocation5 + $0x1b0] sm:$0xff]
    %v4453 = vld [vmem:[#allocation5 + $0x1b8] sm:$0xff]
    %v4454 = vld [vmem:[#allocation5 + $0x1c0] sm:$0xff]
    %v4455 = vld [vmem:[#allocation5 + $0x1c8] sm:$0xff]
    %v4456 = vld [vmem:[#allocation5 + $0x1d0] sm:$0xff]
    %v4457 = vld [vmem:[#allocation5 + $0x1d8] sm:$0xff]
    %v4458 = vld [vmem:[#allocation5 + $0x1e0] sm:$0xff]
    %v4459 = vld [vmem:[#allocation5 + $0x1e8] sm:$0xff]
    %v4460 = vld [vmem:[#allocation5 + $0x1f0] sm:$0xff]
    %v4461 = vld [vmem:[#allocation5 + $0x1f8] sm:$0xff]
    %v4462 = vld [vmem:[#allocation5 + $0x200] sm:$0xff]
    %v4463 = vld [vmem:[#allocation5 + $0x208] sm:$0xff]
    %v4464 = vld [vmem:[#allocation5 + $0x210] sm:$0xff]
    %v4465 = vld [vmem:[#allocation5 + $0x218] sm:$0xff]
    %v4466 = vld [vmem:[#allocation5 + $0x220] sm:$0xff]
    %v4467 = vld [vmem:[#allocation5 + $0x228] sm:$0xff]
    %v4468 = vld [vmem:[#allocation5 + $0x230] sm:$0xff]
    %v4469 = vld [vmem:[#allocation5 + $0x238] sm:$0xff]
    %v4470 = vld [vmem:[#allocation5 + $0x240] sm:$0xff]
    %v4471 = vld [vmem:[#allocation5 + $0x248] sm:$0xff]
    %v4472 = vld [vmem:[#allocation5 + $0x250] sm:$0xff]
    %v4473 = vld [vmem:[#allocation5 + $0x258] sm:$0xff]
    %v4474 = vld [vmem:[#allocation5 + $0x260] sm:$0xff]
    %v4475 = vld [vmem:[#allocation5 + $0x268] sm:$0xff]
    %v4476 = vld [vmem:[#allocation5 + $0x270] sm:$0xff]
    %v4477 = vld [vmem:[#allocation5 + $0x278] sm:$0xff]
    %v4478 = vld [vmem:[#allocation5 + $0x280] sm:$0xff]
    %v4479 = vld [vmem:[#allocation5 + $0x288] sm:$0xff]
    %v4480 = vld [vmem:[#allocation5 + $0x290] sm:$0xff]
    %v4481 = vld [vmem:[#allocation5 + $0x298] sm:$0xff]
    %v4482 = vld [vmem:[#allocation5 + $0x2a0] sm:$0xff]
    %v4483 = vld [vmem:[#allocation5 + $0x2a8] sm:$0xff]
    %v4484 = vld [vmem:[#allocation5 + $0x2b0] sm:$0xff]
    %v4485 = vld [vmem:[#allocation5 + $0x2b8] sm:$0xff]
    %v4486 = vld [vmem:[#allocation5 + $0x2c0] sm:$0xff]
    %v4487 = vld [vmem:[#allocation5 + $0x2c8] sm:$0xff]
    %v4488 = vld [vmem:[#allocation5 + $0x2d0] sm:$0xff]
    %v4489 = vld [vmem:[#allocation5 + $0x2d8] sm:$0xff]
    %v4490 = vld [vmem:[#allocation5 + $0x2e0] sm:$0xff]
    %v4491 = vld [vmem:[#allocation5 + $0x2e8] sm:$0xff]
    %v4492 = vld [vmem:[#allocation5 + $0x2f0] sm:$0xff]
    %v4493 = vld [vmem:[#allocation5 + $0x2f8] sm:$0xff]
    %v4494 = vld [vmem:[#allocation5 + $0x300] sm:$0xff]
    %v4495 = vld [vmem:[#allocation5 + $0x308] sm:$0xff]
    %v4496 = vld [vmem:[#allocation5 + $0x310] sm:$0xff]
    %v4497 = vld [vmem:[#allocation5 + $0x318] sm:$0xff]
    %v4498 = vld [vmem:[#allocation5 + $0x320] sm:$0xff]
    %v4499 = vld [vmem:[#allocation5 + $0x328] sm:$0xff]
    %v4500 = vld [vmem:[#allocation5 + $0x330] sm:$0xff]
    %v4501 = vld [vmem:[#allocation5 + $0x338] sm:$0xff]
    %v4502 = vld [vmem:[#allocation5 + $0x340] sm:$0xff]
    %v4503 = vld [vmem:[#allocation5 + $0x348] sm:$0xff]
    %v4504 = vld [vmem:[#allocation5 + $0x350] sm:$0xff]
    %v4505 = vld [vmem:[#allocation5 + $0x358] sm:$0xff]
    %v4506 = vld [vmem:[#allocation5 + $0x360] sm:$0xff]
    %v4507 = vld [vmem:[#allocation5 + $0x368] sm:$0xff]
    %v4508 = vld [vmem:[#allocation5 + $0x370] sm:$0xff]
    %v4509 = vld [vmem:[#allocation5 + $0x378] sm:$0xff]
    %v4510 = vld [vmem:[#allocation5 + $0x380] sm:$0xff]
    %v4511 = vld [vmem:[#allocation5 + $0x388] sm:$0xff]
    %v4512 = vld [vmem:[#allocation5 + $0x390] sm:$0xff]
    %v4513 = vld [vmem:[#allocation5 + $0x398] sm:$0xff]
    %v4514 = vld [vmem:[#allocation5 + $0x3a0] sm:$0xff]
    %v4515 = vld [vmem:[#allocation5 + $0x3a8] sm:$0xff]
    %v4516 = vld [vmem:[#allocation5 + $0x3b0] sm:$0xff]
    %v4517 = vld [vmem:[#allocation5 + $0x3b8] sm:$0xff]
    %v4518 = vld [vmem:[#allocation5 + $0x3c0] sm:$0xff]
    %v4519 = vld [vmem:[#allocation5 + $0x3c8] sm:$0xff]
    %v4520 = vld [vmem:[#allocation5 + $0x3d0] sm:$0xff]
    %v4521 = vld [vmem:[#allocation5 + $0x3d8] sm:$0xff]
    %v4522 = vld [vmem:[#allocation5 + $0x3e0] sm:$0xff]
    %v4523 = vld [vmem:[#allocation5 + $0x3e8] sm:$0xff]
    %v4524 = vld [vmem:[#allocation5 + $0x3f0] sm:$0xff]
    %v4525 = vld [vmem:[#allocation5 + $0x3f8] sm:$0xff]
    %v4526 = vld [vmem:[#allocation5 + $0x400] sm:$0xff]
    %v4527 = vld [vmem:[#allocation5 + $0x408] sm:$0xff]
    %v4528 = vld [vmem:[#allocation5 + $0x410] sm:$0xff]
    %v4529 = vld [vmem:[#allocation5 + $0x418] sm:$0xff]
    %v4530 = vld [vmem:[#allocation5 + $0x420] sm:$0xff]
    %v4531 = vld [vmem:[#allocation5 + $0x428] sm:$0xff]
    %v4532 = vld [vmem:[#allocation5 + $0x430] sm:$0xff]
    %v4533 = vld [vmem:[#allocation5 + $0x438] sm:$0xff]
    %v4534 = vld [vmem:[#allocation5 + $0x440] sm:$0xff]
    %v4535 = vld [vmem:[#allocation5 + $0x448] sm:$0xff]
    %v4536 = vld [vmem:[#allocation5 + $0x450] sm:$0xff]
    %v4537 = vld [vmem:[#allocation5 + $0x458] sm:$0xff]
    %v4538 = vld [vmem:[#allocation5 + $0x460] sm:$0xff]
    %v4539 = vld [vmem:[#allocation5 + $0x468] sm:$0xff]
    %v4540 = vld [vmem:[#allocation5 + $0x470] sm:$0xff]
    %v4541 = vld [vmem:[#allocation5 + $0x478] sm:$0xff]
    %v4542 = vld [vmem:[#allocation5 + $0x480] sm:$0xff]
    %v4543 = vld [vmem:[#allocation5 + $0x488] sm:$0xff]
    %v4544 = vld [vmem:[#allocation5 + $0x490] sm:$0xff]
    %v4545 = vld [vmem:[#allocation5 + $0x498] sm:$0xff]
    %v4546 = vld [vmem:[#allocation5 + $0x4a0] sm:$0xff]
    %v4547 = vld [vmem:[#allocation5 + $0x4a8] sm:$0xff]
    %v4548 = vld [vmem:[#allocation5 + $0x4b0] sm:$0xff]
    %v4549 = vld [vmem:[#allocation5 + $0x4b8] sm:$0xff]
    %v4550 = vld [vmem:[#allocation5 + $0x4c0] sm:$0xff]
    %v4551 = vld [vmem:[#allocation5 + $0x4c8] sm:$0xff]
    %v4552 = vld [vmem:[#allocation5 + $0x4d0] sm:$0xff]
    %v4553 = vld [vmem:[#allocation5 + $0x4d8] sm:$0xff]
    %v4554 = vld [vmem:[#allocation5 + $0x4e0] sm:$0xff]
    %v4555 = vld [vmem:[#allocation5 + $0x4e8] sm:$0xff]
    %v4556 = vld [vmem:[#allocation5 + $0x4f0] sm:$0xff]
    %v4557 = vld [vmem:[#allocation5 + $0x4f8] sm:$0xff]
    %v4558 = vld [vmem:[#allocation5 + $0x500] sm:$0xff]
    %v4559 = vld [vmem:[#allocation5 + $0x508] sm:$0xff]
    %v4560 = vld [vmem:[#allocation5 + $0x510] sm:$0xff]
    %v4561 = vld [vmem:[#allocation5 + $0x518] sm:$0xff]
    %v4562 = vld [vmem:[#allocation5 + $0x520] sm:$0xff]
    %v4563 = vld [vmem:[#allocation5 + $0x528] sm:$0xff]
    %v4564 = vld [vmem:[#allocation5 + $0x530] sm:$0xff]
    %v4565 = vld [vmem:[#allocation5 + $0x538] sm:$0xff]
    %v4566 = vld [vmem:[#allocation5 + $0x540] sm:$0xff]
    %v4567 = vld [vmem:[#allocation5 + $0x548] sm:$0xff]
    %v4568 = vld [vmem:[#allocation5 + $0x550] sm:$0xff]
    %v4569 = vld [vmem:[#allocation5 + $0x558] sm:$0xff]
    %v4570 = vld [vmem:[#allocation5 + $0x560] sm:$0xff]
    %v4571 = vld [vmem:[#allocation5 + $0x568] sm:$0xff]
    %v4572 = vld [vmem:[#allocation5 + $0x570] sm:$0xff]
    %v4573 = vld [vmem:[#allocation5 + $0x578] sm:$0xff]
    %v4574 = vld [vmem:[#allocation5 + $0x580] sm:$0xff]
    %v4575 = vld [vmem:[#allocation5 + $0x588] sm:$0xff]
    %v4576 = vld [vmem:[#allocation5 + $0x590] sm:$0xff]
    %v4577 = vld [vmem:[#allocation5 + $0x598] sm:$0xff]
    %v4578 = vld [vmem:[#allocation5 + $0x5a0] sm:$0xff]
    %v4579 = vld [vmem:[#allocation5 + $0x5a8] sm:$0xff]
    %v4580 = vld [vmem:[#allocation5 + $0x5b0] sm:$0xff]
    %v4581 = vld [vmem:[#allocation5 + $0x5b8] sm:$0xff]
    %v4582 = vld [vmem:[#allocation5 + $0x5c0] sm:$0xff]
    %v4583 = vld [vmem:[#allocation5 + $0x5c8] sm:$0xff]
    %v4584 = vld [vmem:[#allocation5 + $0x5d0] sm:$0xff]
    %v4585 = vld [vmem:[#allocation5 + $0x5d8] sm:$0xff]
    %v4586 = vld [vmem:[#allocation5 + $0x5e0] sm:$0xff]
    %v4587 = vld [vmem:[#allocation5 + $0x5e8] sm:$0xff]
    %v4588 = vld [vmem:[#allocation5 + $0x5f0] sm:$0xff]
    %v4589 = vld [vmem:[#allocation5 + $0x5f8] sm:$0xff]
    %v4590 = vld [vmem:[%s11] sm:$0xf]
    %v4592 = vlaneseq
    %v4593 = vshrl.u32 %v4592, 7
    %v4594 = vsub.s32 0, %v4593
    %v4595 = vrot.slane %v4590, %v4594
    %v4596 = vlaneseq
    %v4597 = vshrl.u32 %v4596, 7
    %v4598 = vsub.s32 1, %v4597
    %v4599 = vrot.slane %v4590, %v4598
    %v4600 = vlaneseq
    %v4601 = vshrl.u32 %v4600, 7
    %v4602 = vsub.s32 2, %v4601
    %v4603 = vrot.slane %v4590, %v4602
    %v4604 = vlaneseq
    %v4605 = vshrl.u32 %v4604, 7
    %v4606 = vsub.s32 3, %v4605
    %v4607 = vrot.slane %v4590, %v4606
    %4612 = vmatprep.subr.bf16.mxu0 %v4399
    %4613 = vmatpush1.bf16.msra.mxu0 %v4398
    %4614 = vmatprep.subr.bf16.mxu0 %v4403
    %4615 = vmatpush1.bf16.msra.mxu0 %v4402
    %4616 = vmatprep.subr.bf16.mxu0 %v4407
    %4617 = vmatpush1.bf16.msra.mxu0 %v4406
    %4618 = vmatprep.subr.bf16.mxu0 %v4411
    %4619 = vmatpush1.bf16.msra.mxu0 %v4410
    %4620 = vmatprep.subr.bf16.mxu0 %v4415
    %4621 = vmatpush1.bf16.msra.mxu0 %v4414
    %4622 = vmatprep.subr.bf16.mxu0 %v4419
    %4623 = vmatpush1.bf16.msra.mxu0 %v4418
    %4624 = vmatprep.subr.bf16.mxu0 %v4423
    %4625 = vmatpush1.bf16.msra.mxu0 %v4422
    %4626 = vmatprep.subr.bf16.mxu0 %v4427
    %4627 = vmatpush1.bf16.msra.mxu0 %v4426
    %4628 = vmatprep.subr.bf16.mxu0 %v4431
    %4629 = vmatpush1.bf16.msra.mxu0 %v4430
    %4630 = vmatprep.subr.bf16.mxu0 %v4435
    %4631 = vmatpush1.bf16.msra.mxu0 %v4434
    %4632 = vmatprep.subr.bf16.mxu0 %v4439
    %4633 = vmatpush1.bf16.msra.mxu0 %v4438
    %4634 = vmatprep.subr.bf16.mxu0 %v4443
    %4635 = vmatpush1.bf16.msra.mxu0 %v4442
    %4636 = vmatprep.subr.bf16.mxu0 %v4447
    %4637 = vmatpush1.bf16.msra.mxu0 %v4446
    %4638 = vmatprep.subr.bf16.mxu0 %v4451
    %4639 = vmatpush1.bf16.msra.mxu0 %v4450
    %4640 = vmatprep.subr.bf16.mxu0 %v4455
    %4641 = vmatpush1.bf16.msra.mxu0 %v4454
    %4642 = vmatprep.subr.bf16.mxu0 %v4459
    %4643 = vmatpush1.bf16.msra.mxu0 %v4458
    %4644 = vmatprep.mubr.bf16.mxu0 %v4276
    %4645 = vmatmul.mubr.bf16.gmra.mrb[0].mxu0 %v4275
    %v4646 = vpop.f32.mrb[0].mxu0
    %v4647 = vadd.f32 %v4595, %v4646
    %v4648 = vpop.f32.mrb[0].mxu0
    %v4649 = vadd.f32 %v4599, %v4648
    %v4650 = vpop.f32.mrb[0].mxu0
    %v4651 = vadd.f32 %v4595, %v4650
    %v4652 = vpop.f32.mrb[0].mxu0
    %v4653 = vadd.f32 %v4599, %v4652
    %4654 = vmatprep.mubr.bf16.mxu0 %v4380
    %4655 = vmatmul.mubr.bf16.gmra.mrb[0].mxu0 %v4376
    %v4656 = vpop.f32.mrb[0].mxu0
    %v4657 = vadd.f32 %v4595, %v4656
    %v4658 = vpop.f32.mrb[0].mxu0
    %v4659 = vadd.f32 %v4599, %v4658
    %v4660 = vpop.f32.mrb[0].mxu0
    %v4661 = vadd.f32 %v4595, %v4660
    %v4662 = vpop.f32.mrb[0].mxu0
    %v4663 = vadd.f32 %v4599, %v4662
    %4664 = vmatprep.mubr.bf16.mxu0 %v4358
    %4665 = vmatmul.mubr.bf16.gmra.mrb[0].mxu0 %v4356
    %v4666 = vpop.f32.mrb[0].mxu0
    %v4667 = vadd.f32 %v4595, %v4666
    %v4668 = vpop.f32.mrb[0].mxu0
    %v4669 = vadd.f32 %v4599, %v4668
    %v4670 = vpop.f32.mrb[0].mxu0
    %v4671 = vadd.f32 %v4595, %v4670
    %v4672 = vpop.f32.mrb[0].mxu0
    %v4673 = vadd.f32 %v4599, %v4672
    %4674 = vdwg.mxu0
    %4675 = vmatprep.subr.bf16.mxu0 %v4463
    %4676 = vmatpush1.bf16.msra.mxu0 %v4462
    %4677 = vmatprep.subr.bf16.mxu0 %v4467
    %4678 = vmatpush1.bf16.msra.mxu0 %v4466
    %4679 = vmatprep.subr.bf16.mxu0 %v4471
    %4680 = vmatpush1.bf16.msra.mxu0 %v4470
    %4681 = vmatprep.subr.bf16.mxu0 %v4475
    %4682 = vmatpush1.bf16.msra.mxu0 %v4474
    %4683 = vmatprep.subr.bf16.mxu0 %v4479
    %4684 = vmatpush1.bf16.msra.mxu0 %v4478
    %4685 = vmatprep.subr.bf16.mxu0 %v4483
    %4686 = vmatpush1.bf16.msra.mxu0 %v4482
    %4687 = vmatprep.subr.bf16.mxu0 %v4487
    %4688 = vmatpush1.bf16.msra.mxu0 %v4486
    %4689 = vmatprep.subr.bf16.mxu0 %v4491
    %4690 = vmatpush1.bf16.msra.mxu0 %v4490
    %4691 = vmatprep.subr.bf16.mxu0 %v4495
    %4692 = vmatpush1.bf16.msra.mxu0 %v4494
    %4693 = vmatprep.subr.bf16.mxu0 %v4499
    %4694 = vmatpush1.bf16.msra.mxu0 %v4498
    %4695 = vmatprep.subr.bf16.mxu0 %v4503
    %4696 = vmatpush1.bf16.msra.mxu0 %v4502
    %4697 = vmatprep.subr.bf16.mxu0 %v4507
    %4698 = vmatpush1.bf16.msra.mxu0 %v4506
    %4699 = vmatprep.subr.bf16.mxu0 %v4511
    %4700 = vmatpush1.bf16.msra.mxu0 %v4510
    %4701 = vmatprep.subr.bf16.mxu0 %v4515
    %4702 = vmatpush1.bf16.msra.mxu0 %v4514
    %4703 = vmatprep.subr.bf16.mxu0 %v4519
    %4704 = vmatpush1.bf16.msra.mxu0 %v4518
    %4705 = vmatprep.subr.bf16.mxu0 %v4523
    %4706 = vmatpush1.bf16.msra.mxu0 %v4522
    %4707 = vmatprep.mubr.bf16.mxu0 %v4303
    %4708 = vmatmul.mubr.bf16.gmra.mrb[0].mxu0 %v4300
    %v4709 = vpop.f32.mrb[0].mxu0
    %v4710 = vadd.f32 %v4647, %v4709
    %v4711 = vpop.f32.mrb[0].mxu0
    %v4712 = vadd.f32 %v4649, %v4711
    %v4713 = vpop.f32.mrb[0].mxu0
    %v4714 = vadd.f32 %v4651, %v4713
    %v4715 = vpop.f32.mrb[0].mxu0
    %v4716 = vadd.f32 %v4653, %v4715
    %4717 = vmatprep.mubr.bf16.mxu0 %v4388
    %4718 = vmatmul.mubr.bf16.gmra.mrb[0].mxu0 %v4384
    %v4719 = vpop.f32.mrb[0].mxu0
    %v4720 = vadd.f32 %v4657, %v4719
    %v4721 = vpop.f32.mrb[0].mxu0
    %v4722 = vadd.f32 %v4659, %v4721
    %v4723 = vpop.f32.mrb[0].mxu0
    %v4724 = vadd.f32 %v4661, %v4723
    %v4725 = vpop.f32.mrb[0].mxu0
    %v4726 = vadd.f32 %v4663, %v4725
    %4727 = vmatprep.mubr.bf16.mxu0 %v4362
    %4728 = vmatmul.mubr.bf16.gmra.mrb[0].mxu0 %v4360
    %v4729 = vpop.f32.mrb[0].mxu0
    %v4730 = vadd.f32 %v4667, %v4729
    %v4731 = vpop.f32.mrb[0].mxu0
    %v4732 = vadd.f32 %v4669, %v4731
    %v4733 = vpop.f32.mrb[0].mxu0
    %v4734 = vadd.f32 %v4671, %v4733
    %v4735 = vpop.f32.mrb[0].mxu0
    %v4736 = vadd.f32 %v4673, %v4735
    %4737 = vdwg.mxu0
    %4738 = vmatprep.subr.bf16.mxu0 %v4527
    %4739 = vmatpush1.bf16.msra.mxu0 %v4526
    %4740 = vmatprep.subr.bf16.mxu0 %v4531
    %4741 = vmatpush1.bf16.msra.mxu0 %v4530
    %4742 = vmatprep.subr.bf16.mxu0 %v4535
    %4743 = vmatpush1.bf16.msra.mxu0 %v4534
    %4744 = vmatprep.subr.bf16.mxu0 %v4539
    %4745 = vmatpush1.bf16.msra.mxu0 %v4538
    %4746 = vmatprep.subr.bf16.mxu0 %v4543
    %4747 = vmatpush1.bf16.msra.mxu0 %v4542
    %4748 = vmatprep.subr.bf16.mxu0 %v4547
    %4749 = vmatpush1.bf16.msra.mxu0 %v4546
    %4750 = vmatprep.subr.bf16.mxu0 %v4551
    %4751 = vmatpush1.bf16.msra.mxu0 %v4550
    %4752 = vmatprep.subr.bf16.mxu0 %v4555
    %4753 = vmatpush1.bf16.msra.mxu0 %v4554
    %4754 = vmatprep.subr.bf16.mxu0 %v4559
    %4755 = vmatpush1.bf16.msra.mxu0 %v4558
    %4756 = vmatprep.subr.bf16.mxu0 %v4563
    %4757 = vmatpush1.bf16.msra.mxu0 %v4562
    %4758 = vmatprep.subr.bf16.mxu0 %v4567
    %4759 = vmatpush1.bf16.msra.mxu0 %v4566
    %4760 = vmatprep.subr.bf16.mxu0 %v4571
    %4761 = vmatpush1.bf16.msra.mxu0 %v4570
    %4762 = vmatprep.subr.bf16.mxu0 %v4575
    %4763 = vmatpush1.bf16.msra.mxu0 %v4574
    %4764 = vmatprep.subr.bf16.mxu0 %v4579
    %4765 = vmatpush1.bf16.msra.mxu0 %v4578
    %4766 = vmatprep.subr.bf16.mxu0 %v4583
    %4767 = vmatpush1.bf16.msra.mxu0 %v4582
    %4768 = vmatprep.subr.bf16.mxu0 %v4587
    %4769 = vmatpush1.bf16.msra.mxu0 %v4586
    %4770 = vmatprep.mubr.bf16.mxu0 %v4290
    %4771 = vmatmul.mubr.bf16.gmra.mrb[0].mxu0 %v4289
    %v4772 = vpop.f32.mrb[0].mxu0
    %v4773 = vadd.f32 %v4710, %v4772
    %v4774 = vpop.f32.mrb[0].mxu0
    %v4775 = vadd.f32 %v4712, %v4774
    %v4776 = vpop.f32.mrb[0].mxu0
    %v4777 = vadd.f32 %v4714, %v4776
    %v4778 = vpop.f32.mrb[0].mxu0
    %v4779 = vadd.f32 %v4716, %v4778
    %4780 = vmatprep.mubr.bf16.mxu0 %v4396
    %4781 = vmatmul.mubr.bf16.gmra.mrb[0].mxu0 %v4392
    %v4782 = vpop.f32.mrb[0].mxu0
    %v4783 = vadd.f32 %v4720, %v4782
    %v4784 = vpop.f32.mrb[0].mxu0
    %v4785 = vadd.f32 %v4722, %v4784
    %v4786 = vpop.f32.mrb[0].mxu0
    %v4787 = vadd.f32 %v4724, %v4786
    %v4788 = vpop.f32.mrb[0].mxu0
    %v4789 = vadd.f32 %v4726, %v4788
    %4790 = vmatprep.mubr.bf16.mxu0 %v4366
    %4791 = vmatmul.mubr.bf16.gmra.mrb[0].mxu0 %v4364
    %v4792 = vpop.f32.mrb[0].mxu0
    %v4793 = vadd.f32 %v4730, %v4792
    %v4794 = vpop.f32.mrb[0].mxu0
    %v4795 = vadd.f32 %v4732, %v4794
    %v4796 = vpop.f32.mrb[0].mxu0
    %v4797 = vadd.f32 %v4734, %v4796
    %v4798 = vpop.f32.mrb[0].mxu0
    %v4799 = vadd.f32 %v4736, %v4798
    %4800 = vdwg.mxu0
    %4801 = vmatprep.subr.bf16.mxu0 %v4401
    %4802 = vmatpush1.bf16.msra.mxu0 %v4400
    %4803 = vmatprep.subr.bf16.mxu0 %v4405
    %4804 = vmatpush1.bf16.msra.mxu0 %v4404
    %4805 = vmatprep.subr.bf16.mxu0 %v4409
    %4806 = vmatpush1.bf16.msra.mxu0 %v4408
    %4807 = vmatprep.subr.bf16.mxu0 %v4413
    %4808 = vmatpush1.bf16.msra.mxu0 %v4412
    %4809 = vmatprep.subr.bf16.mxu0 %v4417
    %4810 = vmatpush1.bf16.msra.mxu0 %v4416
    %4811 = vmatprep.subr.bf16.mxu0 %v4421
    %4812 = vmatpush1.bf16.msra.mxu0 %v4420
    %4813 = vmatprep.subr.bf16.mxu0 %v4425
    %4814 = vmatpush1.bf16.msra.mxu0 %v4424
    %4815 = vmatprep.subr.bf16.mxu0 %v4429
    %4816 = vmatpush1.bf16.msra.mxu0 %v4428
    %4817 = vmatprep.subr.bf16.mxu0 %v4433
    %4818 = vmatpush1.bf16.msra.mxu0 %v4432
    %4819 = vmatprep.subr.bf16.mxu0 %v4437
    %4820 = vmatpush1.bf16.msra.mxu0 %v4436
    %4821 = vmatprep.subr.bf16.mxu0 %v4441
    %4822 = vmatpush1.bf16.msra.mxu0 %v4440
    %4823 = vmatprep.subr.bf16.mxu0 %v4445
    %4824 = vmatpush1.bf16.msra.mxu0 %v4444
    %4825 = vmatprep.subr.bf16.mxu0 %v4449
    %4826 = vmatpush1.bf16.msra.mxu0 %v4448
    %4827 = vmatprep.subr.bf16.mxu0 %v4453
    %4828 = vmatpush1.bf16.msra.mxu0 %v4452
    %4829 = vmatprep.subr.bf16.mxu0 %v4457
    %4830 = vmatpush1.bf16.msra.mxu0 %v4456
    %4831 = vmatprep.subr.bf16.mxu0 %v4461
    %4832 = vmatpush1.bf16.msra.mxu0 %v4460
    %4833 = vmatprep.mubr.bf16.mxu0 %v4276
    %4834 = vmatmul.mubr.bf16.gmra.mrb[0].mxu0 %v4275
    %v4835 = vpop.f32.mrb[0].mxu0
    %v4836 = vadd.f32 %v4603, %v4835
    %v4837 = vpop.f32.mrb[0].mxu0
    %v4838 = vadd.f32 %v4607, %v4837
    %v4839 = vpop.f32.mrb[0].mxu0
    %v4840 = vadd.f32 %v4603, %v4839
    %v4841 = vpop.f32.mrb[0].mxu0
    %v4842 = vadd.f32 %v4607, %v4841
    %4843 = vmatprep.mubr.bf16.mxu0 %v4380
    %4844 = vmatmul.mubr.bf16.gmra.mrb[0].mxu0 %v4376
    %v4845 = vpop.f32.mrb[0].mxu0
    %v4846 = vadd.f32 %v4603, %v4845
    %v4847 = vpop.f32.mrb[0].mxu0
    %v4848 = vadd.f32 %v4607, %v4847
    %v4849 = vpop.f32.mrb[0].mxu0
    %v4850 = vadd.f32 %v4603, %v4849
    %v4851 = vpop.f32.mrb[0].mxu0
    %v4852 = vadd.f32 %v4607, %v4851
    %4853 = vmatprep.mubr.bf16.mxu0 %v4358
    %4854 = vmatmul.mubr.bf16.gmra.mrb[0].mxu0 %v4356
    %v4855 = vpop.f32.mrb[0].mxu0
    %v4856 = vadd.f32 %v4603, %v4855
    %v4857 = vpop.f32.mrb[0].mxu0
    %v4858 = vadd.f32 %v4607, %v4857
    %v4859 = vpop.f32.mrb[0].mxu0
    %v4860 = vadd.f32 %v4603, %v4859
    %v4861 = vpop.f32.mrb[0].mxu0
    %v4862 = vadd.f32 %v4607, %v4861
    %4863 = vdwg.mxu0
    %4864 = vmatprep.subr.bf16.mxu0 %v4465
    %4865 = vmatpush1.bf16.msra.mxu0 %v4464
    %4866 = vmatprep.subr.bf16.mxu0 %v4469
    %4867 = vmatpush1.bf16.msra.mxu0 %v4468
    %4868 = vmatprep.subr.bf16.mxu0 %v4473
    %4869 = vmatpush1.bf16.msra.mxu0 %v4472
    %4870 = vmatprep.subr.bf16.mxu0 %v4477
    %4871 = vmatpush1.bf16.msra.mxu0 %v4476
    %4872 = vmatprep.subr.bf16.mxu0 %v4481
    %4873 = vmatpush1.bf16.msra.mxu0 %v4480
    %4874 = vmatprep.subr.bf16.mxu0 %v4485
    %4875 = vmatpush1.bf16.msra.mxu0 %v4484
    %4876 = vmatprep.subr.bf16.mxu0 %v4489
    %4877 = vmatpush1.bf16.msra.mxu0 %v4488
    %4878 = vmatprep.subr.bf16.mxu0 %v4493
    %4879 = vmatpush1.bf16.msra.mxu0 %v4492
    %4880 = vmatprep.subr.bf16.mxu0 %v4497
    %4881 = vmatpush1.bf16.msra.mxu0 %v4496
    %4882 = vmatprep.subr.bf16.mxu0 %v4501
    %4883 = vmatpush1.bf16.msra.mxu0 %v4500
    %4884 = vmatprep.subr.bf16.mxu0 %v4505
    %4885 = vmatpush1.bf16.msra.mxu0 %v4504
    %4886 = vmatprep.subr.bf16.mxu0 %v4509
    %4887 = vmatpush1.bf16.msra.mxu0 %v4508
    %4888 = vmatprep.subr.bf16.mxu0 %v4513
    %4889 = vmatpush1.bf16.msra.mxu0 %v4512
    %4890 = vmatprep.subr.bf16.mxu0 %v4517
    %4891 = vmatpush1.bf16.msra.mxu0 %v4516
    %4892 = vmatprep.subr.bf16.mxu0 %v4521
    %4893 = vmatpush1.bf16.msra.mxu0 %v4520
    %4894 = vmatprep.subr.bf16.mxu0 %v4525
    %4895 = vmatpush1.bf16.msra.mxu0 %v4524
    %4896 = vmatprep.mubr.bf16.mxu0 %v4303
    %4897 = vmatmul.mubr.bf16.gmra.mrb[0].mxu0 %v4300
    %v4898 = vpop.f32.mrb[0].mxu0
    %v4899 = vadd.f32 %v4836, %v4898
    %v4900 = vpop.f32.mrb[0].mxu0
    %v4901 = vadd.f32 %v4838, %v4900
    %v4902 = vpop.f32.mrb[0].mxu0
    %v4903 = vadd.f32 %v4840, %v4902
    %v4904 = vpop.f32.mrb[0].mxu0
    %v4905 = vadd.f32 %v4842, %v4904
    %4906 = vmatprep.mubr.bf16.mxu0 %v4388
    %4907 = vmatmul.mubr.bf16.gmra.mrb[0].mxu0 %v4384
    %v4908 = vpop.f32.mrb[0].mxu0
    %v4909 = vadd.f32 %v4846, %v4908
    %v4910 = vpop.f32.mrb[0].mxu0
    %v4911 = vadd.f32 %v4848, %v4910
    %v4912 = vpop.f32.mrb[0].mxu0
    %v4913 = vadd.f32 %v4850, %v4912
    %v4914 = vpop.f32.mrb[0].mxu0
    %v4915 = vadd.f32 %v4852, %v4914
    %4916 = vmatprep.mubr.bf16.mxu0 %v4362
    %4917 = vmatmul.mubr.bf16.gmra.mrb[0].mxu0 %v4360
    %v4918 = vpop.f32.mrb[0].mxu0
    %v4919 = vadd.f32 %v4856, %v4918
    %v4920 = vpop.f32.mrb[0].mxu0
    %v4921 = vadd.f32 %v4858, %v4920
    %v4922 = vpop.f32.mrb[0].mxu0
    %v4923 = vadd.f32 %v4860, %v4922
    %v4924 = vpop.f32.mrb[0].mxu0
    %v4925 = vadd.f32 %v4862, %v4924
    %4926 = vdwg.mxu0
    %4927 = vmatprep.subr.bf16.mxu0 %v4529
    %4928 = vmatpush1.bf16.msra.mxu0 %v4528
    %4929 = vmatprep.subr.bf16.mxu0 %v4533
    %4930 = vmatpush1.bf16.msra.mxu0 %v4532
    %4931 = vmatprep.subr.bf16.mxu0 %v4537
    %4932 = vmatpush1.bf16.msra.mxu0 %v4536
    %4933 = vmatprep.subr.bf16.mxu0 %v4541
    %4934 = vmatpush1.bf16.msra.mxu0 %v4540
    %4935 = vmatprep.subr.bf16.mxu0 %v4545
    %4936 = vmatpush1.bf16.msra.mxu0 %v4544
    %4937 = vmatprep.subr.bf16.mxu0 %v4549
    %4938 = vmatpush1.bf16.msra.mxu0 %v4548
    %4939 = vmatprep.subr.bf16.mxu0 %v4553
    %4940 = vmatpush1.bf16.msra.mxu0 %v4552
    %4941 = vmatprep.subr.bf16.mxu0 %v4557
    %4942 = vmatpush1.bf16.msra.mxu0 %v4556
    %4943 = vmatprep.subr.bf16.mxu0 %v4561
    %4944 = vmatpush1.bf16.msra.mxu0 %v4560
    %4945 = vmatprep.subr.bf16.mxu0 %v4565
    %4946 = vmatpush1.bf16.msra.mxu0 %v4564
    %4947 = vmatprep.subr.bf16.mxu0 %v4569
    %4948 = vmatpush1.bf16.msra.mxu0 %v4568
    %4949 = vmatprep.subr.bf16.mxu0 %v4573
    %4950 = vmatpush1.bf16.msra.mxu0 %v4572
    %4951 = vmatprep.subr.bf16.mxu0 %v4577
    %4952 = vmatpush1.bf16.msra.mxu0 %v4576
    %4953 = vmatprep.subr.bf16.mxu0 %v4581
    %4954 = vmatpush1.bf16.msra.mxu0 %v4580
    %4955 = vmatprep.subr.bf16.mxu0 %v4585
    %4956 = vmatpush1.bf16.msra.mxu0 %v4584
    %4957 = vmatprep.subr.bf16.mxu0 %v4589
    %4958 = vmatpush1.bf16.msra.mxu0 %v4588
    %4959 = vmatprep.mubr.bf16.mxu0 %v4290
    %4960 = vmatmul.mubr.bf16.gmra.mrb[0].mxu0 %v4289
    %v4961 = vpop.f32.mrb[0].mxu0
    %v4962 = vadd.f32 %v4899, %v4961
    %v4963 = vpop.f32.mrb[0].mxu0
    %v4964 = vadd.f32 %v4901, %v4963
    %v4965 = vpop.f32.mrb[0].mxu0
    %v4966 = vadd.f32 %v4903, %v4965
    %v4967 = vpop.f32.mrb[0].mxu0
    %v4968 = vadd.f32 %v4905, %v4967
    %4969 = vmatprep.mubr.bf16.mxu0 %v4396
    %4970 = vmatmul.mubr.bf16.gmra.mrb[0].mxu0 %v4392
    %v4971 = vpop.f32.mrb[0].mxu0
    %v4972 = vadd.f32 %v4909, %v4971
    %v4973 = vpop.f32.mrb[0].mxu0
    %v4974 = vadd.f32 %v4911, %v4973
    %v4975 = vpop.f32.mrb[0].mxu0
    %v4976 = vadd.f32 %v4913, %v4975
    %v4977 = vpop.f32.mrb[0].mxu0
    %v4978 = vadd.f32 %v4915, %v4977
    %4979 = vmatprep.mubr.bf16.mxu0 %v4366
    %4980 = vmatmul.mubr.bf16.gmra.mrb[0].mxu0 %v4364
    %v4981 = vpop.f32.mrb[0].mxu0
    %v4982 = vadd.f32 %v4919, %v4981
    %v4983 = vpop.f32.mrb[0].mxu0
    %v4984 = vadd.f32 %v4921, %v4983
    %v4985 = vpop.f32.mrb[0].mxu0
    %v4986 = vadd.f32 %v4923, %v4985
    %v4987 = vpop.f32.mrb[0].mxu0
    %v4988 = vadd.f32 %v4925, %v4987
    %4989 = vdwg.mxu0
    %v4990 = vadd.f32 %v4773, %v4777
    %v4991 = vadd.f32 %v4990, %v4783
    %v4992 = vadd.f32 %v4991, %v4787
    %v4993 = vadd.f32 %v4992, %v4793
    %v4994 = vadd.f32 %v4993, %v4797
    %v4995 = vrot.slane %v4994, 4
    %v4996 = vadd.f32 %v4994, %v4995
    %v4997 = vrot.slane %v4996, 2
    %v4998 = vadd.f32 %v4996, %v4997
    %v4999 = vrot.slane %v4998, 1
    %v5000 = vadd.f32 %v4998, %v4999
    %v5001 = vadd.f32 %v4775, %v4779
    %v5002 = vadd.f32 %v5001, %v4785
    %v5003 = vadd.f32 %v5002, %v4789
    %v5004 = vadd.f32 %v5003, %v4795
    %v5005 = vadd.f32 %v5004, %v4799
    %v5006 = vrot.slane %v5005, 4
    %v5007 = vadd.f32 %v5005, %v5006
    %v5008 = vrot.slane %v5007, 2
    %v5009 = vadd.f32 %v5007, %v5008
    %v5010 = vrot.slane %v5009, 1
    %v5011 = vadd.f32 %v5009, %v5010
    %v5012 = vadd.f32 %v4962, %v4966
    %v5013 = vadd.f32 %v5012, %v4972
    %v5014 = vadd.f32 %v5013, %v4976
    %v5015 = vadd.f32 %v5014, %v4982
    %v5016 = vadd.f32 %v5015, %v4986
    %v5017 = vrot.slane %v5016, 4
    %v5018 = vadd.f32 %v5016, %v5017
    %v5019 = vrot.slane %v5018, 2
    %v5020 = vadd.f32 %v5018, %v5019
    %v5021 = vrot.slane %v5020, 1
    %v5022 = vadd.f32 %v5020, %v5021
    %v5023 = vadd.f32 %v4964, %v4968
    %v5024 = vadd.f32 %v5023, %v4974
    %v5025 = vadd.f32 %v5024, %v4978
    %v5026 = vadd.f32 %v5025, %v4984
    %v5027 = vadd.f32 %v5026, %v4988
    %v5028 = vrot.slane %v5027, 4
    %v5029 = vadd.f32 %v5027, %v5028
    %v5030 = vrot.slane %v5029, 2
    %v5031 = vadd.f32 %v5029, %v5030
    %v5032 = vrot.slane %v5031, 1
    %v5033 = vadd.f32 %v5031, %v5032
    %v5034 = vrcp.pop 48.0
    %v5035 = vmul.f32 %v5000, %v5034
    %v5036 = vmul.f32 %v5011, %v5034
    %v5037 = vmul.f32 %v5022, %v5034
    %v5038 = vmul.f32 %v5033, %v5034
    %v5039 = vsub.f32 %v4773, %v5035
    %v5040 = vsub.f32 %v4775, %v5036
    %v5041 = vsub.f32 %v4962, %v5037
    %v5042 = vsub.f32 %v4964, %v5038
    %v5043 = vsub.f32 %v4777, %v5035
    %v5044 = vsub.f32 %v4779, %v5036
    %v5045 = vsub.f32 %v4966, %v5037
    %v5046 = vsub.f32 %v4968, %v5038
    %v5047 = vsub.f32 %v4783, %v5035
    %v5048 = vsub.f32 %v4785, %v5036
    %v5049 = vsub.f32 %v4972, %v5037
    %v5050 = vsub.f32 %v4974, %v5038
    %v5051 = vsub.f32 %v4787, %v5035
    %v5052 = vsub.f32 %v4789, %v5036
    %v5053 = vsub.f32 %v4976, %v5037
    %v5054 = vsub.f32 %v4978, %v5038
    %v5055 = vsub.f32 %v4793, %v5035
    %v5056 = vsub.f32 %v4795, %v5036
    %v5057 = vsub.f32 %v4982, %v5037
    %v5058 = vsub.f32 %v4984, %v5038
    %v5059 = vsub.f32 %v4797, %v5035
    %v5060 = vsub.f32 %v4799, %v5036
    %v5061 = vsub.f32 %v4986, %v5037
    %v5062 = vsub.f32 %v4988, %v5038
    %v5063 = vmul.f32 %v5039, %v5039
    %v5064 = vmul.f32 %v5040, %v5040
    %v5065 = vmul.f32 %v5041, %v5041
    %v5066 = vmul.f32 %v5042, %v5042
    %v5067 = vmul.f32 %v5043, %v5043
    %v5068 = vmul.f32 %v5044, %v5044
    %v5069 = vmul.f32 %v5045, %v5045
    %v5070 = vmul.f32 %v5046, %v5046
    %v5071 = vmul.f32 %v5047, %v5047
    %v5072 = vmul.f32 %v5048, %v5048
    %v5073 = vmul.f32 %v5049, %v5049
    %v5074 = vmul.f32 %v5050, %v5050
    %v5075 = vmul.f32 %v5051, %v5051
    %v5076 = vmul.f32 %v5052, %v5052
    %v5077 = vmul.f32 %v5053, %v5053
    %v5078 = vmul.f32 %v5054, %v5054
    %v5079 = vmul.f32 %v5055, %v5055
    %v5080 = vmul.f32 %v5056, %v5056
    %v5081 = vmul.f32 %v5057, %v5057
    %v5082 = vmul.f32 %v5058, %v5058
    %v5083 = vmul.f32 %v5059, %v5059
    %v5084 = vmul.f32 %v5060, %v5060
    %v5085 = vmul.f32 %v5061, %v5061
    %v5086 = vmul.f32 %v5062, %v5062
    %v5087 = vadd.f32 %v5063, %v5067
    %v5088 = vadd.f32 %v5087, %v5071
    %v5089 = vadd.f32 %v5088, %v5075
    %v5090 = vadd.f32 %v5089, %v5079
    %v5091 = vadd.f32 %v5090, %v5083
    %v5092 = vrot.slane %v5091, 4
    %v5093 = vadd.f32 %v5091, %v5092
    %v5094 = vrot.slane %v5093, 2
    %v5095 = vadd.f32 %v5093, %v5094
    %v5096 = vrot.slane %v5095, 1
    %v5097 = vadd.f32 %v5095, %v5096
    %v5098 = vadd.f32 %v5064, %v5068
    %v5099 = vadd.f32 %v5098, %v5072
    %v5100 = vadd.f32 %v5099, %v5076
    %v5101 = vadd.f32 %v5100, %v5080
    %v5102 = vadd.f32 %v5101, %v5084
    %v5103 = vrot.slane %v5102, 4
    %v5104 = vadd.f32 %v5102, %v5103
    %v5105 = vrot.slane %v5104, 2
    %v5106 = vadd.f32 %v5104, %v5105
    %v5107 = vrot.slane %v5106, 1
    %v5108 = vadd.f32 %v5106, %v5107
    %v5109 = vadd.f32 %v5065, %v5069
    %v5110 = vadd.f32 %v5109, %v5073
    %v5111 = vadd.f32 %v5110, %v5077
    %v5112 = vadd.f32 %v5111, %v5081
    %v5113 = vadd.f32 %v5112, %v5085
    %v5114 = vrot.slane %v5113, 4
    %v5115 = vadd.f32 %v5113, %v5114
    %v5116 = vrot.slane %v5115, 2
    %v5117 = vadd.f32 %v5115, %v5116
    %v5118 = vrot.slane %v5117, 1
    %v5119 = vadd.f32 %v5117, %v5118
    %v5120 = vadd.f32 %v5066, %v5070
    %v5121 = vadd.f32 %v5120, %v5074
    %v5122 = vadd.f32 %v5121, %v5078
    %v5123 = vadd.f32 %v5122, %v5082
    %v5124 = vadd.f32 %v5123, %v5086
    %v5125 = vrot.slane %v5124, 4
    %v5126 = vadd.f32 %v5124, %v5125
    %v5127 = vrot.slane %v5126, 2
    %v5128 = vadd.f32 %v5126, %v5127
    %v5129 = vrot.slane %v5128, 1
    %v5130 = vadd.f32 %v5128, %v5129
    %v5131 = vmul.f32 %v5097, %v5034
    %v5132 = vmul.f32 %v5108, %v5034
    %v5133 = vmul.f32 %v5119, %v5034
    %v5134 = vmul.f32 %v5130, %v5034
    %v5135 = vld [vmem:[%s12] sm:$0xf]
    %v5136 = vadd.f32 %v5131, 1e-05
    %v5137 = vadd.f32 %v5132, 1e-05
    %v5138 = vadd.f32 %v5133, 1e-05
    %v5139 = vadd.f32 %v5134, 1e-05
    %v5140 = vrsqrt.pop %v5136
    %v5141 = vmul.f32 %v5136, %v5140
    %vm5142 = vcmp.eq.f32.partialorder %v5136, inf
    %v5143 = vsel %vm5142, %v5136, %v5141
    %vm5144 = vcmp.eq.f32.partialorder %v5136, 0.0
    %v5145 = vand.u32 %v5136, 2147483648
    %v5146 = vsel %vm5144, %v5145, %v5143
    %v5147 = vrsqrt.pop %v5137
    %v5148 = vmul.f32 %v5137, %v5147
    %vm5149 = vcmp.eq.f32.partialorder %v5137, inf
    %v5150 = vsel %vm5149, %v5137, %v5148
    %vm5151 = vcmp.eq.f32.partialorder %v5137, 0.0
    %v5152 = vand.u32 %v5137, 2147483648
    %v5153 = vsel %vm5151, %v5152, %v5150
    %v5154 = vrsqrt.pop %v5138
    %v5155 = vmul.f32 %v5138, %v5154
    %vm5156 = vcmp.eq.f32.partialorder %v5138, inf
    %v5157 = vsel %vm5156, %v5138, %v5155
    %vm5158 = vcmp.eq.f32.partialorder %v5138, 0.0
    %v5159 = vand.u32 %v5138, 2147483648
    %v5160 = vsel %vm5158, %v5159, %v5157
    %v5161 = vrsqrt.pop %v5139
    %v5162 = vmul.f32 %v5139, %v5161
    %vm5163 = vcmp.eq.f32.partialorder %v5139, inf
    %v5164 = vsel %vm5163, %v5139, %v5162
    %vm5165 = vcmp.eq.f32.partialorder %v5139, 0.0
    %v5166 = vand.u32 %v5139, 2147483648
    %v5167 = vsel %vm5165, %v5166, %v5164
    %v5172 = vcombine.low %v5146, %v5153
    %v5173 = vcombine.low %v5160, %v5167
    %v5175 = vunpack.c.l.s4 1966171168
    %v5176 = vunpack.c.0.s8 %v5175
    %v5177 = vlaneseq
    %v5178 = vshrl.u32 %v5177, 7
    %v5179 = vsub.s32 %v5176, %v5178
    %v5180 = vrot.slane %v5172, %v5179
    %v5182 = vunpack.c.l.s4 1966171168
    %v5183 = vunpack.c.0.s8 %v5182
    %v5184 = vlaneseq
    %v5185 = vshrl.u32 %v5184, 7
    %v5186 = vsub.s32 %v5183, %v5185
    %v5187 = vrot.slane %v5173, %v5186
    %v5188 = vcombine.low %v5180, %v5187
    %v5190 = vunpack.c.l.s4 1966171168
    %v5191 = vunpack.c.0.s8 %v5190
    %v5192 = vlaneseq
    %v5193 = vshrl.u32 %v5192, 7
    %v5194 = vsub.s32 %v5191, %v5193
    %v5195 = vrot.slane %v5188, %v5194
    %v5197 = vrcp.pop %v5195
    %v5198 = vmul.f32 %v5135, %v5197
    %v5200 = vlaneseq
    %v5201 = vshrl.u32 %v5200, 7
    %v5202 = vsub.s32 0, %v5201
    %v5203 = vrot.slane %v5198, %v5202
    %v5204 = vlaneseq
    %v5205 = vshrl.u32 %v5204, 7
    %v5206 = vsub.s32 1, %v5205
    %v5207 = vrot.slane %v5198, %v5206
    %v5208 = vlaneseq
    %v5209 = vshrl.u32 %v5208, 7
    %v5210 = vsub.s32 2, %v5209
    %v5211 = vrot.slane %v5198, %v5210
    %v5212 = vlaneseq
    %v5213 = vshrl.u32 %v5212, 7
    %v5214 = vsub.s32 3, %v5213
    %v5215 = vrot.slane %v5198, %v5214
    %v5220 = vmul.f32 %v5039, %v5203
    %v5221 = vmul.f32 %v5040, %v5207
    %v5222 = vmul.f32 %v5041, %v5211
    %v5223 = vmul.f32 %v5042, %v5215
    %v5224 = vmul.f32 %v5043, %v5203
    %v5225 = vmul.f32 %v5044, %v5207
    %v5226 = vmul.f32 %v5045, %v5211
    %v5227 = vmul.f32 %v5046, %v5215
    %v5228 = vmul.f32 %v5047, %v5203
    %v5229 = vmul.f32 %v5048, %v5207
    %v5230 = vmul.f32 %v5049, %v5211
    %v5231 = vmul.f32 %v5050, %v5215
    %v5232 = vmul.f32 %v5051, %v5203
    %v5233 = vmul.f32 %v5052, %v5207
    %v5234 = vmul.f32 %v5053, %v5211
    %v5235 = vmul.f32 %v5054, %v5215
    %v5236 = vmul.f32 %v5055, %v5203
    %v5237 = vmul.f32 %v5056, %v5207
    %v5238 = vmul.f32 %v5057, %v5211
    %v5239 = vmul.f32 %v5058, %v5215
    %v5240 = vmul.f32 %v5059, %v5203
    %v5241 = vmul.f32 %v5060, %v5207
    %v5242 = vmul.f32 %v5061, %v5211
    %v5243 = vmul.f32 %v5062, %v5215
    %v5244 = vld [vmem:[%s13] sm:$0xf]
    %v5246 = vlaneseq
    %v5247 = vshrl.u32 %v5246, 7
    %v5248 = vsub.s32 0, %v5247
    %v5249 = vrot.slane %v5244, %v5248
    %v5250 = vlaneseq
    %v5251 = vshrl.u32 %v5250, 7
    %v5252 = vsub.s32 1, %v5251
    %v5253 = vrot.slane %v5244, %v5252
    %v5254 = vlaneseq
    %v5255 = vshrl.u32 %v5254, 7
    %v5256 = vsub.s32 2, %v5255
    %v5257 = vrot.slane %v5244, %v5256
    %v5258 = vlaneseq
    %v5259 = vshrl.u32 %v5258, 7
    %v5260 = vsub.s32 3, %v5259
    %v5261 = vrot.slane %v5244, %v5260
    %v5266 = vadd.f32 %v5220, %v5249
    %v5267 = vadd.f32 %v5221, %v5253
    %v5268 = vadd.f32 %v5222, %v5257
    %v5269 = vadd.f32 %v5223, %v5261
    %v5270 = vadd.f32 %v5224, %v5249
    %v5271 = vadd.f32 %v5225, %v5253
    %v5272 = vadd.f32 %v5226, %v5257
    %v5273 = vadd.f32 %v5227, %v5261
    %v5274 = vadd.f32 %v5228, %v5249
    %v5275 = vadd.f32 %v5229, %v5253
    %v5276 = vadd.f32 %v5230, %v5257
    %v5277 = vadd.f32 %v5231, %v5261
    %v5278 = vadd.f32 %v5232, %v5249
    %v5279 = vadd.f32 %v5233, %v5253
    %v5280 = vadd.f32 %v5234, %v5257
    %v5281 = vadd.f32 %v5235, %v5261
    %v5282 = vadd.f32 %v5236, %v5249
    %v5283 = vadd.f32 %v5237, %v5253
    %v5284 = vadd.f32 %v5238, %v5257
    %v5285 = vadd.f32 %v5239, %v5261
    %v5286 = vadd.f32 %v5240, %v5249
    %v5287 = vadd.f32 %v5241, %v5253
    %v5288 = vadd.f32 %v5242, %v5257
    %v5289 = vadd.f32 %v5243, %v5261
    %v5290 = vmax.f32 %v5266, 0.0
    %v5291 = vmax.f32 %v5267, 0.0
    %v5292 = vmax.f32 %v5268, 0.0
    %v5293 = vmax.f32 %v5269, 0.0
    %v5294 = vmax.f32 %v5270, 0.0
    %v5295 = vmax.f32 %v5271, 0.0
    %v5296 = vmax.f32 %v5272, 0.0
    %v5297 = vmax.f32 %v5273, 0.0
    %v5298 = vmax.f32 %v5274, 0.0
    %v5299 = vmax.f32 %v5275, 0.0
    %v5300 = vmax.f32 %v5276, 0.0
    %v5301 = vmax.f32 %v5277, 0.0
    %v5302 = vmax.f32 %v5278, 0.0
    %v5303 = vmax.f32 %v5279, 0.0
    %v5304 = vmax.f32 %v5280, 0.0
    %v5305 = vmax.f32 %v5281, 0.0
    %v5306 = vmax.f32 %v5282, 0.0
    %v5307 = vmax.f32 %v5283, 0.0
    %v5308 = vmax.f32 %v5284, 0.0
    %v5309 = vmax.f32 %v5285, 0.0
    %v5310 = vmax.f32 %v5286, 0.0
    %v5311 = vmax.f32 %v5287, 0.0
    %v5312 = vmax.f32 %v5288, 0.0
    %v5313 = vmax.f32 %v5289, 0.0
    %5314 = vst [vmem:[#allocation4 + $0x20] sm:$0xff] %v5290
    %5315 = vst [vmem:[#allocation4 + $0x28] sm:$0xff] %v5291
    %5316 = vst [vmem:[#allocation4 + $0x30] sm:$0xff] %v5292
    %5317 = vst [vmem:[#allocation4 + $0x38] sm:$0xff] %v5293
    %5318 = vst [vmem:[#allocation4 + $0x40] sm:$0xff] %v5294
    %5319 = vst [vmem:[#allocation4 + $0x48] sm:$0xff] %v5295
    %5320 = vst [vmem:[#allocation4 + $0x50] sm:$0xff] %v5296
    %5321 = vst [vmem:[#allocation4 + $0x58] sm:$0xff] %v5297
    %5322 = vst [vmem:[#allocation4 + $0x60] sm:$0xff] %v5298
    %5323 = vst [vmem:[#allocation4 + $0x68] sm:$0xff] %v5299
    %5324 = vst [vmem:[#allocation4 + $0x70] sm:$0xff] %v5300
    %5325 = vst [vmem:[#allocation4 + $0x78] sm:$0xff] %v5301
    %s5326 = scalar_lea.vmem [#allocation4], 160
    %5327 = vst [vmem:[%s5326 + $0x20] sm:$0xff] %v5302
    %5328 = vst [vmem:[%s5326 + $0x28] sm:$0xff] %v5303
    %5329 = vst [vmem:[%s5326 + $0x30] sm:$0xff] %v5304
    %5330 = vst [vmem:[%s5326 + $0x38] sm:$0xff] %v5305
    %5331 = vst [vmem:[%s5326 + $0x40] sm:$0xff] %v5306
    %5332 = vst [vmem:[%s5326 + $0x48] sm:$0xff] %v5307
    %5333 = vst [vmem:[%s5326 + $0x50] sm:$0xff] %v5308
    %5334 = vst [vmem:[%s5326 + $0x58] sm:$0xff] %v5309
    %5335 = vst [vmem:[%s5326 + $0x60] sm:$0xff] %v5310
    %5336 = vst [vmem:[%s5326 + $0x68] sm:$0xff] %v5311
    %5337 = vst [vmem:[%s5326 + $0x70] sm:$0xff] %v5312
    %5338 = vst [vmem:[%s5326 + $0x78] sm:$0xff] %v5313
    %s5339 = smul.u32 4, 192
    %s5340 = smul.u32 %s5339, 2
    %s5341 = sshll.u32 %s5340, 4
    %5342 = dma.done %s1662, %s5341
    %v5343 = vld [vmem:[#allocation4] sm:$0xfc]
    %v5344 = vld [vmem:[#allocation4 + $0x8] sm:$0xfc]
    %v5345 = vld [vmem:[#allocation4 + $0x10] sm:$0xfc]
    %v5346 = vld [vmem:[#allocation4 + $0x18] sm:$0xfc]
    %v5347 = vld [vmem:[#allocation4 + $0x20] sm:$0xff]
    %v5348 = vld [vmem:[#allocation4 + $0x28] sm:$0xff]
    %v5349 = vld [vmem:[#allocation4 + $0x30] sm:$0xff]
    %v5350 = vld [vmem:[#allocation4 + $0x38] sm:$0xff]
    %v5351 = vld [vmem:[#allocation4 + $0x40] sm:$0xff]
    %v5352 = vld [vmem:[#allocation4 + $0x48] sm:$0xff]
    %v5353 = vld [vmem:[#allocation4 + $0x50] sm:$0xff]
    %v5354 = vld [vmem:[#allocation4 + $0x58] sm:$0xff]
    %v5355 = vld [vmem:[#allocation4 + $0x60] sm:$0x3f]
    %v5356 = vld [vmem:[#allocation4 + $0x68] sm:$0x3f]
    %v5357 = vld [vmem:[#allocation4 + $0x70] sm:$0x3f]
    %v5358 = vld [vmem:[#allocation4 + $0x78] sm:$0x3f]
    %v5359 = vpack.c.bf16 %v5347, %v5343
    %v5360 = vpack.c.bf16 %v5348, %v5344
    %v5361 = vpack.c.bf16 %v5349, %v5345
    %v5362 = vpack.c.bf16 %v5350, %v5346
    %v5363 = vpack.c.bf16 %v5355, %v5351
    %v5364 = vpack.c.bf16 %v5356, %v5352
    %v5365 = vpack.c.bf16 %v5357, %v5353
    %v5366 = vpack.c.bf16 %v5358, %v5354
    %v5367 = vld [vmem:[#allocation4] sm:$0xc0]
    %v5368 = vld [vmem:[#allocation4 + $0x8] sm:$0xc0]
    %v5369 = vld [vmem:[#allocation4 + $0x10] sm:$0xc0]
    %v5370 = vld [vmem:[#allocation4 + $0x18] sm:$0xc0]
    %v5371 = vld [vmem:[#allocation4 + $0x60] sm:$0xff]
    %v5372 = vld [vmem:[#allocation4 + $0x68] sm:$0xff]
    %v5373 = vld [vmem:[#allocation4 + $0x70] sm:$0xff]
    %v5374 = vld [vmem:[#allocation4 + $0x78] sm:$0xff]
    %v5375 = vld [vmem:[#allocation4 + $0x80] sm:$0x3]
    %v5376 = vld [vmem:[#allocation4 + $0x88] sm:$0x3]
    %v5377 = vld [vmem:[#allocation4 + $0x90] sm:$0x3]
    %v5378 = vld [vmem:[#allocation4 + $0x98] sm:$0x3]
    %v5379 = vpack.c.bf16 %v5347, %v5367
    %v5380 = vpack.c.bf16 %v5348, %v5368
    %v5381 = vpack.c.bf16 %v5349, %v5369
    %v5382 = vpack.c.bf16 %v5350, %v5370
    %v5383 = vpack.c.bf16 %v5371, %v5351
    %v5384 = vpack.c.bf16 %v5372, %v5352
    %v5385 = vpack.c.bf16 %v5373, %v5353
    %v5386 = vpack.c.bf16 %v5374, %v5354
    %v5387 = vpack.c.bf16 %v5375, %v5375
    %v5388 = vpack.c.bf16 %v5376, %v5376
    %v5389 = vpack.c.bf16 %v5377, %v5377
    %v5390 = vpack.c.bf16 %v5378, %v5378
    %v5391 = vld [vmem:[#allocation4 + $0x20] sm:$0xfc]
    %v5392 = vld [vmem:[#allocation4 + $0x28] sm:$0xfc]
    %v5393 = vld [vmem:[#allocation4 + $0x30] sm:$0xfc]
    %v5394 = vld [vmem:[#allocation4 + $0x38] sm:$0xfc]
    %v5395 = vld [vmem:[#allocation4 + $0x80] sm:$0x3f]
    %v5396 = vld [vmem:[#allocation4 + $0x88] sm:$0x3f]
    %v5397 = vld [vmem:[#allocation4 + $0x90] sm:$0x3f]
    %v5398 = vld [vmem:[#allocation4 + $0x98] sm:$0x3f]
    %v5399 = vpack.c.bf16 %v5351, %v5391
    %v5400 = vpack.c.bf16 %v5352, %v5392
    %v5401 = vpack.c.bf16 %v5353, %v5393
    %v5402 = vpack.c.bf16 %v5354, %v5394
    %v5403 = vpack.c.bf16 %v5395, %v5371
    %v5404 = vpack.c.bf16 %v5396, %v5372
    %v5405 = vpack.c.bf16 %v5397, %v5373
    %v5406 = vpack.c.bf16 %v5398, %v5374
    %v5419 = vrot.slane %v5379, 2
    %v5420 = vrot.slane %v5383, 2
    %v5421 = vsel %vm4297, %v5419, %v5420
    %v5422 = vrot.slane %v5380, 2
    %v5423 = vrot.slane %v5384, 2
    %v5424 = vsel %vm4297, %v5422, %v5423
    %v5425 = vrot.slane %v5381, 2
    %v5426 = vrot.slane %v5385, 2
    %v5427 = vsel %vm4297, %v5425, %v5426
    %v5428 = vrot.slane %v5382, 2
    %v5429 = vrot.slane %v5386, 2
    %v5430 = vsel %vm4297, %v5428, %v5429
    %v5431 = vrot.slane %v5387, 2
    %v5432 = vsel %vm4297, %v5420, %v5431
    %v5433 = vrot.slane %v5388, 2
    %v5434 = vsel %vm4297, %v5423, %v5433
    %v5435 = vrot.slane %v5389, 2
    %v5436 = vsel %vm4297, %v5426, %v5435
    %v5437 = vrot.slane %v5390, 2
    %v5438 = vsel %vm4297, %v5429, %v5437
    %v5439 = vld [vmem:[%s5326] sm:$0xfc]
    %v5440 = vld [vmem:[%s5326 + $0x8] sm:$0xfc]
    %v5441 = vld [vmem:[%s5326 + $0x10] sm:$0xfc]
    %v5442 = vld [vmem:[%s5326 + $0x18] sm:$0xfc]
    %v5443 = vld [vmem:[%s5326 + $0x20] sm:$0xff]
    %v5444 = vld [vmem:[%s5326 + $0x28] sm:$0xff]
    %v5445 = vld [vmem:[%s5326 + $0x30] sm:$0xff]
    %v5446 = vld [vmem:[%s5326 + $0x38] sm:$0xff]
    %v5447 = vld [vmem:[%s5326 + $0x40] sm:$0xff]
    %v5448 = vld [vmem:[%s5326 + $0x48] sm:$0xff]
    %v5449 = vld [vmem:[%s5326 + $0x50] sm:$0xff]
    %v5450 = vld [vmem:[%s5326 + $0x58] sm:$0xff]
    %v5451 = vld [vmem:[%s5326 + $0x60] sm:$0x3f]
    %v5452 = vld [vmem:[%s5326 + $0x68] sm:$0x3f]
    %v5453 = vld [vmem:[%s5326 + $0x70] sm:$0x3f]
    %v5454 = vld [vmem:[%s5326 + $0x78] sm:$0x3f]
    %v5455 = vpack.c.bf16 %v5443, %v5439
    %v5456 = vpack.c.bf16 %v5444, %v5440
    %v5457 = vpack.c.bf16 %v5445, %v5441
    %v5458 = vpack.c.bf16 %v5446, %v5442
    %v5459 = vpack.c.bf16 %v5451, %v5447
    %v5460 = vpack.c.bf16 %v5452, %v5448
    %v5461 = vpack.c.bf16 %v5453, %v5449
    %v5462 = vpack.c.bf16 %v5454, %v5450
    %v5463 = vld [vmem:[%s5326] sm:$0xc0]
    %v5464 = vld [vmem:[%s5326 + $0x8] sm:$0xc0]
    %v5465 = vld [vmem:[%s5326 + $0x10] sm:$0xc0]
    %v5466 = vld [vmem:[%s5326 + $0x18] sm:$0xc0]
    %v5467 = vld [vmem:[%s5326 + $0x60] sm:$0xff]
    %v5468 = vld [vmem:[%s5326 + $0x68] sm:$0xff]
    %v5469 = vld [vmem:[%s5326 + $0x70] sm:$0xff]
    %v5470 = vld [vmem:[%s5326 + $0x78] sm:$0xff]
    %v5471 = vld [vmem:[%s5326 + $0x80] sm:$0x3]
    %v5472 = vld [vmem:[%s5326 + $0x88] sm:$0x3]
    %v5473 = vld [vmem:[%s5326 + $0x90] sm:$0x3]
    %v5474 = vld [vmem:[%s5326 + $0x98] sm:$0x3]
    %v5475 = vpack.c.bf16 %v5443, %v5463
    %v5476 = vpack.c.bf16 %v5444, %v5464
    %v5477 = vpack.c.bf16 %v5445, %v5465
    %v5478 = vpack.c.bf16 %v5446, %v5466
    %v5479 = vpack.c.bf16 %v5467, %v5447
    %v5480 = vpack.c.bf16 %v5468, %v5448
    %v5481 = vpack.c.bf16 %v5469, %v5449
    %v5482 = vpack.c.bf16 %v5470, %v5450
    %v5483 = vpack.c.bf16 %v5471, %v5471
    %v5484 = vpack.c.bf16 %v5472, %v5472
    %v5485 = vpack.c.bf16 %v5473, %v5473
    %v5486 = vpack.c.bf16 %v5474, %v5474
    %v5487 = vld [vmem:[%s5326 + $0x20] sm:$0xfc]
    %v5488 = vld [vmem:[%s5326 + $0x28] sm:$0xfc]
    %v5489 = vld [vmem:[%s5326 + $0x30] sm:$0xfc]
    %v5490 = vld [vmem:[%s5326 + $0x38] sm:$0xfc]
    %v5491 = vld [vmem:[%s5326 + $0x80] sm:$0x3f]
    %v5492 = vld [vmem:[%s5326 + $0x88] sm:$0x3f]
    %v5493 = vld [vmem:[%s5326 + $0x90] sm:$0x3f]
    %v5494 = vld [vmem:[%s5326 + $0x98] sm:$0x3f]
    %v5495 = vpack.c.bf16 %v5447, %v5487
    %v5496 = vpack.c.bf16 %v5448, %v5488
    %v5497 = vpack.c.bf16 %v5449, %v5489
    %v5498 = vpack.c.bf16 %v5450, %v5490
    %v5499 = vpack.c.bf16 %v5491, %v5467
    %v5500 = vpack.c.bf16 %v5492, %v5468
    %v5501 = vpack.c.bf16 %v5493, %v5469
    %v5502 = vpack.c.bf16 %v5494, %v5470
    %v5515 = vrot.slane %v5475, 2
    %v5516 = vrot.slane %v5479, 2
    %v5517 = vsel %vm4297, %v5515, %v5516
    %v5518 = vrot.slane %v5476, 2
    %v5519 = vrot.slane %v5480, 2
    %v5520 = vsel %vm4297, %v5518, %v5519
    %v5521 = vrot.slane %v5477, 2
    %v5522 = vrot.slane %v5481, 2
    %v5523 = vsel %vm4297, %v5521, %v5522
    %v5524 = vrot.slane %v5478, 2
    %v5525 = vrot.slane %v5482, 2
    %v5526 = vsel %vm4297, %v5524, %v5525
    %v5527 = vrot.slane %v5483, 2
    %v5528 = vsel %vm4297, %v5516, %v5527
    %v5529 = vrot.slane %v5484, 2
    %v5530 = vsel %vm4297, %v5519, %v5529
    %v5531 = vrot.slane %v5485, 2
    %v5532 = vsel %vm4297, %v5522, %v5531
    %v5533 = vrot.slane %v5486, 2
    %v5534 = vsel %vm4297, %v5525, %v5533
    %vm5551 = vcmask 1046528
    %v5552 = vrot.slane %v5359, 1
    %v5553 = vrot.slane %v5363, 1
    %v5554 = vsel %vm5551, %v5552, %v5553
    %v5555 = vrot.slane %v5360, 1
    %v5556 = vrot.slane %v5364, 1
    %v5557 = vsel %vm5551, %v5555, %v5556
    %v5558 = vrot.slane %v5361, 1
    %v5559 = vrot.slane %v5365, 1
    %v5560 = vsel %vm5551, %v5558, %v5559
    %v5561 = vrot.slane %v5362, 1
    %v5562 = vrot.slane %v5366, 1
    %v5563 = vsel %vm5551, %v5561, %v5562
    %v5564 = vrot.slane %v5421, 1
    %v5565 = vrot.slane %v5432, 1
    %v5566 = vsel %vm5551, %v5564, %v5565
    %v5567 = vrot.slane %v5424, 1
    %v5568 = vrot.slane %v5434, 1
    %v5569 = vsel %vm5551, %v5567, %v5568
    %v5570 = vrot.slane %v5427, 1
    %v5571 = vrot.slane %v5436, 1
    %v5572 = vsel %vm5551, %v5570, %v5571
    %v5573 = vrot.slane %v5430, 1
    %v5574 = vrot.slane %v5438, 1
    %v5575 = vsel %vm5551, %v5573, %v5574
    %v5576 = vrot.slane %v5399, 1
    %v5577 = vrot.slane %v5403, 1
    %v5578 = vsel %vm5551, %v5576, %v5577
    %v5579 = vrot.slane %v5400, 1
    %v5580 = vrot.slane %v5404, 1
    %v5581 = vsel %vm5551, %v5579, %v5580
    %v5582 = vrot.slane %v5401, 1
    %v5583 = vrot.slane %v5405, 1
    %v5584 = vsel %vm5551, %v5582, %v5583
    %v5585 = vrot.slane %v5402, 1
    %v5586 = vrot.slane %v5406, 1
    %v5587 = vsel %vm5551, %v5585, %v5586
    %vm5616 = vcmask 1044480
    %v5617 = vrot.slane %v5455, 3
    %v5618 = vrot.slane %v5456, 3
    %v5619 = vrot.slane %v5457, 3
    %v5620 = vrot.slane %v5458, 3
    %v5621 = vrot.slane %v5517, 3
    %v5622 = vrot.slane %v5520, 3
    %v5623 = vrot.slane %v5523, 3
    %v5624 = vrot.slane %v5526, 3
    %v5625 = vrot.slane %v5495, 3
    %v5626 = vrot.slane %v5496, 3
    %v5627 = vrot.slane %v5497, 3
    %v5628 = vrot.slane %v5498, 3
    %v5629 = vrot.slane %v5459, 3
    %v5630 = vsel %vm5616, %v5617, %v5629
    %v5631 = vrot.slane %v5460, 3
    %v5632 = vsel %vm5616, %v5618, %v5631
    %v5633 = vrot.slane %v5461, 3
    %v5634 = vsel %vm5616, %v5619, %v5633
    %v5635 = vrot.slane %v5462, 3
    %v5636 = vsel %vm5616, %v5620, %v5635
    %v5637 = vrot.slane %v5528, 3
    %v5638 = vsel %vm5616, %v5621, %v5637
    %v5639 = vrot.slane %v5530, 3
    %v5640 = vsel %vm5616, %v5622, %v5639
    %v5641 = vrot.slane %v5532, 3
    %v5642 = vsel %vm5616, %v5623, %v5641
    %v5643 = vrot.slane %v5534, 3
    %v5644 = vsel %vm5616, %v5624, %v5643
    %v5645 = vrot.slane %v5499, 3
    %v5646 = vsel %vm5616, %v5625, %v5645
    %v5647 = vrot.slane %v5500, 3
    %v5648 = vsel %vm5616, %v5626, %v5647
    %v5649 = vrot.slane %v5501, 3
    %v5650 = vsel %vm5616, %v5627, %v5649
    %v5651 = vrot.slane %v5502, 3
    %v5652 = vsel %vm5616, %v5628, %v5651
    %v5679 = vsel %vm3318, %v5553, %v5617
    %v5683 = vsel %vm3318, %v5556, %v5618
    %v5687 = vsel %vm3318, %v5559, %v5619
    %v5691 = vsel %vm3318, %v5562, %v5620
    %v5695 = vsel %vm3318, %v5565, %v5621
    %v5699 = vsel %vm3318, %v5568, %v5622
    %v5703 = vsel %vm3318, %v5571, %v5623
    %v5707 = vsel %vm3318, %v5574, %v5624
    %v5711 = vsel %vm3318, %v5577, %v5625
    %v5715 = vsel %vm3318, %v5580, %v5626
    %v5719 = vsel %vm3318, %v5583, %v5627
    %v5723 = vsel %vm3318, %v5586, %v5628
    %v5725 = vld [vmem:[#allocation6] sm:$0xff]
    %v5726 = vld [vmem:[#allocation6 + $0x8] sm:$0xff]
    %v5727 = vld [vmem:[#allocation6 + $0x10] sm:$0xff]
    %v5728 = vld [vmem:[#allocation6 + $0x18] sm:$0xff]
    %v5729 = vld [vmem:[#allocation6 + $0x20] sm:$0xff]
    %v5730 = vld [vmem:[#allocation6 + $0x28] sm:$0xff]
    %v5731 = vld [vmem:[#allocation6 + $0x30] sm:$0xff]
    %v5732 = vld [vmem:[#allocation6 + $0x38] sm:$0xff]
    %v5733 = vld [vmem:[#allocation6 + $0x40] sm:$0xff]
    %v5734 = vld [vmem:[#allocation6 + $0x48] sm:$0xff]
    %v5735 = vld [vmem:[#allocation6 + $0x50] sm:$0xff]
    %v5736 = vld [vmem:[#allocation6 + $0x58] sm:$0xff]
    %v5737 = vld [vmem:[#allocation6 + $0x60] sm:$0xff]
    %v5738 = vld [vmem:[#allocation6 + $0x68] sm:$0xff]
    %v5739 = vld [vmem:[#allocation6 + $0x70] sm:$0xff]
    %v5740 = vld [vmem:[#allocation6 + $0x78] sm:$0xff]
    %v5741 = vld [vmem:[#allocation6 + $0x80] sm:$0xff]
    %v5742 = vld [vmem:[#allocation6 + $0x88] sm:$0xff]
    %v5743 = vld [vmem:[#allocation6 + $0x90] sm:$0xff]
    %v5744 = vld [vmem:[#allocation6 + $0x98] sm:$0xff]
    %v5745 = vld [vmem:[#allocation6 + $0xa0] sm:$0xff]
    %v5746 = vld [vmem:[#allocation6 + $0xa8] sm:$0xff]
    %v5747 = vld [vmem:[#allocation6 + $0xb0] sm:$0xff]
    %v5748 = vld [vmem:[#allocation6 + $0xb8] sm:$0xff]
    %v5749 = vld [vmem:[#allocation6 + $0xc0] sm:$0xff]
    %v5750 = vld [vmem:[#allocation6 + $0xc8] sm:$0xff]
    %v5751 = vld [vmem:[#allocation6 + $0xd0] sm:$0xff]
    %v5752 = vld [vmem:[#allocation6 + $0xd8] sm:$0xff]
    %v5753 = vld [vmem:[#allocation6 + $0xe0] sm:$0xff]
    %v5754 = vld [vmem:[#allocation6 + $0xe8] sm:$0xff]
    %v5755 = vld [vmem:[#allocation6 + $0xf0] sm:$0xff]
    %v5756 = vld [vmem:[#allocation6 + $0xf8] sm:$0xff]
    %v5757 = vld [vmem:[#allocation6 + $0x100] sm:$0xff]
    %v5758 = vld [vmem:[#allocation6 + $0x108] sm:$0xff]
    %v5759 = vld [vmem:[#allocation6 + $0x110] sm:$0xff]
    %v5760 = vld [vmem:[#allocation6 + $0x118] sm:$0xff]
    %v5761 = vld [vmem:[#allocation6 + $0x120] sm:$0xff]
    %v5762 = vld [vmem:[#allocation6 + $0x128] sm:$0xff]
    %v5763 = vld [vmem:[#allocation6 + $0x130] sm:$0xff]
    %v5764 = vld [vmem:[#allocation6 + $0x138] sm:$0xff]
    %v5765 = vld [vmem:[#allocation6 + $0x140] sm:$0xff]
    %v5766 = vld [vmem:[#allocation6 + $0x148] sm:$0xff]
    %v5767 = vld [vmem:[#allocation6 + $0x150] sm:$0xff]
    %v5768 = vld [vmem:[#allocation6 + $0x158] sm:$0xff]
    %v5769 = vld [vmem:[#allocation6 + $0x160] sm:$0xff]
    %v5770 = vld [vmem:[#allocation6 + $0x168] sm:$0xff]
    %v5771 = vld [vmem:[#allocation6 + $0x170] sm:$0xff]
    %v5772 = vld [vmem:[#allocation6 + $0x178] sm:$0xff]
    %v5773 = vld [vmem:[#allocation6 + $0x180] sm:$0xff]
    %v5774 = vld [vmem:[#allocation6 + $0x188] sm:$0xff]
    %v5775 = vld [vmem:[#allocation6 + $0x190] sm:$0xff]
    %v5776 = vld [vmem:[#allocation6 + $0x198] sm:$0xff]
    %v5777 = vld [vmem:[#allocation6 + $0x1a0] sm:$0xff]
    %v5778 = vld [vmem:[#allocation6 + $0x1a8] sm:$0xff]
    %v5779 = vld [vmem:[#allocation6 + $0x1b0] sm:$0xff]
    %v5780 = vld [vmem:[#allocation6 + $0x1b8] sm:$0xff]
    %v5781 = vld [vmem:[#allocation6 + $0x1c0] sm:$0xff]
    %v5782 = vld [vmem:[#allocation6 + $0x1c8] sm:$0xff]
    %v5783 = vld [vmem:[#allocation6 + $0x1d0] sm:$0xff]
    %v5784 = vld [vmem:[#allocation6 + $0x1d8] sm:$0xff]
    %v5785 = vld [vmem:[#allocation6 + $0x1e0] sm:$0xff]
    %v5786 = vld [vmem:[#allocation6 + $0x1e8] sm:$0xff]
    %v5787 = vld [vmem:[#allocation6 + $0x1f0] sm:$0xff]
    %v5788 = vld [vmem:[#allocation6 + $0x1f8] sm:$0xff]
    %v5789 = vld [vmem:[#allocation6 + $0x200] sm:$0xff]
    %v5790 = vld [vmem:[#allocation6 + $0x208] sm:$0xff]
    %v5791 = vld [vmem:[#allocation6 + $0x210] sm:$0xff]
    %v5792 = vld [vmem:[#allocation6 + $0x218] sm:$0xff]
    %v5793 = vld [vmem:[#allocation6 + $0x220] sm:$0xff]
    %v5794 = vld [vmem:[#allocation6 + $0x228] sm:$0xff]
    %v5795 = vld [vmem:[#allocation6 + $0x230] sm:$0xff]
    %v5796 = vld [vmem:[#allocation6 + $0x238] sm:$0xff]
    %v5797 = vld [vmem:[#allocation6 + $0x240] sm:$0xff]
    %v5798 = vld [vmem:[#allocation6 + $0x248] sm:$0xff]
    %v5799 = vld [vmem:[#allocation6 + $0x250] sm:$0xff]
    %v5800 = vld [vmem:[#allocation6 + $0x258] sm:$0xff]
    %v5801 = vld [vmem:[#allocation6 + $0x260] sm:$0xff]
    %v5802 = vld [vmem:[#allocation6 + $0x268] sm:$0xff]
    %v5803 = vld [vmem:[#allocation6 + $0x270] sm:$0xff]
    %v5804 = vld [vmem:[#allocation6 + $0x278] sm:$0xff]
    %v5805 = vld [vmem:[#allocation6 + $0x280] sm:$0xff]
    %v5806 = vld [vmem:[#allocation6 + $0x288] sm:$0xff]
    %v5807 = vld [vmem:[#allocation6 + $0x290] sm:$0xff]
    %v5808 = vld [vmem:[#allocation6 + $0x298] sm:$0xff]
    %v5809 = vld [vmem:[#allocation6 + $0x2a0] sm:$0xff]
    %v5810 = vld [vmem:[#allocation6 + $0x2a8] sm:$0xff]
    %v5811 = vld [vmem:[#allocation6 + $0x2b0] sm:$0xff]
    %v5812 = vld [vmem:[#allocation6 + $0x2b8] sm:$0xff]
    %v5813 = vld [vmem:[#allocation6 + $0x2c0] sm:$0xff]
    %v5814 = vld [vmem:[#allocation6 + $0x2c8] sm:$0xff]
    %v5815 = vld [vmem:[#allocation6 + $0x2d0] sm:$0xff]
    %v5816 = vld [vmem:[#allocation6 + $0x2d8] sm:$0xff]
    %v5817 = vld [vmem:[#allocation6 + $0x2e0] sm:$0xff]
    %v5818 = vld [vmem:[#allocation6 + $0x2e8] sm:$0xff]
    %v5819 = vld [vmem:[#allocation6 + $0x2f0] sm:$0xff]
    %v5820 = vld [vmem:[#allocation6 + $0x2f8] sm:$0xff]
    %v5821 = vld [vmem:[#allocation6 + $0x300] sm:$0xff]
    %v5822 = vld [vmem:[#allocation6 + $0x308] sm:$0xff]
    %v5823 = vld [vmem:[#allocation6 + $0x310] sm:$0xff]
    %v5824 = vld [vmem:[#allocation6 + $0x318] sm:$0xff]
    %v5825 = vld [vmem:[#allocation6 + $0x320] sm:$0xff]
    %v5826 = vld [vmem:[#allocation6 + $0x328] sm:$0xff]
    %v5827 = vld [vmem:[#allocation6 + $0x330] sm:$0xff]
    %v5828 = vld [vmem:[#allocation6 + $0x338] sm:$0xff]
    %v5829 = vld [vmem:[#allocation6 + $0x340] sm:$0xff]
    %v5830 = vld [vmem:[#allocation6 + $0x348] sm:$0xff]
    %v5831 = vld [vmem:[#allocation6 + $0x350] sm:$0xff]
    %v5832 = vld [vmem:[#allocation6 + $0x358] sm:$0xff]
    %v5833 = vld [vmem:[#allocation6 + $0x360] sm:$0xff]
    %v5834 = vld [vmem:[#allocation6 + $0x368] sm:$0xff]
    %v5835 = vld [vmem:[#allocation6 + $0x370] sm:$0xff]
    %v5836 = vld [vmem:[#allocation6 + $0x378] sm:$0xff]
    %v5837 = vld [vmem:[#allocation6 + $0x380] sm:$0xff]
    %v5838 = vld [vmem:[#allocation6 + $0x388] sm:$0xff]
    %v5839 = vld [vmem:[#allocation6 + $0x390] sm:$0xff]
    %v5840 = vld [vmem:[#allocation6 + $0x398] sm:$0xff]
    %v5841 = vld [vmem:[#allocation6 + $0x3a0] sm:$0xff]
    %v5842 = vld [vmem:[#allocation6 + $0x3a8] sm:$0xff]
    %v5843 = vld [vmem:[#allocation6 + $0x3b0] sm:$0xff]
    %v5844 = vld [vmem:[#allocation6 + $0x3b8] sm:$0xff]
    %v5845 = vld [vmem:[#allocation6 + $0x3c0] sm:$0xff]
    %v5846 = vld [vmem:[#allocation6 + $0x3c8] sm:$0xff]
    %v5847 = vld [vmem:[#allocation6 + $0x3d0] sm:$0xff]
    %v5848 = vld [vmem:[#allocation6 + $0x3d8] sm:$0xff]
    %v5849 = vld [vmem:[#allocation6 + $0x3e0] sm:$0xff]
    %v5850 = vld [vmem:[#allocation6 + $0x3e8] sm:$0xff]
    %v5851 = vld [vmem:[#allocation6 + $0x3f0] sm:$0xff]
    %v5852 = vld [vmem:[#allocation6 + $0x3f8] sm:$0xff]
    %v5853 = vld [vmem:[#allocation6 + $0x400] sm:$0xff]
    %v5854 = vld [vmem:[#allocation6 + $0x408] sm:$0xff]
    %v5855 = vld [vmem:[#allocation6 + $0x410] sm:$0xff]
    %v5856 = vld [vmem:[#allocation6 + $0x418] sm:$0xff]
    %v5857 = vld [vmem:[#allocation6 + $0x420] sm:$0xff]
    %v5858 = vld [vmem:[#allocation6 + $0x428] sm:$0xff]
    %v5859 = vld [vmem:[#allocation6 + $0x430] sm:$0xff]
    %v5860 = vld [vmem:[#allocation6 + $0x438] sm:$0xff]
    %v5861 = vld [vmem:[#allocation6 + $0x440] sm:$0xff]
    %v5862 = vld [vmem:[#allocation6 + $0x448] sm:$0xff]
    %v5863 = vld [vmem:[#allocation6 + $0x450] sm:$0xff]
    %v5864 = vld [vmem:[#allocation6 + $0x458] sm:$0xff]
    %v5865 = vld [vmem:[#allocation6 + $0x460] sm:$0xff]
    %v5866 = vld [vmem:[#allocation6 + $0x468] sm:$0xff]
    %v5867 = vld [vmem:[#allocation6 + $0x470] sm:$0xff]
    %v5868 = vld [vmem:[#allocation6 + $0x478] sm:$0xff]
    %v5869 = vld [vmem:[#allocation6 + $0x480] sm:$0xff]
    %v5870 = vld [vmem:[#allocation6 + $0x488] sm:$0xff]
    %v5871 = vld [vmem:[#allocation6 + $0x490] sm:$0xff]
    %v5872 = vld [vmem:[#allocation6 + $0x498] sm:$0xff]
    %v5873 = vld [vmem:[#allocation6 + $0x4a0] sm:$0xff]
    %v5874 = vld [vmem:[#allocation6 + $0x4a8] sm:$0xff]
    %v5875 = vld [vmem:[#allocation6 + $0x4b0] sm:$0xff]
    %v5876 = vld [vmem:[#allocation6 + $0x4b8] sm:$0xff]
    %v5877 = vld [vmem:[#allocation6 + $0x4c0] sm:$0xff]
    %v5878 = vld [vmem:[#allocation6 + $0x4c8] sm:$0xff]
    %v5879 = vld [vmem:[#allocation6 + $0x4d0] sm:$0xff]
    %v5880 = vld [vmem:[#allocation6 + $0x4d8] sm:$0xff]
    %v5881 = vld [vmem:[#allocation6 + $0x4e0] sm:$0xff]
    %v5882 = vld [vmem:[#allocation6 + $0x4e8] sm:$0xff]
    %v5883 = vld [vmem:[#allocation6 + $0x4f0] sm:$0xff]
    %v5884 = vld [vmem:[#allocation6 + $0x4f8] sm:$0xff]
    %v5885 = vld [vmem:[#allocation6 + $0x500] sm:$0xff]
    %v5886 = vld [vmem:[#allocation6 + $0x508] sm:$0xff]
    %v5887 = vld [vmem:[#allocation6 + $0x510] sm:$0xff]
    %v5888 = vld [vmem:[#allocation6 + $0x518] sm:$0xff]
    %v5889 = vld [vmem:[#allocation6 + $0x520] sm:$0xff]
    %v5890 = vld [vmem:[#allocation6 + $0x528] sm:$0xff]
    %v5891 = vld [vmem:[#allocation6 + $0x530] sm:$0xff]
    %v5892 = vld [vmem:[#allocation6 + $0x538] sm:$0xff]
    %v5893 = vld [vmem:[#allocation6 + $0x540] sm:$0xff]
    %v5894 = vld [vmem:[#allocation6 + $0x548] sm:$0xff]
    %v5895 = vld [vmem:[#allocation6 + $0x550] sm:$0xff]
    %v5896 = vld [vmem:[#allocation6 + $0x558] sm:$0xff]
    %v5897 = vld [vmem:[#allocation6 + $0x560] sm:$0xff]
    %v5898 = vld [vmem:[#allocation6 + $0x568] sm:$0xff]
    %v5899 = vld [vmem:[#allocation6 + $0x570] sm:$0xff]
    %v5900 = vld [vmem:[#allocation6 + $0x578] sm:$0xff]
    %v5901 = vld [vmem:[#allocation6 + $0x580] sm:$0xff]
    %v5902 = vld [vmem:[#allocation6 + $0x588] sm:$0xff]
    %v5903 = vld [vmem:[#allocation6 + $0x590] sm:$0xff]
    %v5904 = vld [vmem:[#allocation6 + $0x598] sm:$0xff]
    %v5905 = vld [vmem:[#allocation6 + $0x5a0] sm:$0xff]
    %v5906 = vld [vmem:[#allocation6 + $0x5a8] sm:$0xff]
    %v5907 = vld [vmem:[#allocation6 + $0x5b0] sm:$0xff]
    %v5908 = vld [vmem:[#allocation6 + $0x5b8] sm:$0xff]
    %v5909 = vld [vmem:[#allocation6 + $0x5c0] sm:$0xff]
    %v5910 = vld [vmem:[#allocation6 + $0x5c8] sm:$0xff]
    %v5911 = vld [vmem:[#allocation6 + $0x5d0] sm:$0xff]
    %v5912 = vld [vmem:[#allocation6 + $0x5d8] sm:$0xff]
    %v5913 = vld [vmem:[#allocation6 + $0x5e0] sm:$0xff]
    %v5914 = vld [vmem:[#allocation6 + $0x5e8] sm:$0xff]
    %v5915 = vld [vmem:[#allocation6 + $0x5f0] sm:$0xff]
    %v5916 = vld [vmem:[#allocation6 + $0x5f8] sm:$0xff]
    %v5917 = vld [vmem:[%s15] sm:$0x3]
    %v5919 = vlaneseq
    %v5920 = vshrl.u32 %v5919, 7
    %v5921 = vsub.s32 0, %v5920
    %v5922 = vrot.slane %v5917, %v5921
    %v5923 = vlaneseq
    %v5924 = vshrl.u32 %v5923, 7
    %v5925 = vsub.s32 1, %v5924
    %v5926 = vrot.slane %v5917, %v5925
    %5929 = vmatprep.subr.bf16.mxu0 %v5726
    %5930 = vmatpush1.bf16.msra.mxu0 %v5725
    %5931 = vmatprep.subr.bf16.mxu0 %v5728
    %5932 = vmatpush1.bf16.msra.mxu0 %v5727
    %5933 = vmatprep.subr.bf16.mxu0 %v5730
    %5934 = vmatpush1.bf16.msra.mxu0 %v5729
    %5935 = vmatprep.subr.bf16.mxu0 %v5732
    %5936 = vmatpush1.bf16.msra.mxu0 %v5731
    %5937 = vmatprep.subr.bf16.mxu0 %v5734
    %5938 = vmatpush1.bf16.msra.mxu0 %v5733
    %5939 = vmatprep.subr.bf16.mxu0 %v5736
    %5940 = vmatpush1.bf16.msra.mxu0 %v5735
    %5941 = vmatprep.subr.bf16.mxu0 %v5738
    %5942 = vmatpush1.bf16.msra.mxu0 %v5737
    %5943 = vmatprep.subr.bf16.mxu0 %v5740
    %5944 = vmatpush1.bf16.msra.mxu0 %v5739
    %5945 = vmatprep.subr.bf16.mxu0 %v5742
    %5946 = vmatpush1.bf16.msra.mxu0 %v5741
    %5947 = vmatprep.subr.bf16.mxu0 %v5744
    %5948 = vmatpush1.bf16.msra.mxu0 %v5743
    %5949 = vmatprep.subr.bf16.mxu0 %v5746
    %5950 = vmatpush1.bf16.msra.mxu0 %v5745
    %5951 = vmatprep.subr.bf16.mxu0 %v5748
    %5952 = vmatpush1.bf16.msra.mxu0 %v5747
    %5953 = vmatprep.subr.bf16.mxu0 %v5750
    %5954 = vmatpush1.bf16.msra.mxu0 %v5749
    %5955 = vmatprep.subr.bf16.mxu0 %v5752
    %5956 = vmatpush1.bf16.msra.mxu0 %v5751
    %5957 = vmatprep.subr.bf16.mxu0 %v5754
    %5958 = vmatpush1.bf16.msra.mxu0 %v5753
    %5959 = vmatprep.subr.bf16.mxu0 %v5756
    %5960 = vmatpush1.bf16.msra.mxu0 %v5755
    %5961 = vmatprep.mubr.bf16.mxu0 %v5557
    %5962 = vmatmul.mubr.bf16.gmra.mrb[0].mxu0 %v5554
    %v5963 = vpop.f32.mrb[0].mxu0
    %v5964 = vadd.f32 %v5922, %v5963
    %v5965 = vpop.f32.mrb[0].mxu0
    %v5966 = vadd.f32 %v5926, %v5965
    %v5967 = vpop.f32.mrb[0].mxu0
    %v5968 = vadd.f32 %v5922, %v5967
    %v5969 = vpop.f32.mrb[0].mxu0
    %v5970 = vadd.f32 %v5926, %v5969
    %5971 = vmatprep.mubr.bf16.mxu0 %v5683
    %5972 = vmatmul.mubr.bf16.gmra.mrb[0].mxu0 %v5679
    %v5973 = vpop.f32.mrb[0].mxu0
    %v5974 = vadd.f32 %v5922, %v5973
    %v5975 = vpop.f32.mrb[0].mxu0
    %v5976 = vadd.f32 %v5926, %v5975
    %v5977 = vpop.f32.mrb[0].mxu0
    %v5978 = vadd.f32 %v5922, %v5977
    %v5979 = vpop.f32.mrb[0].mxu0
    %v5980 = vadd.f32 %v5926, %v5979
    %5981 = vmatprep.mubr.bf16.mxu0 %v5632
    %5982 = vmatmul.mubr.bf16.gmra.mrb[0].mxu0 %v5630
    %v5983 = vpop.f32.mrb[0].mxu0
    %v5984 = vadd.f32 %v5922, %v5983
    %v5985 = vpop.f32.mrb[0].mxu0
    %v5986 = vadd.f32 %v5926, %v5985
    %v5987 = vpop.f32.mrb[0].mxu0
    %v5988 = vadd.f32 %v5922, %v5987
    %v5989 = vpop.f32.mrb[0].mxu0
    %v5990 = vadd.f32 %v5926, %v5989
    %5991 = vmatprep.mubr.bf16.mxu0 %v5631
    %5992 = vmatmul.mubr.bf16.gmra.mrb[0].mxu0 %v5629
    %v5993 = vpop.f32.mrb[0].mxu0
    %v5994 = vadd.f32 %v5922, %v5993
    %v5995 = vpop.f32.mrb[0].mxu0
    %v5996 = vadd.f32 %v5926, %v5995
    %v5997 = vpop.f32.mrb[0].mxu0
    %v5998 = vpop.f32.mrb[0].mxu0
    %5999 = vdwg.mxu0
    %6000 = vmatprep.subr.bf16.mxu0 %v5758
    %6001 = vmatpush1.bf16.msra.mxu0 %v5757
    %6002 = vmatprep.subr.bf16.mxu0 %v5760
    %6003 = vmatpush1.bf16.msra.mxu0 %v5759
    %6004 = vmatprep.subr.bf16.mxu0 %v5762
    %6005 = vmatpush1.bf16.msra.mxu0 %v5761
    %6006 = vmatprep.subr.bf16.mxu0 %v5764
    %6007 = vmatpush1.bf16.msra.mxu0 %v5763
    %6008 = vmatprep.subr.bf16.mxu0 %v5766
    %6009 = vmatpush1.bf16.msra.mxu0 %v5765
    %6010 = vmatprep.subr.bf16.mxu0 %v5768
    %6011 = vmatpush1.bf16.msra.mxu0 %v5767
    %6012 = vmatprep.subr.bf16.mxu0 %v5770
    %6013 = vmatpush1.bf16.msra.mxu0 %v5769
    %6014 = vmatprep.subr.bf16.mxu0 %v5772
    %6015 = vmatpush1.bf16.msra.mxu0 %v5771
    %6016 = vmatprep.subr.bf16.mxu0 %v5774
    %6017 = vmatpush1.bf16.msra.mxu0 %v5773
    %6018 = vmatprep.subr.bf16.mxu0 %v5776
    %6019 = vmatpush1.bf16.msra.mxu0 %v5775
    %6020 = vmatprep.subr.bf16.mxu0 %v5778
    %6021 = vmatpush1.bf16.msra.mxu0 %v5777
    %6022 = vmatprep.subr.bf16.mxu0 %v5780
    %6023 = vmatpush1.bf16.msra.mxu0 %v5779
    %6024 = vmatprep.subr.bf16.mxu0 %v5782
    %6025 = vmatpush1.bf16.msra.mxu0 %v5781
    %6026 = vmatprep.subr.bf16.mxu0 %v5784
    %6027 = vmatpush1.bf16.msra.mxu0 %v5783
    %6028 = vmatprep.subr.bf16.mxu0 %v5786
    %6029 = vmatpush1.bf16.msra.mxu0 %v5785
    %6030 = vmatprep.subr.bf16.mxu0 %v5788
    %6031 = vmatpush1.bf16.msra.mxu0 %v5787
    %6032 = vmatprep.mubr.bf16.mxu0 %v5563
    %6033 = vmatmul.mubr.bf16.gmra.mrb[0].mxu0 %v5560
    %v6034 = vpop.f32.mrb[0].mxu0
    %v6035 = vadd.f32 %v5964, %v6034
    %v6036 = vpop.f32.mrb[0].mxu0
    %v6037 = vadd.f32 %v5966, %v6036
    %v6038 = vpop.f32.mrb[0].mxu0
    %v6039 = vadd.f32 %v5968, %v6038
    %v6040 = vpop.f32.mrb[0].mxu0
    %v6041 = vadd.f32 %v5970, %v6040
    %6042 = vmatprep.mubr.bf16.mxu0 %v5691
    %6043 = vmatmul.mubr.bf16.gmra.mrb[0].mxu0 %v5687
    %v6044 = vpop.f32.mrb[0].mxu0
    %v6045 = vadd.f32 %v5974, %v6044
    %v6046 = vpop.f32.mrb[0].mxu0
    %v6047 = vadd.f32 %v5976, %v6046
    %v6048 = vpop.f32.mrb[0].mxu0
    %v6049 = vadd.f32 %v5978, %v6048
    %v6050 = vpop.f32.mrb[0].mxu0
    %v6051 = vadd.f32 %v5980, %v6050
    %6052 = vmatprep.mubr.bf16.mxu0 %v5636
    %6053 = vmatmul.mubr.bf16.gmra.mrb[0].mxu0 %v5634
    %v6054 = vpop.f32.mrb[0].mxu0
    %v6055 = vadd.f32 %v5984, %v6054
    %v6056 = vpop.f32.mrb[0].mxu0
    %v6057 = vadd.f32 %v5986, %v6056
    %v6058 = vpop.f32.mrb[0].mxu0
    %v6059 = vadd.f32 %v5988, %v6058
    %v6060 = vpop.f32.mrb[0].mxu0
    %v6061 = vadd.f32 %v5990, %v6060
    %6062 = vmatprep.mubr.bf16.mxu0 %v5635
    %6063 = vmatmul.mubr.bf16.gmra.mrb[0].mxu0 %v5633
    %v6064 = vpop.f32.mrb[0].mxu0
    %v6065 = vadd.f32 %v5994, %v6064
    %v6066 = vpop.f32.mrb[0].mxu0
    %v6067 = vadd.f32 %v5996, %v6066
    %v6068 = vpop.f32.mrb[0].mxu0
    %v6069 = vpop.f32.mrb[0].mxu0
    %6070 = vdwg.mxu0
    %6071 = vmatprep.subr.bf16.mxu0 %v5790
    %6072 = vmatpush1.bf16.msra.mxu0 %v5789
    %6073 = vmatprep.subr.bf16.mxu0 %v5792
    %6074 = vmatpush1.bf16.msra.mxu0 %v5791
    %6075 = vmatprep.subr.bf16.mxu0 %v5794
    %6076 = vmatpush1.bf16.msra.mxu0 %v5793
    %6077 = vmatprep.subr.bf16.mxu0 %v5796
    %6078 = vmatpush1.bf16.msra.mxu0 %v5795
    %6079 = vmatprep.subr.bf16.mxu0 %v5798
    %6080 = vmatpush1.bf16.msra.mxu0 %v5797
    %6081 = vmatprep.subr.bf16.mxu0 %v5800
    %6082 = vmatpush1.bf16.msra.mxu0 %v5799
    %6083 = vmatprep.subr.bf16.mxu0 %v5802
    %6084 = vmatpush1.bf16.msra.mxu0 %v5801
    %6085 = vmatprep.subr.bf16.mxu0 %v5804
    %6086 = vmatpush1.bf16.msra.mxu0 %v5803
    %6087 = vmatprep.subr.bf16.mxu0 %v5806
    %6088 = vmatpush1.bf16.msra.mxu0 %v5805
    %6089 = vmatprep.subr.bf16.mxu0 %v5808
    %6090 = vmatpush1.bf16.msra.mxu0 %v5807
    %6091 = vmatprep.subr.bf16.mxu0 %v5810
    %6092 = vmatpush1.bf16.msra.mxu0 %v5809
    %6093 = vmatprep.subr.bf16.mxu0 %v5812
    %6094 = vmatpush1.bf16.msra.mxu0 %v5811
    %6095 = vmatprep.subr.bf16.mxu0 %v5814
    %6096 = vmatpush1.bf16.msra.mxu0 %v5813
    %6097 = vmatprep.subr.bf16.mxu0 %v5816
    %6098 = vmatpush1.bf16.msra.mxu0 %v5815
    %6099 = vmatprep.subr.bf16.mxu0 %v5818
    %6100 = vmatpush1.bf16.msra.mxu0 %v5817
    %6101 = vmatprep.subr.bf16.mxu0 %v5820
    %6102 = vmatpush1.bf16.msra.mxu0 %v5819
    %6103 = vmatprep.mubr.bf16.mxu0 %v5569
    %6104 = vmatmul.mubr.bf16.gmra.mrb[0].mxu0 %v5566
    %v6105 = vpop.f32.mrb[0].mxu0
    %v6106 = vadd.f32 %v6035, %v6105
    %v6107 = vpop.f32.mrb[0].mxu0
    %v6108 = vadd.f32 %v6037, %v6107
    %v6109 = vpop.f32.mrb[0].mxu0
    %v6110 = vadd.f32 %v6039, %v6109
    %v6111 = vpop.f32.mrb[0].mxu0
    %v6112 = vadd.f32 %v6041, %v6111
    %6113 = vmatprep.mubr.bf16.mxu0 %v5699
    %6114 = vmatmul.mubr.bf16.gmra.mrb[0].mxu0 %v5695
    %v6115 = vpop.f32.mrb[0].mxu0
    %v6116 = vadd.f32 %v6045, %v6115
    %v6117 = vpop.f32.mrb[0].mxu0
    %v6118 = vadd.f32 %v6047, %v6117
    %v6119 = vpop.f32.mrb[0].mxu0
    %v6120 = vadd.f32 %v6049, %v6119
    %v6121 = vpop.f32.mrb[0].mxu0
    %v6122 = vadd.f32 %v6051, %v6121
    %6123 = vmatprep.mubr.bf16.mxu0 %v5640
    %6124 = vmatmul.mubr.bf16.gmra.mrb[0].mxu0 %v5638
    %v6125 = vpop.f32.mrb[0].mxu0
    %v6126 = vadd.f32 %v6055, %v6125
    %v6127 = vpop.f32.mrb[0].mxu0
    %v6128 = vadd.f32 %v6057, %v6127
    %v6129 = vpop.f32.mrb[0].mxu0
    %v6130 = vadd.f32 %v6059, %v6129
    %v6131 = vpop.f32.mrb[0].mxu0
    %v6132 = vadd.f32 %v6061, %v6131
    %6133 = vmatprep.mubr.bf16.mxu0 %v5639
    %6134 = vmatmul.mubr.bf16.gmra.mrb[0].mxu0 %v5637
    %v6135 = vpop.f32.mrb[0].mxu0
    %v6136 = vadd.f32 %v6065, %v6135
    %v6137 = vpop.f32.mrb[0].mxu0
    %v6138 = vadd.f32 %v6067, %v6137
    %v6139 = vpop.f32.mrb[0].mxu0
    %v6140 = vpop.f32.mrb[0].mxu0
    %6141 = vdwg.mxu0
    %6142 = vmatprep.subr.bf16.mxu0 %v5822
    %6143 = vmatpush1.bf16.msra.mxu0 %v5821
    %6144 = vmatprep.subr.bf16.mxu0 %v5824
    %6145 = vmatpush1.bf16.msra.mxu0 %v5823
    %6146 = vmatprep.subr.bf16.mxu0 %v5826
    %6147 = vmatpush1.bf16.msra.mxu0 %v5825
    %6148 = vmatprep.subr.bf16.mxu0 %v5828
    %6149 = vmatpush1.bf16.msra.mxu0 %v5827
    %6150 = vmatprep.subr.bf16.mxu0 %v5830
    %6151 = vmatpush1.bf16.msra.mxu0 %v5829
    %6152 = vmatprep.subr.bf16.mxu0 %v5832
    %6153 = vmatpush1.bf16.msra.mxu0 %v5831
    %6154 = vmatprep.subr.bf16.mxu0 %v5834
    %6155 = vmatpush1.bf16.msra.mxu0 %v5833
    %6156 = vmatprep.subr.bf16.mxu0 %v5836
    %6157 = vmatpush1.bf16.msra.mxu0 %v5835
    %6158 = vmatprep.subr.bf16.mxu0 %v5838
    %6159 = vmatpush1.bf16.msra.mxu0 %v5837
    %6160 = vmatprep.subr.bf16.mxu0 %v5840
    %6161 = vmatpush1.bf16.msra.mxu0 %v5839
    %6162 = vmatprep.subr.bf16.mxu0 %v5842
    %6163 = vmatpush1.bf16.msra.mxu0 %v5841
    %6164 = vmatprep.subr.bf16.mxu0 %v5844
    %6165 = vmatpush1.bf16.msra.mxu0 %v5843
    %6166 = vmatprep.subr.bf16.mxu0 %v5846
    %6167 = vmatpush1.bf16.msra.mxu0 %v5845
    %6168 = vmatprep.subr.bf16.mxu0 %v5848
    %6169 = vmatpush1.bf16.msra.mxu0 %v5847
    %6170 = vmatprep.subr.bf16.mxu0 %v5850
    %6171 = vmatpush1.bf16.msra.mxu0 %v5849
    %6172 = vmatprep.subr.bf16.mxu0 %v5852
    %6173 = vmatpush1.bf16.msra.mxu0 %v5851
    %6174 = vmatprep.mubr.bf16.mxu0 %v5575
    %6175 = vmatmul.mubr.bf16.gmra.mrb[0].mxu0 %v5572
    %v6176 = vpop.f32.mrb[0].mxu0
    %v6177 = vadd.f32 %v6106, %v6176
    %v6178 = vpop.f32.mrb[0].mxu0
    %v6179 = vadd.f32 %v6108, %v6178
    %v6180 = vpop.f32.mrb[0].mxu0
    %v6181 = vadd.f32 %v6110, %v6180
    %v6182 = vpop.f32.mrb[0].mxu0
    %v6183 = vadd.f32 %v6112, %v6182
    %6184 = vmatprep.mubr.bf16.mxu0 %v5707
    %6185 = vmatmul.mubr.bf16.gmra.mrb[0].mxu0 %v5703
    %v6186 = vpop.f32.mrb[0].mxu0
    %v6187 = vadd.f32 %v6116, %v6186
    %v6188 = vpop.f32.mrb[0].mxu0
    %v6189 = vadd.f32 %v6118, %v6188
    %v6190 = vpop.f32.mrb[0].mxu0
    %v6191 = vadd.f32 %v6120, %v6190
    %v6192 = vpop.f32.mrb[0].mxu0
    %v6193 = vadd.f32 %v6122, %v6192
    %6194 = vmatprep.mubr.bf16.mxu0 %v5644
    %6195 = vmatmul.mubr.bf16.gmra.mrb[0].mxu0 %v5642
    %v6196 = vpop.f32.mrb[0].mxu0
    %v6197 = vadd.f32 %v6126, %v6196
    %v6198 = vpop.f32.mrb[0].mxu0
    %v6199 = vadd.f32 %v6128, %v6198
    %v6200 = vpop.f32.mrb[0].mxu0
    %v6201 = vadd.f32 %v6130, %v6200
    %v6202 = vpop.f32.mrb[0].mxu0
    %v6203 = vadd.f32 %v6132, %v6202
    %6204 = vmatprep.mubr.bf16.mxu0 %v5643
    %6205 = vmatmul.mubr.bf16.gmra.mrb[0].mxu0 %v5641
    %v6206 = vpop.f32.mrb[0].mxu0
    %v6207 = vadd.f32 %v6136, %v6206
    %v6208 = vpop.f32.mrb[0].mxu0
    %v6209 = vadd.f32 %v6138, %v6208
    %v6210 = vpop.f32.mrb[0].mxu0
    %v6211 = vpop.f32.mrb[0].mxu0
    %6212 = vdwg.mxu0
    %6213 = vmatprep.subr.bf16.mxu0 %v5854
    %6214 = vmatpush1.bf16.msra.mxu0 %v5853
    %6215 = vmatprep.subr.bf16.mxu0 %v5856
    %6216 = vmatpush1.bf16.msra.mxu0 %v5855
    %6217 = vmatprep.subr.bf16.mxu0 %v5858
    %6218 = vmatpush1.bf16.msra.mxu0 %v5857
    %6219 = vmatprep.subr.bf16.mxu0 %v5860
    %6220 = vmatpush1.bf16.msra.mxu0 %v5859
    %6221 = vmatprep.subr.bf16.mxu0 %v5862
    %6222 = vmatpush1.bf16.msra.mxu0 %v5861
    %6223 = vmatprep.subr.bf16.mxu0 %v5864
    %6224 = vmatpush1.bf16.msra.mxu0 %v5863
    %6225 = vmatprep.subr.bf16.mxu0 %v5866
    %6226 = vmatpush1.bf16.msra.mxu0 %v5865
    %6227 = vmatprep.subr.bf16.mxu0 %v5868
    %6228 = vmatpush1.bf16.msra.mxu0 %v5867
    %6229 = vmatprep.subr.bf16.mxu0 %v5870
    %6230 = vmatpush1.bf16.msra.mxu0 %v5869
    %6231 = vmatprep.subr.bf16.mxu0 %v5872
    %6232 = vmatpush1.bf16.msra.mxu0 %v5871
    %6233 = vmatprep.subr.bf16.mxu0 %v5874
    %6234 = vmatpush1.bf16.msra.mxu0 %v5873
    %6235 = vmatprep.subr.bf16.mxu0 %v5876
    %6236 = vmatpush1.bf16.msra.mxu0 %v5875
    %6237 = vmatprep.subr.bf16.mxu0 %v5878
    %6238 = vmatpush1.bf16.msra.mxu0 %v5877
    %6239 = vmatprep.subr.bf16.mxu0 %v5880
    %6240 = vmatpush1.bf16.msra.mxu0 %v5879
    %6241 = vmatprep.subr.bf16.mxu0 %v5882
    %6242 = vmatpush1.bf16.msra.mxu0 %v5881
    %6243 = vmatprep.subr.bf16.mxu0 %v5884
    %6244 = vmatpush1.bf16.msra.mxu0 %v5883
    %6245 = vmatprep.mubr.bf16.mxu0 %v5581
    %6246 = vmatmul.mubr.bf16.gmra.mrb[0].mxu0 %v5578
    %v6247 = vpop.f32.mrb[0].mxu0
    %v6248 = vadd.f32 %v6177, %v6247
    %v6249 = vpop.f32.mrb[0].mxu0
    %v6250 = vadd.f32 %v6179, %v6249
    %v6251 = vpop.f32.mrb[0].mxu0
    %v6252 = vadd.f32 %v6181, %v6251
    %v6253 = vpop.f32.mrb[0].mxu0
    %v6254 = vadd.f32 %v6183, %v6253
    %6255 = vmatprep.mubr.bf16.mxu0 %v5715
    %6256 = vmatmul.mubr.bf16.gmra.mrb[0].mxu0 %v5711
    %v6257 = vpop.f32.mrb[0].mxu0
    %v6258 = vadd.f32 %v6187, %v6257
    %v6259 = vpop.f32.mrb[0].mxu0
    %v6260 = vadd.f32 %v6189, %v6259
    %v6261 = vpop.f32.mrb[0].mxu0
    %v6262 = vadd.f32 %v6191, %v6261
    %v6263 = vpop.f32.mrb[0].mxu0
    %v6264 = vadd.f32 %v6193, %v6263
    %6265 = vmatprep.mubr.bf16.mxu0 %v5648
    %6266 = vmatmul.mubr.bf16.gmra.mrb[0].mxu0 %v5646
    %v6267 = vpop.f32.mrb[0].mxu0
    %v6268 = vadd.f32 %v6197, %v6267
    %v6269 = vpop.f32.mrb[0].mxu0
    %v6270 = vadd.f32 %v6199, %v6269
    %v6271 = vpop.f32.mrb[0].mxu0
    %v6272 = vadd.f32 %v6201, %v6271
    %v6273 = vpop.f32.mrb[0].mxu0
    %v6274 = vadd.f32 %v6203, %v6273
    %6275 = vmatprep.mubr.bf16.mxu0 %v5647
    %6276 = vmatmul.mubr.bf16.gmra.mrb[0].mxu0 %v5645
    %v6277 = vpop.f32.mrb[0].mxu0
    %v6278 = vadd.f32 %v6207, %v6277
    %v6279 = vpop.f32.mrb[0].mxu0
    %v6280 = vadd.f32 %v6209, %v6279
    %v6281 = vpop.f32.mrb[0].mxu0
    %v6282 = vpop.f32.mrb[0].mxu0
    %6283 = vdwg.mxu0
    %6284 = vmatprep.subr.bf16.mxu0 %v5886
    %6285 = vmatpush1.bf16.msra.mxu0 %v5885
    %6286 = vmatprep.subr.bf16.mxu0 %v5888
    %6287 = vmatpush1.bf16.msra.mxu0 %v5887
    %6288 = vmatprep.subr.bf16.mxu0 %v5890
    %6289 = vmatpush1.bf16.msra.mxu0 %v5889
    %6290 = vmatprep.subr.bf16.mxu0 %v5892
    %6291 = vmatpush1.bf16.msra.mxu0 %v5891
    %6292 = vmatprep.subr.bf16.mxu0 %v5894
    %6293 = vmatpush1.bf16.msra.mxu0 %v5893
    %6294 = vmatprep.subr.bf16.mxu0 %v5896
    %6295 = vmatpush1.bf16.msra.mxu0 %v5895
    %6296 = vmatprep.subr.bf16.mxu0 %v5898
    %6297 = vmatpush1.bf16.msra.mxu0 %v5897
    %6298 = vmatprep.subr.bf16.mxu0 %v5900
    %6299 = vmatpush1.bf16.msra.mxu0 %v5899
    %6300 = vmatprep.subr.bf16.mxu0 %v5902
    %6301 = vmatpush1.bf16.msra.mxu0 %v5901
    %6302 = vmatprep.subr.bf16.mxu0 %v5904
    %6303 = vmatpush1.bf16.msra.mxu0 %v5903
    %6304 = vmatprep.subr.bf16.mxu0 %v5906
    %6305 = vmatpush1.bf16.msra.mxu0 %v5905
    %6306 = vmatprep.subr.bf16.mxu0 %v5908
    %6307 = vmatpush1.bf16.msra.mxu0 %v5907
    %6308 = vmatprep.subr.bf16.mxu0 %v5910
    %6309 = vmatpush1.bf16.msra.mxu0 %v5909
    %6310 = vmatprep.subr.bf16.mxu0 %v5912
    %6311 = vmatpush1.bf16.msra.mxu0 %v5911
    %6312 = vmatprep.subr.bf16.mxu0 %v5914
    %6313 = vmatpush1.bf16.msra.mxu0 %v5913
    %6314 = vmatprep.subr.bf16.mxu0 %v5916
    %6315 = vmatpush1.bf16.msra.mxu0 %v5915
    %6316 = vmatprep.mubr.bf16.mxu0 %v5587
    %6317 = vmatmul.mubr.bf16.gmra.mrb[0].mxu0 %v5584
    %v6318 = vpop.f32.mrb[0].mxu0
    %v6319 = vadd.f32 %v6248, %v6318
    %v6320 = vpop.f32.mrb[0].mxu0
    %v6321 = vadd.f32 %v6250, %v6320
    %v6322 = vpop.f32.mrb[0].mxu0
    %v6323 = vadd.f32 %v6252, %v6322
    %v6324 = vpop.f32.mrb[0].mxu0
    %v6325 = vadd.f32 %v6254, %v6324
    %6326 = vmatprep.mubr.bf16.mxu0 %v5723
    %6327 = vmatmul.mubr.bf16.gmra.mrb[0].mxu0 %v5719
    %v6328 = vpop.f32.mrb[0].mxu0
    %v6329 = vadd.f32 %v6258, %v6328
    %v6330 = vpop.f32.mrb[0].mxu0
    %v6331 = vadd.f32 %v6260, %v6330
    %v6332 = vpop.f32.mrb[0].mxu0
    %v6333 = vadd.f32 %v6262, %v6332
    %v6334 = vpop.f32.mrb[0].mxu0
    %v6335 = vadd.f32 %v6264, %v6334
    %6336 = vmatprep.mubr.bf16.mxu0 %v5652
    %6337 = vmatmul.mubr.bf16.gmra.mrb[0].mxu0 %v5650
    %v6338 = vpop.f32.mrb[0].mxu0
    %v6339 = vadd.f32 %v6268, %v6338
    %v6340 = vpop.f32.mrb[0].mxu0
    %v6341 = vadd.f32 %v6270, %v6340
    %v6342 = vpop.f32.mrb[0].mxu0
    %v6343 = vadd.f32 %v6272, %v6342
    %v6344 = vpop.f32.mrb[0].mxu0
    %v6345 = vadd.f32 %v6274, %v6344
    %6346 = vmatprep.mubr.bf16.mxu0 %v5651
    %6347 = vmatmul.mubr.bf16.gmra.mrb[0].mxu0 %v5649
    %v6348 = vpop.f32.mrb[0].mxu0
    %v6349 = vadd.f32 %v6278, %v6348
    %v6350 = vpop.f32.mrb[0].mxu0
    %v6351 = vadd.f32 %v6280, %v6350
    %v6352 = vpop.f32.mrb[0].mxu0
    %v6353 = vpop.f32.mrb[0].mxu0
    %6354 = vdwg.mxu0
    %v6355 = vadd.f32 %v6319, %v6323
    %v6356 = vadd.f32 %v6355, %v6329
    %v6357 = vadd.f32 %v6356, %v6333
    %v6358 = vadd.f32 %v6357, %v6339
    %v6359 = vadd.f32 %v6358, %v6343
    %v6360 = vadd.f32 %v6359, %v6349
    %v6361 = vrot.slane %v6360, 4
    %v6362 = vadd.f32 %v6360, %v6361
    %v6363 = vrot.slane %v6362, 2
    %v6364 = vadd.f32 %v6362, %v6363
    %v6365 = vrot.slane %v6364, 1
    %v6366 = vadd.f32 %v6364, %v6365
    %v6367 = vadd.f32 %v6321, %v6325
    %v6368 = vadd.f32 %v6367, %v6331
    %v6369 = vadd.f32 %v6368, %v6335
    %v6370 = vadd.f32 %v6369, %v6341
    %v6371 = vadd.f32 %v6370, %v6345
    %v6372 = vadd.f32 %v6371, %v6351
    %v6373 = vrot.slane %v6372, 4
    %v6374 = vadd.f32 %v6372, %v6373
    %v6375 = vrot.slane %v6374, 2
    %v6376 = vadd.f32 %v6374, %v6375
    %v6377 = vrot.slane %v6376, 1
    %v6378 = vadd.f32 %v6376, %v6377
    %v6379 = vrcp.pop 56.0
    %v6380 = vmul.f32 %v6366, %v6379
    %v6381 = vmul.f32 %v6378, %v6379
    %v6382 = vsub.f32 %v6319, %v6380
    %v6383 = vsub.f32 %v6321, %v6381
    %v6384 = vsub.f32 %v6323, %v6380
    %v6385 = vsub.f32 %v6325, %v6381
    %v6386 = vsub.f32 %v6329, %v6380
    %v6387 = vsub.f32 %v6331, %v6381
    %v6388 = vsub.f32 %v6333, %v6380
    %v6389 = vsub.f32 %v6335, %v6381
    %v6390 = vsub.f32 %v6339, %v6380
    %v6391 = vsub.f32 %v6341, %v6381
    %v6392 = vsub.f32 %v6343, %v6380
    %v6393 = vsub.f32 %v6345, %v6381
    %v6394 = vsub.f32 %v6349, %v6380
    %v6395 = vsub.f32 %v6351, %v6381
    %v6396 = vmul.f32 %v6382, %v6382
    %v6397 = vmul.f32 %v6383, %v6383
    %v6398 = vmul.f32 %v6384, %v6384
    %v6399 = vmul.f32 %v6385, %v6385
    %v6400 = vmul.f32 %v6386, %v6386
    %v6401 = vmul.f32 %v6387, %v6387
    %v6402 = vmul.f32 %v6388, %v6388
    %v6403 = vmul.f32 %v6389, %v6389
    %v6404 = vmul.f32 %v6390, %v6390
    %v6405 = vmul.f32 %v6391, %v6391
    %v6406 = vmul.f32 %v6392, %v6392
    %v6407 = vmul.f32 %v6393, %v6393
    %v6408 = vmul.f32 %v6394, %v6394
    %v6409 = vmul.f32 %v6395, %v6395
    %v6410 = vadd.f32 %v6396, %v6398
    %v6411 = vadd.f32 %v6410, %v6400
    %v6412 = vadd.f32 %v6411, %v6402
    %v6413 = vadd.f32 %v6412, %v6404
    %v6414 = vadd.f32 %v6413, %v6406
    %v6415 = vadd.f32 %v6414, %v6408
    %v6416 = vrot.slane %v6415, 4
    %v6417 = vadd.f32 %v6415, %v6416
    %v6418 = vrot.slane %v6417, 2
    %v6419 = vadd.f32 %v6417, %v6418
    %v6420 = vrot.slane %v6419, 1
    %v6421 = vadd.f32 %v6419, %v6420
    %v6422 = vadd.f32 %v6397, %v6399
    %v6423 = vadd.f32 %v6422, %v6401
    %v6424 = vadd.f32 %v6423, %v6403
    %v6425 = vadd.f32 %v6424, %v6405
    %v6426 = vadd.f32 %v6425, %v6407
    %v6427 = vadd.f32 %v6426, %v6409
    %v6428 = vrot.slane %v6427, 4
    %v6429 = vadd.f32 %v6427, %v6428
    %v6430 = vrot.slane %v6429, 2
    %v6431 = vadd.f32 %v6429, %v6430
    %v6432 = vrot.slane %v6431, 1
    %v6433 = vadd.f32 %v6431, %v6432
    %v6434 = vmul.f32 %v6421, %v6379
    %v6435 = vmul.f32 %v6433, %v6379
    %v6436 = vld [vmem:[%s16] sm:$0x3]
    %v6437 = vadd.f32 %v6434, 1e-05
    %v6438 = vadd.f32 %v6435, 1e-05
    %v6439 = vrsqrt.pop %v6437
    %v6440 = vmul.f32 %v6437, %v6439
    %vm6441 = vcmp.eq.f32.partialorder %v6437, inf
    %v6442 = vsel %vm6441, %v6437, %v6440
    %vm6443 = vcmp.eq.f32.partialorder %v6437, 0.0
    %v6444 = vand.u32 %v6437, 2147483648
    %v6445 = vsel %vm6443, %v6444, %v6442
    %v6446 = vrsqrt.pop %v6438
    %v6447 = vmul.f32 %v6438, %v6446
    %vm6448 = vcmp.eq.f32.partialorder %v6438, inf
    %v6449 = vsel %vm6448, %v6438, %v6447
    %vm6450 = vcmp.eq.f32.partialorder %v6438, 0.0
    %v6451 = vand.u32 %v6438, 2147483648
    %v6452 = vsel %vm6450, %v6451, %v6449
    %v6455 = vcombine.low %v6445, %v6452
    %v6457 = vunpack.c.l.s4 1966171168
    %v6458 = vunpack.c.0.s8 %v6457
    %v6459 = vlaneseq
    %v6460 = vshrl.u32 %v6459, 7
    %v6461 = vsub.s32 %v6458, %v6460
    %v6462 = vrot.slane %v6455, %v6461
    %v6464 = vunpack.c.l.s4 1966171168
    %v6465 = vunpack.c.0.s8 %v6464
    %v6466 = vlaneseq
    %v6467 = vshrl.u32 %v6466, 7
    %v6468 = vsub.s32 %v6465, %v6467
    %v6469 = vrot.slane %v6462, %v6468
    %v6471 = vrcp.pop %v6469
    %v6472 = vmul.f32 %v6436, %v6471
    %v6474 = vlaneseq
    %v6475 = vshrl.u32 %v6474, 7
    %v6476 = vsub.s32 0, %v6475
    %v6477 = vrot.slane %v6472, %v6476
    %v6478 = vlaneseq
    %v6479 = vshrl.u32 %v6478, 7
    %v6480 = vsub.s32 1, %v6479
    %v6481 = vrot.slane %v6472, %v6480
    %v6484 = vmul.f32 %v6382, %v6477
    %v6485 = vmul.f32 %v6383, %v6481
    %v6486 = vmul.f32 %v6384, %v6477
    %v6487 = vmul.f32 %v6385, %v6481
    %v6488 = vmul.f32 %v6386, %v6477
    %v6489 = vmul.f32 %v6387, %v6481
    %v6490 = vmul.f32 %v6388, %v6477
    %v6491 = vmul.f32 %v6389, %v6481
    %v6492 = vmul.f32 %v6390, %v6477
    %v6493 = vmul.f32 %v6391, %v6481
    %v6494 = vmul.f32 %v6392, %v6477
    %v6495 = vmul.f32 %v6393, %v6481
    %v6496 = vmul.f32 %v6394, %v6477
    %v6497 = vmul.f32 %v6395, %v6481
    %v6498 = vld [vmem:[%s17] sm:$0x3]
    %v6500 = vlaneseq
    %v6501 = vshrl.u32 %v6500, 7
    %v6502 = vsub.s32 0, %v6501
    %v6503 = vrot.slane %v6498, %v6502
    %v6504 = vlaneseq
    %v6505 = vshrl.u32 %v6504, 7
    %v6506 = vsub.s32 1, %v6505
    %v6507 = vrot.slane %v6498, %v6506
    %v6510 = vadd.f32 %v6484, %v6503
    %v6511 = vadd.f32 %v6485, %v6507
    %v6512 = vadd.f32 %v6486, %v6503
    %v6513 = vadd.f32 %v6487, %v6507
    %v6514 = vadd.f32 %v6488, %v6503
    %v6515 = vadd.f32 %v6489, %v6507
    %v6516 = vadd.f32 %v6490, %v6503
    %v6517 = vadd.f32 %v6491, %v6507
    %v6518 = vadd.f32 %v6492, %v6503
    %v6519 = vadd.f32 %v6493, %v6507
    %v6520 = vadd.f32 %v6494, %v6503
    %v6521 = vadd.f32 %v6495, %v6507
    %v6522 = vadd.f32 %v6496, %v6503
    %v6523 = vadd.f32 %v6497, %v6507
    %v6524 = vmax.f32 %v6510, 0.0
    %v6525 = vmax.f32 %v6511, 0.0
    %v6526 = vmax.f32 %v6512, 0.0
    %v6527 = vmax.f32 %v6513, 0.0
    %v6528 = vmax.f32 %v6514, 0.0
    %v6529 = vmax.f32 %v6515, 0.0
    %v6530 = vmax.f32 %v6516, 0.0
    %v6531 = vmax.f32 %v6517, 0.0
    %v6532 = vmax.f32 %v6518, 0.0
    %v6533 = vmax.f32 %v6519, 0.0
    %v6534 = vmax.f32 %v6520, 0.0
    %v6535 = vmax.f32 %v6521, 0.0
    %v6536 = vmax.f32 %v6522, 0.0
    %v6537 = vmax.f32 %v6523, 0.0
    %v6538 = vadd.f32 %v6524, %v6526
    %v6539 = vadd.f32 %v6538, %v6528
    %v6540 = vsel %vm4373, %v6530, 0.0
    %v6541 = vadd.f32 %v6539, %v6540
    %v6542 = vrot.slane %v6541, 4
    %v6543 = vadd.f32 %v6541, %v6542
    %v6544 = vrot.slane %v6543, 2
    %v6545 = vadd.f32 %v6543, %v6544
    %v6546 = vrot.slane %v6545, 1
    %v6547 = vadd.f32 %v6545, %v6546
    %v6548 = vadd.f32 %v6525, %v6527
    %v6549 = vadd.f32 %v6548, %v6529
    %v6550 = vsel %vm4373, %v6531, 0.0
    %v6551 = vadd.f32 %v6549, %v6550
    %v6552 = vrot.slane %v6551, 4
    %v6553 = vadd.f32 %v6551, %v6552
    %v6554 = vrot.slane %v6553, 2
    %v6555 = vadd.f32 %v6553, %v6554
    %v6556 = vrot.slane %v6555, 1
    %v6557 = vadd.f32 %v6555, %v6556
    %v6558 = vrcp.pop 28.0
    %v6559 = vmul.f32 %v6547, %v6558
    %v6560 = vmul.f32 %v6557, %v6558
    %v6569 = vrot.slane %v6530, 4
    %v6570 = vrot.slane %v6532, 4
    %v6571 = vsel %vm4373, %v6569, %v6570
    %v6572 = vrot.slane %v6531, 4
    %v6573 = vrot.slane %v6533, 4
    %v6574 = vsel %vm4373, %v6572, %v6573
    %v6575 = vrot.slane %v6534, 4
    %v6576 = vsel %vm4373, %v6570, %v6575
    %v6577 = vrot.slane %v6535, 4
    %v6578 = vsel %vm4373, %v6573, %v6577
    %v6579 = vrot.slane %v6536, 4
    %v6580 = vsel %vm4373, %v6575, %v6579
    %v6581 = vrot.slane %v6537, 4
    %v6582 = vsel %vm4373, %v6577, %v6581
    %v6591 = vadd.f32 %v6571, %v6576
    %v6592 = vadd.f32 %v6591, %v6580
    %v6593 = vsel %vm4373, %v6579, 0.0
    %v6594 = vadd.f32 %v6592, %v6593
    %v6595 = vrot.slane %v6594, 4
    %v6596 = vadd.f32 %v6594, %v6595
    %v6597 = vrot.slane %v6596, 2
    %v6598 = vadd.f32 %v6596, %v6597
    %v6599 = vrot.slane %v6598, 1
    %v6600 = vadd.f32 %v6598, %v6599
    %v6601 = vadd.f32 %v6574, %v6578
    %v6602 = vadd.f32 %v6601, %v6582
    %v6603 = vsel %vm4373, %v6581, 0.0
    %v6604 = vadd.f32 %v6602, %v6603
    %v6605 = vrot.slane %v6604, 4
    %v6606 = vadd.f32 %v6604, %v6605
    %v6607 = vrot.slane %v6606, 2
    %v6608 = vadd.f32 %v6606, %v6607
    %v6609 = vrot.slane %v6608, 1
    %v6610 = vadd.f32 %v6608, %v6609
    %v6611 = vmul.f32 %v6600, %v6558
    %v6612 = vmul.f32 %v6610, %v6558
    %vm6613 = vcmask 1040384
    %v6614 = vsel %vm6613, %v6559, %v6611
    %v6615 = vsel %vm6613, %v6560, %v6612
    %v6616 = vld [vmem:[%s1] sm:$0x3]
    %v6617 = vpack.c.bf16 %v6614, %v6614
    %v6618 = vpack.c.bf16 %v6615, %v6615
    %v6619 = vld [vmem:[%s18] sm:$0xff]
    %v6620 = vld [vmem:[%s18 + $0x8] sm:$0xff]
    %v6621 = vld [vmem:[%s18 + $0x10] sm:$0xff]
    %v6622 = vld [vmem:[%s18 + $0x18] sm:$0xff]
    %v6623 = vld [vmem:[%s18 + $0x20] sm:$0xff]
    %v6624 = vld [vmem:[%s18 + $0x28] sm:$0xff]
    %v6625 = vld [vmem:[%s18 + $0x30] sm:$0xff]
    %v6626 = vld [vmem:[%s18 + $0x38] sm:$0xff]
    %v6627 = vld [vmem:[%s18 + $0x40] sm:$0xff]
    %v6628 = vld [vmem:[%s18 + $0x48] sm:$0xff]
    %v6629 = vld [vmem:[%s18 + $0x50] sm:$0xff]
    %v6630 = vld [vmem:[%s18 + $0x58] sm:$0xff]
    %v6631 = vld [vmem:[%s18 + $0x60] sm:$0xff]
    %v6632 = vld [vmem:[%s18 + $0x68] sm:$0xff]
    %v6633 = vld [vmem:[%s18 + $0x70] sm:$0xff]
    %v6634 = vld [vmem:[%s18 + $0x78] sm:$0xff]
    %v6635 = vld [vmem:[%s18 + $0x80] sm:$0xff]
    %v6636 = vld [vmem:[%s18 + $0x88] sm:$0xff]
    %v6637 = vld [vmem:[%s18 + $0x90] sm:$0xff]
    %v6638 = vld [vmem:[%s18 + $0x98] sm:$0xff]
    %v6639 = vld [vmem:[%s18 + $0xa0] sm:$0xff]
    %v6640 = vld [vmem:[%s18 + $0xa8] sm:$0xff]
    %v6641 = vld [vmem:[%s18 + $0xb0] sm:$0xff]
    %v6642 = vld [vmem:[%s18 + $0xb8] sm:$0xff]
    %v6643 = vld [vmem:[%s18 + $0xc0] sm:$0xff]
    %v6644 = vld [vmem:[%s18 + $0xc8] sm:$0xff]
    %v6645 = vld [vmem:[%s18 + $0xd0] sm:$0xff]
    %v6646 = vld [vmem:[%s18 + $0xd8] sm:$0xff]
    %v6647 = vld [vmem:[%s18 + $0xe0] sm:$0xff]
    %v6648 = vld [vmem:[%s18 + $0xe8] sm:$0xff]
    %v6649 = vld [vmem:[%s18 + $0xf0] sm:$0xff]
    %v6650 = vld [vmem:[%s18 + $0xf8] sm:$0xff]
    %v6651 = vld [vmem:[%s19] ss:$2 sm:$0x3]
    %6653 = vset.pattern.permute.xlu0 0
    %6654 = vperm.xlu0 %6653, %v6616
    %v6655 = vpop.permute.xlu0 %6654
    %v6658 = vlaneseq
    %v6659 = vshrl.u32 %v6658, 7
    %v6660 = vsub.s32 0, %v6659
    %v6661 = vrot.slane %v6651, %v6660
    %v6662 = vlaneseq
    %v6663 = vshrl.u32 %v6662, 7
    %v6664 = vsub.s32 1, %v6663
    %v6665 = vrot.slane %v6651, %v6664
    %v6668 = vmul.f32 %v6655, %v6661
    %v6669 = vmul.f32 %v6655, %v6665
    %v6702 = vunpack.c.l.b16 %v6619
    %v6703 = vunpack.c.h.b16 %v6619
    %v6704 = vunpack.c.l.b16 %v6620
    %v6705 = vunpack.c.h.b16 %v6620
    %v6706 = vunpack.c.l.b16 %v6621
    %v6707 = vunpack.c.h.b16 %v6621
    %v6708 = vunpack.c.l.b16 %v6622
    %v6709 = vunpack.c.h.b16 %v6622
    %v6710 = vunpack.c.l.b16 %v6623
    %v6711 = vunpack.c.h.b16 %v6623
    %v6712 = vunpack.c.l.b16 %v6624
    %v6713 = vunpack.c.h.b16 %v6624
    %v6714 = vunpack.c.l.b16 %v6625
    %v6715 = vunpack.c.h.b16 %v6625
    %v6716 = vunpack.c.l.b16 %v6626
    %v6717 = vunpack.c.h.b16 %v6626
    %v6718 = vunpack.c.l.b16 %v6627
    %v6719 = vunpack.c.h.b16 %v6627
    %v6720 = vunpack.c.l.b16 %v6628
    %v6721 = vunpack.c.h.b16 %v6628
    %v6722 = vunpack.c.l.b16 %v6629
    %v6723 = vunpack.c.h.b16 %v6629
    %v6724 = vunpack.c.l.b16 %v6630
    %v6725 = vunpack.c.h.b16 %v6630
    %v6726 = vunpack.c.l.b16 %v6631
    %v6727 = vunpack.c.h.b16 %v6631
    %v6728 = vunpack.c.l.b16 %v6632
    %v6729 = vunpack.c.h.b16 %v6632
    %v6730 = vunpack.c.l.b16 %v6633
    %v6731 = vunpack.c.h.b16 %v6633
    %v6732 = vunpack.c.l.b16 %v6634
    %v6733 = vunpack.c.h.b16 %v6634
    %v6734 = vunpack.c.l.b16 %v6635
    %v6735 = vunpack.c.h.b16 %v6635
    %v6736 = vunpack.c.l.b16 %v6636
    %v6737 = vunpack.c.h.b16 %v6636
    %v6738 = vunpack.c.l.b16 %v6637
    %v6739 = vunpack.c.h.b16 %v6637
    %v6740 = vunpack.c.l.b16 %v6638
    %v6741 = vunpack.c.h.b16 %v6638
    %v6742 = vunpack.c.l.b16 %v6639
    %v6743 = vunpack.c.h.b16 %v6639
    %v6744 = vunpack.c.l.b16 %v6640
    %v6745 = vunpack.c.h.b16 %v6640
    %v6746 = vunpack.c.l.b16 %v6641
    %v6747 = vunpack.c.h.b16 %v6641
    %v6748 = vunpack.c.l.b16 %v6642
    %v6749 = vunpack.c.h.b16 %v6642
    %v6750 = vunpack.c.l.b16 %v6643
    %v6751 = vunpack.c.h.b16 %v6643
    %v6752 = vunpack.c.l.b16 %v6644
    %v6753 = vunpack.c.h.b16 %v6644
    %v6754 = vunpack.c.l.b16 %v6645
    %v6755 = vunpack.c.h.b16 %v6645
    %v6756 = vunpack.c.l.b16 %v6646
    %v6757 = vunpack.c.h.b16 %v6646
    %v6758 = vunpack.c.l.b16 %v6647
    %v6759 = vunpack.c.h.b16 %v6647
    %v6760 = vunpack.c.l.b16 %v6648
    %v6761 = vunpack.c.h.b16 %v6648
    %v6762 = vunpack.c.l.b16 %v6649
    %v6763 = vunpack.c.h.b16 %v6649
    %v6764 = vunpack.c.l.b16 %v6650
    %v6765 = vunpack.c.h.b16 %v6650
    %v6766 = vpack.c.b16 %v6704, %v6702
    %v6767 = vpack.c.b16 %v6705, %v6703
    %v6768 = vpack.c.b16 %v6708, %v6706
    %v6769 = vpack.c.b16 %v6709, %v6707
    %v6770 = vpack.c.b16 %v6712, %v6710
    %v6771 = vpack.c.b16 %v6713, %v6711
    %v6772 = vpack.c.b16 %v6716, %v6714
    %v6773 = vpack.c.b16 %v6717, %v6715
    %v6774 = vpack.c.b16 %v6720, %v6718
    %v6775 = vpack.c.b16 %v6721, %v6719
    %v6776 = vpack.c.b16 %v6724, %v6722
    %v6777 = vpack.c.b16 %v6725, %v6723
    %v6778 = vpack.c.b16 %v6728, %v6726
    %v6779 = vpack.c.b16 %v6729, %v6727
    %v6780 = vpack.c.b16 %v6732, %v6730
    %v6781 = vpack.c.b16 %v6733, %v6731
    %v6782 = vpack.c.b16 %v6736, %v6734
    %v6783 = vpack.c.b16 %v6737, %v6735
    %v6784 = vpack.c.b16 %v6740, %v6738
    %v6785 = vpack.c.b16 %v6741, %v6739
    %v6786 = vpack.c.b16 %v6744, %v6742
    %v6787 = vpack.c.b16 %v6745, %v6743
    %v6788 = vpack.c.b16 %v6748, %v6746
    %v6789 = vpack.c.b16 %v6749, %v6747
    %v6790 = vpack.c.b16 %v6752, %v6750
    %v6791 = vpack.c.b16 %v6753, %v6751
    %v6792 = vpack.c.b16 %v6756, %v6754
    %v6793 = vpack.c.b16 %v6757, %v6755
    %v6794 = vpack.c.b16 %v6760, %v6758
    %v6795 = vpack.c.b16 %v6761, %v6759
    %v6796 = vpack.c.b16 %v6764, %v6762
    %v6797 = vpack.c.b16 %v6765, %v6763
    %6830 = vmatprep.subr.bf16.mxu0 %v6767
    %6831 = vmatpush1.bf16.msra.mxu0 %v6766
    %6832 = vmatprep.subr.bf16.mxu0 %v6769
    %6833 = vmatpush1.bf16.msra.mxu0 %v6768
    %6834 = vmatprep.subr.bf16.mxu0 %v6771
    %6835 = vmatpush1.bf16.msra.mxu0 %v6770
    %6836 = vmatprep.subr.bf16.mxu0 %v6773
    %6837 = vmatpush1.bf16.msra.mxu0 %v6772
    %6838 = vmatprep.subr.bf16.mxu0 %v6775
    %6839 = vmatpush1.bf16.msra.mxu0 %v6774
    %6840 = vmatprep.subr.bf16.mxu0 %v6777
    %6841 = vmatpush1.bf16.msra.mxu0 %v6776
    %6842 = vmatprep.subr.bf16.mxu0 %v6779
    %6843 = vmatpush1.bf16.msra.mxu0 %v6778
    %6844 = vmatprep.subr.bf16.mxu0 %v6781
    %6845 = vmatpush1.bf16.msra.mxu0 %v6780
    %6846 = vmatprep.subr.bf16.mxu0 %v6783
    %6847 = vmatpush1.bf16.msra.mxu0 %v6782
    %6848 = vmatprep.subr.bf16.mxu0 %v6785
    %6849 = vmatpush1.bf16.msra.mxu0 %v6784
    %6850 = vmatprep.subr.bf16.mxu0 %v6787
    %6851 = vmatpush1.bf16.msra.mxu0 %v6786
    %6852 = vmatprep.subr.bf16.mxu0 %v6789
    %6853 = vmatpush1.bf16.msra.mxu0 %v6788
    %6854 = vmatprep.subr.bf16.mxu0 %v6791
    %6855 = vmatpush1.bf16.msra.mxu0 %v6790
    %6856 = vmatprep.subr.bf16.mxu0 %v6793
    %6857 = vmatpush1.bf16.msra.mxu0 %v6792
    %6858 = vmatprep.subr.bf16.mxu0 %v6795
    %6859 = vmatpush1.bf16.msra.mxu0 %v6794
    %6860 = vmatprep.subr.bf16.mxu0 %v6797
    %6861 = vmatpush1.bf16.msra.mxu0 %v6796
    %6862 = vmatprep.mubr.bf16.mxu0 %v6618
    %6863 = vmatmul.mubr.bf16.gmra.mrb[0].mxu0 %v6617
    %v6864 = vpop.f32.mrb[0].mxu0
    %v6865 = vadd.f32 %v6668, %v6864
    %v6866 = vpop.f32.mrb[0].mxu0
    %v6867 = vadd.f32 %v6669, %v6866
    %v6868 = vpop.f32.mrb[0].mxu0
    %v6869 = vpop.f32.mrb[0].mxu0
    %6870 = vdwg.mxu0
    %s6871 = scalar_lea.vmem %s19, 1
    %v6872 = vld [vmem:[%s6871] ss:$2 sm:$0x3]
    %6873 = vset.pattern.permute.xlu0 1
    %6874 = vperm.xlu0 %6873, %v6616
    %v6875 = vpop.permute.xlu0 %6874
    %v6878 = vlaneseq
    %v6879 = vshrl.u32 %v6878, 7
    %v6880 = vsub.s32 0, %v6879
    %v6881 = vrot.slane %v6872, %v6880
    %v6882 = vlaneseq
    %v6883 = vshrl.u32 %v6882, 7
    %v6884 = vsub.s32 1, %v6883
    %v6885 = vrot.slane %v6872, %v6884
    %v6888 = vmul.f32 %v6875, %v6881
    %v6889 = vmul.f32 %v6875, %v6885
    %v6890 = vadd.f32 %v6865, %v6888
    %v6891 = vadd.f32 %v6867, %v6889
    %v6892 = vld [vmem:[%s20] sm:$0x3]
    %v6894 = vlaneseq
    %v6895 = vshrl.u32 %v6894, 7
    %v6896 = vsub.s32 0, %v6895
    %v6897 = vrot.slane %v6892, %v6896
    %v6898 = vlaneseq
    %v6899 = vshrl.u32 %v6898, 7
    %v6900 = vsub.s32 1, %v6899
    %v6901 = vrot.slane %v6892, %v6900
    %v6904 = vadd.f32 %v6890, %v6897
    %v6905 = vadd.f32 %v6891, %v6901
    %vm6906 = vcmask 1041408
    %v6907 = vsel %vm6906, %v6904, 0.0
    %v6908 = vrot.slane %v6907, 4
    %v6909 = vadd.f32 %v6907, %v6908
    %v6910 = vrot.slane %v6909, 2
    %v6911 = vadd.f32 %v6909, %v6910
    %v6912 = vrot.slane %v6911, 1
    %v6913 = vadd.f32 %v6911, %v6912
    %v6914 = vsel %vm6906, %v6905, 0.0
    %v6915 = vrot.slane %v6914, 4
    %v6916 = vadd.f32 %v6914, %v6915
    %v6917 = vrot.slane %v6916, 2
    %v6918 = vadd.f32 %v6916, %v6917
    %v6919 = vrot.slane %v6918, 1
    %v6920 = vadd.f32 %v6918, %v6919
    %v6921 = vrcp.pop 2.0
    %v6922 = vmul.f32 %v6913, %v6921
    %v6923 = vmul.f32 %v6920, %v6921
    %v6924 = vsub.f32 %v6904, %v6922
    %v6925 = vsub.f32 %v6905, %v6923
    %v6926 = vmul.f32 %v6924, %v6924
    %v6927 = vmul.f32 %v6925, %v6925
    %v6928 = vsel %vm6906, %v6926, 0.0
    %v6929 = vrot.slane %v6928, 4
    %v6930 = vadd.f32 %v6928, %v6929
    %v6931 = vrot.slane %v6930, 2
    %v6932 = vadd.f32 %v6930, %v6931
    %v6933 = vrot.slane %v6932, 1
    %v6934 = vadd.f32 %v6932, %v6933
    %v6935 = vsel %vm6906, %v6927, 0.0
    %v6936 = vrot.slane %v6935, 4
    %v6937 = vadd.f32 %v6935, %v6936
    %v6938 = vrot.slane %v6937, 2
    %v6939 = vadd.f32 %v6937, %v6938
    %v6940 = vrot.slane %v6939, 1
    %v6941 = vadd.f32 %v6939, %v6940
    %v6942 = vmul.f32 %v6934, %v6921
    %v6943 = vmul.f32 %v6941, %v6921
    %v6944 = vld [vmem:[%s21] sm:$0x3]
    %v6945 = vadd.f32 %v6942, 1e-05
    %v6946 = vadd.f32 %v6943, 1e-05
    %v6947 = vrsqrt.pop %v6945
    %v6948 = vmul.f32 %v6945, %v6947
    %vm6949 = vcmp.eq.f32.partialorder %v6945, inf
    %v6950 = vsel %vm6949, %v6945, %v6948
    %vm6951 = vcmp.eq.f32.partialorder %v6945, 0.0
    %v6952 = vand.u32 %v6945, 2147483648
    %v6953 = vsel %vm6951, %v6952, %v6950
    %v6954 = vrsqrt.pop %v6946
    %v6955 = vmul.f32 %v6946, %v6954
    %vm6956 = vcmp.eq.f32.partialorder %v6946, inf
    %v6957 = vsel %vm6956, %v6946, %v6955
    %vm6958 = vcmp.eq.f32.partialorder %v6946, 0.0
    %v6959 = vand.u32 %v6946, 2147483648
    %v6960 = vsel %vm6958, %v6959, %v6957
    %v6963 = vcombine.low %v6953, %v6960
    %v6965 = vunpack.c.l.s4 1966171168
    %v6966 = vunpack.c.0.s8 %v6965
    %v6967 = vlaneseq
    %v6968 = vshrl.u32 %v6967, 7
    %v6969 = vsub.s32 %v6966, %v6968
    %v6970 = vrot.slane %v6963, %v6969
    %v6972 = vunpack.c.l.s4 1966171168
    %v6973 = vunpack.c.0.s8 %v6972
    %v6974 = vlaneseq
    %v6975 = vshrl.u32 %v6974, 7
    %v6976 = vsub.s32 %v6973, %v6975
    %v6977 = vrot.slane %v6970, %v6976
    %v6979 = vrcp.pop %v6977
    %v6980 = vmul.f32 %v6944, %v6979
    %v6982 = vlaneseq
    %v6983 = vshrl.u32 %v6982, 7
    %v6984 = vsub.s32 0, %v6983
    %v6985 = vrot.slane %v6980, %v6984
    %v6986 = vlaneseq
    %v6987 = vshrl.u32 %v6986, 7
    %v6988 = vsub.s32 1, %v6987
    %v6989 = vrot.slane %v6980, %v6988
    %v6992 = vmul.f32 %v6924, %v6985
    %v6993 = vmul.f32 %v6925, %v6989
    %v6994 = vld [vmem:[%s22] sm:$0x3]
    %v6996 = vlaneseq
    %v6997 = vshrl.u32 %v6996, 7
    %v6998 = vsub.s32 0, %v6997
    %v6999 = vrot.slane %v6994, %v6998
    %v7000 = vlaneseq
    %v7001 = vshrl.u32 %v7000, 7
    %v7002 = vsub.s32 1, %v7001
    %v7003 = vrot.slane %v6994, %v7002
    %v7006 = vadd.f32 %v6992, %v6999
    %v7007 = vadd.f32 %v6993, %v7003
    %v7008 = vmax.f32 %v7006, 0.0
    %v7009 = vmax.f32 %v7007, 0.0
    %v7010 = vpack.c.bf16 %v7008, %v7008
    %v7011 = vpack.c.bf16 %v7009, %v7009
    %v7012 = vld [vmem:[%s23] sm:$0xf]
    %v7013 = vld [vmem:[%s23 + $0x4] sm:$0xf]
    %v7014 = vld [vmem:[%s23 + $0x8] sm:$0xf]
    %v7015 = vld [vmem:[%s23 + $0xc] sm:$0xf]
    %v7016 = vld [vmem:[%s23 + $0x10] sm:$0xf]
    %v7017 = vld [vmem:[%s23 + $0x14] sm:$0xf]
    %v7018 = vld [vmem:[%s23 + $0x18] sm:$0xf]
    %v7019 = vld [vmem:[%s23 + $0x1c] sm:$0xf]
    %v7020 = vld [vmem:[%s23 + $0x20] sm:$0xf]
    %v7021 = vld [vmem:[%s23 + $0x24] sm:$0xf]
    %v7022 = vld [vmem:[%s23 + $0x28] sm:$0xf]
    %v7023 = vld [vmem:[%s23 + $0x2c] sm:$0xf]
    %v7024 = vld [vmem:[%s23 + $0x30] sm:$0xf]
    %v7025 = vld [vmem:[%s23 + $0x34] sm:$0xf]
    %v7026 = vld [vmem:[%s23 + $0x38] sm:$0xf]
    %v7027 = vld [vmem:[%s23 + $0x3c] sm:$0xf]
    %v7028 = vld [vmem:[%s23 + $0x40] sm:$0xf]
    %v7029 = vld [vmem:[%s23 + $0x44] sm:$0xf]
    %v7030 = vld [vmem:[%s23 + $0x48] sm:$0xf]
    %v7031 = vld [vmem:[%s23 + $0x4c] sm:$0xf]
    %v7032 = vld [vmem:[%s23 + $0x50] sm:$0xf]
    %v7033 = vld [vmem:[%s23 + $0x54] sm:$0xf]
    %v7034 = vld [vmem:[%s23 + $0x58] sm:$0xf]
    %v7035 = vld [vmem:[%s23 + $0x5c] sm:$0xf]
    %v7036 = vld [vmem:[%s23 + $0x60] sm:$0xf]
    %v7037 = vld [vmem:[%s23 + $0x64] sm:$0xf]
    %v7038 = vld [vmem:[%s23 + $0x68] sm:$0xf]
    %v7039 = vld [vmem:[%s23 + $0x6c] sm:$0xf]
    %v7040 = vld [vmem:[%s23 + $0x70] sm:$0xf]
    %v7041 = vld [vmem:[%s23 + $0x74] sm:$0xf]
    %v7042 = vld [vmem:[%s23 + $0x78] sm:$0xf]
    %v7043 = vld [vmem:[%s23 + $0x7c] sm:$0xf]
    %v7044 = vld [vmem:[%s24] sm:$0x1]
    %v7046 = vlaneseq
    %v7047 = vshrl.u32 %v7046, 7
    %v7048 = vsub.s32 0, %v7047
    %v7049 = vrot.slane %v7044, %v7048
    %v7083 = vunpack.c.l.b16 %v7012
    %v7084 = vunpack.c.l.b16 %v7013
    %v7085 = vunpack.c.l.b16 %v7014
    %v7086 = vunpack.c.l.b16 %v7015
    %v7087 = vunpack.c.l.b16 %v7016
    %v7088 = vunpack.c.l.b16 %v7017
    %v7089 = vunpack.c.l.b16 %v7018
    %v7090 = vunpack.c.l.b16 %v7019
    %v7091 = vunpack.c.l.b16 %v7020
    %v7092 = vunpack.c.l.b16 %v7021
    %v7093 = vunpack.c.l.b16 %v7022
    %v7094 = vunpack.c.l.b16 %v7023
    %v7095 = vunpack.c.l.b16 %v7024
    %v7096 = vunpack.c.l.b16 %v7025
    %v7097 = vunpack.c.l.b16 %v7026
    %v7098 = vunpack.c.l.b16 %v7027
    %v7099 = vunpack.c.l.b16 %v7028
    %v7100 = vunpack.c.l.b16 %v7029
    %v7101 = vunpack.c.l.b16 %v7030
    %v7102 = vunpack.c.l.b16 %v7031
    %v7103 = vunpack.c.l.b16 %v7032
    %v7104 = vunpack.c.l.b16 %v7033
    %v7105 = vunpack.c.l.b16 %v7034
    %v7106 = vunpack.c.l.b16 %v7035
    %v7107 = vunpack.c.l.b16 %v7036
    %v7108 = vunpack.c.l.b16 %v7037
    %v7109 = vunpack.c.l.b16 %v7038
    %v7110 = vunpack.c.l.b16 %v7039
    %v7111 = vunpack.c.l.b16 %v7040
    %v7112 = vunpack.c.l.b16 %v7041
    %v7113 = vunpack.c.l.b16 %v7042
    %v7114 = vunpack.c.l.b16 %v7043
    %v7115 = vpack.c.b16 %v7084, %v7083
    %v7116 = vpack.c.b16 %v7086, %v7085
    %v7117 = vpack.c.b16 %v7088, %v7087
    %v7118 = vpack.c.b16 %v7090, %v7089
    %v7119 = vpack.c.b16 %v7092, %v7091
    %v7120 = vpack.c.b16 %v7094, %v7093
    %v7121 = vpack.c.b16 %v7096, %v7095
    %v7122 = vpack.c.b16 %v7098, %v7097
    %v7123 = vpack.c.b16 %v7100, %v7099
    %v7124 = vpack.c.b16 %v7102, %v7101
    %v7125 = vpack.c.b16 %v7104, %v7103
    %v7126 = vpack.c.b16 %v7106, %v7105
    %v7127 = vpack.c.b16 %v7108, %v7107
    %v7128 = vpack.c.b16 %v7110, %v7109
    %v7129 = vpack.c.b16 %v7112, %v7111
    %v7130 = vpack.c.b16 %v7114, %v7113
    %7147 = vmatprep.subr.bf16.mxu0 0
    %7148 = vmatpush1.bf16.msra.mxu0 %v7115
    %7149 = vmatprep.subr.bf16.mxu0 0
    %7150 = vmatpush1.bf16.msra.mxu0 %v7116
    %7151 = vmatprep.subr.bf16.mxu0 0
    %7152 = vmatpush1.bf16.msra.mxu0 %v7117
    %7153 = vmatprep.subr.bf16.mxu0 0
    %7154 = vmatpush1.bf16.msra.mxu0 %v7118
    %7155 = vmatprep.subr.bf16.mxu0 0
    %7156 = vmatpush1.bf16.msra.mxu0 %v7119
    %7157 = vmatprep.subr.bf16.mxu0 0
    %7158 = vmatpush1.bf16.msra.mxu0 %v7120
    %7159 = vmatprep.subr.bf16.mxu0 0
    %7160 = vmatpush1.bf16.msra.mxu0 %v7121
    %7161 = vmatprep.subr.bf16.mxu0 0
    %7162 = vmatpush1.bf16.msra.mxu0 %v7122
    %7163 = vmatprep.subr.bf16.mxu0 0
    %7164 = vmatpush1.bf16.msra.mxu0 %v7123
    %7165 = vmatprep.subr.bf16.mxu0 0
    %7166 = vmatpush1.bf16.msra.mxu0 %v7124
    %7167 = vmatprep.subr.bf16.mxu0 0
    %7168 = vmatpush1.bf16.msra.mxu0 %v7125
    %7169 = vmatprep.subr.bf16.mxu0 0
    %7170 = vmatpush1.bf16.msra.mxu0 %v7126
    %7171 = vmatprep.subr.bf16.mxu0 0
    %7172 = vmatpush1.bf16.msra.mxu0 %v7127
    %7173 = vmatprep.subr.bf16.mxu0 0
    %7174 = vmatpush1.bf16.msra.mxu0 %v7128
    %7175 = vmatprep.subr.bf16.mxu0 0
    %7176 = vmatpush1.bf16.msra.mxu0 %v7129
    %7177 = vmatprep.subr.bf16.mxu0 0
    %7178 = vmatpush1.bf16.msra.mxu0 %v7130
    %7179 = vmatprep.mubr.bf16.mxu0 %v7011
    %7180 = vmatmul.mubr.bf16.gmra.mrb[0].mxu0 %v7010
    %v7181 = vpop.f32.mrb[0].mxu0
    %v7182 = vadd.f32 %v7049, %v7181
    %v7183 = vpop.f32.mrb[0].mxu0
    %v7184 = vpop.f32.mrb[0].mxu0
    %v7185 = vpop.f32.mrb[0].mxu0
    %7186 = vdwg.mxu0
    %vm7187 = vcmask 9216
    %7188 = vst.msk [vmem:[#allocation8] sm:$0x3] %vm7187, %v7182
    // Predicated region
    $region168: #{fcn1_forward.1} parent=1 // pred_check
      _
    $region169: #{fcn1_forward.1} parent=1 // pred_check_branch
      %7190 = sbr.rel (0) target = $region171
    $region170: #{fcn1_forward.1} parent=1 // pred_region
      %s7192 = ssub.s32 32, 32
      %7193 = vsyncadd [#allocation9], %s7192
      %s7195 = sshll.u32 [#allocation8], 4
      %s7196 = int_to_ptr.vmem [resolvable:$true] %s7195
      %7198 = dma.vmem_to_hbm [thread:$0]  %s7196, 32, %s25, [#allocation9]
    $region171: #{fcn1_forward.1} parent=1 // pred_fallthru
      _
    // Predicated region
    $region172: #{fcn1_forward.1} parent=1 // pred_check
      _
    $region173: #{fcn1_forward.1} parent=1 // pred_check_branch
      %7200 = sbr.rel (0) target = $region175
    $region174: #{fcn1_forward.1} parent=1 // pred_region
      %7201 = dma.done [#allocation9], 32
    $region175: #{fcn1_forward.1} parent=1 // pred_fallthru
      _
    %7202 = vsyncpa [#allocation9], 1
  %7203 = vsyncmov [#allocation7]
  %s7204 = vpop.sfrf %7203
  %p7205 = scmp.eq.s32.totalorder %s7204, 0
  %p7206 = pneg %p7205
  %7208 = shalt.err (%p7206)
  %s7209 = scalar_lea.sflag [#allocation7], 1
  %7210 = vsyncmov %s7209
  %s7211 = vpop.sfrf %7210
  %p7212 = scmp.eq.s32.totalorder %s7211, 0
  %p7213 = pneg %p7212
  %7215 = shalt.err (%p7213)

</llo_original>
